<compile_context>
chip_gen: v7x
topology: tpu7x:2x2x1
jax: 0.10.0
libtpu: 0.0.40
codegen_flags: <defaults>
</compile_context>

<pallas_src>
import functools

import jax
import jax.numpy as jnp
from jax import lax
from jax.experimental import pallas as pl
from jax.experimental.pallas import tpu as pltpu


# ------------------------------- shared math ----------------------------------

def _linear_t(v, w, use_mxu):
    """v @ w.T (nn.Linear, no bias).  VPU broadcast-mul-sum for small D; MXU for
    D >= 64 (the (Bt, D, D) VPU intermediate would spill vregs there)."""
    if use_mxu:
        return lax.dot_general(v, w, (((1,), (1,)), ((), ())),
                               preferred_element_type=jnp.float32)
    return jnp.sum(v[:, None, :] * w[None, :, :], axis=-1)


def _scale_shift_from_stats(avg, mean_sq, wm, ws, wg, bg, *, eps, use_mxu):
    """Per-(B, D) scale/shift so that  out = x * scale - shift.

    mean((x-A)^2) = [mean(x^2) - mean(x)^2] + (mean(x) - A)^2  (stable grouping).
    mean((x-A)/astd, 2) = (mean(x) - A)/astd   -> no extra pass over x for the gate.
    """
    a_avg = _linear_t(avg, wm, use_mxu)                        # adaptive_avg
    var_x = jnp.maximum(mean_sq - avg * avg, 0.0)
    diff = avg - a_avg
    std = jnp.sqrt(var_x + diff * diff + eps)                  # sqrt(...+eps) BEFORE W_scale
    a_std = _linear_t(std, ws, use_mxu)                        # adaptive_std
    a_std = jnp.where(a_std <= eps, jnp.float32(1.0), a_std)   # guard AFTER W_scale
    inv_std = 1.0 / a_std
    z = _linear_t(diff * inv_std, wg, use_mxu) + bg
    gate = 1.0 / (1.0 + jnp.exp(-z))                           # sigmoid on stats only
    scale = gate * inv_std
    shift = a_avg * scale
    return scale, shift


# ----------------------------- Pass 1: statistics ------------------------------

def _dain_stats_kernel(x_ref, sum_ref, sumsq_ref, acc_ref, accsq_ref, *,
                       seq_len, block_l, mask_tail):
    l = pl.program_id(1)

    @pl.when(l == 0)
    def _init():
        acc_ref[...] = jnp.zeros_like(acc_ref)
        accsq_ref[...] = jnp.zeros_like(accsq_ref)

    xf = x_ref[...].astype(jnp.float32)
    if mask_tail:  # only emitted when block_l does not divide L (pl.cdiv grid)
        lane = lax.broadcasted_iota(jnp.int32, xf.shape, 2)
        xf = jnp.where(lane + l * block_l < seq_len, xf, 0.0)

    # Tiny (block_b, D) accumulators: lane reduce on the XLU, one small store per
    # tile -- the vst slot and VMEM stay free for the HBM stream.
    # NOTE: single f32 accumulation; for L >~ 1e5 consider pairwise/Kahan sums.
    acc_ref[...] += jnp.sum(xf, axis=-1)
    accsq_ref[...] += jnp.sum(xf * xf, axis=-1)

    @pl.when(l == pl.num_programs(1) - 1)
    def _finalize():
        sum_ref[...] = acc_ref[...]
        sumsq_ref[...] = accsq_ref[...]


# ------------------------------- Pass 2: apply ---------------------------------

def _dain_apply_kernel(x_ref, sum_ref, sumsq_ref, wm_ref, ws_ref, wg_ref, bg_ref,
                       o_ref, scale_ref, shift_ref, *, seq_len, eps, use_mxu,
                       compute_dtype):
    l = pl.program_id(1)

    @pl.when(l == 0)
    def _per_b_block_epilogue():
        inv_L = 1.0 / float(seq_len)
        avg = sum_ref[...] * inv_L
        mean_sq = sumsq_ref[...] * inv_L
        scale, shift = _scale_shift_from_stats(
            avg, mean_sq, wm_ref[...], ws_ref[...], wg_ref[...], bg_ref[...],
            eps=eps, use_mxu=use_mxu)
        # Stored as (bb, D, 1); pre-broadcasting to lane width 128 is a possible
        # few-% win -- verify in the bundle before adding the extra scratch.
        scale_ref[...] = scale.astype(compute_dtype)[:, :, None]
        shift_ref[...] = shift.astype(compute_dtype)[:, :, None]

    # Bandwidth-critical body: one vmul + one vsub per vreg (bf16 stays packed).
    xc = x_ref[...]
    if xc.dtype != compute_dtype:
        xc = xc.astype(compute_dtype)
    o_ref[...] = (xc * scale_ref[...] - shift_ref[...]).astype(o_ref.dtype)


# --------------------------- Fused single-pass path ----------------------------

def _dain_fused_kernel(x_ref, wm_ref, ws_ref, wg_ref, bg_ref, o_ref, *,
                       seq_len, eps, use_mxu, compute_dtype):
    xf = x_ref[...].astype(jnp.float32)
    inv_L = 1.0 / float(seq_len)
    avg = jnp.sum(xf, axis=-1) * inv_L
    mean_sq = jnp.sum(xf * xf, axis=-1) * inv_L
    scale, shift = _scale_shift_from_stats(
        avg, mean_sq, wm_ref[...], ws_ref[...], wg_ref[...], bg_ref[...],
        eps=eps, use_mxu=use_mxu)
    xc = x_ref[...]
    if xc.dtype != compute_dtype:
        xc = xc.astype(compute_dtype)
    o_ref[...] = (xc * scale.astype(compute_dtype)[:, :, None]
                  - shift.astype(compute_dtype)[:, :, None]).astype(o_ref.dtype)


# ----------------------------------- wrapper -----------------------------------

def dain_forward(x, w_mean, w_scale, w_gate, b_gate, *, eps=1e-8,
                 block_b=None, block_l=None, fused=None, vmem_limit_bytes=None):
    """DAIN_Layer.forward (mode='full') for x of shape (B, D, L) == torch (N, C, L)."""
    B, D, L = x.shape
    f32 = jnp.float32
    in_bytes = jnp.dtype(x.dtype).itemsize
    # v6e/v7x: keep the hot apply loop in bf16 when the input is bf16; stats f32.
    compute_dtype = jnp.bfloat16 if x.dtype == jnp.bfloat16 else f32
    use_mxu = D >= 64

    # Generation-aware VMEM budget (v5e/v6e: 128 MiB physical, v7x: 64 MiB).
    try:
        phys = int(pltpu.get_tpu_info().vmem_capacity_bytes)
    except Exception:
        phys = 64 << 20                          # conservative fallback (v7x per-TC)
    if vmem_limit_bytes is None:
        vmem_limit_bytes = min(phys, max(32 << 20, phys // 2))
    budget = int(0.8 * vmem_limit_bytes)

    # B tile: multiple of 8 (sublane) or full B; >= 2 parallel blocks for v7x's 2 TCs.
    if block_b is None:
        block_b = 8 if (B % 8 == 0 and B >= 16) else B
    assert B % block_b == 0, "block_b must divide B"

    # Fused single-pass fast path: 1 read + 1 write of x when the slab fits VMEM.
    if fused is None:
        fused_per_elem = 4 * in_bytes + 12       # dbl-buffered in+out slabs + f32 temps
        fused = (block_b * D * L * fused_per_elem) <= budget and block_l is None

    w_mean = w_mean.astype(f32)
    w_scale = w_scale.astype(f32)
    w_gate = w_gate.astype(f32)
    b_gate2d = b_gate.astype(f32).reshape(1, D)

    if fused:
        x_full_spec = pl.BlockSpec((block_b, D, L), lambda b: (b, 0, 0))
        w_spec1 = pl.BlockSpec((D, D), lambda b: (0, 0))
        bias_spec1 = pl.BlockSpec((1, D), lambda b: (0, 0))
        return pl.pallas_call(
            functools.partial(_dain_fused_kernel, seq_len=L, eps=float(eps),
                              use_mxu=use_mxu, compute_dtype=compute_dtype),
            out_shape=jax.ShapeDtypeStruct((B, D, L), x.dtype),
            grid_spec=pltpu.PrefetchScalarGridSpec(
                num_scalar_prefetch=0,
                grid=(B // block_b,),
                in_specs=[x_full_spec, w_spec1, w_spec1, w_spec1, bias_spec1],
                out_specs=x_full_spec),
            compiler_params=pltpu.CompilerParams(
                dimension_semantics=("parallel",),
                vmem_limit_bytes=vmem_limit_bytes),
        )(x, w_mean, w_scale, w_gate, b_gate2d)

    # -------------------- two-pass streaming path ---------------------------
    if block_l is None:
        per_elem = 4 * in_bytes + 8              # worst-case streaming bytes/elem
        cap_l = max(128, budget // max(1, block_b * D * per_elem))
        best = 0
        c = 128
        while c <= L and c <= cap_l:             # largest lane-dense divisor tile
            if L % c == 0:
                best = c
            c += 128
        if best > 0:
            block_l = best
        elif L <= cap_l:
            block_l = L                          # full-extent block is always legal
        else:
            block_l = max(128, (min(cap_l, L) // 128) * 128)   # cdiv grid + tail mask
    assert block_l == L or block_l % 128 == 0, "block_l must be x128 or full L"
    mask_tail = (L % block_l) != 0

    grid = (B // block_b, pl.cdiv(L, block_l))   # reduction axis (L) last
    cparams = pltpu.CompilerParams(dimension_semantics=("parallel", "arbitrary"),
                                   vmem_limit_bytes=vmem_limit_bytes)

    x_spec = pl.BlockSpec((block_b, D, block_l), lambda b, l: (b, 0, l))
    bd_spec = pl.BlockSpec((block_b, D), lambda b, l: (b, 0))
    w_spec = pl.BlockSpec((D, D), lambda b, l: (0, 0))
    bias_spec = pl.BlockSpec((1, D), lambda b, l: (0, 0))

    # Pass 1: per-(B, D) sum and sum-of-squares over L (one streaming read of x).
    sum_x, sumsq_x = pl.pallas_call(
        functools.partial(_dain_stats_kernel, seq_len=L, block_l=block_l,
                          mask_tail=mask_tail),
        out_shape=(jax.ShapeDtypeStruct((B, D), f32),
                   jax.ShapeDtypeStruct((B, D), f32)),
        grid_spec=pltpu.PrefetchScalarGridSpec(
            num_scalar_prefetch=0,
            grid=grid,
            in_specs=[x_spec],
            out_specs=[bd_spec, bd_spec],
            scratch_shapes=[pltpu.VMEM((block_b, D), f32),
                            pltpu.VMEM((block_b, D), f32)]),
        compiler_params=cparams,
    )(x)

    # Pass 2: one read + one write of x; per-B-block epilogue math at l == 0.
    # (If profiling shows an exposed DMA bubble at B-block boundaries, try
    #  pipeline_mode=pl.Buffered(3) on x_spec.)
    out = pl.pallas_call(
        functools.partial(_dain_apply_kernel, seq_len=L, eps=float(eps),
                          use_mxu=use_mxu, compute_dtype=compute_dtype),
        out_shape=jax.ShapeDtypeStruct((B, D, L), x.dtype),
        grid_spec=pltpu.PrefetchScalarGridSpec(
            num_scalar_prefetch=0,
            grid=grid,
            in_specs=[x_spec, bd_spec, bd_spec, w_spec, w_spec, w_spec, bias_spec],
            out_specs=x_spec,
            scratch_shapes=[pltpu.VMEM((block_b, D, 1), compute_dtype),
                            pltpu.VMEM((block_b, D, 1), compute_dtype)]),
        compiler_params=cparams,
    )(x, sum_x, sumsq_x, w_mean, w_scale, w_gate, b_gate2d)
    return out


# ------------------------------ pure-JAX reference ------------------------------

def _dain_reference(x, w_mean, w_scale, w_gate, b_gate, eps):
    avg = jnp.mean(x, axis=2)
    adaptive_avg = avg @ w_mean.T
    x = x - adaptive_avg[:, :, None]
    std = jnp.sqrt(jnp.mean(x * x, axis=2) + eps)
    adaptive_std = std @ w_scale.T
    adaptive_std = jnp.where(adaptive_std <= eps, 1.0, adaptive_std)
    x = x / adaptive_std[:, :, None]
    avg2 = jnp.mean(x, axis=2)
    gate = 1.0 / (1.0 + jnp.exp(-(avg2 @ w_gate.T + b_gate[None, :])))
    return x * gate[:, :, None]


if __name__ == "__main__":
    key = jax.random.PRNGKey(0)
    kx, kwm, kws, kwg, kbg, kx2 = jax.random.split(key, 6)

    # Shapes consistent with the module: (batch, input_dim, seq_len).
    B, D, L = 16, 16, 1536
    # Non-zero-mean data exercises the stable variance reconstruction.
    x = 0.5 * jax.random.normal(kx, (B, D, L), dtype=jnp.float32) + 3.0

    # mean/scale layers start near identity (perturbed to exercise the general
    # path); gating layer ~ default nn.Linear init.
    w_mean = jnp.eye(D, dtype=jnp.float32) + 0.05 * jax.random.normal(kwm, (D, D), jnp.float32)
    w_scale = jnp.eye(D, dtype=jnp.float32) + 0.05 * jax.random.normal(kws, (D, D), jnp.float32)
    bound = 1.0 / (D ** 0.5)
    w_gate = jax.random.uniform(kwg, (D, D), jnp.float32, minval=-bound, maxval=bound)
    b_gate = jax.random.uniform(kbg, (D,), jnp.float32, minval=-bound, maxval=bound)

    ref = _dain_reference(x, w_mean, w_scale, w_gate, b_gate, 1e-8)

    # 1) auto path (fused single-pass for this small shape)
    out_fused = jax.block_until_ready(
        dain_forward(x, w_mean, w_scale, w_gate, b_gate, eps=1e-8))
    err_fused = float(jnp.max(jnp.abs(out_fused - ref)))

    # 2) two-pass streaming path
    out_2p = jax.block_until_ready(
        dain_forward(x, w_mean, w_scale, w_gate, b_gate, eps=1e-8, fused=False))
    err_2p = float(jnp.max(jnp.abs(out_2p - ref)))

    # 3) two-pass with a non-dividing L tile (exercises cdiv grid + tail masking)
    B3, D3, L3 = 4, 24, 640
    x3 = jax.random.normal(kx2, (B3, D3, L3), dtype=jnp.float32) + 1.5
    w_m3 = jnp.eye(D3, dtype=jnp.float32)
    w_s3 = jnp.eye(D3, dtype=jnp.float32)
    b3 = 1.0 / (D3 ** 0.5)
    w_g3 = jax.random.uniform(kwg, (D3, D3), jnp.float32, minval=-b3, maxval=b3)
    b_g3 = jax.random.uniform(kbg, (D3,), jnp.float32, minval=-b3, maxval=b3)
    ref3 = _dain_reference(x3, w_m3, w_s3, w_g3, b_g3, 1e-8)
    out3 = jax.block_until_ready(
        dain_forward(x3, w_m3, w_s3, w_g3, b_g3, eps=1e-8, fused=False, block_l=256))
    err3 = float(jnp.max(jnp.abs(out3 - ref3)))

    for name, err in (("fused", err_fused), ("two_pass", err_2p), ("tail_mask", err3)):
        if err > 1e-3:
            raise AssertionError(f"Pallas DAIN output mismatch ({name}): max|diff| = {err}")
    print("KERNEL_OK")
</pallas_src>

<mosaic_0001>
module attributes {stable_mosaic.version = 11 : i64} {
  func.func @_dain_fused_kernel(%arg0: i32, %arg1: memref<8x16x1536xf32, #tpu.memory_space<vmem>>, %arg2: memref<16x16xf32, #tpu.memory_space<vmem>>, %arg3: memref<16x16xf32, #tpu.memory_space<vmem>>, %arg4: memref<16x16xf32, #tpu.memory_space<vmem>>, %arg5: memref<1x16xf32, #tpu.memory_space<vmem>>, %arg6: memref<8x16x1536xf32, #tpu.memory_space<vmem>>) attributes {dimension_semantics = [#tpu.dimension_semantics<parallel>], iteration_bounds = array<i64: 2>, scalar_prefetch = 0 : i64, scratch_operands = 0 : i64, tpu.core_type = #tpu.core_type<tc>, window_params = [{transform_indices = @transform_0, window_bounds = array<i64: 8, 16, 1536>}, {pipeline_mode = #tpu.pipeline_mode<synchronous>, transform_indices = @transform_1, window_bounds = array<i64: 16, 16>}, {pipeline_mode = #tpu.pipeline_mode<synchronous>, transform_indices = @transform_2, window_bounds = array<i64: 16, 16>}, {pipeline_mode = #tpu.pipeline_mode<synchronous>, transform_indices = @transform_3, window_bounds = array<i64: 16, 16>}, {pipeline_mode = #tpu.pipeline_mode<synchronous>, transform_indices = @transform_4, window_bounds = array<i64: 1, 16>}, {transform_indices = @transform_5, window_bounds = array<i64: 8, 16, 1536>}]} {
    %c0 = arith.constant 0 : index
    %c0_0 = arith.constant 0 : index
    %c0_1 = arith.constant 0 : index
    %0 = vector.load %arg1[%c0, %c0_0, %c0_1] : memref<8x16x1536xf32, #tpu.memory_space<vmem>>, vector<8x16x1536xf32>
    %cst = arith.constant dense<0.000000e+00> : vector<8x16xf32>
    %1 = vector.multi_reduction <add>, %0, %cst [2] : vector<8x16x1536xf32> to vector<8x16xf32>
    %cst_2 = arith.constant 6.51041686E-4 : f32
    %2 = vector.broadcast %cst_2 : f32 to vector<8x16xf32>
    %3 = arith.mulf %1, %2 : vector<8x16xf32>
    %4 = arith.mulf %0, %0 : vector<8x16x1536xf32>
    %cst_3 = arith.constant dense<0.000000e+00> : vector<8x16xf32>
    %5 = vector.multi_reduction <add>, %4, %cst_3 [2] : vector<8x16x1536xf32> to vector<8x16xf32>
    %cst_4 = arith.constant 6.51041686E-4 : f32
    %6 = vector.broadcast %cst_4 : f32 to vector<8x16xf32>
    %7 = arith.mulf %5, %6 : vector<8x16xf32>
    %c0_5 = arith.constant 0 : index
    %c0_6 = arith.constant 0 : index
    %8 = vector.load %arg2[%c0_5, %c0_6] : memref<16x16xf32, #tpu.memory_space<vmem>>, vector<16x16xf32>
    %c0_7 = arith.constant 0 : index
    %c0_8 = arith.constant 0 : index
    %9 = vector.load %arg3[%c0_7, %c0_8] : memref<16x16xf32, #tpu.memory_space<vmem>>, vector<16x16xf32>
    %c0_9 = arith.constant 0 : index
    %c0_10 = arith.constant 0 : index
    %10 = vector.load %arg4[%c0_9, %c0_10] : memref<16x16xf32, #tpu.memory_space<vmem>>, vector<16x16xf32>
    %c0_11 = arith.constant 0 : index
    %c0_12 = arith.constant 0 : index
    %11 = vector.load %arg5[%c0_11, %c0_12] : memref<1x16xf32, #tpu.memory_space<vmem>>, vector<1x16xf32>
    %12 = vector.shape_cast %3 : vector<8x16xf32> to vector<8x1x16xf32>
    %13 = vector.shape_cast %8 : vector<16x16xf32> to vector<1x16x16xf32>
    %14 = vector.broadcast %12 : vector<8x1x16xf32> to vector<8x16x16xf32>
    %15 = vector.broadcast %13 : vector<1x16x16xf32> to vector<8x16x16xf32>
    %16 = arith.mulf %14, %15 : vector<8x16x16xf32>
    %cst_13 = arith.constant dense<0.000000e+00> : vector<8x16xf32>
    %17 = vector.multi_reduction <add>, %16, %cst_13 [2] : vector<8x16x16xf32> to vector<8x16xf32>
    %18 = arith.mulf %3, %3 : vector<8x16xf32>
    %19 = arith.subf %7, %18 : vector<8x16xf32>
    %cst_14 = arith.constant 0.000000e+00 : f32
    %20 = vector.broadcast %cst_14 : f32 to vector<8x16xf32>
    %21 = arith.maximumf %19, %20 : vector<8x16xf32>
    %22 = arith.subf %3, %17 : vector<8x16xf32>
    %23 = arith.mulf %22, %22 : vector<8x16xf32>
    %24 = arith.addf %21, %23 : vector<8x16xf32>
    %cst_15 = arith.constant 9.99999993E-9 : f32
    %25 = vector.broadcast %cst_15 : f32 to vector<8x16xf32>
    %26 = arith.addf %24, %25 : vector<8x16xf32>
    %27 = math.sqrt %26 : vector<8x16xf32>
    %28 = vector.shape_cast %27 : vector<8x16xf32> to vector<8x1x16xf32>
    %29 = vector.shape_cast %9 : vector<16x16xf32> to vector<1x16x16xf32>
    %30 = vector.broadcast %28 : vector<8x1x16xf32> to vector<8x16x16xf32>
    %31 = vector.broadcast %29 : vector<1x16x16xf32> to vector<8x16x16xf32>
    %32 = arith.mulf %30, %31 : vector<8x16x16xf32>
    %cst_16 = arith.constant dense<0.000000e+00> : vector<8x16xf32>
    %33 = vector.multi_reduction <add>, %32, %cst_16 [2] : vector<8x16x16xf32> to vector<8x16xf32>
    %cst_17 = arith.constant 9.99999993E-9 : f32
    %34 = vector.broadcast %cst_17 : f32 to vector<8x16xf32>
    %35 = arith.cmpf ole, %33, %34 : vector<8x16xf32>
    %cst_18 = arith.constant 1.000000e+00 : f32
    %36 = vector.broadcast %cst_18 : f32 to vector<8x16xf32>
    %37 = arith.select %35, %36, %33 : vector<8x16xi1>, vector<8x16xf32>
    %cst_19 = arith.constant 1.000000e+00 : f32
    %38 = vector.broadcast %cst_19 : f32 to vector<8x16xf32>
    %39 = arith.divf %38, %37 : vector<8x16xf32>
    %40 = arith.mulf %22, %39 : vector<8x16xf32>
    %41 = vector.shape_cast %40 : vector<8x16xf32> to vector<8x1x16xf32>
    %42 = vector.shape_cast %10 : vector<16x16xf32> to vector<1x16x16xf32>
    %43 = vector.broadcast %41 : vector<8x1x16xf32> to vector<8x16x16xf32>
    %44 = vector.broadcast %42 : vector<1x16x16xf32> to vector<8x16x16xf32>
    %45 = arith.mulf %43, %44 : vector<8x16x16xf32>
    %cst_20 = arith.constant dense<0.000000e+00> : vector<8x16xf32>
    %46 = vector.multi_reduction <add>, %45, %cst_20 [2] : vector<8x16x16xf32> to vector<8x16xf32>
    %47 = vector.broadcast %11 : vector<1x16xf32> to vector<8x16xf32>
    %48 = arith.addf %46, %47 : vector<8x16xf32>
    %cst_21 = arith.constant 0.000000e+00 : f32
    %49 = vector.broadcast %cst_21 : f32 to vector<8x16xf32>
    %50 = arith.subf %49, %48 : vector<8x16xf32>
    %51 = math.exp %50 : vector<8x16xf32>
    %cst_22 = arith.constant 1.000000e+00 : f32
    %52 = vector.broadcast %cst_22 : f32 to vector<8x16xf32>
    %53 = arith.addf %52, %51 : vector<8x16xf32>
    %cst_23 = arith.constant 1.000000e+00 : f32
    %54 = vector.broadcast %cst_23 : f32 to vector<8x16xf32>
    %55 = arith.divf %54, %53 : vector<8x16xf32>
    %56 = arith.mulf %55, %39 : vector<8x16xf32>
    %57 = arith.mulf %17, %56 : vector<8x16xf32>
    %c0_24 = arith.constant 0 : index
    %c0_25 = arith.constant 0 : index
    %c0_26 = arith.constant 0 : index
    %58 = vector.load %arg1[%c0_24, %c0_25, %c0_26] : memref<8x16x1536xf32, #tpu.memory_space<vmem>>, vector<8x16x1536xf32>
    %59 = vector.shape_cast %56 : vector<8x16xf32> to vector<8x16x1xf32>
    %60 = vector.broadcast %59 : vector<8x16x1xf32> to vector<8x16x1536xf32>
    %61 = arith.mulf %58, %60 : vector<8x16x1536xf32>
    %62 = vector.shape_cast %57 : vector<8x16xf32> to vector<8x16x1xf32>
    %63 = vector.broadcast %62 : vector<8x16x1xf32> to vector<8x16x1536xf32>
    %64 = arith.subf %61, %63 : vector<8x16x1536xf32>
    %c0_27 = arith.constant 0 : index
    %c0_28 = arith.constant 0 : index
    %c0_29 = arith.constant 0 : index
    %65 = vector.load %arg6[%c0_27, %c0_28, %c0_29] : memref<8x16x1536xf32, #tpu.memory_space<vmem>>, vector<8x16x1536xf32>
    tpu.vector_store %arg6[%c0_27, %c0_28, %c0_29], %64 {strides = array<i32>} : memref<8x16x1536xf32, #tpu.memory_space<vmem>>, vector<8x16x1536xf32>,
    return
  }
  func.func @transform_0(%arg0: i32) -> (i32, i32, i32) {
    %c0_i32 = arith.constant 0 : i32
    %c0_i32_0 = arith.constant 0 : i32
    %c0_i32_1 = arith.constant 0 : i32
    return %arg0, %c0_i32, %c0_i32_0 : i32, i32, i32
  }
  func.func @transform_1(%arg0: i32) -> (i32, i32) {
    %c0_i32 = arith.constant 0 : i32
    %c0_i32_0 = arith.constant 0 : i32
    %c0_i32_1 = arith.constant 0 : i32
    return %c0_i32, %c0_i32_0 : i32, i32
  }
  func.func @transform_2(%arg0: i32) -> (i32, i32) {
    %c0_i32 = arith.constant 0 : i32
    %c0_i32_0 = arith.constant 0 : i32
    %c0_i32_1 = arith.constant 0 : i32
    return %c0_i32, %c0_i32_0 : i32, i32
  }
  func.func @transform_3(%arg0: i32) -> (i32, i32) {
    %c0_i32 = arith.constant 0 : i32
    %c0_i32_0 = arith.constant 0 : i32
    %c0_i32_1 = arith.constant 0 : i32
    return %c0_i32, %c0_i32_0 : i32, i32
  }
  func.func @transform_4(%arg0: i32) -> (i32, i32) {
    %c0_i32 = arith.constant 0 : i32
    %c0_i32_0 = arith.constant 0 : i32
    %c0_i32_1 = arith.constant 0 : i32
    return %c0_i32, %c0_i32_0 : i32, i32
  }
  func.func @transform_5(%arg0: i32) -> (i32, i32, i32) {
    %c0_i32 = arith.constant 0 : i32
    %c0_i32_0 = arith.constant 0 : i32
    %c0_i32_1 = arith.constant 0 : i32
    return %arg0, %c0_i32, %c0_i32_0 : i32, i32, i32
  }
}

</mosaic_0001>

<llo_original>
// kernel: tpu_custom_call.1
$region0: #{tpu_custom_call.1}
  #allocation0 [shape = 'u32[]', space=smem, size = 0x4, offset = 0x4, fixed_abs, tag = 'smem constant byte address 0x4 - core index']
  #allocation1 [shape = 'u32[144,128]{1,0:T(1,128)}', space=vmem, size = 0x12000, scoped, tag = 'internal scratch']
  %s0 = inlined_call_operand.hbm [shape: f32[16,16,1536], index: 0, kind: input, shape index: {}]
  %s1 = inlined_call_operand.hbm [shape: f32[16,16], index: 1, kind: input, shape index: {}]
  %s2 = inlined_call_operand.hbm [shape: f32[16,16], index: 2, kind: input, shape index: {}]
  %s3 = inlined_call_operand.hbm [shape: f32[16,16], index: 3, kind: input, shape index: {}]
  %s4 = inlined_call_operand.hbm [shape: f32[1,16], index: 4, kind: input, shape index: {}]
  %s5 = inlined_call_operand.hbm [shape: f32[16,16,1536], index: 5, kind: output, shape index: {}]
  %s6 = sld [smem:[#allocation0]]
  $region73: #{tpu_custom_call.1} parent=0
    _
  %s8 = ssub.s32 1, %s6
  %s9 = scalar_select 0, %s8, %s6
  $region1: #{tpu_custom_call.1} parent=0
    #allocation2 [shape = 'u8[1572864]{0}', space=vmem, size = 0x180000, scoped, tag = 'input window, operand 0']
    #allocation3 [shape = 's32[2]{0}', space=sflag, size = 0x8, scoped, tag = 'scoped memory for tpu_custom_call.1']
    #allocation4 [shape = 's32[2]{0}', space=sflag, size = 0x8, scoped, tag = 'scoped memory for tpu_custom_call.1']
    #allocation5 [shape = 'u8[8192]{0}', space=vmem, size = 0x2000, scoped, tag = 'input window, operand 1, single buffered']
    #allocation6 [shape = 's32[1]{0}', space=sflag, size = 0x4, scoped, tag = 'scoped memory for tpu_custom_call.1']
    #allocation7 [shape = 'u8[8192]{0}', space=vmem, size = 0x2000, scoped, tag = 'input window, operand 2, single buffered']
    #allocation8 [shape = 'u8[8192]{0}', space=vmem, size = 0x2000, scoped, tag = 'input window, operand 3, single buffered']
    #allocation9 [shape = 's32[1]{0}', space=sflag, size = 0x4, scoped, tag = 'scoped memory for tpu_custom_call.1']
    #allocation10 [shape = 'u8[512]{0}', space=vmem, size = 0x400, scoped, tag = 'input window, operand 4, single buffered']
    #allocation11 [shape = 'u8[1572864]{0}', space=vmem, size = 0x180000, scoped, tag = 'output window, operand 0']
    %10 = vsyncpa [#allocation3], 0
    %s11 = scalar_lea.sflag [#allocation3], 1
    %12 = vsyncpa %s11, 0
    %13 = vsyncpa [#allocation6], 0
    %14 = vsyncpa [#allocation9], 0
    %15 = vsyncpa [#allocation4], 0
    %s16 = scalar_lea.sflag [#allocation4], 1
    %17 = vsyncpa %s16, 0
    loop: start=0, step=1, limit=4
    $region2: #{tpu_custom_call.1} parent=1 // loop_pre_header
      _
    $region3: #{tpu_custom_call.1} parent=1 // loop_header
      %s19 = sphi 0, %s23
      %p20 = scmp.ge.s32.totalorder %s19, 4
      %s29 = sphi 0, %s31
      %s32 = sphi 0, %s29
      %s33 = sphi 0, %s32
      %s49 = sphi 0, %s33
      %s53 = sphi 0, %s53
      %s55 = sphi 0, %s53
      %s56 = sphi 0, %s55
      %s70 = sphi 0, %s56
      %s74 = sphi 0, %s74
      %s76 = sphi 0, %s74
      %s77 = sphi 0, %s76
      %s91 = sphi 0, %s77
      %s95 = sphi 0, %s95
      %s97 = sphi 0, %s95
      %s98 = sphi 0, %s97
      %s112 = sphi 0, %s98
      %s116 = sphi 0, %s116
      %s118 = sphi 0, %s116
      %s119 = sphi 0, %s118
      %s133 = sphi 0, %s119
      %s139 = sphi 0, %s141
      %s142 = sphi 0, %s139
      %s143 = sphi 0, %s142
      %s159 = sphi 0, %s143
    $region4: #{tpu_custom_call.1} parent=1 // loop_header_branch
      %22 = sbr.rel (%p20) target = $region8
    $region5: #{tpu_custom_call.1} parent=1 // loop_body
      %s24 = ssub.s32 %s19, 1
      %s25 = ssub.s32 %s19, 2
      %s26 = sadd.s32 %s19, 1
      %s27 = ssub.s32 %s19, %s26
      %p28 = scmp.eq.s32.totalorder %s27, 0
      %s30 = sadd.s32 %s29, 1
      %s31 = scalar_select %p28, %s29, %s30
      %p34 = pneg %p28
      %p35 = scmp.eq.s32.totalorder %s19, 1
      %p36 = por %p34, %p35
      %p37 = scmp.ne.s32.totalorder %s29, %s32
      %p38 = scmp.eq.s32.totalorder %s19, 0
      %p39 = por %p37, %p38
      %p40 = scmp.ne.s32.totalorder %s29, %s32
      %p41 = scmp.eq.s32.totalorder %s24, 1
      %p42 = por %p40, %p41
      %p43 = scmp.ne.s32.totalorder %s32, %s33
      %p44 = scmp.eq.s32.totalorder %s24, 0
      %p45 = por %p43, %p44
      %p46 = scmp.ne.s32.totalorder %s32, %s33
      %p47 = scmp.eq.s32.totalorder %s25, 1
      %p48 = por %p46, %p47
      %p50 = scmp.ne.s32.totalorder %s33, %s49
      %p51 = scmp.eq.s32.totalorder %s25, 0
      %p52 = por %p50, %p51
      %s54 = sadd.s32 %s53, 1
      %p57 = scmp.eq.s32.totalorder %s19, 1
      %p58 = scmp.ne.s32.totalorder %s53, %s55
      %p59 = scmp.eq.s32.totalorder %s19, 0
      %p60 = por %p58, %p59
      %p61 = scmp.ne.s32.totalorder %s53, %s55
      %p62 = scmp.eq.s32.totalorder %s24, 1
      %p63 = por %p61, %p62
      %p64 = scmp.ne.s32.totalorder %s55, %s56
      %p65 = scmp.eq.s32.totalorder %s24, 0
      %p66 = por %p64, %p65
      %p67 = scmp.ne.s32.totalorder %s55, %s56
      %p68 = scmp.eq.s32.totalorder %s25, 1
      %p69 = por %p67, %p68
      %p71 = scmp.ne.s32.totalorder %s56, %s70
      %p72 = scmp.eq.s32.totalorder %s25, 0
      %p73 = por %p71, %p72
      %s75 = sadd.s32 %s74, 1
      %p78 = scmp.eq.s32.totalorder %s19, 1
      %p79 = scmp.ne.s32.totalorder %s74, %s76
      %p80 = scmp.eq.s32.totalorder %s19, 0
      %p81 = por %p79, %p80
      %p82 = scmp.ne.s32.totalorder %s74, %s76
      %p83 = scmp.eq.s32.totalorder %s24, 1
      %p84 = por %p82, %p83
      %p85 = scmp.ne.s32.totalorder %s76, %s77
      %p86 = scmp.eq.s32.totalorder %s24, 0
      %p87 = por %p85, %p86
      %p88 = scmp.ne.s32.totalorder %s76, %s77
      %p89 = scmp.eq.s32.totalorder %s25, 1
      %p90 = por %p88, %p89
      %p92 = scmp.ne.s32.totalorder %s77, %s91
      %p93 = scmp.eq.s32.totalorder %s25, 0
      %p94 = por %p92, %p93
      %s96 = sadd.s32 %s95, 1
      %p99 = scmp.eq.s32.totalorder %s19, 1
      %p100 = scmp.ne.s32.totalorder %s95, %s97
      %p101 = scmp.eq.s32.totalorder %s19, 0
      %p102 = por %p100, %p101
      %p103 = scmp.ne.s32.totalorder %s95, %s97
      %p104 = scmp.eq.s32.totalorder %s24, 1
      %p105 = por %p103, %p104
      %p106 = scmp.ne.s32.totalorder %s97, %s98
      %p107 = scmp.eq.s32.totalorder %s24, 0
      %p108 = por %p106, %p107
      %p109 = scmp.ne.s32.totalorder %s97, %s98
      %p110 = scmp.eq.s32.totalorder %s25, 1
      %p111 = por %p109, %p110
      %p113 = scmp.ne.s32.totalorder %s98, %s112
      %p114 = scmp.eq.s32.totalorder %s25, 0
      %p115 = por %p113, %p114
      %s117 = sadd.s32 %s116, 1
      %p120 = scmp.eq.s32.totalorder %s19, 1
      %p121 = scmp.ne.s32.totalorder %s116, %s118
      %p122 = scmp.eq.s32.totalorder %s19, 0
      %p123 = por %p121, %p122
      %p124 = scmp.ne.s32.totalorder %s116, %s118
      %p125 = scmp.eq.s32.totalorder %s24, 1
      %p126 = por %p124, %p125
      %p127 = scmp.ne.s32.totalorder %s118, %s119
      %p128 = scmp.eq.s32.totalorder %s24, 0
      %p129 = por %p127, %p128
      %p130 = scmp.ne.s32.totalorder %s118, %s119
      %p131 = scmp.eq.s32.totalorder %s25, 1
      %p132 = por %p130, %p131
      %p134 = scmp.ne.s32.totalorder %s119, %s133
      %p135 = scmp.eq.s32.totalorder %s25, 0
      %p136 = por %p134, %p135
      %s137 = ssub.s32 %s19, %s26
      %p138 = scmp.eq.s32.totalorder %s137, 0
      %s140 = sadd.s32 %s139, 1
      %s141 = scalar_select %p138, %s139, %s140
      %p144 = pneg %p138
      %p145 = scmp.eq.s32.totalorder %s19, 1
      %p146 = por %p144, %p145
      %p147 = scmp.ne.s32.totalorder %s139, %s142
      %p148 = scmp.eq.s32.totalorder %s19, 0
      %p149 = por %p147, %p148
      %p150 = scmp.ne.s32.totalorder %s139, %s142
      %p151 = scmp.eq.s32.totalorder %s24, 1
      %p152 = por %p150, %p151
      %p153 = scmp.ne.s32.totalorder %s142, %s143
      %p154 = scmp.eq.s32.totalorder %s24, 0
      %p155 = por %p153, %p154
      %p156 = scmp.ne.s32.totalorder %s142, %s143
      %p157 = scmp.eq.s32.totalorder %s25, 1
      %p158 = por %p156, %p157
      %p160 = scmp.ne.s32.totalorder %s143, %s159
      %p161 = scmp.eq.s32.totalorder %s25, 0
      %p162 = por %p160, %p161
      %p163 = scmp.le.s32.totalorder 1, %s19
      %p164 = scmp.lt.s32.totalorder %s19, 3
      %p165 = pnand %p163, %p164
      %p166 = pneg %p165
      // Predicated region
      $region9: #{tpu_custom_call.1} parent=5 // pred_check
        _
      $region10: #{tpu_custom_call.1} parent=5 // pred_check_branch
        %168 = sbr.rel (%p165) target = $region12
      $region11: #{tpu_custom_call.1} parent=5 // pred_region
        %s169 = ssub.s32 %s19, 1
        // Predicated region
        $region13: #{tpu_custom_call.1} parent=11 // pred_check
          %p170 = pneg %p66
        $region14: #{tpu_custom_call.1} parent=11 // pred_check_branch
          %172 = sbr.rel (%p170) target = $region16
        $region15: #{tpu_custom_call.1} parent=11 // pred_region
          %s174 = ssub.s32 256, 256
          %175 = vsyncadd [#allocation6], %s174
          %s176 = sshll.u32 [#allocation5], 4
          %s177 = int_to_ptr.vmem [resolvable:$true] %s176
          %182 = dma.hbm_to_vmem [thread:$0]  %s1, 256, %s177, [#allocation6], 128, 128, 8
        $region16: #{tpu_custom_call.1} parent=11 // pred_fallthru
          _
        // Predicated region
        $region17: #{tpu_custom_call.1} parent=11 // pred_check
          %p183 = pneg %p87
        $region18: #{tpu_custom_call.1} parent=11 // pred_check_branch
          %185 = sbr.rel (%p183) target = $region20
        $region19: #{tpu_custom_call.1} parent=11 // pred_region
          %s187 = ssub.s32 256, 256
          %188 = vsyncadd [#allocation6], %s187
          %s189 = sshll.u32 [#allocation7], 4
          %s190 = int_to_ptr.vmem [resolvable:$true] %s189
          %195 = dma.hbm_to_vmem [thread:$0]  %s2, 256, %s190, [#allocation6], 128, 128, 8
        $region20: #{tpu_custom_call.1} parent=11 // pred_fallthru
          _
        // Predicated region
        $region21: #{tpu_custom_call.1} parent=11 // pred_check
          %p196 = pneg %p108
        $region22: #{tpu_custom_call.1} parent=11 // pred_check_branch
          %198 = sbr.rel (%p196) target = $region24
        $region23: #{tpu_custom_call.1} parent=11 // pred_region
          %s200 = ssub.s32 256, 256
          %201 = vsyncadd [#allocation9], %s200
          %s202 = sshll.u32 [#allocation8], 4
          %s203 = int_to_ptr.vmem [resolvable:$true] %s202
          %208 = dma.hbm_to_vmem [thread:$0]  %s3, 256, %s203, [#allocation9], 128, 128, 8
        $region24: #{tpu_custom_call.1} parent=11 // pred_fallthru
          _
        // Predicated region
        $region25: #{tpu_custom_call.1} parent=11 // pred_check
          %p209 = pneg %p129
        $region26: #{tpu_custom_call.1} parent=11 // pred_check_branch
          %211 = sbr.rel (%p209) target = $region28
        $region27: #{tpu_custom_call.1} parent=11 // pred_region
          %s213 = ssub.s32 16, 16
          %214 = vsyncadd [#allocation9], %s213
          %s216 = sshll.u32 [#allocation10], 4
          %s217 = int_to_ptr.vmem [resolvable:$true] %s216
          %219 = dma.hbm_to_vmem [thread:$0]  %s4, 16, %s217, [#allocation9]
        $region28: #{tpu_custom_call.1} parent=11 // pred_fallthru
          _
      $region12: #{tpu_custom_call.1} parent=5 // pred_fallthru
        _
      %p220 = scmp.lt.s32.totalorder %s19, 2
      // Predicated region
      $region29: #{tpu_custom_call.1} parent=5 // pred_check
        %p221 = pneg %p220
      $region30: #{tpu_custom_call.1} parent=5 // pred_check_branch
        %223 = sbr.rel (%p221) target = $region32
      $region31: #{tpu_custom_call.1} parent=5 // pred_region
        // Predicated region
        $region33: #{tpu_custom_call.1} parent=31 // pred_check
          %p224 = pneg %p39
        $region34: #{tpu_custom_call.1} parent=31 // pred_check_branch
          %226 = sbr.rel (%p224) target = $region36
        $region35: #{tpu_custom_call.1} parent=31 // pred_region
          %s227 = sand.u32 %s29, 1
          %s228 = scalar_lea.sflag [#allocation3], %s227
          %s229 = sand.u32 %s29, 1
          %s230 = smul.addr %s229, 1536
          %s231 = scalar_lea.vmem [#allocation2], %s230
          %s232 = smul.u32 8, %s19
          %s234 = ssub.s32 24576, 24576
          %235 = vsyncadd %s228, %s234
          %s236 = smul.addr %s232, 24
          %s237 = smul.addr %s236, 128
          %s238 = scalar_lea.hbm %s0, %s237
          %s239 = sshll.u32 %s231, 4
          %s240 = int_to_ptr.vmem [resolvable:$true] %s239
          %245 = dma.hbm_to_vmem [thread:$0]  %s238, 24576, %s240, %s228, 1536, 1536, 96
        $region36: #{tpu_custom_call.1} parent=31 // pred_fallthru
          _
      $region32: #{tpu_custom_call.1} parent=5 // pred_fallthru
        _
      %p246 = scmp.le.s32.totalorder 1, %s19
      %p247 = scmp.lt.s32.totalorder %s19, 3
      %p248 = pnand %p246, %p247
      %p249 = pneg %p248
      // Predicated region
      $region37: #{tpu_custom_call.1} parent=5 // pred_check
        _
      $region38: #{tpu_custom_call.1} parent=5 // pred_check_branch
        %251 = sbr.rel (%p248) target = $region40
      $region39: #{tpu_custom_call.1} parent=5 // pred_region
        %s252 = ssub.s32 %s19, 1
        %s253 = sand.u32 %s32, 1
        %s254 = scalar_lea.sflag [#allocation3], %s253
        %s255 = sand.u32 %s32, 1
        %s256 = smul.addr %s255, 1536
        %s257 = scalar_lea.vmem [#allocation2], %s256
        // Predicated region
        $region41: #{tpu_custom_call.1} parent=39 // pred_check
          %p258 = pneg %p45
        $region42: #{tpu_custom_call.1} parent=39 // pred_check_branch
          %260 = sbr.rel (%p258) target = $region44
        $region43: #{tpu_custom_call.1} parent=39 // pred_region
          %261 = dma.done %s254, 24576
        $region44: #{tpu_custom_call.1} parent=39 // pred_fallthru
          _
        // Predicated region
        $region45: #{tpu_custom_call.1} parent=39 // pred_check
          %p262 = pneg %p66
        $region46: #{tpu_custom_call.1} parent=39 // pred_check_branch
          %264 = sbr.rel (%p262) target = $region48
        $region47: #{tpu_custom_call.1} parent=39 // pred_region
          %265 = dma.done [#allocation6], 256
        $region48: #{tpu_custom_call.1} parent=39 // pred_fallthru
          _
        // Predicated region
        $region49: #{tpu_custom_call.1} parent=39 // pred_check
          %p266 = pneg %p87
        $region50: #{tpu_custom_call.1} parent=39 // pred_check_branch
          %268 = sbr.rel (%p266) target = $region52
        $region51: #{tpu_custom_call.1} parent=39 // pred_region
          %269 = dma.done [#allocation6], 256
        $region52: #{tpu_custom_call.1} parent=39 // pred_fallthru
          _
        // Predicated region
        $region53: #{tpu_custom_call.1} parent=39 // pred_check
          %p270 = pneg %p108
        $region54: #{tpu_custom_call.1} parent=39 // pred_check_branch
          %272 = sbr.rel (%p270) target = $region56
        $region55: #{tpu_custom_call.1} parent=39 // pred_region
          %273 = dma.done [#allocation9], 256
        $region56: #{tpu_custom_call.1} parent=39 // pred_fallthru
          _
        // Predicated region
        $region57: #{tpu_custom_call.1} parent=39 // pred_check
          %p274 = pneg %p129
        $region58: #{tpu_custom_call.1} parent=39 // pred_check_branch
          %276 = sbr.rel (%p274) target = $region60
        $region59: #{tpu_custom_call.1} parent=39 // pred_region
          %277 = dma.done [#allocation9], 16
        $region60: #{tpu_custom_call.1} parent=39 // pred_fallthru
          _
        %s278 = sand.u32 %s32, 1
        %s279 = scalar_lea.sflag [#allocation3], %s278
        %s280 = sand.u32 %s32, 1
        %s281 = smul.addr %s280, 1536
        %s282 = scalar_lea.vmem [#allocation2], %s281
        %p283 = pneg %p45
        %p284 = pneg %p42
        %p285 = pneg %p66
        %p286 = pneg %p63
        %p287 = pneg %p87
        %p288 = pneg %p84
        %p289 = pneg %p108
        %p290 = pneg %p105
        %p291 = pneg %p129
        %p292 = pneg %p126
        %p293 = pneg %p155
        %p294 = pneg %p152
        %s295 = sand.u32 %s142, 1
        %s296 = scalar_lea.sflag [#allocation4], %s295
        %s297 = sand.u32 %s142, 1
        %s298 = smul.addr %s297, 1536
        %s299 = scalar_lea.vmem [#allocation11], %s298
        %s300 = smul.u32 8, %s24
        %s301 = smul.u32 8, %s24
        %v302 = vld [vmem:[%s257] sm:$0xff]
        %v303 = vld [vmem:[%s257 + $0x8] sm:$0xff]
        %v304 = vld [vmem:[%s257 + $0x10] sm:$0xff]
        %v305 = vld [vmem:[%s257 + $0x18] sm:$0xff]
        %v306 = vld [vmem:[%s257 + $0x20] sm:$0xff]
        %v307 = vld [vmem:[%s257 + $0x28] sm:$0xff]
        %v308 = vld [vmem:[%s257 + $0x30] sm:$0xff]
        %v309 = vld [vmem:[%s257 + $0x38] sm:$0xff]
        %v310 = vld [vmem:[%s257 + $0x40] sm:$0xff]
        %v311 = vld [vmem:[%s257 + $0x48] sm:$0xff]
        %v312 = vld [vmem:[%s257 + $0x50] sm:$0xff]
        %v313 = vld [vmem:[%s257 + $0x58] sm:$0xff]
        %v314 = vld [vmem:[%s257 + $0x60] sm:$0xff]
        %v315 = vld [vmem:[%s257 + $0x68] sm:$0xff]
        %v316 = vld [vmem:[%s257 + $0x70] sm:$0xff]
        %v317 = vld [vmem:[%s257 + $0x78] sm:$0xff]
        %v318 = vld [vmem:[%s257 + $0x80] sm:$0xff]
        %v319 = vld [vmem:[%s257 + $0x88] sm:$0xff]
        %v320 = vld [vmem:[%s257 + $0x90] sm:$0xff]
        %v321 = vld [vmem:[%s257 + $0x98] sm:$0xff]
        %v322 = vld [vmem:[%s257 + $0xa0] sm:$0xff]
        %v323 = vld [vmem:[%s257 + $0xa8] sm:$0xff]
        %v324 = vld [vmem:[%s257 + $0xb0] sm:$0xff]
        %v325 = vld [vmem:[%s257 + $0xb8] sm:$0xff]
        %v326 = vld [vmem:[%s257 + $0xc0] sm:$0xff]
        %v327 = vld [vmem:[%s257 + $0xc8] sm:$0xff]
        %v328 = vld [vmem:[%s257 + $0xd0] sm:$0xff]
        %v329 = vld [vmem:[%s257 + $0xd8] sm:$0xff]
        %v330 = vld [vmem:[%s257 + $0xe0] sm:$0xff]
        %v331 = vld [vmem:[%s257 + $0xe8] sm:$0xff]
        %v332 = vld [vmem:[%s257 + $0xf0] sm:$0xff]
        %v333 = vld [vmem:[%s257 + $0xf8] sm:$0xff]
        %v334 = vld [vmem:[%s257 + $0x100] sm:$0xff]
        %v335 = vld [vmem:[%s257 + $0x108] sm:$0xff]
        %v336 = vld [vmem:[%s257 + $0x110] sm:$0xff]
        %v337 = vld [vmem:[%s257 + $0x118] sm:$0xff]
        %v338 = vld [vmem:[%s257 + $0x120] sm:$0xff]
        %v339 = vld [vmem:[%s257 + $0x128] sm:$0xff]
        %v340 = vld [vmem:[%s257 + $0x130] sm:$0xff]
        %v341 = vld [vmem:[%s257 + $0x138] sm:$0xff]
        %v342 = vld [vmem:[%s257 + $0x140] sm:$0xff]
        %v343 = vld [vmem:[%s257 + $0x148] sm:$0xff]
        %v344 = vld [vmem:[%s257 + $0x150] sm:$0xff]
        %v345 = vld [vmem:[%s257 + $0x158] sm:$0xff]
        %v346 = vld [vmem:[%s257 + $0x160] sm:$0xff]
        %v347 = vld [vmem:[%s257 + $0x168] sm:$0xff]
        %v348 = vld [vmem:[%s257 + $0x170] sm:$0xff]
        %v349 = vld [vmem:[%s257 + $0x178] sm:$0xff]
        %v350 = vld [vmem:[%s257 + $0x180] sm:$0xff]
        %v351 = vld [vmem:[%s257 + $0x188] sm:$0xff]
        %v352 = vld [vmem:[%s257 + $0x190] sm:$0xff]
        %v353 = vld [vmem:[%s257 + $0x198] sm:$0xff]
        %v354 = vld [vmem:[%s257 + $0x1a0] sm:$0xff]
        %v355 = vld [vmem:[%s257 + $0x1a8] sm:$0xff]
        %v356 = vld [vmem:[%s257 + $0x1b0] sm:$0xff]
        %v357 = vld [vmem:[%s257 + $0x1b8] sm:$0xff]
        %v358 = vld [vmem:[%s257 + $0x1c0] sm:$0xff]
        %v359 = vld [vmem:[%s257 + $0x1c8] sm:$0xff]
        %v360 = vld [vmem:[%s257 + $0x1d0] sm:$0xff]
        %v361 = vld [vmem:[%s257 + $0x1d8] sm:$0xff]
        %v362 = vld [vmem:[%s257 + $0x1e0] sm:$0xff]
        %v363 = vld [vmem:[%s257 + $0x1e8] sm:$0xff]
        %v364 = vld [vmem:[%s257 + $0x1f0] sm:$0xff]
        %v365 = vld [vmem:[%s257 + $0x1f8] sm:$0xff]
        %v366 = vld [vmem:[%s257 + $0x200] sm:$0xff]
        %v367 = vld [vmem:[%s257 + $0x208] sm:$0xff]
        %v368 = vld [vmem:[%s257 + $0x210] sm:$0xff]
        %v369 = vld [vmem:[%s257 + $0x218] sm:$0xff]
        %v370 = vld [vmem:[%s257 + $0x220] sm:$0xff]
        %v371 = vld [vmem:[%s257 + $0x228] sm:$0xff]
        %v372 = vld [vmem:[%s257 + $0x230] sm:$0xff]
        %v373 = vld [vmem:[%s257 + $0x238] sm:$0xff]
        %v374 = vld [vmem:[%s257 + $0x240] sm:$0xff]
        %v375 = vld [vmem:[%s257 + $0x248] sm:$0xff]
        %v376 = vld [vmem:[%s257 + $0x250] sm:$0xff]
        %v377 = vld [vmem:[%s257 + $0x258] sm:$0xff]
        %v378 = vld [vmem:[%s257 + $0x260] sm:$0xff]
        %v379 = vld [vmem:[%s257 + $0x268] sm:$0xff]
        %v380 = vld [vmem:[%s257 + $0x270] sm:$0xff]
        %v381 = vld [vmem:[%s257 + $0x278] sm:$0xff]
        %v382 = vld [vmem:[%s257 + $0x280] sm:$0xff]
        %v383 = vld [vmem:[%s257 + $0x288] sm:$0xff]
        %v384 = vld [vmem:[%s257 + $0x290] sm:$0xff]
        %v385 = vld [vmem:[%s257 + $0x298] sm:$0xff]
        %v386 = vld [vmem:[%s257 + $0x2a0] sm:$0xff]
        %v387 = vld [vmem:[%s257 + $0x2a8] sm:$0xff]
        %v388 = vld [vmem:[%s257 + $0x2b0] sm:$0xff]
        %v389 = vld [vmem:[%s257 + $0x2b8] sm:$0xff]
        %v390 = vld [vmem:[%s257 + $0x2c0] sm:$0xff]
        %v391 = vld [vmem:[%s257 + $0x2c8] sm:$0xff]
        %v392 = vld [vmem:[%s257 + $0x2d0] sm:$0xff]
        %v393 = vld [vmem:[%s257 + $0x2d8] sm:$0xff]
        %v394 = vld [vmem:[%s257 + $0x2e0] sm:$0xff]
        %v395 = vld [vmem:[%s257 + $0x2e8] sm:$0xff]
        %v396 = vld [vmem:[%s257 + $0x2f0] sm:$0xff]
        %v397 = vld [vmem:[%s257 + $0x2f8] sm:$0xff]
        %v398 = vld [vmem:[%s257 + $0x300] sm:$0xff]
        %v399 = vld [vmem:[%s257 + $0x308] sm:$0xff]
        %v400 = vld [vmem:[%s257 + $0x310] sm:$0xff]
        %v401 = vld [vmem:[%s257 + $0x318] sm:$0xff]
        %v402 = vld [vmem:[%s257 + $0x320] sm:$0xff]
        %v403 = vld [vmem:[%s257 + $0x328] sm:$0xff]
        %v404 = vld [vmem:[%s257 + $0x330] sm:$0xff]
        %v405 = vld [vmem:[%s257 + $0x338] sm:$0xff]
        %v406 = vld [vmem:[%s257 + $0x340] sm:$0xff]
        %v407 = vld [vmem:[%s257 + $0x348] sm:$0xff]
        %v408 = vld [vmem:[%s257 + $0x350] sm:$0xff]
        %v409 = vld [vmem:[%s257 + $0x358] sm:$0xff]
        %v410 = vld [vmem:[%s257 + $0x360] sm:$0xff]
        %v411 = vld [vmem:[%s257 + $0x368] sm:$0xff]
        %v412 = vld [vmem:[%s257 + $0x370] sm:$0xff]
        %v413 = vld [vmem:[%s257 + $0x378] sm:$0xff]
        %v414 = vld [vmem:[%s257 + $0x380] sm:$0xff]
        %v415 = vld [vmem:[%s257 + $0x388] sm:$0xff]
        %v416 = vld [vmem:[%s257 + $0x390] sm:$0xff]
        %v417 = vld [vmem:[%s257 + $0x398] sm:$0xff]
        %v418 = vld [vmem:[%s257 + $0x3a0] sm:$0xff]
        %v419 = vld [vmem:[%s257 + $0x3a8] sm:$0xff]
        %v420 = vld [vmem:[%s257 + $0x3b0] sm:$0xff]
        %v421 = vld [vmem:[%s257 + $0x3b8] sm:$0xff]
        %v422 = vld [vmem:[%s257 + $0x3c0] sm:$0xff]
        %v423 = vld [vmem:[%s257 + $0x3c8] sm:$0xff]
        %v424 = vld [vmem:[%s257 + $0x3d0] sm:$0xff]
        %v425 = vld [vmem:[%s257 + $0x3d8] sm:$0xff]
        %v426 = vld [vmem:[%s257 + $0x3e0] sm:$0xff]
        %v427 = vld [vmem:[%s257 + $0x3e8] sm:$0xff]
        %v428 = vld [vmem:[%s257 + $0x3f0] sm:$0xff]
        %v429 = vld [vmem:[%s257 + $0x3f8] sm:$0xff]
        %v430 = vld [vmem:[%s257 + $0x400] sm:$0xff]
        %v431 = vld [vmem:[%s257 + $0x408] sm:$0xff]
        %v432 = vld [vmem:[%s257 + $0x410] sm:$0xff]
        %v433 = vld [vmem:[%s257 + $0x418] sm:$0xff]
        %v434 = vld [vmem:[%s257 + $0x420] sm:$0xff]
        %v435 = vld [vmem:[%s257 + $0x428] sm:$0xff]
        %v436 = vld [vmem:[%s257 + $0x430] sm:$0xff]
        %v437 = vld [vmem:[%s257 + $0x438] sm:$0xff]
        %v438 = vld [vmem:[%s257 + $0x440] sm:$0xff]
        %v439 = vld [vmem:[%s257 + $0x448] sm:$0xff]
        %v440 = vld [vmem:[%s257 + $0x450] sm:$0xff]
        %v441 = vld [vmem:[%s257 + $0x458] sm:$0xff]
        %v442 = vld [vmem:[%s257 + $0x460] sm:$0xff]
        %v443 = vld [vmem:[%s257 + $0x468] sm:$0xff]
        %v444 = vld [vmem:[%s257 + $0x470] sm:$0xff]
        %v445 = vld [vmem:[%s257 + $0x478] sm:$0xff]
        %v446 = vld [vmem:[%s257 + $0x480] sm:$0xff]
        %v447 = vld [vmem:[%s257 + $0x488] sm:$0xff]
        %v448 = vld [vmem:[%s257 + $0x490] sm:$0xff]
        %v449 = vld [vmem:[%s257 + $0x498] sm:$0xff]
        %v450 = vld [vmem:[%s257 + $0x4a0] sm:$0xff]
        %v451 = vld [vmem:[%s257 + $0x4a8] sm:$0xff]
        %v452 = vld [vmem:[%s257 + $0x4b0] sm:$0xff]
        %v453 = vld [vmem:[%s257 + $0x4b8] sm:$0xff]
        %v454 = vld [vmem:[%s257 + $0x4c0] sm:$0xff]
        %v455 = vld [vmem:[%s257 + $0x4c8] sm:$0xff]
        %v456 = vld [vmem:[%s257 + $0x4d0] sm:$0xff]
        %v457 = vld [vmem:[%s257 + $0x4d8] sm:$0xff]
        %v458 = vld [vmem:[%s257 + $0x4e0] sm:$0xff]
        %v459 = vld [vmem:[%s257 + $0x4e8] sm:$0xff]
        %v460 = vld [vmem:[%s257 + $0x4f0] sm:$0xff]
        %v461 = vld [vmem:[%s257 + $0x4f8] sm:$0xff]
        %v462 = vld [vmem:[%s257 + $0x500] sm:$0xff]
        %v463 = vld [vmem:[%s257 + $0x508] sm:$0xff]
        %v464 = vld [vmem:[%s257 + $0x510] sm:$0xff]
        %v465 = vld [vmem:[%s257 + $0x518] sm:$0xff]
        %v466 = vld [vmem:[%s257 + $0x520] sm:$0xff]
        %v467 = vld [vmem:[%s257 + $0x528] sm:$0xff]
        %v468 = vld [vmem:[%s257 + $0x530] sm:$0xff]
        %v469 = vld [vmem:[%s257 + $0x538] sm:$0xff]
        %v470 = vld [vmem:[%s257 + $0x540] sm:$0xff]
        %v471 = vld [vmem:[%s257 + $0x548] sm:$0xff]
        %v472 = vld [vmem:[%s257 + $0x550] sm:$0xff]
        %v473 = vld [vmem:[%s257 + $0x558] sm:$0xff]
        %v474 = vld [vmem:[%s257 + $0x560] sm:$0xff]
        %v475 = vld [vmem:[%s257 + $0x568] sm:$0xff]
        %v476 = vld [vmem:[%s257 + $0x570] sm:$0xff]
        %v477 = vld [vmem:[%s257 + $0x578] sm:$0xff]
        %v478 = vld [vmem:[%s257 + $0x580] sm:$0xff]
        %v479 = vld [vmem:[%s257 + $0x588] sm:$0xff]
        %v480 = vld [vmem:[%s257 + $0x590] sm:$0xff]
        %v481 = vld [vmem:[%s257 + $0x598] sm:$0xff]
        %v482 = vld [vmem:[%s257 + $0x5a0] sm:$0xff]
        %v483 = vld [vmem:[%s257 + $0x5a8] sm:$0xff]
        %v484 = vld [vmem:[%s257 + $0x5b0] sm:$0xff]
        %v485 = vld [vmem:[%s257 + $0x5b8] sm:$0xff]
        %v486 = vld [vmem:[%s257 + $0x5c0] sm:$0xff]
        %v487 = vld [vmem:[%s257 + $0x5c8] sm:$0xff]
        %v488 = vld [vmem:[%s257 + $0x5d0] sm:$0xff]
        %v489 = vld [vmem:[%s257 + $0x5d8] sm:$0xff]
        %v490 = vld [vmem:[%s257 + $0x5e0] sm:$0xff]
        %v491 = vld [vmem:[%s257 + $0x5e8] sm:$0xff]
        %v492 = vld [vmem:[%s257 + $0x5f0] sm:$0xff]
        %v493 = vld [vmem:[%s257 + $0x5f8] sm:$0xff]
        %v494 = vadd.f32 %v302, %v303
        %v495 = vadd.f32 %v494, %v304
        %v496 = vadd.f32 %v495, %v305
        %v497 = vadd.f32 %v496, %v306
        %v498 = vadd.f32 %v497, %v307
        %v499 = vadd.f32 %v498, %v308
        %v500 = vadd.f32 %v499, %v309
        %v501 = vadd.f32 %v500, %v310
        %v502 = vadd.f32 %v501, %v311
        %v503 = vadd.f32 %v502, %v312
        %v504 = vadd.f32 %v503, %v313
        %505 = vadd.xlane.f32.xlu0 %v504
        %v506 = vpop.xlane.xlu0 %505
        %v507 = vadd.f32 %v314, %v315
        %v508 = vadd.f32 %v507, %v316
        %v509 = vadd.f32 %v508, %v317
        %v510 = vadd.f32 %v509, %v318
        %v511 = vadd.f32 %v510, %v319
        %v512 = vadd.f32 %v511, %v320
        %v513 = vadd.f32 %v512, %v321
        %v514 = vadd.f32 %v513, %v322
        %v515 = vadd.f32 %v514, %v323
        %v516 = vadd.f32 %v515, %v324
        %v517 = vadd.f32 %v516, %v325
        %518 = vadd.xlane.f32.xlu0 %v517
        %v519 = vpop.xlane.xlu0 %518
        %v520 = vadd.f32 %v326, %v327
        %v521 = vadd.f32 %v520, %v328
        %v522 = vadd.f32 %v521, %v329
        %v523 = vadd.f32 %v522, %v330
        %v524 = vadd.f32 %v523, %v331
        %v525 = vadd.f32 %v524, %v332
        %v526 = vadd.f32 %v525, %v333
        %v527 = vadd.f32 %v526, %v334
        %v528 = vadd.f32 %v527, %v335
        %v529 = vadd.f32 %v528, %v336
        %v530 = vadd.f32 %v529, %v337
        %531 = vadd.xlane.f32.xlu0 %v530
        %v532 = vpop.xlane.xlu0 %531
        %v533 = vadd.f32 %v338, %v339
        %v534 = vadd.f32 %v533, %v340
        %v535 = vadd.f32 %v534, %v341
        %v536 = vadd.f32 %v535, %v342
        %v537 = vadd.f32 %v536, %v343
        %v538 = vadd.f32 %v537, %v344
        %v539 = vadd.f32 %v538, %v345
        %v540 = vadd.f32 %v539, %v346
        %v541 = vadd.f32 %v540, %v347
        %v542 = vadd.f32 %v541, %v348
        %v543 = vadd.f32 %v542, %v349
        %544 = vadd.xlane.f32.xlu0 %v543
        %v545 = vpop.xlane.xlu0 %544
        %v546 = vadd.f32 %v350, %v351
        %v547 = vadd.f32 %v546, %v352
        %v548 = vadd.f32 %v547, %v353
        %v549 = vadd.f32 %v548, %v354
        %v550 = vadd.f32 %v549, %v355
        %v551 = vadd.f32 %v550, %v356
        %v552 = vadd.f32 %v551, %v357
        %v553 = vadd.f32 %v552, %v358
        %v554 = vadd.f32 %v553, %v359
        %v555 = vadd.f32 %v554, %v360
        %v556 = vadd.f32 %v555, %v361
        %557 = vadd.xlane.f32.xlu0 %v556
        %v558 = vpop.xlane.xlu0 %557
        %v559 = vadd.f32 %v362, %v363
        %v560 = vadd.f32 %v559, %v364
        %v561 = vadd.f32 %v560, %v365
        %v562 = vadd.f32 %v561, %v366
        %v563 = vadd.f32 %v562, %v367
        %v564 = vadd.f32 %v563, %v368
        %v565 = vadd.f32 %v564, %v369
        %v566 = vadd.f32 %v565, %v370
        %v567 = vadd.f32 %v566, %v371
        %v568 = vadd.f32 %v567, %v372
        %v569 = vadd.f32 %v568, %v373
        %570 = vadd.xlane.f32.xlu0 %v569
        %v571 = vpop.xlane.xlu0 %570
        %v572 = vadd.f32 %v374, %v375
        %v573 = vadd.f32 %v572, %v376
        %v574 = vadd.f32 %v573, %v377
        %v575 = vadd.f32 %v574, %v378
        %v576 = vadd.f32 %v575, %v379
        %v577 = vadd.f32 %v576, %v380
        %v578 = vadd.f32 %v577, %v381
        %v579 = vadd.f32 %v578, %v382
        %v580 = vadd.f32 %v579, %v383
        %v581 = vadd.f32 %v580, %v384
        %v582 = vadd.f32 %v581, %v385
        %583 = vadd.xlane.f32.xlu0 %v582
        %v584 = vpop.xlane.xlu0 %583
        %v585 = vadd.f32 %v386, %v387
        %v586 = vadd.f32 %v585, %v388
        %v587 = vadd.f32 %v586, %v389
        %v588 = vadd.f32 %v587, %v390
        %v589 = vadd.f32 %v588, %v391
        %v590 = vadd.f32 %v589, %v392
        %v591 = vadd.f32 %v590, %v393
        %v592 = vadd.f32 %v591, %v394
        %v593 = vadd.f32 %v592, %v395
        %v594 = vadd.f32 %v593, %v396
        %v595 = vadd.f32 %v594, %v397
        %596 = vadd.xlane.f32.xlu0 %v595
        %v597 = vpop.xlane.xlu0 %596
        %v598 = vadd.f32 %v398, %v399
        %v599 = vadd.f32 %v598, %v400
        %v600 = vadd.f32 %v599, %v401
        %v601 = vadd.f32 %v600, %v402
        %v602 = vadd.f32 %v601, %v403
        %v603 = vadd.f32 %v602, %v404
        %v604 = vadd.f32 %v603, %v405
        %v605 = vadd.f32 %v604, %v406
        %v606 = vadd.f32 %v605, %v407
        %v607 = vadd.f32 %v606, %v408
        %v608 = vadd.f32 %v607, %v409
        %609 = vadd.xlane.f32.xlu0 %v608
        %v610 = vpop.xlane.xlu0 %609
        %v611 = vadd.f32 %v410, %v411
        %v612 = vadd.f32 %v611, %v412
        %v613 = vadd.f32 %v612, %v413
        %v614 = vadd.f32 %v613, %v414
        %v615 = vadd.f32 %v614, %v415
        %v616 = vadd.f32 %v615, %v416
        %v617 = vadd.f32 %v616, %v417
        %v618 = vadd.f32 %v617, %v418
        %v619 = vadd.f32 %v618, %v419
        %v620 = vadd.f32 %v619, %v420
        %v621 = vadd.f32 %v620, %v421
        %622 = vadd.xlane.f32.xlu0 %v621
        %v623 = vpop.xlane.xlu0 %622
        %v624 = vadd.f32 %v422, %v423
        %v625 = vadd.f32 %v624, %v424
        %v626 = vadd.f32 %v625, %v425
        %v627 = vadd.f32 %v626, %v426
        %v628 = vadd.f32 %v627, %v427
        %v629 = vadd.f32 %v628, %v428
        %v630 = vadd.f32 %v629, %v429
        %v631 = vadd.f32 %v630, %v430
        %v632 = vadd.f32 %v631, %v431
        %v633 = vadd.f32 %v632, %v432
        %v634 = vadd.f32 %v633, %v433
        %635 = vadd.xlane.f32.xlu0 %v634
        %v636 = vpop.xlane.xlu0 %635
        %v637 = vadd.f32 %v434, %v435
        %v638 = vadd.f32 %v637, %v436
        %v639 = vadd.f32 %v638, %v437
        %v640 = vadd.f32 %v639, %v438
        %v641 = vadd.f32 %v640, %v439
        %v642 = vadd.f32 %v641, %v440
        %v643 = vadd.f32 %v642, %v441
        %v644 = vadd.f32 %v643, %v442
        %v645 = vadd.f32 %v644, %v443
        %v646 = vadd.f32 %v645, %v444
        %v647 = vadd.f32 %v646, %v445
        %648 = vadd.xlane.f32.xlu0 %v647
        %v649 = vpop.xlane.xlu0 %648
        %v650 = vadd.f32 %v446, %v447
        %v651 = vadd.f32 %v650, %v448
        %v652 = vadd.f32 %v651, %v449
        %v653 = vadd.f32 %v652, %v450
        %v654 = vadd.f32 %v653, %v451
        %v655 = vadd.f32 %v654, %v452
        %v656 = vadd.f32 %v655, %v453
        %v657 = vadd.f32 %v656, %v454
        %v658 = vadd.f32 %v657, %v455
        %v659 = vadd.f32 %v658, %v456
        %v660 = vadd.f32 %v659, %v457
        %661 = vadd.xlane.f32.xlu0 %v660
        %v662 = vpop.xlane.xlu0 %661
        %v663 = vadd.f32 %v458, %v459
        %v664 = vadd.f32 %v663, %v460
        %v665 = vadd.f32 %v664, %v461
        %v666 = vadd.f32 %v665, %v462
        %v667 = vadd.f32 %v666, %v463
        %v668 = vadd.f32 %v667, %v464
        %v669 = vadd.f32 %v668, %v465
        %v670 = vadd.f32 %v669, %v466
        %v671 = vadd.f32 %v670, %v467
        %v672 = vadd.f32 %v671, %v468
        %v673 = vadd.f32 %v672, %v469
        %674 = vadd.xlane.f32.xlu0 %v673
        %v675 = vpop.xlane.xlu0 %674
        %v676 = vadd.f32 %v470, %v471
        %v677 = vadd.f32 %v676, %v472
        %v678 = vadd.f32 %v677, %v473
        %v679 = vadd.f32 %v678, %v474
        %v680 = vadd.f32 %v679, %v475
        %v681 = vadd.f32 %v680, %v476
        %v682 = vadd.f32 %v681, %v477
        %v683 = vadd.f32 %v682, %v478
        %v684 = vadd.f32 %v683, %v479
        %v685 = vadd.f32 %v684, %v480
        %v686 = vadd.f32 %v685, %v481
        %687 = vadd.xlane.f32.xlu0 %v686
        %v688 = vpop.xlane.xlu0 %687
        %v689 = vadd.f32 %v482, %v483
        %v690 = vadd.f32 %v689, %v484
        %v691 = vadd.f32 %v690, %v485
        %v692 = vadd.f32 %v691, %v486
        %v693 = vadd.f32 %v692, %v487
        %v694 = vadd.f32 %v693, %v488
        %v695 = vadd.f32 %v694, %v489
        %v696 = vadd.f32 %v695, %v490
        %v697 = vadd.f32 %v696, %v491
        %v698 = vadd.f32 %v697, %v492
        %v699 = vadd.f32 %v698, %v493
        %700 = vadd.xlane.f32.xlu0 %v699
        %v701 = vpop.xlane.xlu0 %700
        %v702 = vmul.f32 %v506, 0.0006510417
        %v703 = vmul.f32 %v519, 0.0006510417
        %v704 = vmul.f32 %v532, 0.0006510417
        %v705 = vmul.f32 %v545, 0.0006510417
        %v706 = vmul.f32 %v558, 0.0006510417
        %v707 = vmul.f32 %v571, 0.0006510417
        %v708 = vmul.f32 %v584, 0.0006510417
        %v709 = vmul.f32 %v597, 0.0006510417
        %v710 = vmul.f32 %v610, 0.0006510417
        %v711 = vmul.f32 %v623, 0.0006510417
        %v712 = vmul.f32 %v636, 0.0006510417
        %v713 = vmul.f32 %v649, 0.0006510417
        %v714 = vmul.f32 %v662, 0.0006510417
        %v715 = vmul.f32 %v675, 0.0006510417
        %v716 = vmul.f32 %v688, 0.0006510417
        %v717 = vmul.f32 %v701, 0.0006510417
        %v718 = vmul.f32 %v302, %v302
        %v719 = vmul.f32 %v303, %v303
        %v720 = vmul.f32 %v304, %v304
        %v721 = vmul.f32 %v305, %v305
        %v722 = vmul.f32 %v306, %v306
        %v723 = vmul.f32 %v307, %v307
        %v724 = vmul.f32 %v308, %v308
        %v725 = vmul.f32 %v309, %v309
        %v726 = vmul.f32 %v310, %v310
        %v727 = vmul.f32 %v311, %v311
        %v728 = vmul.f32 %v312, %v312
        %v729 = vmul.f32 %v313, %v313
        %v730 = vmul.f32 %v314, %v314
        %v731 = vmul.f32 %v315, %v315
        %v732 = vmul.f32 %v316, %v316
        %v733 = vmul.f32 %v317, %v317
        %v734 = vmul.f32 %v318, %v318
        %v735 = vmul.f32 %v319, %v319
        %v736 = vmul.f32 %v320, %v320
        %v737 = vmul.f32 %v321, %v321
        %v738 = vmul.f32 %v322, %v322
        %v739 = vmul.f32 %v323, %v323
        %v740 = vmul.f32 %v324, %v324
        %v741 = vmul.f32 %v325, %v325
        %v742 = vmul.f32 %v326, %v326
        %v743 = vmul.f32 %v327, %v327
        %v744 = vmul.f32 %v328, %v328
        %v745 = vmul.f32 %v329, %v329
        %v746 = vmul.f32 %v330, %v330
        %v747 = vmul.f32 %v331, %v331
        %v748 = vmul.f32 %v332, %v332
        %v749 = vmul.f32 %v333, %v333
        %v750 = vmul.f32 %v334, %v334
        %v751 = vmul.f32 %v335, %v335
        %v752 = vmul.f32 %v336, %v336
        %v753 = vmul.f32 %v337, %v337
        %v754 = vmul.f32 %v338, %v338
        %v755 = vmul.f32 %v339, %v339
        %v756 = vmul.f32 %v340, %v340
        %v757 = vmul.f32 %v341, %v341
        %v758 = vmul.f32 %v342, %v342
        %v759 = vmul.f32 %v343, %v343
        %v760 = vmul.f32 %v344, %v344
        %v761 = vmul.f32 %v345, %v345
        %v762 = vmul.f32 %v346, %v346
        %v763 = vmul.f32 %v347, %v347
        %v764 = vmul.f32 %v348, %v348
        %v765 = vmul.f32 %v349, %v349
        %v766 = vmul.f32 %v350, %v350
        %v767 = vmul.f32 %v351, %v351
        %v768 = vmul.f32 %v352, %v352
        %v769 = vmul.f32 %v353, %v353
        %v770 = vmul.f32 %v354, %v354
        %v771 = vmul.f32 %v355, %v355
        %v772 = vmul.f32 %v356, %v356
        %v773 = vmul.f32 %v357, %v357
        %v774 = vmul.f32 %v358, %v358
        %v775 = vmul.f32 %v359, %v359
        %v776 = vmul.f32 %v360, %v360
        %v777 = vmul.f32 %v361, %v361
        %v778 = vmul.f32 %v362, %v362
        %v779 = vmul.f32 %v363, %v363
        %v780 = vmul.f32 %v364, %v364
        %v781 = vmul.f32 %v365, %v365
        %v782 = vmul.f32 %v366, %v366
        %v783 = vmul.f32 %v367, %v367
        %v784 = vmul.f32 %v368, %v368
        %v785 = vmul.f32 %v369, %v369
        %v786 = vmul.f32 %v370, %v370
        %v787 = vmul.f32 %v371, %v371
        %v788 = vmul.f32 %v372, %v372
        %v789 = vmul.f32 %v373, %v373
        %v790 = vmul.f32 %v374, %v374
        %v791 = vmul.f32 %v375, %v375
        %v792 = vmul.f32 %v376, %v376
        %v793 = vmul.f32 %v377, %v377
        %v794 = vmul.f32 %v378, %v378
        %v795 = vmul.f32 %v379, %v379
        %v796 = vmul.f32 %v380, %v380
        %v797 = vmul.f32 %v381, %v381
        %v798 = vmul.f32 %v382, %v382
        %v799 = vmul.f32 %v383, %v383
        %v800 = vmul.f32 %v384, %v384
        %v801 = vmul.f32 %v385, %v385
        %v802 = vmul.f32 %v386, %v386
        %v803 = vmul.f32 %v387, %v387
        %v804 = vmul.f32 %v388, %v388
        %v805 = vmul.f32 %v389, %v389
        %v806 = vmul.f32 %v390, %v390
        %v807 = vmul.f32 %v391, %v391
        %v808 = vmul.f32 %v392, %v392
        %v809 = vmul.f32 %v393, %v393
        %v810 = vmul.f32 %v394, %v394
        %v811 = vmul.f32 %v395, %v395
        %v812 = vmul.f32 %v396, %v396
        %v813 = vmul.f32 %v397, %v397
        %v814 = vmul.f32 %v398, %v398
        %v815 = vmul.f32 %v399, %v399
        %v816 = vmul.f32 %v400, %v400
        %v817 = vmul.f32 %v401, %v401
        %v818 = vmul.f32 %v402, %v402
        %v819 = vmul.f32 %v403, %v403
        %v820 = vmul.f32 %v404, %v404
        %v821 = vmul.f32 %v405, %v405
        %v822 = vmul.f32 %v406, %v406
        %v823 = vmul.f32 %v407, %v407
        %v824 = vmul.f32 %v408, %v408
        %v825 = vmul.f32 %v409, %v409
        %v826 = vmul.f32 %v410, %v410
        %v827 = vmul.f32 %v411, %v411
        %v828 = vmul.f32 %v412, %v412
        %v829 = vmul.f32 %v413, %v413
        %v830 = vmul.f32 %v414, %v414
        %v831 = vmul.f32 %v415, %v415
        %v832 = vmul.f32 %v416, %v416
        %v833 = vmul.f32 %v417, %v417
        %v834 = vmul.f32 %v418, %v418
        %v835 = vmul.f32 %v419, %v419
        %v836 = vmul.f32 %v420, %v420
        %v837 = vmul.f32 %v421, %v421
        %v838 = vmul.f32 %v422, %v422
        %v839 = vmul.f32 %v423, %v423
        %v840 = vmul.f32 %v424, %v424
        %v841 = vmul.f32 %v425, %v425
        %v842 = vmul.f32 %v426, %v426
        %v843 = vmul.f32 %v427, %v427
        %v844 = vmul.f32 %v428, %v428
        %v845 = vmul.f32 %v429, %v429
        %v846 = vmul.f32 %v430, %v430
        %v847 = vmul.f32 %v431, %v431
        %v848 = vmul.f32 %v432, %v432
        %v849 = vmul.f32 %v433, %v433
        %v850 = vmul.f32 %v434, %v434
        %v851 = vmul.f32 %v435, %v435
        %v852 = vmul.f32 %v436, %v436
        %v853 = vmul.f32 %v437, %v437
        %v854 = vmul.f32 %v438, %v438
        %v855 = vmul.f32 %v439, %v439
        %v856 = vmul.f32 %v440, %v440
        %v857 = vmul.f32 %v441, %v441
        %v858 = vmul.f32 %v442, %v442
        %v859 = vmul.f32 %v443, %v443
        %v860 = vmul.f32 %v444, %v444
        %v861 = vmul.f32 %v445, %v445
        %v862 = vmul.f32 %v446, %v446
        %v863 = vmul.f32 %v447, %v447
        %v864 = vmul.f32 %v448, %v448
        %v865 = vmul.f32 %v449, %v449
        %v866 = vmul.f32 %v450, %v450
        %v867 = vmul.f32 %v451, %v451
        %v868 = vmul.f32 %v452, %v452
        %v869 = vmul.f32 %v453, %v453
        %v870 = vmul.f32 %v454, %v454
        %v871 = vmul.f32 %v455, %v455
        %v872 = vmul.f32 %v456, %v456
        %v873 = vmul.f32 %v457, %v457
        %v874 = vmul.f32 %v458, %v458
        %v875 = vmul.f32 %v459, %v459
        %v876 = vmul.f32 %v460, %v460
        %v877 = vmul.f32 %v461, %v461
        %v878 = vmul.f32 %v462, %v462
        %v879 = vmul.f32 %v463, %v463
        %v880 = vmul.f32 %v464, %v464
        %v881 = vmul.f32 %v465, %v465
        %v882 = vmul.f32 %v466, %v466
        %v883 = vmul.f32 %v467, %v467
        %v884 = vmul.f32 %v468, %v468
        %v885 = vmul.f32 %v469, %v469
        %v886 = vmul.f32 %v470, %v470
        %v887 = vmul.f32 %v471, %v471
        %v888 = vmul.f32 %v472, %v472
        %v889 = vmul.f32 %v473, %v473
        %v890 = vmul.f32 %v474, %v474
        %v891 = vmul.f32 %v475, %v475
        %v892 = vmul.f32 %v476, %v476
        %v893 = vmul.f32 %v477, %v477
        %v894 = vmul.f32 %v478, %v478
        %v895 = vmul.f32 %v479, %v479
        %v896 = vmul.f32 %v480, %v480
        %v897 = vmul.f32 %v481, %v481
        %v898 = vmul.f32 %v482, %v482
        %v899 = vmul.f32 %v483, %v483
        %v900 = vmul.f32 %v484, %v484
        %v901 = vmul.f32 %v485, %v485
        %v902 = vmul.f32 %v486, %v486
        %v903 = vmul.f32 %v487, %v487
        %v904 = vmul.f32 %v488, %v488
        %v905 = vmul.f32 %v489, %v489
        %v906 = vmul.f32 %v490, %v490
        %v907 = vmul.f32 %v491, %v491
        %v908 = vmul.f32 %v492, %v492
        %v909 = vmul.f32 %v493, %v493
        %v910 = vadd.f32 %v718, %v719
        %v911 = vadd.f32 %v910, %v720
        %v912 = vadd.f32 %v911, %v721
        %v913 = vadd.f32 %v912, %v722
        %v914 = vadd.f32 %v913, %v723
        %v915 = vadd.f32 %v914, %v724
        %v916 = vadd.f32 %v915, %v725
        %v917 = vadd.f32 %v916, %v726
        %v918 = vadd.f32 %v917, %v727
        %v919 = vadd.f32 %v918, %v728
        %v920 = vadd.f32 %v919, %v729
        %921 = vadd.xlane.f32.xlu0 %v920
        %v922 = vpop.xlane.xlu0 %921
        %v923 = vadd.f32 %v730, %v731
        %v924 = vadd.f32 %v923, %v732
        %v925 = vadd.f32 %v924, %v733
        %v926 = vadd.f32 %v925, %v734
        %v927 = vadd.f32 %v926, %v735
        %v928 = vadd.f32 %v927, %v736
        %v929 = vadd.f32 %v928, %v737
        %v930 = vadd.f32 %v929, %v738
        %v931 = vadd.f32 %v930, %v739
        %v932 = vadd.f32 %v931, %v740
        %v933 = vadd.f32 %v932, %v741
        %934 = vadd.xlane.f32.xlu0 %v933
        %v935 = vpop.xlane.xlu0 %934
        %v936 = vadd.f32 %v742, %v743
        %v937 = vadd.f32 %v936, %v744
        %v938 = vadd.f32 %v937, %v745
        %v939 = vadd.f32 %v938, %v746
        %v940 = vadd.f32 %v939, %v747
        %v941 = vadd.f32 %v940, %v748
        %v942 = vadd.f32 %v941, %v749
        %v943 = vadd.f32 %v942, %v750
        %v944 = vadd.f32 %v943, %v751
        %v945 = vadd.f32 %v944, %v752
        %v946 = vadd.f32 %v945, %v753
        %947 = vadd.xlane.f32.xlu0 %v946
        %v948 = vpop.xlane.xlu0 %947
        %v949 = vadd.f32 %v754, %v755
        %v950 = vadd.f32 %v949, %v756
        %v951 = vadd.f32 %v950, %v757
        %v952 = vadd.f32 %v951, %v758
        %v953 = vadd.f32 %v952, %v759
        %v954 = vadd.f32 %v953, %v760
        %v955 = vadd.f32 %v954, %v761
        %v956 = vadd.f32 %v955, %v762
        %v957 = vadd.f32 %v956, %v763
        %v958 = vadd.f32 %v957, %v764
        %v959 = vadd.f32 %v958, %v765
        %960 = vadd.xlane.f32.xlu0 %v959
        %v961 = vpop.xlane.xlu0 %960
        %v962 = vadd.f32 %v766, %v767
        %v963 = vadd.f32 %v962, %v768
        %v964 = vadd.f32 %v963, %v769
        %v965 = vadd.f32 %v964, %v770
        %v966 = vadd.f32 %v965, %v771
        %v967 = vadd.f32 %v966, %v772
        %v968 = vadd.f32 %v967, %v773
        %v969 = vadd.f32 %v968, %v774
        %v970 = vadd.f32 %v969, %v775
        %v971 = vadd.f32 %v970, %v776
        %v972 = vadd.f32 %v971, %v777
        %973 = vadd.xlane.f32.xlu0 %v972
        %v974 = vpop.xlane.xlu0 %973
        %v975 = vadd.f32 %v778, %v779
        %v976 = vadd.f32 %v975, %v780
        %v977 = vadd.f32 %v976, %v781
        %v978 = vadd.f32 %v977, %v782
        %v979 = vadd.f32 %v978, %v783
        %v980 = vadd.f32 %v979, %v784
        %v981 = vadd.f32 %v980, %v785
        %v982 = vadd.f32 %v981, %v786
        %v983 = vadd.f32 %v982, %v787
        %v984 = vadd.f32 %v983, %v788
        %v985 = vadd.f32 %v984, %v789
        %986 = vadd.xlane.f32.xlu0 %v985
        %v987 = vpop.xlane.xlu0 %986
        %v988 = vadd.f32 %v790, %v791
        %v989 = vadd.f32 %v988, %v792
        %v990 = vadd.f32 %v989, %v793
        %v991 = vadd.f32 %v990, %v794
        %v992 = vadd.f32 %v991, %v795
        %v993 = vadd.f32 %v992, %v796
        %v994 = vadd.f32 %v993, %v797
        %v995 = vadd.f32 %v994, %v798
        %v996 = vadd.f32 %v995, %v799
        %v997 = vadd.f32 %v996, %v800
        %v998 = vadd.f32 %v997, %v801
        %999 = vadd.xlane.f32.xlu0 %v998
        %v1000 = vpop.xlane.xlu0 %999
        %v1001 = vadd.f32 %v802, %v803
        %v1002 = vadd.f32 %v1001, %v804
        %v1003 = vadd.f32 %v1002, %v805
        %v1004 = vadd.f32 %v1003, %v806
        %v1005 = vadd.f32 %v1004, %v807
        %v1006 = vadd.f32 %v1005, %v808
        %v1007 = vadd.f32 %v1006, %v809
        %v1008 = vadd.f32 %v1007, %v810
        %v1009 = vadd.f32 %v1008, %v811
        %v1010 = vadd.f32 %v1009, %v812
        %v1011 = vadd.f32 %v1010, %v813
        %1012 = vadd.xlane.f32.xlu0 %v1011
        %v1013 = vpop.xlane.xlu0 %1012
        %v1014 = vadd.f32 %v814, %v815
        %v1015 = vadd.f32 %v1014, %v816
        %v1016 = vadd.f32 %v1015, %v817
        %v1017 = vadd.f32 %v1016, %v818
        %v1018 = vadd.f32 %v1017, %v819
        %v1019 = vadd.f32 %v1018, %v820
        %v1020 = vadd.f32 %v1019, %v821
        %v1021 = vadd.f32 %v1020, %v822
        %v1022 = vadd.f32 %v1021, %v823
        %v1023 = vadd.f32 %v1022, %v824
        %v1024 = vadd.f32 %v1023, %v825
        %1025 = vadd.xlane.f32.xlu0 %v1024
        %v1026 = vpop.xlane.xlu0 %1025
        %v1027 = vadd.f32 %v826, %v827
        %v1028 = vadd.f32 %v1027, %v828
        %v1029 = vadd.f32 %v1028, %v829
        %v1030 = vadd.f32 %v1029, %v830
        %v1031 = vadd.f32 %v1030, %v831
        %v1032 = vadd.f32 %v1031, %v832
        %v1033 = vadd.f32 %v1032, %v833
        %v1034 = vadd.f32 %v1033, %v834
        %v1035 = vadd.f32 %v1034, %v835
        %v1036 = vadd.f32 %v1035, %v836
        %v1037 = vadd.f32 %v1036, %v837
        %1038 = vadd.xlane.f32.xlu0 %v1037
        %v1039 = vpop.xlane.xlu0 %1038
        %v1040 = vadd.f32 %v838, %v839
        %v1041 = vadd.f32 %v1040, %v840
        %v1042 = vadd.f32 %v1041, %v841
        %v1043 = vadd.f32 %v1042, %v842
        %v1044 = vadd.f32 %v1043, %v843
        %v1045 = vadd.f32 %v1044, %v844
        %v1046 = vadd.f32 %v1045, %v845
        %v1047 = vadd.f32 %v1046, %v846
        %v1048 = vadd.f32 %v1047, %v847
        %v1049 = vadd.f32 %v1048, %v848
        %v1050 = vadd.f32 %v1049, %v849
        %1051 = vadd.xlane.f32.xlu0 %v1050
        %v1052 = vpop.xlane.xlu0 %1051
        %v1053 = vadd.f32 %v850, %v851
        %v1054 = vadd.f32 %v1053, %v852
        %v1055 = vadd.f32 %v1054, %v853
        %v1056 = vadd.f32 %v1055, %v854
        %v1057 = vadd.f32 %v1056, %v855
        %v1058 = vadd.f32 %v1057, %v856
        %v1059 = vadd.f32 %v1058, %v857
        %v1060 = vadd.f32 %v1059, %v858
        %v1061 = vadd.f32 %v1060, %v859
        %v1062 = vadd.f32 %v1061, %v860
        %v1063 = vadd.f32 %v1062, %v861
        %1064 = vadd.xlane.f32.xlu0 %v1063
        %v1065 = vpop.xlane.xlu0 %1064
        %v1066 = vadd.f32 %v862, %v863
        %v1067 = vadd.f32 %v1066, %v864
        %v1068 = vadd.f32 %v1067, %v865
        %v1069 = vadd.f32 %v1068, %v866
        %v1070 = vadd.f32 %v1069, %v867
        %v1071 = vadd.f32 %v1070, %v868
        %v1072 = vadd.f32 %v1071, %v869
        %v1073 = vadd.f32 %v1072, %v870
        %v1074 = vadd.f32 %v1073, %v871
        %v1075 = vadd.f32 %v1074, %v872
        %v1076 = vadd.f32 %v1075, %v873
        %1077 = vadd.xlane.f32.xlu0 %v1076
        %v1078 = vpop.xlane.xlu0 %1077
        %v1079 = vadd.f32 %v874, %v875
        %v1080 = vadd.f32 %v1079, %v876
        %v1081 = vadd.f32 %v1080, %v877
        %v1082 = vadd.f32 %v1081, %v878
        %v1083 = vadd.f32 %v1082, %v879
        %v1084 = vadd.f32 %v1083, %v880
        %v1085 = vadd.f32 %v1084, %v881
        %v1086 = vadd.f32 %v1085, %v882
        %v1087 = vadd.f32 %v1086, %v883
        %v1088 = vadd.f32 %v1087, %v884
        %v1089 = vadd.f32 %v1088, %v885
        %1090 = vadd.xlane.f32.xlu0 %v1089
        %v1091 = vpop.xlane.xlu0 %1090
        %v1092 = vadd.f32 %v886, %v887
        %v1093 = vadd.f32 %v1092, %v888
        %v1094 = vadd.f32 %v1093, %v889
        %v1095 = vadd.f32 %v1094, %v890
        %v1096 = vadd.f32 %v1095, %v891
        %v1097 = vadd.f32 %v1096, %v892
        %v1098 = vadd.f32 %v1097, %v893
        %v1099 = vadd.f32 %v1098, %v894
        %v1100 = vadd.f32 %v1099, %v895
        %v1101 = vadd.f32 %v1100, %v896
        %v1102 = vadd.f32 %v1101, %v897
        %1103 = vadd.xlane.f32.xlu0 %v1102
        %v1104 = vpop.xlane.xlu0 %1103
        %v1105 = vadd.f32 %v898, %v899
        %v1106 = vadd.f32 %v1105, %v900
        %v1107 = vadd.f32 %v1106, %v901
        %v1108 = vadd.f32 %v1107, %v902
        %v1109 = vadd.f32 %v1108, %v903
        %v1110 = vadd.f32 %v1109, %v904
        %v1111 = vadd.f32 %v1110, %v905
        %v1112 = vadd.f32 %v1111, %v906
        %v1113 = vadd.f32 %v1112, %v907
        %v1114 = vadd.f32 %v1113, %v908
        %v1115 = vadd.f32 %v1114, %v909
        %1116 = vadd.xlane.f32.xlu0 %v1115
        %v1117 = vpop.xlane.xlu0 %1116
        %v1118 = vmul.f32 %v922, 0.0006510417
        %v1119 = vmul.f32 %v935, 0.0006510417
        %v1120 = vmul.f32 %v948, 0.0006510417
        %v1121 = vmul.f32 %v961, 0.0006510417
        %v1122 = vmul.f32 %v974, 0.0006510417
        %v1123 = vmul.f32 %v987, 0.0006510417
        %v1124 = vmul.f32 %v1000, 0.0006510417
        %v1125 = vmul.f32 %v1013, 0.0006510417
        %v1126 = vmul.f32 %v1026, 0.0006510417
        %v1127 = vmul.f32 %v1039, 0.0006510417
        %v1128 = vmul.f32 %v1052, 0.0006510417
        %v1129 = vmul.f32 %v1065, 0.0006510417
        %v1130 = vmul.f32 %v1078, 0.0006510417
        %v1131 = vmul.f32 %v1091, 0.0006510417
        %v1132 = vmul.f32 %v1104, 0.0006510417
        %v1133 = vmul.f32 %v1117, 0.0006510417
        %v1134 = vld [vmem:[#allocation5] sm:$0xff]
        %v1135 = vld [vmem:[#allocation5 + $0x8] sm:$0xff]
        %v1136 = vld [vmem:[#allocation7] sm:$0xff]
        %v1137 = vld [vmem:[#allocation7 + $0x8] sm:$0xff]
        %v1138 = vld [vmem:[#allocation8] sm:$0xff]
        %v1139 = vld [vmem:[#allocation8 + $0x8] sm:$0xff]
        %v1140 = vld [vmem:[#allocation10] sm:$0x1]
        %v1143 = vlaneseq
        %v1144 = vshrl.u32 %v1143, 7
        %v1145 = vsub.s32 0, %v1144
        %v1146 = vrot.slane %v1134, %v1145
        %1148 = vbcast.lane.b32.xlu0 %v1146, 256
        %v1149 = vpop.permute.xlu0 %1148
        %s1151 = sor.u32 256, 8
        %1152 = vbcast.lane.b32.xlu0 %v1146, %s1151
        %v1153 = vpop.permute.xlu0 %1152
        %v1154 = vlaneseq
        %v1155 = vshrl.u32 %v1154, 7
        %v1156 = vsub.s32 1, %v1155
        %v1157 = vrot.slane %v1134, %v1156
        %1159 = vbcast.lane.b32.xlu0 %v1157, 256
        %v1160 = vpop.permute.xlu0 %1159
        %s1162 = sor.u32 256, 8
        %1163 = vbcast.lane.b32.xlu0 %v1157, %s1162
        %v1164 = vpop.permute.xlu0 %1163
        %v1165 = vlaneseq
        %v1166 = vshrl.u32 %v1165, 7
        %v1167 = vsub.s32 2, %v1166
        %v1168 = vrot.slane %v1134, %v1167
        %1170 = vbcast.lane.b32.xlu0 %v1168, 256
        %v1171 = vpop.permute.xlu0 %1170
        %s1173 = sor.u32 256, 8
        %1174 = vbcast.lane.b32.xlu0 %v1168, %s1173
        %v1175 = vpop.permute.xlu0 %1174
        %v1176 = vlaneseq
        %v1177 = vshrl.u32 %v1176, 7
        %v1178 = vsub.s32 3, %v1177
        %v1179 = vrot.slane %v1134, %v1178
        %1181 = vbcast.lane.b32.xlu0 %v1179, 256
        %v1182 = vpop.permute.xlu0 %1181
        %s1184 = sor.u32 256, 8
        %1185 = vbcast.lane.b32.xlu0 %v1179, %s1184
        %v1186 = vpop.permute.xlu0 %1185
        %v1187 = vlaneseq
        %v1188 = vshrl.u32 %v1187, 7
        %v1189 = vsub.s32 4, %v1188
        %v1190 = vrot.slane %v1134, %v1189
        %1192 = vbcast.lane.b32.xlu0 %v1190, 256
        %v1193 = vpop.permute.xlu0 %1192
        %s1195 = sor.u32 256, 8
        %1196 = vbcast.lane.b32.xlu0 %v1190, %s1195
        %v1197 = vpop.permute.xlu0 %1196
        %v1198 = vlaneseq
        %v1199 = vshrl.u32 %v1198, 7
        %v1200 = vsub.s32 5, %v1199
        %v1201 = vrot.slane %v1134, %v1200
        %1203 = vbcast.lane.b32.xlu0 %v1201, 256
        %v1204 = vpop.permute.xlu0 %1203
        %s1206 = sor.u32 256, 8
        %1207 = vbcast.lane.b32.xlu0 %v1201, %s1206
        %v1208 = vpop.permute.xlu0 %1207
        %v1209 = vlaneseq
        %v1210 = vshrl.u32 %v1209, 7
        %v1211 = vsub.s32 6, %v1210
        %v1212 = vrot.slane %v1134, %v1211
        %1214 = vbcast.lane.b32.xlu0 %v1212, 256
        %v1215 = vpop.permute.xlu0 %1214
        %s1217 = sor.u32 256, 8
        %1218 = vbcast.lane.b32.xlu0 %v1212, %s1217
        %v1219 = vpop.permute.xlu0 %1218
        %v1220 = vlaneseq
        %v1221 = vshrl.u32 %v1220, 7
        %v1222 = vsub.s32 7, %v1221
        %v1223 = vrot.slane %v1134, %v1222
        %1225 = vbcast.lane.b32.xlu0 %v1223, 256
        %v1226 = vpop.permute.xlu0 %1225
        %s1228 = sor.u32 256, 8
        %1229 = vbcast.lane.b32.xlu0 %v1223, %s1228
        %v1230 = vpop.permute.xlu0 %1229
        %v1231 = vlaneseq
        %v1232 = vshrl.u32 %v1231, 7
        %v1233 = vsub.s32 0, %v1232
        %v1234 = vrot.slane %v1135, %v1233
        %1236 = vbcast.lane.b32.xlu0 %v1234, 256
        %v1237 = vpop.permute.xlu0 %1236
        %s1239 = sor.u32 256, 8
        %1240 = vbcast.lane.b32.xlu0 %v1234, %s1239
        %v1241 = vpop.permute.xlu0 %1240
        %v1242 = vlaneseq
        %v1243 = vshrl.u32 %v1242, 7
        %v1244 = vsub.s32 1, %v1243
        %v1245 = vrot.slane %v1135, %v1244
        %1247 = vbcast.lane.b32.xlu0 %v1245, 256
        %v1248 = vpop.permute.xlu0 %1247
        %s1250 = sor.u32 256, 8
        %1251 = vbcast.lane.b32.xlu0 %v1245, %s1250
        %v1252 = vpop.permute.xlu0 %1251
        %v1253 = vlaneseq
        %v1254 = vshrl.u32 %v1253, 7
        %v1255 = vsub.s32 2, %v1254
        %v1256 = vrot.slane %v1135, %v1255
        %1258 = vbcast.lane.b32.xlu0 %v1256, 256
        %v1259 = vpop.permute.xlu0 %1258
        %s1261 = sor.u32 256, 8
        %1262 = vbcast.lane.b32.xlu0 %v1256, %s1261
        %v1263 = vpop.permute.xlu0 %1262
        %v1264 = vlaneseq
        %v1265 = vshrl.u32 %v1264, 7
        %v1266 = vsub.s32 3, %v1265
        %v1267 = vrot.slane %v1135, %v1266
        %1269 = vbcast.lane.b32.xlu0 %v1267, 256
        %v1270 = vpop.permute.xlu0 %1269
        %s1272 = sor.u32 256, 8
        %1273 = vbcast.lane.b32.xlu0 %v1267, %s1272
        %v1274 = vpop.permute.xlu0 %1273
        %v1275 = vlaneseq
        %v1276 = vshrl.u32 %v1275, 7
        %v1277 = vsub.s32 4, %v1276
        %v1278 = vrot.slane %v1135, %v1277
        %1280 = vbcast.lane.b32.xlu0 %v1278, 256
        %v1281 = vpop.permute.xlu0 %1280
        %s1283 = sor.u32 256, 8
        %1284 = vbcast.lane.b32.xlu0 %v1278, %s1283
        %v1285 = vpop.permute.xlu0 %1284
        %v1286 = vlaneseq
        %v1287 = vshrl.u32 %v1286, 7
        %v1288 = vsub.s32 5, %v1287
        %v1289 = vrot.slane %v1135, %v1288
        %1291 = vbcast.lane.b32.xlu0 %v1289, 256
        %v1292 = vpop.permute.xlu0 %1291
        %s1294 = sor.u32 256, 8
        %1295 = vbcast.lane.b32.xlu0 %v1289, %s1294
        %v1296 = vpop.permute.xlu0 %1295
        %v1297 = vlaneseq
        %v1298 = vshrl.u32 %v1297, 7
        %v1299 = vsub.s32 6, %v1298
        %v1300 = vrot.slane %v1135, %v1299
        %1302 = vbcast.lane.b32.xlu0 %v1300, 256
        %v1303 = vpop.permute.xlu0 %1302
        %s1305 = sor.u32 256, 8
        %1306 = vbcast.lane.b32.xlu0 %v1300, %s1305
        %v1307 = vpop.permute.xlu0 %1306
        %v1308 = vlaneseq
        %v1309 = vshrl.u32 %v1308, 7
        %v1310 = vsub.s32 7, %v1309
        %v1311 = vrot.slane %v1135, %v1310
        %1313 = vbcast.lane.b32.xlu0 %v1311, 256
        %v1314 = vpop.permute.xlu0 %1313
        %s1316 = sor.u32 256, 8
        %1317 = vbcast.lane.b32.xlu0 %v1311, %s1316
        %v1318 = vpop.permute.xlu0 %1317
        %v1351 = vmul.f32 %v702, %v1149
        %v1352 = vmul.f32 %v703, %v1153
        %v1353 = vmul.f32 %v702, %v1160
        %v1354 = vmul.f32 %v703, %v1164
        %v1355 = vmul.f32 %v702, %v1171
        %v1356 = vmul.f32 %v703, %v1175
        %v1357 = vmul.f32 %v702, %v1182
        %v1358 = vmul.f32 %v703, %v1186
        %v1359 = vmul.f32 %v702, %v1193
        %v1360 = vmul.f32 %v703, %v1197
        %v1361 = vmul.f32 %v702, %v1204
        %v1362 = vmul.f32 %v703, %v1208
        %v1363 = vmul.f32 %v702, %v1215
        %v1364 = vmul.f32 %v703, %v1219
        %v1365 = vmul.f32 %v702, %v1226
        %v1366 = vmul.f32 %v703, %v1230
        %v1367 = vmul.f32 %v702, %v1237
        %v1368 = vmul.f32 %v703, %v1241
        %v1369 = vmul.f32 %v702, %v1248
        %v1370 = vmul.f32 %v703, %v1252
        %v1371 = vmul.f32 %v702, %v1259
        %v1372 = vmul.f32 %v703, %v1263
        %v1373 = vmul.f32 %v702, %v1270
        %v1374 = vmul.f32 %v703, %v1274
        %v1375 = vmul.f32 %v702, %v1281
        %v1376 = vmul.f32 %v703, %v1285
        %v1377 = vmul.f32 %v702, %v1292
        %v1378 = vmul.f32 %v703, %v1296
        %v1379 = vmul.f32 %v702, %v1303
        %v1380 = vmul.f32 %v703, %v1307
        %v1381 = vmul.f32 %v702, %v1314
        %v1382 = vmul.f32 %v703, %v1318
        %v1383 = vmul.f32 %v704, %v1149
        %v1384 = vmul.f32 %v705, %v1153
        %v1385 = vmul.f32 %v704, %v1160
        %v1386 = vmul.f32 %v705, %v1164
        %v1387 = vmul.f32 %v704, %v1171
        %v1388 = vmul.f32 %v705, %v1175
        %v1389 = vmul.f32 %v704, %v1182
        %v1390 = vmul.f32 %v705, %v1186
        %v1391 = vmul.f32 %v704, %v1193
        %v1392 = vmul.f32 %v705, %v1197
        %v1393 = vmul.f32 %v704, %v1204
        %v1394 = vmul.f32 %v705, %v1208
        %v1395 = vmul.f32 %v704, %v1215
        %v1396 = vmul.f32 %v705, %v1219
        %v1397 = vmul.f32 %v704, %v1226
        %v1398 = vmul.f32 %v705, %v1230
        %v1399 = vmul.f32 %v704, %v1237
        %v1400 = vmul.f32 %v705, %v1241
        %v1401 = vmul.f32 %v704, %v1248
        %v1402 = vmul.f32 %v705, %v1252
        %v1403 = vmul.f32 %v704, %v1259
        %v1404 = vmul.f32 %v705, %v1263
        %v1405 = vmul.f32 %v704, %v1270
        %v1406 = vmul.f32 %v705, %v1274
        %v1407 = vmul.f32 %v704, %v1281
        %v1408 = vmul.f32 %v705, %v1285
        %v1409 = vmul.f32 %v704, %v1292
        %v1410 = vmul.f32 %v705, %v1296
        %v1411 = vmul.f32 %v704, %v1303
        %v1412 = vmul.f32 %v705, %v1307
        %v1413 = vmul.f32 %v704, %v1314
        %v1414 = vmul.f32 %v705, %v1318
        %v1415 = vmul.f32 %v706, %v1149
        %v1416 = vmul.f32 %v707, %v1153
        %v1417 = vmul.f32 %v706, %v1160
        %v1418 = vmul.f32 %v707, %v1164
        %v1419 = vmul.f32 %v706, %v1171
        %v1420 = vmul.f32 %v707, %v1175
        %v1421 = vmul.f32 %v706, %v1182
        %v1422 = vmul.f32 %v707, %v1186
        %v1423 = vmul.f32 %v706, %v1193
        %v1424 = vmul.f32 %v707, %v1197
        %v1425 = vmul.f32 %v706, %v1204
        %v1426 = vmul.f32 %v707, %v1208
        %v1427 = vmul.f32 %v706, %v1215
        %v1428 = vmul.f32 %v707, %v1219
        %v1429 = vmul.f32 %v706, %v1226
        %v1430 = vmul.f32 %v707, %v1230
        %v1431 = vmul.f32 %v706, %v1237
        %v1432 = vmul.f32 %v707, %v1241
        %v1433 = vmul.f32 %v706, %v1248
        %v1434 = vmul.f32 %v707, %v1252
        %v1435 = vmul.f32 %v706, %v1259
        %v1436 = vmul.f32 %v707, %v1263
        %v1437 = vmul.f32 %v706, %v1270
        %v1438 = vmul.f32 %v707, %v1274
        %v1439 = vmul.f32 %v706, %v1281
        %v1440 = vmul.f32 %v707, %v1285
        %v1441 = vmul.f32 %v706, %v1292
        %v1442 = vmul.f32 %v707, %v1296
        %v1443 = vmul.f32 %v706, %v1303
        %v1444 = vmul.f32 %v707, %v1307
        %v1445 = vmul.f32 %v706, %v1314
        %v1446 = vmul.f32 %v707, %v1318
        %v1447 = vmul.f32 %v708, %v1149
        %v1448 = vmul.f32 %v709, %v1153
        %v1449 = vmul.f32 %v708, %v1160
        %v1450 = vmul.f32 %v709, %v1164
        %v1451 = vmul.f32 %v708, %v1171
        %v1452 = vmul.f32 %v709, %v1175
        %v1453 = vmul.f32 %v708, %v1182
        %v1454 = vmul.f32 %v709, %v1186
        %v1455 = vmul.f32 %v708, %v1193
        %v1456 = vmul.f32 %v709, %v1197
        %v1457 = vmul.f32 %v708, %v1204
        %v1458 = vmul.f32 %v709, %v1208
        %v1459 = vmul.f32 %v708, %v1215
        %v1460 = vmul.f32 %v709, %v1219
        %v1461 = vmul.f32 %v708, %v1226
        %v1462 = vmul.f32 %v709, %v1230
        %v1463 = vmul.f32 %v708, %v1237
        %v1464 = vmul.f32 %v709, %v1241
        %v1465 = vmul.f32 %v708, %v1248
        %v1466 = vmul.f32 %v709, %v1252
        %v1467 = vmul.f32 %v708, %v1259
        %v1468 = vmul.f32 %v709, %v1263
        %v1469 = vmul.f32 %v708, %v1270
        %v1470 = vmul.f32 %v709, %v1274
        %v1471 = vmul.f32 %v708, %v1281
        %v1472 = vmul.f32 %v709, %v1285
        %v1473 = vmul.f32 %v708, %v1292
        %v1474 = vmul.f32 %v709, %v1296
        %v1475 = vmul.f32 %v708, %v1303
        %v1476 = vmul.f32 %v709, %v1307
        %v1477 = vmul.f32 %v708, %v1314
        %v1478 = vmul.f32 %v709, %v1318
        %v1479 = vmul.f32 %v710, %v1149
        %v1480 = vmul.f32 %v711, %v1153
        %v1481 = vmul.f32 %v710, %v1160
        %v1482 = vmul.f32 %v711, %v1164
        %v1483 = vmul.f32 %v710, %v1171
        %v1484 = vmul.f32 %v711, %v1175
        %v1485 = vmul.f32 %v710, %v1182
        %v1486 = vmul.f32 %v711, %v1186
        %v1487 = vmul.f32 %v710, %v1193
        %v1488 = vmul.f32 %v711, %v1197
        %v1489 = vmul.f32 %v710, %v1204
        %v1490 = vmul.f32 %v711, %v1208
        %v1491 = vmul.f32 %v710, %v1215
        %v1492 = vmul.f32 %v711, %v1219
        %v1493 = vmul.f32 %v710, %v1226
        %v1494 = vmul.f32 %v711, %v1230
        %v1495 = vmul.f32 %v710, %v1237
        %v1496 = vmul.f32 %v711, %v1241
        %v1497 = vmul.f32 %v710, %v1248
        %v1498 = vmul.f32 %v711, %v1252
        %v1499 = vmul.f32 %v710, %v1259
        %v1500 = vmul.f32 %v711, %v1263
        %v1501 = vmul.f32 %v710, %v1270
        %v1502 = vmul.f32 %v711, %v1274
        %v1503 = vmul.f32 %v710, %v1281
        %v1504 = vmul.f32 %v711, %v1285
        %v1505 = vmul.f32 %v710, %v1292
        %v1506 = vmul.f32 %v711, %v1296
        %v1507 = vmul.f32 %v710, %v1303
        %v1508 = vmul.f32 %v711, %v1307
        %v1509 = vmul.f32 %v710, %v1314
        %v1510 = vmul.f32 %v711, %v1318
        %v1511 = vmul.f32 %v712, %v1149
        %v1512 = vmul.f32 %v713, %v1153
        %v1513 = vmul.f32 %v712, %v1160
        %v1514 = vmul.f32 %v713, %v1164
        %v1515 = vmul.f32 %v712, %v1171
        %v1516 = vmul.f32 %v713, %v1175
        %v1517 = vmul.f32 %v712, %v1182
        %v1518 = vmul.f32 %v713, %v1186
        %v1519 = vmul.f32 %v712, %v1193
        %v1520 = vmul.f32 %v713, %v1197
        %v1521 = vmul.f32 %v712, %v1204
        %v1522 = vmul.f32 %v713, %v1208
        %v1523 = vmul.f32 %v712, %v1215
        %v1524 = vmul.f32 %v713, %v1219
        %v1525 = vmul.f32 %v712, %v1226
        %v1526 = vmul.f32 %v713, %v1230
        %v1527 = vmul.f32 %v712, %v1237
        %v1528 = vmul.f32 %v713, %v1241
        %v1529 = vmul.f32 %v712, %v1248
        %v1530 = vmul.f32 %v713, %v1252
        %v1531 = vmul.f32 %v712, %v1259
        %v1532 = vmul.f32 %v713, %v1263
        %v1533 = vmul.f32 %v712, %v1270
        %v1534 = vmul.f32 %v713, %v1274
        %v1535 = vmul.f32 %v712, %v1281
        %v1536 = vmul.f32 %v713, %v1285
        %v1537 = vmul.f32 %v712, %v1292
        %v1538 = vmul.f32 %v713, %v1296
        %v1539 = vmul.f32 %v712, %v1303
        %v1540 = vmul.f32 %v713, %v1307
        %v1541 = vmul.f32 %v712, %v1314
        %v1542 = vmul.f32 %v713, %v1318
        %v1543 = vmul.f32 %v714, %v1149
        %v1544 = vmul.f32 %v715, %v1153
        %v1545 = vmul.f32 %v714, %v1160
        %v1546 = vmul.f32 %v715, %v1164
        %v1547 = vmul.f32 %v714, %v1171
        %v1548 = vmul.f32 %v715, %v1175
        %v1549 = vmul.f32 %v714, %v1182
        %v1550 = vmul.f32 %v715, %v1186
        %v1551 = vmul.f32 %v714, %v1193
        %v1552 = vmul.f32 %v715, %v1197
        %v1553 = vmul.f32 %v714, %v1204
        %v1554 = vmul.f32 %v715, %v1208
        %v1555 = vmul.f32 %v714, %v1215
        %v1556 = vmul.f32 %v715, %v1219
        %v1557 = vmul.f32 %v714, %v1226
        %v1558 = vmul.f32 %v715, %v1230
        %v1559 = vmul.f32 %v714, %v1237
        %v1560 = vmul.f32 %v715, %v1241
        %v1561 = vmul.f32 %v714, %v1248
        %v1562 = vmul.f32 %v715, %v1252
        %v1563 = vmul.f32 %v714, %v1259
        %v1564 = vmul.f32 %v715, %v1263
        %v1565 = vmul.f32 %v714, %v1270
        %v1566 = vmul.f32 %v715, %v1274
        %v1567 = vmul.f32 %v714, %v1281
        %v1568 = vmul.f32 %v715, %v1285
        %v1569 = vmul.f32 %v714, %v1292
        %v1570 = vmul.f32 %v715, %v1296
        %v1571 = vmul.f32 %v714, %v1303
        %v1572 = vmul.f32 %v715, %v1307
        %v1573 = vmul.f32 %v714, %v1314
        %v1574 = vmul.f32 %v715, %v1318
        %v1575 = vmul.f32 %v716, %v1149
        %v1576 = vmul.f32 %v717, %v1153
        %v1577 = vmul.f32 %v716, %v1160
        %v1578 = vmul.f32 %v717, %v1164
        %v1579 = vmul.f32 %v716, %v1171
        %v1580 = vmul.f32 %v717, %v1175
        %v1581 = vmul.f32 %v716, %v1182
        %v1582 = vmul.f32 %v717, %v1186
        %v1583 = vmul.f32 %v716, %v1193
        %v1584 = vmul.f32 %v717, %v1197
        %v1585 = vmul.f32 %v716, %v1204
        %v1586 = vmul.f32 %v717, %v1208
        %v1587 = vmul.f32 %v716, %v1215
        %v1588 = vmul.f32 %v717, %v1219
        %v1589 = vmul.f32 %v716, %v1226
        %v1590 = vmul.f32 %v717, %v1230
        %v1591 = vmul.f32 %v716, %v1237
        %v1592 = vmul.f32 %v717, %v1241
        %v1593 = vmul.f32 %v716, %v1248
        %v1594 = vmul.f32 %v717, %v1252
        %v1595 = vmul.f32 %v716, %v1259
        %v1596 = vmul.f32 %v717, %v1263
        %v1597 = vmul.f32 %v716, %v1270
        %v1598 = vmul.f32 %v717, %v1274
        %v1599 = vmul.f32 %v716, %v1281
        %v1600 = vmul.f32 %v717, %v1285
        %v1601 = vmul.f32 %v716, %v1292
        %v1602 = vmul.f32 %v717, %v1296
        %v1603 = vmul.f32 %v716, %v1303
        %v1604 = vmul.f32 %v717, %v1307
        %v1605 = vmul.f32 %v716, %v1314
        %v1606 = vmul.f32 %v717, %v1318
        %1863 = vset.pattern.permute.xlu0 0
        %1864 = vperm.xlu0 %1863, %v1351
        %v1865 = vpop.permute.xlu0 %1864
        %1866 = vset.pattern.permute.xlu0 0
        %1867 = vperm.xlu0 %1866, %v1352
        %v1868 = vpop.permute.xlu0 %1867
        %1869 = vset.pattern.permute.xlu0 0
        %1870 = vperm.xlu0 %1869, %v1353
        %v1871 = vpop.permute.xlu0 %1870
        %1872 = vset.pattern.permute.xlu0 0
        %1873 = vperm.xlu0 %1872, %v1354
        %v1874 = vpop.permute.xlu0 %1873
        %1875 = vset.pattern.permute.xlu0 0
        %1876 = vperm.xlu0 %1875, %v1355
        %v1877 = vpop.permute.xlu0 %1876
        %1878 = vset.pattern.permute.xlu0 0
        %1879 = vperm.xlu0 %1878, %v1356
        %v1880 = vpop.permute.xlu0 %1879
        %1881 = vset.pattern.permute.xlu0 0
        %1882 = vperm.xlu0 %1881, %v1357
        %v1883 = vpop.permute.xlu0 %1882
        %1884 = vset.pattern.permute.xlu0 0
        %1885 = vperm.xlu0 %1884, %v1358
        %v1886 = vpop.permute.xlu0 %1885
        %1887 = vset.pattern.permute.xlu0 0
        %1888 = vperm.xlu0 %1887, %v1359
        %v1889 = vpop.permute.xlu0 %1888
        %1890 = vset.pattern.permute.xlu0 0
        %1891 = vperm.xlu0 %1890, %v1360
        %v1892 = vpop.permute.xlu0 %1891
        %1893 = vset.pattern.permute.xlu0 0
        %1894 = vperm.xlu0 %1893, %v1361
        %v1895 = vpop.permute.xlu0 %1894
        %1896 = vset.pattern.permute.xlu0 0
        %1897 = vperm.xlu0 %1896, %v1362
        %v1898 = vpop.permute.xlu0 %1897
        %1899 = vset.pattern.permute.xlu0 0
        %1900 = vperm.xlu0 %1899, %v1363
        %v1901 = vpop.permute.xlu0 %1900
        %1902 = vset.pattern.permute.xlu0 0
        %1903 = vperm.xlu0 %1902, %v1364
        %v1904 = vpop.permute.xlu0 %1903
        %1905 = vset.pattern.permute.xlu0 0
        %1906 = vperm.xlu0 %1905, %v1365
        %v1907 = vpop.permute.xlu0 %1906
        %1908 = vset.pattern.permute.xlu0 0
        %1909 = vperm.xlu0 %1908, %v1366
        %v1910 = vpop.permute.xlu0 %1909
        %1911 = vset.pattern.permute.xlu0 0
        %1912 = vperm.xlu0 %1911, %v1367
        %v1913 = vpop.permute.xlu0 %1912
        %1914 = vset.pattern.permute.xlu0 0
        %1915 = vperm.xlu0 %1914, %v1368
        %v1916 = vpop.permute.xlu0 %1915
        %1917 = vset.pattern.permute.xlu0 0
        %1918 = vperm.xlu0 %1917, %v1369
        %v1919 = vpop.permute.xlu0 %1918
        %1920 = vset.pattern.permute.xlu0 0
        %1921 = vperm.xlu0 %1920, %v1370
        %v1922 = vpop.permute.xlu0 %1921
        %1923 = vset.pattern.permute.xlu0 0
        %1924 = vperm.xlu0 %1923, %v1371
        %v1925 = vpop.permute.xlu0 %1924
        %1926 = vset.pattern.permute.xlu0 0
        %1927 = vperm.xlu0 %1926, %v1372
        %v1928 = vpop.permute.xlu0 %1927
        %1929 = vset.pattern.permute.xlu0 0
        %1930 = vperm.xlu0 %1929, %v1373
        %v1931 = vpop.permute.xlu0 %1930
        %1932 = vset.pattern.permute.xlu0 0
        %1933 = vperm.xlu0 %1932, %v1374
        %v1934 = vpop.permute.xlu0 %1933
        %1935 = vset.pattern.permute.xlu0 0
        %1936 = vperm.xlu0 %1935, %v1375
        %v1937 = vpop.permute.xlu0 %1936
        %1938 = vset.pattern.permute.xlu0 0
        %1939 = vperm.xlu0 %1938, %v1376
        %v1940 = vpop.permute.xlu0 %1939
        %1941 = vset.pattern.permute.xlu0 0
        %1942 = vperm.xlu0 %1941, %v1377
        %v1943 = vpop.permute.xlu0 %1942
        %1944 = vset.pattern.permute.xlu0 0
        %1945 = vperm.xlu0 %1944, %v1378
        %v1946 = vpop.permute.xlu0 %1945
        %1947 = vset.pattern.permute.xlu0 0
        %1948 = vperm.xlu0 %1947, %v1379
        %v1949 = vpop.permute.xlu0 %1948
        %1950 = vset.pattern.permute.xlu0 0
        %1951 = vperm.xlu0 %1950, %v1380
        %v1952 = vpop.permute.xlu0 %1951
        %1953 = vset.pattern.permute.xlu0 0
        %1954 = vperm.xlu0 %1953, %v1381
        %v1955 = vpop.permute.xlu0 %1954
        %1956 = vset.pattern.permute.xlu0 0
        %1957 = vperm.xlu0 %1956, %v1382
        %v1958 = vpop.permute.xlu0 %1957
        %1959 = vset.pattern.permute.xlu0 0
        %1960 = vperm.xlu0 %1959, %v1383
        %v1961 = vpop.permute.xlu0 %1960
        %1962 = vset.pattern.permute.xlu0 0
        %1963 = vperm.xlu0 %1962, %v1384
        %v1964 = vpop.permute.xlu0 %1963
        %1965 = vset.pattern.permute.xlu0 0
        %1966 = vperm.xlu0 %1965, %v1385
        %v1967 = vpop.permute.xlu0 %1966
        %1968 = vset.pattern.permute.xlu0 0
        %1969 = vperm.xlu0 %1968, %v1386
        %v1970 = vpop.permute.xlu0 %1969
        %1971 = vset.pattern.permute.xlu0 0
        %1972 = vperm.xlu0 %1971, %v1387
        %v1973 = vpop.permute.xlu0 %1972
        %1974 = vset.pattern.permute.xlu0 0
        %1975 = vperm.xlu0 %1974, %v1388
        %v1976 = vpop.permute.xlu0 %1975
        %1977 = vset.pattern.permute.xlu0 0
        %1978 = vperm.xlu0 %1977, %v1389
        %v1979 = vpop.permute.xlu0 %1978
        %1980 = vset.pattern.permute.xlu0 0
        %1981 = vperm.xlu0 %1980, %v1390
        %v1982 = vpop.permute.xlu0 %1981
        %1983 = vset.pattern.permute.xlu0 0
        %1984 = vperm.xlu0 %1983, %v1391
        %v1985 = vpop.permute.xlu0 %1984
        %1986 = vset.pattern.permute.xlu0 0
        %1987 = vperm.xlu0 %1986, %v1392
        %v1988 = vpop.permute.xlu0 %1987
        %1989 = vset.pattern.permute.xlu0 0
        %1990 = vperm.xlu0 %1989, %v1393
        %v1991 = vpop.permute.xlu0 %1990
        %1992 = vset.pattern.permute.xlu0 0
        %1993 = vperm.xlu0 %1992, %v1394
        %v1994 = vpop.permute.xlu0 %1993
        %1995 = vset.pattern.permute.xlu0 0
        %1996 = vperm.xlu0 %1995, %v1395
        %v1997 = vpop.permute.xlu0 %1996
        %1998 = vset.pattern.permute.xlu0 0
        %1999 = vperm.xlu0 %1998, %v1396
        %v2000 = vpop.permute.xlu0 %1999
        %2001 = vset.pattern.permute.xlu0 0
        %2002 = vperm.xlu0 %2001, %v1397
        %v2003 = vpop.permute.xlu0 %2002
        %2004 = vset.pattern.permute.xlu0 0
        %2005 = vperm.xlu0 %2004, %v1398
        %v2006 = vpop.permute.xlu0 %2005
        %2007 = vset.pattern.permute.xlu0 0
        %2008 = vperm.xlu0 %2007, %v1399
        %v2009 = vpop.permute.xlu0 %2008
        %2010 = vset.pattern.permute.xlu0 0
        %2011 = vperm.xlu0 %2010, %v1400
        %v2012 = vpop.permute.xlu0 %2011
        %2013 = vset.pattern.permute.xlu0 0
        %2014 = vperm.xlu0 %2013, %v1401
        %v2015 = vpop.permute.xlu0 %2014
        %2016 = vset.pattern.permute.xlu0 0
        %2017 = vperm.xlu0 %2016, %v1402
        %v2018 = vpop.permute.xlu0 %2017
        %2019 = vset.pattern.permute.xlu0 0
        %2020 = vperm.xlu0 %2019, %v1403
        %v2021 = vpop.permute.xlu0 %2020
        %2022 = vset.pattern.permute.xlu0 0
        %2023 = vperm.xlu0 %2022, %v1404
        %v2024 = vpop.permute.xlu0 %2023
        %2025 = vset.pattern.permute.xlu0 0
        %2026 = vperm.xlu0 %2025, %v1405
        %v2027 = vpop.permute.xlu0 %2026
        %2028 = vset.pattern.permute.xlu0 0
        %2029 = vperm.xlu0 %2028, %v1406
        %v2030 = vpop.permute.xlu0 %2029
        %2031 = vset.pattern.permute.xlu0 0
        %2032 = vperm.xlu0 %2031, %v1407
        %v2033 = vpop.permute.xlu0 %2032
        %2034 = vset.pattern.permute.xlu0 0
        %2035 = vperm.xlu0 %2034, %v1408
        %v2036 = vpop.permute.xlu0 %2035
        %2037 = vset.pattern.permute.xlu0 0
        %2038 = vperm.xlu0 %2037, %v1409
        %v2039 = vpop.permute.xlu0 %2038
        %2040 = vset.pattern.permute.xlu0 0
        %2041 = vperm.xlu0 %2040, %v1410
        %v2042 = vpop.permute.xlu0 %2041
        %2043 = vset.pattern.permute.xlu0 0
        %2044 = vperm.xlu0 %2043, %v1411
        %v2045 = vpop.permute.xlu0 %2044
        %2046 = vset.pattern.permute.xlu0 0
        %2047 = vperm.xlu0 %2046, %v1412
        %v2048 = vpop.permute.xlu0 %2047
        %2049 = vset.pattern.permute.xlu0 0
        %2050 = vperm.xlu0 %2049, %v1413
        %v2051 = vpop.permute.xlu0 %2050
        %2052 = vset.pattern.permute.xlu0 0
        %2053 = vperm.xlu0 %2052, %v1414
        %v2054 = vpop.permute.xlu0 %2053
        %2055 = vset.pattern.permute.xlu0 0
        %2056 = vperm.xlu0 %2055, %v1415
        %v2057 = vpop.permute.xlu0 %2056
        %2058 = vset.pattern.permute.xlu0 0
        %2059 = vperm.xlu0 %2058, %v1416
        %v2060 = vpop.permute.xlu0 %2059
        %2061 = vset.pattern.permute.xlu0 0
        %2062 = vperm.xlu0 %2061, %v1417
        %v2063 = vpop.permute.xlu0 %2062
        %2064 = vset.pattern.permute.xlu0 0
        %2065 = vperm.xlu0 %2064, %v1418
        %v2066 = vpop.permute.xlu0 %2065
        %2067 = vset.pattern.permute.xlu0 0
        %2068 = vperm.xlu0 %2067, %v1419
        %v2069 = vpop.permute.xlu0 %2068
        %2070 = vset.pattern.permute.xlu0 0
        %2071 = vperm.xlu0 %2070, %v1420
        %v2072 = vpop.permute.xlu0 %2071
        %2073 = vset.pattern.permute.xlu0 0
        %2074 = vperm.xlu0 %2073, %v1421
        %v2075 = vpop.permute.xlu0 %2074
        %2076 = vset.pattern.permute.xlu0 0
        %2077 = vperm.xlu0 %2076, %v1422
        %v2078 = vpop.permute.xlu0 %2077
        %2079 = vset.pattern.permute.xlu0 0
        %2080 = vperm.xlu0 %2079, %v1423
        %v2081 = vpop.permute.xlu0 %2080
        %2082 = vset.pattern.permute.xlu0 0
        %2083 = vperm.xlu0 %2082, %v1424
        %v2084 = vpop.permute.xlu0 %2083
        %2085 = vset.pattern.permute.xlu0 0
        %2086 = vperm.xlu0 %2085, %v1425
        %v2087 = vpop.permute.xlu0 %2086
        %2088 = vset.pattern.permute.xlu0 0
        %2089 = vperm.xlu0 %2088, %v1426
        %v2090 = vpop.permute.xlu0 %2089
        %2091 = vset.pattern.permute.xlu0 0
        %2092 = vperm.xlu0 %2091, %v1427
        %v2093 = vpop.permute.xlu0 %2092
        %2094 = vset.pattern.permute.xlu0 0
        %2095 = vperm.xlu0 %2094, %v1428
        %v2096 = vpop.permute.xlu0 %2095
        %2097 = vset.pattern.permute.xlu0 0
        %2098 = vperm.xlu0 %2097, %v1429
        %v2099 = vpop.permute.xlu0 %2098
        %2100 = vset.pattern.permute.xlu0 0
        %2101 = vperm.xlu0 %2100, %v1430
        %v2102 = vpop.permute.xlu0 %2101
        %2103 = vset.pattern.permute.xlu0 0
        %2104 = vperm.xlu0 %2103, %v1431
        %v2105 = vpop.permute.xlu0 %2104
        %2106 = vset.pattern.permute.xlu0 0
        %2107 = vperm.xlu0 %2106, %v1432
        %v2108 = vpop.permute.xlu0 %2107
        %2109 = vset.pattern.permute.xlu0 0
        %2110 = vperm.xlu0 %2109, %v1433
        %v2111 = vpop.permute.xlu0 %2110
        %2112 = vset.pattern.permute.xlu0 0
        %2113 = vperm.xlu0 %2112, %v1434
        %v2114 = vpop.permute.xlu0 %2113
        %2115 = vset.pattern.permute.xlu0 0
        %2116 = vperm.xlu0 %2115, %v1435
        %v2117 = vpop.permute.xlu0 %2116
        %2118 = vset.pattern.permute.xlu0 0
        %2119 = vperm.xlu0 %2118, %v1436
        %v2120 = vpop.permute.xlu0 %2119
        %2121 = vset.pattern.permute.xlu0 0
        %2122 = vperm.xlu0 %2121, %v1437
        %v2123 = vpop.permute.xlu0 %2122
        %2124 = vset.pattern.permute.xlu0 0
        %2125 = vperm.xlu0 %2124, %v1438
        %v2126 = vpop.permute.xlu0 %2125
        %2127 = vset.pattern.permute.xlu0 0
        %2128 = vperm.xlu0 %2127, %v1439
        %v2129 = vpop.permute.xlu0 %2128
        %2130 = vset.pattern.permute.xlu0 0
        %2131 = vperm.xlu0 %2130, %v1440
        %v2132 = vpop.permute.xlu0 %2131
        %2133 = vset.pattern.permute.xlu0 0
        %2134 = vperm.xlu0 %2133, %v1441
        %v2135 = vpop.permute.xlu0 %2134
        %2136 = vset.pattern.permute.xlu0 0
        %2137 = vperm.xlu0 %2136, %v1442
        %v2138 = vpop.permute.xlu0 %2137
        %2139 = vset.pattern.permute.xlu0 0
        %2140 = vperm.xlu0 %2139, %v1443
        %v2141 = vpop.permute.xlu0 %2140
        %2142 = vset.pattern.permute.xlu0 0
        %2143 = vperm.xlu0 %2142, %v1444
        %v2144 = vpop.permute.xlu0 %2143
        %2145 = vset.pattern.permute.xlu0 0
        %2146 = vperm.xlu0 %2145, %v1445
        %v2147 = vpop.permute.xlu0 %2146
        %2148 = vset.pattern.permute.xlu0 0
        %2149 = vperm.xlu0 %2148, %v1446
        %v2150 = vpop.permute.xlu0 %2149
        %2151 = vset.pattern.permute.xlu0 0
        %2152 = vperm.xlu0 %2151, %v1447
        %v2153 = vpop.permute.xlu0 %2152
        %2154 = vset.pattern.permute.xlu0 0
        %2155 = vperm.xlu0 %2154, %v1448
        %v2156 = vpop.permute.xlu0 %2155
        %2157 = vset.pattern.permute.xlu0 0
        %2158 = vperm.xlu0 %2157, %v1449
        %v2159 = vpop.permute.xlu0 %2158
        %2160 = vset.pattern.permute.xlu0 0
        %2161 = vperm.xlu0 %2160, %v1450
        %v2162 = vpop.permute.xlu0 %2161
        %2163 = vset.pattern.permute.xlu0 0
        %2164 = vperm.xlu0 %2163, %v1451
        %v2165 = vpop.permute.xlu0 %2164
        %2166 = vset.pattern.permute.xlu0 0
        %2167 = vperm.xlu0 %2166, %v1452
        %v2168 = vpop.permute.xlu0 %2167
        %2169 = vset.pattern.permute.xlu0 0
        %2170 = vperm.xlu0 %2169, %v1453
        %v2171 = vpop.permute.xlu0 %2170
        %2172 = vset.pattern.permute.xlu0 0
        %2173 = vperm.xlu0 %2172, %v1454
        %v2174 = vpop.permute.xlu0 %2173
        %2175 = vset.pattern.permute.xlu0 0
        %2176 = vperm.xlu0 %2175, %v1455
        %v2177 = vpop.permute.xlu0 %2176
        %2178 = vset.pattern.permute.xlu0 0
        %2179 = vperm.xlu0 %2178, %v1456
        %v2180 = vpop.permute.xlu0 %2179
        %2181 = vset.pattern.permute.xlu0 0
        %2182 = vperm.xlu0 %2181, %v1457
        %v2183 = vpop.permute.xlu0 %2182
        %2184 = vset.pattern.permute.xlu0 0
        %2185 = vperm.xlu0 %2184, %v1458
        %v2186 = vpop.permute.xlu0 %2185
        %2187 = vset.pattern.permute.xlu0 0
        %2188 = vperm.xlu0 %2187, %v1459
        %v2189 = vpop.permute.xlu0 %2188
        %2190 = vset.pattern.permute.xlu0 0
        %2191 = vperm.xlu0 %2190, %v1460
        %v2192 = vpop.permute.xlu0 %2191
        %2193 = vset.pattern.permute.xlu0 0
        %2194 = vperm.xlu0 %2193, %v1461
        %v2195 = vpop.permute.xlu0 %2194
        %2196 = vset.pattern.permute.xlu0 0
        %2197 = vperm.xlu0 %2196, %v1462
        %v2198 = vpop.permute.xlu0 %2197
        %2199 = vset.pattern.permute.xlu0 0
        %2200 = vperm.xlu0 %2199, %v1463
        %v2201 = vpop.permute.xlu0 %2200
        %2202 = vset.pattern.permute.xlu0 0
        %2203 = vperm.xlu0 %2202, %v1464
        %v2204 = vpop.permute.xlu0 %2203
        %2205 = vset.pattern.permute.xlu0 0
        %2206 = vperm.xlu0 %2205, %v1465
        %v2207 = vpop.permute.xlu0 %2206
        %2208 = vset.pattern.permute.xlu0 0
        %2209 = vperm.xlu0 %2208, %v1466
        %v2210 = vpop.permute.xlu0 %2209
        %2211 = vset.pattern.permute.xlu0 0
        %2212 = vperm.xlu0 %2211, %v1467
        %v2213 = vpop.permute.xlu0 %2212
        %2214 = vset.pattern.permute.xlu0 0
        %2215 = vperm.xlu0 %2214, %v1468
        %v2216 = vpop.permute.xlu0 %2215
        %2217 = vset.pattern.permute.xlu0 0
        %2218 = vperm.xlu0 %2217, %v1469
        %v2219 = vpop.permute.xlu0 %2218
        %2220 = vset.pattern.permute.xlu0 0
        %2221 = vperm.xlu0 %2220, %v1470
        %v2222 = vpop.permute.xlu0 %2221
        %2223 = vset.pattern.permute.xlu0 0
        %2224 = vperm.xlu0 %2223, %v1471
        %v2225 = vpop.permute.xlu0 %2224
        %2226 = vset.pattern.permute.xlu0 0
        %2227 = vperm.xlu0 %2226, %v1472
        %v2228 = vpop.permute.xlu0 %2227
        %2229 = vset.pattern.permute.xlu0 0
        %2230 = vperm.xlu0 %2229, %v1473
        %v2231 = vpop.permute.xlu0 %2230
        %2232 = vset.pattern.permute.xlu0 0
        %2233 = vperm.xlu0 %2232, %v1474
        %v2234 = vpop.permute.xlu0 %2233
        %2235 = vset.pattern.permute.xlu0 0
        %2236 = vperm.xlu0 %2235, %v1475
        %v2237 = vpop.permute.xlu0 %2236
        %2238 = vset.pattern.permute.xlu0 0
        %2239 = vperm.xlu0 %2238, %v1476
        %v2240 = vpop.permute.xlu0 %2239
        %2241 = vset.pattern.permute.xlu0 0
        %2242 = vperm.xlu0 %2241, %v1477
        %v2243 = vpop.permute.xlu0 %2242
        %2244 = vset.pattern.permute.xlu0 0
        %2245 = vperm.xlu0 %2244, %v1478
        %v2246 = vpop.permute.xlu0 %2245
        %2247 = vset.pattern.permute.xlu0 0
        %2248 = vperm.xlu0 %2247, %v1479
        %v2249 = vpop.permute.xlu0 %2248
        %2250 = vset.pattern.permute.xlu0 0
        %2251 = vperm.xlu0 %2250, %v1480
        %v2252 = vpop.permute.xlu0 %2251
        %2253 = vset.pattern.permute.xlu0 0
        %2254 = vperm.xlu0 %2253, %v1481
        %v2255 = vpop.permute.xlu0 %2254
        %2256 = vset.pattern.permute.xlu0 0
        %2257 = vperm.xlu0 %2256, %v1482
        %v2258 = vpop.permute.xlu0 %2257
        %2259 = vset.pattern.permute.xlu0 0
        %2260 = vperm.xlu0 %2259, %v1483
        %v2261 = vpop.permute.xlu0 %2260
        %2262 = vset.pattern.permute.xlu0 0
        %2263 = vperm.xlu0 %2262, %v1484
        %v2264 = vpop.permute.xlu0 %2263
        %2265 = vset.pattern.permute.xlu0 0
        %2266 = vperm.xlu0 %2265, %v1485
        %v2267 = vpop.permute.xlu0 %2266
        %2268 = vset.pattern.permute.xlu0 0
        %2269 = vperm.xlu0 %2268, %v1486
        %v2270 = vpop.permute.xlu0 %2269
        %2271 = vset.pattern.permute.xlu0 0
        %2272 = vperm.xlu0 %2271, %v1487
        %v2273 = vpop.permute.xlu0 %2272
        %2274 = vset.pattern.permute.xlu0 0
        %2275 = vperm.xlu0 %2274, %v1488
        %v2276 = vpop.permute.xlu0 %2275
        %2277 = vset.pattern.permute.xlu0 0
        %2278 = vperm.xlu0 %2277, %v1489
        %v2279 = vpop.permute.xlu0 %2278
        %2280 = vset.pattern.permute.xlu0 0
        %2281 = vperm.xlu0 %2280, %v1490
        %v2282 = vpop.permute.xlu0 %2281
        %2283 = vset.pattern.permute.xlu0 0
        %2284 = vperm.xlu0 %2283, %v1491
        %v2285 = vpop.permute.xlu0 %2284
        %2286 = vset.pattern.permute.xlu0 0
        %2287 = vperm.xlu0 %2286, %v1492
        %v2288 = vpop.permute.xlu0 %2287
        %2289 = vset.pattern.permute.xlu0 0
        %2290 = vperm.xlu0 %2289, %v1493
        %v2291 = vpop.permute.xlu0 %2290
        %2292 = vset.pattern.permute.xlu0 0
        %2293 = vperm.xlu0 %2292, %v1494
        %v2294 = vpop.permute.xlu0 %2293
        %2295 = vset.pattern.permute.xlu0 0
        %2296 = vperm.xlu0 %2295, %v1495
        %v2297 = vpop.permute.xlu0 %2296
        %2298 = vset.pattern.permute.xlu0 0
        %2299 = vperm.xlu0 %2298, %v1496
        %v2300 = vpop.permute.xlu0 %2299
        %2301 = vset.pattern.permute.xlu0 0
        %2302 = vperm.xlu0 %2301, %v1497
        %v2303 = vpop.permute.xlu0 %2302
        %2304 = vset.pattern.permute.xlu0 0
        %2305 = vperm.xlu0 %2304, %v1498
        %v2306 = vpop.permute.xlu0 %2305
        %2307 = vset.pattern.permute.xlu0 0
        %2308 = vperm.xlu0 %2307, %v1499
        %v2309 = vpop.permute.xlu0 %2308
        %2310 = vset.pattern.permute.xlu0 0
        %2311 = vperm.xlu0 %2310, %v1500
        %v2312 = vpop.permute.xlu0 %2311
        %2313 = vset.pattern.permute.xlu0 0
        %2314 = vperm.xlu0 %2313, %v1501
        %v2315 = vpop.permute.xlu0 %2314
        %2316 = vset.pattern.permute.xlu0 0
        %2317 = vperm.xlu0 %2316, %v1502
        %v2318 = vpop.permute.xlu0 %2317
        %2319 = vset.pattern.permute.xlu0 0
        %2320 = vperm.xlu0 %2319, %v1503
        %v2321 = vpop.permute.xlu0 %2320
        %2322 = vset.pattern.permute.xlu0 0
        %2323 = vperm.xlu0 %2322, %v1504
        %v2324 = vpop.permute.xlu0 %2323
        %2325 = vset.pattern.permute.xlu0 0
        %2326 = vperm.xlu0 %2325, %v1505
        %v2327 = vpop.permute.xlu0 %2326
        %2328 = vset.pattern.permute.xlu0 0
        %2329 = vperm.xlu0 %2328, %v1506
        %v2330 = vpop.permute.xlu0 %2329
        %2331 = vset.pattern.permute.xlu0 0
        %2332 = vperm.xlu0 %2331, %v1507
        %v2333 = vpop.permute.xlu0 %2332
        %2334 = vset.pattern.permute.xlu0 0
        %2335 = vperm.xlu0 %2334, %v1508
        %v2336 = vpop.permute.xlu0 %2335
        %2337 = vset.pattern.permute.xlu0 0
        %2338 = vperm.xlu0 %2337, %v1509
        %v2339 = vpop.permute.xlu0 %2338
        %2340 = vset.pattern.permute.xlu0 0
        %2341 = vperm.xlu0 %2340, %v1510
        %v2342 = vpop.permute.xlu0 %2341
        %2343 = vset.pattern.permute.xlu0 0
        %2344 = vperm.xlu0 %2343, %v1511
        %v2345 = vpop.permute.xlu0 %2344
        %2346 = vset.pattern.permute.xlu0 0
        %2347 = vperm.xlu0 %2346, %v1512
        %v2348 = vpop.permute.xlu0 %2347
        %2349 = vset.pattern.permute.xlu0 0
        %2350 = vperm.xlu0 %2349, %v1513
        %v2351 = vpop.permute.xlu0 %2350
        %2352 = vset.pattern.permute.xlu0 0
        %2353 = vperm.xlu0 %2352, %v1514
        %v2354 = vpop.permute.xlu0 %2353
        %2355 = vset.pattern.permute.xlu0 0
        %2356 = vperm.xlu0 %2355, %v1515
        %v2357 = vpop.permute.xlu0 %2356
        %2358 = vset.pattern.permute.xlu0 0
        %2359 = vperm.xlu0 %2358, %v1516
        %v2360 = vpop.permute.xlu0 %2359
        %2361 = vset.pattern.permute.xlu0 0
        %2362 = vperm.xlu0 %2361, %v1517
        %v2363 = vpop.permute.xlu0 %2362
        %2364 = vset.pattern.permute.xlu0 0
        %2365 = vperm.xlu0 %2364, %v1518
        %v2366 = vpop.permute.xlu0 %2365
        %2367 = vset.pattern.permute.xlu0 0
        %2368 = vperm.xlu0 %2367, %v1519
        %v2369 = vpop.permute.xlu0 %2368
        %2370 = vset.pattern.permute.xlu0 0
        %2371 = vperm.xlu0 %2370, %v1520
        %v2372 = vpop.permute.xlu0 %2371
        %2373 = vset.pattern.permute.xlu0 0
        %2374 = vperm.xlu0 %2373, %v1521
        %v2375 = vpop.permute.xlu0 %2374
        %2376 = vset.pattern.permute.xlu0 0
        %2377 = vperm.xlu0 %2376, %v1522
        %v2378 = vpop.permute.xlu0 %2377
        %2379 = vset.pattern.permute.xlu0 0
        %2380 = vperm.xlu0 %2379, %v1523
        %v2381 = vpop.permute.xlu0 %2380
        %2382 = vset.pattern.permute.xlu0 0
        %2383 = vperm.xlu0 %2382, %v1524
        %v2384 = vpop.permute.xlu0 %2383
        %2385 = vset.pattern.permute.xlu0 0
        %2386 = vperm.xlu0 %2385, %v1525
        %v2387 = vpop.permute.xlu0 %2386
        %2388 = vset.pattern.permute.xlu0 0
        %2389 = vperm.xlu0 %2388, %v1526
        %v2390 = vpop.permute.xlu0 %2389
        %2391 = vset.pattern.permute.xlu0 0
        %2392 = vperm.xlu0 %2391, %v1527
        %v2393 = vpop.permute.xlu0 %2392
        %2394 = vset.pattern.permute.xlu0 0
        %2395 = vperm.xlu0 %2394, %v1528
        %v2396 = vpop.permute.xlu0 %2395
        %2397 = vset.pattern.permute.xlu0 0
        %2398 = vperm.xlu0 %2397, %v1529
        %v2399 = vpop.permute.xlu0 %2398
        %2400 = vset.pattern.permute.xlu0 0
        %2401 = vperm.xlu0 %2400, %v1530
        %v2402 = vpop.permute.xlu0 %2401
        %2403 = vset.pattern.permute.xlu0 0
        %2404 = vperm.xlu0 %2403, %v1531
        %v2405 = vpop.permute.xlu0 %2404
        %2406 = vset.pattern.permute.xlu0 0
        %2407 = vperm.xlu0 %2406, %v1532
        %v2408 = vpop.permute.xlu0 %2407
        %2409 = vset.pattern.permute.xlu0 0
        %2410 = vperm.xlu0 %2409, %v1533
        %v2411 = vpop.permute.xlu0 %2410
        %2412 = vset.pattern.permute.xlu0 0
        %2413 = vperm.xlu0 %2412, %v1534
        %v2414 = vpop.permute.xlu0 %2413
        %2415 = vset.pattern.permute.xlu0 0
        %2416 = vperm.xlu0 %2415, %v1535
        %v2417 = vpop.permute.xlu0 %2416
        %2418 = vset.pattern.permute.xlu0 0
        %2419 = vperm.xlu0 %2418, %v1536
        %v2420 = vpop.permute.xlu0 %2419
        %2421 = vset.pattern.permute.xlu0 0
        %2422 = vperm.xlu0 %2421, %v1537
        %v2423 = vpop.permute.xlu0 %2422
        %2424 = vset.pattern.permute.xlu0 0
        %2425 = vperm.xlu0 %2424, %v1538
        %v2426 = vpop.permute.xlu0 %2425
        %2427 = vset.pattern.permute.xlu0 0
        %2428 = vperm.xlu0 %2427, %v1539
        %v2429 = vpop.permute.xlu0 %2428
        %2430 = vset.pattern.permute.xlu0 0
        %2431 = vperm.xlu0 %2430, %v1540
        %v2432 = vpop.permute.xlu0 %2431
        %2433 = vset.pattern.permute.xlu0 0
        %2434 = vperm.xlu0 %2433, %v1541
        %v2435 = vpop.permute.xlu0 %2434
        %2436 = vset.pattern.permute.xlu0 0
        %2437 = vperm.xlu0 %2436, %v1542
        %v2438 = vpop.permute.xlu0 %2437
        %2439 = vset.pattern.permute.xlu0 0
        %2440 = vperm.xlu0 %2439, %v1543
        %v2441 = vpop.permute.xlu0 %2440
        %2442 = vset.pattern.permute.xlu0 0
        %2443 = vperm.xlu0 %2442, %v1544
        %v2444 = vpop.permute.xlu0 %2443
        %2445 = vset.pattern.permute.xlu0 0
        %2446 = vperm.xlu0 %2445, %v1545
        %v2447 = vpop.permute.xlu0 %2446
        %2448 = vset.pattern.permute.xlu0 0
        %2449 = vperm.xlu0 %2448, %v1546
        %v2450 = vpop.permute.xlu0 %2449
        %2451 = vset.pattern.permute.xlu0 0
        %2452 = vperm.xlu0 %2451, %v1547
        %v2453 = vpop.permute.xlu0 %2452
        %2454 = vset.pattern.permute.xlu0 0
        %2455 = vperm.xlu0 %2454, %v1548
        %v2456 = vpop.permute.xlu0 %2455
        %2457 = vset.pattern.permute.xlu0 0
        %2458 = vperm.xlu0 %2457, %v1549
        %v2459 = vpop.permute.xlu0 %2458
        %2460 = vset.pattern.permute.xlu0 0
        %2461 = vperm.xlu0 %2460, %v1550
        %v2462 = vpop.permute.xlu0 %2461
        %2463 = vset.pattern.permute.xlu0 0
        %2464 = vperm.xlu0 %2463, %v1551
        %v2465 = vpop.permute.xlu0 %2464
        %2466 = vset.pattern.permute.xlu0 0
        %2467 = vperm.xlu0 %2466, %v1552
        %v2468 = vpop.permute.xlu0 %2467
        %2469 = vset.pattern.permute.xlu0 0
        %2470 = vperm.xlu0 %2469, %v1553
        %v2471 = vpop.permute.xlu0 %2470
        %2472 = vset.pattern.permute.xlu0 0
        %2473 = vperm.xlu0 %2472, %v1554
        %v2474 = vpop.permute.xlu0 %2473
        %2475 = vset.pattern.permute.xlu0 0
        %2476 = vperm.xlu0 %2475, %v1555
        %v2477 = vpop.permute.xlu0 %2476
        %2478 = vset.pattern.permute.xlu0 0
        %2479 = vperm.xlu0 %2478, %v1556
        %v2480 = vpop.permute.xlu0 %2479
        %2481 = vset.pattern.permute.xlu0 0
        %2482 = vperm.xlu0 %2481, %v1557
        %v2483 = vpop.permute.xlu0 %2482
        %2484 = vset.pattern.permute.xlu0 0
        %2485 = vperm.xlu0 %2484, %v1558
        %v2486 = vpop.permute.xlu0 %2485
        %2487 = vset.pattern.permute.xlu0 0
        %2488 = vperm.xlu0 %2487, %v1559
        %v2489 = vpop.permute.xlu0 %2488
        %2490 = vset.pattern.permute.xlu0 0
        %2491 = vperm.xlu0 %2490, %v1560
        %v2492 = vpop.permute.xlu0 %2491
        %2493 = vset.pattern.permute.xlu0 0
        %2494 = vperm.xlu0 %2493, %v1561
        %v2495 = vpop.permute.xlu0 %2494
        %2496 = vset.pattern.permute.xlu0 0
        %2497 = vperm.xlu0 %2496, %v1562
        %v2498 = vpop.permute.xlu0 %2497
        %2499 = vset.pattern.permute.xlu0 0
        %2500 = vperm.xlu0 %2499, %v1563
        %v2501 = vpop.permute.xlu0 %2500
        %2502 = vset.pattern.permute.xlu0 0
        %2503 = vperm.xlu0 %2502, %v1564
        %v2504 = vpop.permute.xlu0 %2503
        %2505 = vset.pattern.permute.xlu0 0
        %2506 = vperm.xlu0 %2505, %v1565
        %v2507 = vpop.permute.xlu0 %2506
        %2508 = vset.pattern.permute.xlu0 0
        %2509 = vperm.xlu0 %2508, %v1566
        %v2510 = vpop.permute.xlu0 %2509
        %2511 = vset.pattern.permute.xlu0 0
        %2512 = vperm.xlu0 %2511, %v1567
        %v2513 = vpop.permute.xlu0 %2512
        %2514 = vset.pattern.permute.xlu0 0
        %2515 = vperm.xlu0 %2514, %v1568
        %v2516 = vpop.permute.xlu0 %2515
        %2517 = vset.pattern.permute.xlu0 0
        %2518 = vperm.xlu0 %2517, %v1569
        %v2519 = vpop.permute.xlu0 %2518
        %2520 = vset.pattern.permute.xlu0 0
        %2521 = vperm.xlu0 %2520, %v1570
        %v2522 = vpop.permute.xlu0 %2521
        %2523 = vset.pattern.permute.xlu0 0
        %2524 = vperm.xlu0 %2523, %v1571
        %v2525 = vpop.permute.xlu0 %2524
        %2526 = vset.pattern.permute.xlu0 0
        %2527 = vperm.xlu0 %2526, %v1572
        %v2528 = vpop.permute.xlu0 %2527
        %2529 = vset.pattern.permute.xlu0 0
        %2530 = vperm.xlu0 %2529, %v1573
        %v2531 = vpop.permute.xlu0 %2530
        %2532 = vset.pattern.permute.xlu0 0
        %2533 = vperm.xlu0 %2532, %v1574
        %v2534 = vpop.permute.xlu0 %2533
        %2535 = vset.pattern.permute.xlu0 0
        %2536 = vperm.xlu0 %2535, %v1575
        %v2537 = vpop.permute.xlu0 %2536
        %2538 = vset.pattern.permute.xlu0 0
        %2539 = vperm.xlu0 %2538, %v1576
        %v2540 = vpop.permute.xlu0 %2539
        %2541 = vset.pattern.permute.xlu0 0
        %2542 = vperm.xlu0 %2541, %v1577
        %v2543 = vpop.permute.xlu0 %2542
        %2544 = vset.pattern.permute.xlu0 0
        %2545 = vperm.xlu0 %2544, %v1578
        %v2546 = vpop.permute.xlu0 %2545
        %2547 = vset.pattern.permute.xlu0 0
        %2548 = vperm.xlu0 %2547, %v1579
        %v2549 = vpop.permute.xlu0 %2548
        %2550 = vset.pattern.permute.xlu0 0
        %2551 = vperm.xlu0 %2550, %v1580
        %v2552 = vpop.permute.xlu0 %2551
        %2553 = vset.pattern.permute.xlu0 0
        %2554 = vperm.xlu0 %2553, %v1581
        %v2555 = vpop.permute.xlu0 %2554
        %2556 = vset.pattern.permute.xlu0 0
        %2557 = vperm.xlu0 %2556, %v1582
        %v2558 = vpop.permute.xlu0 %2557
        %2559 = vset.pattern.permute.xlu0 0
        %2560 = vperm.xlu0 %2559, %v1583
        %v2561 = vpop.permute.xlu0 %2560
        %2562 = vset.pattern.permute.xlu0 0
        %2563 = vperm.xlu0 %2562, %v1584
        %v2564 = vpop.permute.xlu0 %2563
        %2565 = vset.pattern.permute.xlu0 0
        %2566 = vperm.xlu0 %2565, %v1585
        %v2567 = vpop.permute.xlu0 %2566
        %2568 = vset.pattern.permute.xlu0 0
        %2569 = vperm.xlu0 %2568, %v1586
        %v2570 = vpop.permute.xlu0 %2569
        %2571 = vset.pattern.permute.xlu0 0
        %2572 = vperm.xlu0 %2571, %v1587
        %v2573 = vpop.permute.xlu0 %2572
        %2574 = vset.pattern.permute.xlu0 0
        %2575 = vperm.xlu0 %2574, %v1588
        %v2576 = vpop.permute.xlu0 %2575
        %2577 = vset.pattern.permute.xlu0 0
        %2578 = vperm.xlu0 %2577, %v1589
        %v2579 = vpop.permute.xlu0 %2578
        %2580 = vset.pattern.permute.xlu0 0
        %2581 = vperm.xlu0 %2580, %v1590
        %v2582 = vpop.permute.xlu0 %2581
        %2583 = vset.pattern.permute.xlu0 0
        %2584 = vperm.xlu0 %2583, %v1591
        %v2585 = vpop.permute.xlu0 %2584
        %2586 = vset.pattern.permute.xlu0 0
        %2587 = vperm.xlu0 %2586, %v1592
        %v2588 = vpop.permute.xlu0 %2587
        %2589 = vset.pattern.permute.xlu0 0
        %2590 = vperm.xlu0 %2589, %v1593
        %v2591 = vpop.permute.xlu0 %2590
        %2592 = vset.pattern.permute.xlu0 0
        %2593 = vperm.xlu0 %2592, %v1594
        %v2594 = vpop.permute.xlu0 %2593
        %2595 = vset.pattern.permute.xlu0 0
        %2596 = vperm.xlu0 %2595, %v1595
        %v2597 = vpop.permute.xlu0 %2596
        %2598 = vset.pattern.permute.xlu0 0
        %2599 = vperm.xlu0 %2598, %v1596
        %v2600 = vpop.permute.xlu0 %2599
        %2601 = vset.pattern.permute.xlu0 0
        %2602 = vperm.xlu0 %2601, %v1597
        %v2603 = vpop.permute.xlu0 %2602
        %2604 = vset.pattern.permute.xlu0 0
        %2605 = vperm.xlu0 %2604, %v1598
        %v2606 = vpop.permute.xlu0 %2605
        %2607 = vset.pattern.permute.xlu0 0
        %2608 = vperm.xlu0 %2607, %v1599
        %v2609 = vpop.permute.xlu0 %2608
        %2610 = vset.pattern.permute.xlu0 0
        %2611 = vperm.xlu0 %2610, %v1600
        %v2612 = vpop.permute.xlu0 %2611
        %2613 = vset.pattern.permute.xlu0 0
        %2614 = vperm.xlu0 %2613, %v1601
        %v2615 = vpop.permute.xlu0 %2614
        %2616 = vset.pattern.permute.xlu0 0
        %2617 = vperm.xlu0 %2616, %v1602
        %v2618 = vpop.permute.xlu0 %2617
        %2619 = vset.pattern.permute.xlu0 0
        %2620 = vperm.xlu0 %2619, %v1603
        %v2621 = vpop.permute.xlu0 %2620
        %2622 = vset.pattern.permute.xlu0 0
        %2623 = vperm.xlu0 %2622, %v1604
        %v2624 = vpop.permute.xlu0 %2623
        %2625 = vset.pattern.permute.xlu0 0
        %2626 = vperm.xlu0 %2625, %v1605
        %v2627 = vpop.permute.xlu0 %2626
        %2628 = vset.pattern.permute.xlu0 0
        %2629 = vperm.xlu0 %2628, %v1606
        %v2630 = vpop.permute.xlu0 %2629
        %v2631 = vlaneseq
        %v2632 = vand.u32 %v2631, 127
        %v2633 = vlaneseq
        %v2634 = vshrl.u32 %v2633, 7
        %v2635 = vsub.s32 %v2632, %v2634
        %v2636 = vrot.slane %v1865, %v2635
        %v2637 = vadd.s32 %v2632, 4294967288
        %v2638 = vlaneseq
        %v2639 = vshrl.u32 %v2638, 7
        %v2640 = vsub.s32 %v2637, %v2639
        %v2641 = vrot.slane %v1868, %v2640
        %vm2642 = vcmask 130112
        %v2643 = vsel %vm2642, %v2641, %v2636
        %v2644 = vlaneseq
        %v2645 = vshrl.u32 %v2644, 7
        %v2646 = vsub.s32 %v2632, %v2645
        %v2647 = vrot.slane %v1871, %v2646
        %v2648 = vlaneseq
        %v2649 = vshrl.u32 %v2648, 7
        %v2650 = vsub.s32 %v2637, %v2649
        %v2651 = vrot.slane %v1874, %v2650
        %v2652 = vsel %vm2642, %v2651, %v2647
        %v2653 = vlaneseq
        %v2654 = vshrl.u32 %v2653, 7
        %v2655 = vsub.s32 %v2632, %v2654
        %v2656 = vrot.slane %v1877, %v2655
        %v2657 = vlaneseq
        %v2658 = vshrl.u32 %v2657, 7
        %v2659 = vsub.s32 %v2637, %v2658
        %v2660 = vrot.slane %v1880, %v2659
        %v2661 = vsel %vm2642, %v2660, %v2656
        %v2662 = vlaneseq
        %v2663 = vshrl.u32 %v2662, 7
        %v2664 = vsub.s32 %v2632, %v2663
        %v2665 = vrot.slane %v1883, %v2664
        %v2666 = vlaneseq
        %v2667 = vshrl.u32 %v2666, 7
        %v2668 = vsub.s32 %v2637, %v2667
        %v2669 = vrot.slane %v1886, %v2668
        %v2670 = vsel %vm2642, %v2669, %v2665
        %v2671 = vlaneseq
        %v2672 = vshrl.u32 %v2671, 7
        %v2673 = vsub.s32 %v2632, %v2672
        %v2674 = vrot.slane %v1889, %v2673
        %v2675 = vlaneseq
        %v2676 = vshrl.u32 %v2675, 7
        %v2677 = vsub.s32 %v2637, %v2676
        %v2678 = vrot.slane %v1892, %v2677
        %v2679 = vsel %vm2642, %v2678, %v2674
        %v2680 = vlaneseq
        %v2681 = vshrl.u32 %v2680, 7
        %v2682 = vsub.s32 %v2632, %v2681
        %v2683 = vrot.slane %v1895, %v2682
        %v2684 = vlaneseq
        %v2685 = vshrl.u32 %v2684, 7
        %v2686 = vsub.s32 %v2637, %v2685
        %v2687 = vrot.slane %v1898, %v2686
        %v2688 = vsel %vm2642, %v2687, %v2683
        %v2689 = vlaneseq
        %v2690 = vshrl.u32 %v2689, 7
        %v2691 = vsub.s32 %v2632, %v2690
        %v2692 = vrot.slane %v1901, %v2691
        %v2693 = vlaneseq
        %v2694 = vshrl.u32 %v2693, 7
        %v2695 = vsub.s32 %v2637, %v2694
        %v2696 = vrot.slane %v1904, %v2695
        %v2697 = vsel %vm2642, %v2696, %v2692
        %v2698 = vlaneseq
        %v2699 = vshrl.u32 %v2698, 7
        %v2700 = vsub.s32 %v2632, %v2699
        %v2701 = vrot.slane %v1907, %v2700
        %v2702 = vlaneseq
        %v2703 = vshrl.u32 %v2702, 7
        %v2704 = vsub.s32 %v2637, %v2703
        %v2705 = vrot.slane %v1910, %v2704
        %v2706 = vsel %vm2642, %v2705, %v2701
        %v2707 = vlaneseq
        %v2708 = vshrl.u32 %v2707, 7
        %v2709 = vsub.s32 %v2632, %v2708
        %v2710 = vrot.slane %v1913, %v2709
        %v2711 = vlaneseq
        %v2712 = vshrl.u32 %v2711, 7
        %v2713 = vsub.s32 %v2637, %v2712
        %v2714 = vrot.slane %v1916, %v2713
        %v2715 = vsel %vm2642, %v2714, %v2710
        %v2716 = vlaneseq
        %v2717 = vshrl.u32 %v2716, 7
        %v2718 = vsub.s32 %v2632, %v2717
        %v2719 = vrot.slane %v1919, %v2718
        %v2720 = vlaneseq
        %v2721 = vshrl.u32 %v2720, 7
        %v2722 = vsub.s32 %v2637, %v2721
        %v2723 = vrot.slane %v1922, %v2722
        %v2724 = vsel %vm2642, %v2723, %v2719
        %v2725 = vlaneseq
        %v2726 = vshrl.u32 %v2725, 7
        %v2727 = vsub.s32 %v2632, %v2726
        %v2728 = vrot.slane %v1925, %v2727
        %v2729 = vlaneseq
        %v2730 = vshrl.u32 %v2729, 7
        %v2731 = vsub.s32 %v2637, %v2730
        %v2732 = vrot.slane %v1928, %v2731
        %v2733 = vsel %vm2642, %v2732, %v2728
        %v2734 = vlaneseq
        %v2735 = vshrl.u32 %v2734, 7
        %v2736 = vsub.s32 %v2632, %v2735
        %v2737 = vrot.slane %v1931, %v2736
        %v2738 = vlaneseq
        %v2739 = vshrl.u32 %v2738, 7
        %v2740 = vsub.s32 %v2637, %v2739
        %v2741 = vrot.slane %v1934, %v2740
        %v2742 = vsel %vm2642, %v2741, %v2737
        %v2743 = vlaneseq
        %v2744 = vshrl.u32 %v2743, 7
        %v2745 = vsub.s32 %v2632, %v2744
        %v2746 = vrot.slane %v1937, %v2745
        %v2747 = vlaneseq
        %v2748 = vshrl.u32 %v2747, 7
        %v2749 = vsub.s32 %v2637, %v2748
        %v2750 = vrot.slane %v1940, %v2749
        %v2751 = vsel %vm2642, %v2750, %v2746
        %v2752 = vlaneseq
        %v2753 = vshrl.u32 %v2752, 7
        %v2754 = vsub.s32 %v2632, %v2753
        %v2755 = vrot.slane %v1943, %v2754
        %v2756 = vlaneseq
        %v2757 = vshrl.u32 %v2756, 7
        %v2758 = vsub.s32 %v2637, %v2757
        %v2759 = vrot.slane %v1946, %v2758
        %v2760 = vsel %vm2642, %v2759, %v2755
        %v2761 = vlaneseq
        %v2762 = vshrl.u32 %v2761, 7
        %v2763 = vsub.s32 %v2632, %v2762
        %v2764 = vrot.slane %v1949, %v2763
        %v2765 = vlaneseq
        %v2766 = vshrl.u32 %v2765, 7
        %v2767 = vsub.s32 %v2637, %v2766
        %v2768 = vrot.slane %v1952, %v2767
        %v2769 = vsel %vm2642, %v2768, %v2764
        %v2770 = vlaneseq
        %v2771 = vshrl.u32 %v2770, 7
        %v2772 = vsub.s32 %v2632, %v2771
        %v2773 = vrot.slane %v1955, %v2772
        %v2774 = vlaneseq
        %v2775 = vshrl.u32 %v2774, 7
        %v2776 = vsub.s32 %v2637, %v2775
        %v2777 = vrot.slane %v1958, %v2776
        %v2778 = vsel %vm2642, %v2777, %v2773
        %v2779 = vlaneseq
        %v2780 = vshrl.u32 %v2779, 7
        %v2781 = vsub.s32 %v2632, %v2780
        %v2782 = vrot.slane %v1961, %v2781
        %v2783 = vlaneseq
        %v2784 = vshrl.u32 %v2783, 7
        %v2785 = vsub.s32 %v2637, %v2784
        %v2786 = vrot.slane %v1964, %v2785
        %v2787 = vsel %vm2642, %v2786, %v2782
        %v2788 = vlaneseq
        %v2789 = vshrl.u32 %v2788, 7
        %v2790 = vsub.s32 %v2632, %v2789
        %v2791 = vrot.slane %v1967, %v2790
        %v2792 = vlaneseq
        %v2793 = vshrl.u32 %v2792, 7
        %v2794 = vsub.s32 %v2637, %v2793
        %v2795 = vrot.slane %v1970, %v2794
        %v2796 = vsel %vm2642, %v2795, %v2791
        %v2797 = vlaneseq
        %v2798 = vshrl.u32 %v2797, 7
        %v2799 = vsub.s32 %v2632, %v2798
        %v2800 = vrot.slane %v1973, %v2799
        %v2801 = vlaneseq
        %v2802 = vshrl.u32 %v2801, 7
        %v2803 = vsub.s32 %v2637, %v2802
        %v2804 = vrot.slane %v1976, %v2803
        %v2805 = vsel %vm2642, %v2804, %v2800
        %v2806 = vlaneseq
        %v2807 = vshrl.u32 %v2806, 7
        %v2808 = vsub.s32 %v2632, %v2807
        %v2809 = vrot.slane %v1979, %v2808
        %v2810 = vlaneseq
        %v2811 = vshrl.u32 %v2810, 7
        %v2812 = vsub.s32 %v2637, %v2811
        %v2813 = vrot.slane %v1982, %v2812
        %v2814 = vsel %vm2642, %v2813, %v2809
        %v2815 = vlaneseq
        %v2816 = vshrl.u32 %v2815, 7
        %v2817 = vsub.s32 %v2632, %v2816
        %v2818 = vrot.slane %v1985, %v2817
        %v2819 = vlaneseq
        %v2820 = vshrl.u32 %v2819, 7
        %v2821 = vsub.s32 %v2637, %v2820
        %v2822 = vrot.slane %v1988, %v2821
        %v2823 = vsel %vm2642, %v2822, %v2818
        %v2824 = vlaneseq
        %v2825 = vshrl.u32 %v2824, 7
        %v2826 = vsub.s32 %v2632, %v2825
        %v2827 = vrot.slane %v1991, %v2826
        %v2828 = vlaneseq
        %v2829 = vshrl.u32 %v2828, 7
        %v2830 = vsub.s32 %v2637, %v2829
        %v2831 = vrot.slane %v1994, %v2830
        %v2832 = vsel %vm2642, %v2831, %v2827
        %v2833 = vlaneseq
        %v2834 = vshrl.u32 %v2833, 7
        %v2835 = vsub.s32 %v2632, %v2834
        %v2836 = vrot.slane %v1997, %v2835
        %v2837 = vlaneseq
        %v2838 = vshrl.u32 %v2837, 7
        %v2839 = vsub.s32 %v2637, %v2838
        %v2840 = vrot.slane %v2000, %v2839
        %v2841 = vsel %vm2642, %v2840, %v2836
        %v2842 = vlaneseq
        %v2843 = vshrl.u32 %v2842, 7
        %v2844 = vsub.s32 %v2632, %v2843
        %v2845 = vrot.slane %v2003, %v2844
        %v2846 = vlaneseq
        %v2847 = vshrl.u32 %v2846, 7
        %v2848 = vsub.s32 %v2637, %v2847
        %v2849 = vrot.slane %v2006, %v2848
        %v2850 = vsel %vm2642, %v2849, %v2845
        %v2851 = vlaneseq
        %v2852 = vshrl.u32 %v2851, 7
        %v2853 = vsub.s32 %v2632, %v2852
        %v2854 = vrot.slane %v2009, %v2853
        %v2855 = vlaneseq
        %v2856 = vshrl.u32 %v2855, 7
        %v2857 = vsub.s32 %v2637, %v2856
        %v2858 = vrot.slane %v2012, %v2857
        %v2859 = vsel %vm2642, %v2858, %v2854
        %v2860 = vlaneseq
        %v2861 = vshrl.u32 %v2860, 7
        %v2862 = vsub.s32 %v2632, %v2861
        %v2863 = vrot.slane %v2015, %v2862
        %v2864 = vlaneseq
        %v2865 = vshrl.u32 %v2864, 7
        %v2866 = vsub.s32 %v2637, %v2865
        %v2867 = vrot.slane %v2018, %v2866
        %v2868 = vsel %vm2642, %v2867, %v2863
        %v2869 = vlaneseq
        %v2870 = vshrl.u32 %v2869, 7
        %v2871 = vsub.s32 %v2632, %v2870
        %v2872 = vrot.slane %v2021, %v2871
        %v2873 = vlaneseq
        %v2874 = vshrl.u32 %v2873, 7
        %v2875 = vsub.s32 %v2637, %v2874
        %v2876 = vrot.slane %v2024, %v2875
        %v2877 = vsel %vm2642, %v2876, %v2872
        %v2878 = vlaneseq
        %v2879 = vshrl.u32 %v2878, 7
        %v2880 = vsub.s32 %v2632, %v2879
        %v2881 = vrot.slane %v2027, %v2880
        %v2882 = vlaneseq
        %v2883 = vshrl.u32 %v2882, 7
        %v2884 = vsub.s32 %v2637, %v2883
        %v2885 = vrot.slane %v2030, %v2884
        %v2886 = vsel %vm2642, %v2885, %v2881
        %v2887 = vlaneseq
        %v2888 = vshrl.u32 %v2887, 7
        %v2889 = vsub.s32 %v2632, %v2888
        %v2890 = vrot.slane %v2033, %v2889
        %v2891 = vlaneseq
        %v2892 = vshrl.u32 %v2891, 7
        %v2893 = vsub.s32 %v2637, %v2892
        %v2894 = vrot.slane %v2036, %v2893
        %v2895 = vsel %vm2642, %v2894, %v2890
        %v2896 = vlaneseq
        %v2897 = vshrl.u32 %v2896, 7
        %v2898 = vsub.s32 %v2632, %v2897
        %v2899 = vrot.slane %v2039, %v2898
        %v2900 = vlaneseq
        %v2901 = vshrl.u32 %v2900, 7
        %v2902 = vsub.s32 %v2637, %v2901
        %v2903 = vrot.slane %v2042, %v2902
        %v2904 = vsel %vm2642, %v2903, %v2899
        %v2905 = vlaneseq
        %v2906 = vshrl.u32 %v2905, 7
        %v2907 = vsub.s32 %v2632, %v2906
        %v2908 = vrot.slane %v2045, %v2907
        %v2909 = vlaneseq
        %v2910 = vshrl.u32 %v2909, 7
        %v2911 = vsub.s32 %v2637, %v2910
        %v2912 = vrot.slane %v2048, %v2911
        %v2913 = vsel %vm2642, %v2912, %v2908
        %v2914 = vlaneseq
        %v2915 = vshrl.u32 %v2914, 7
        %v2916 = vsub.s32 %v2632, %v2915
        %v2917 = vrot.slane %v2051, %v2916
        %v2918 = vlaneseq
        %v2919 = vshrl.u32 %v2918, 7
        %v2920 = vsub.s32 %v2637, %v2919
        %v2921 = vrot.slane %v2054, %v2920
        %v2922 = vsel %vm2642, %v2921, %v2917
        %v2923 = vlaneseq
        %v2924 = vshrl.u32 %v2923, 7
        %v2925 = vsub.s32 %v2632, %v2924
        %v2926 = vrot.slane %v2057, %v2925
        %v2927 = vlaneseq
        %v2928 = vshrl.u32 %v2927, 7
        %v2929 = vsub.s32 %v2637, %v2928
        %v2930 = vrot.slane %v2060, %v2929
        %v2931 = vsel %vm2642, %v2930, %v2926
        %v2932 = vlaneseq
        %v2933 = vshrl.u32 %v2932, 7
        %v2934 = vsub.s32 %v2632, %v2933
        %v2935 = vrot.slane %v2063, %v2934
        %v2936 = vlaneseq
        %v2937 = vshrl.u32 %v2936, 7
        %v2938 = vsub.s32 %v2637, %v2937
        %v2939 = vrot.slane %v2066, %v2938
        %v2940 = vsel %vm2642, %v2939, %v2935
        %v2941 = vlaneseq
        %v2942 = vshrl.u32 %v2941, 7
        %v2943 = vsub.s32 %v2632, %v2942
        %v2944 = vrot.slane %v2069, %v2943
        %v2945 = vlaneseq
        %v2946 = vshrl.u32 %v2945, 7
        %v2947 = vsub.s32 %v2637, %v2946
        %v2948 = vrot.slane %v2072, %v2947
        %v2949 = vsel %vm2642, %v2948, %v2944
        %v2950 = vlaneseq
        %v2951 = vshrl.u32 %v2950, 7
        %v2952 = vsub.s32 %v2632, %v2951
        %v2953 = vrot.slane %v2075, %v2952
        %v2954 = vlaneseq
        %v2955 = vshrl.u32 %v2954, 7
        %v2956 = vsub.s32 %v2637, %v2955
        %v2957 = vrot.slane %v2078, %v2956
        %v2958 = vsel %vm2642, %v2957, %v2953
        %v2959 = vlaneseq
        %v2960 = vshrl.u32 %v2959, 7
        %v2961 = vsub.s32 %v2632, %v2960
        %v2962 = vrot.slane %v2081, %v2961
        %v2963 = vlaneseq
        %v2964 = vshrl.u32 %v2963, 7
        %v2965 = vsub.s32 %v2637, %v2964
        %v2966 = vrot.slane %v2084, %v2965
        %v2967 = vsel %vm2642, %v2966, %v2962
        %v2968 = vlaneseq
        %v2969 = vshrl.u32 %v2968, 7
        %v2970 = vsub.s32 %v2632, %v2969
        %v2971 = vrot.slane %v2087, %v2970
        %v2972 = vlaneseq
        %v2973 = vshrl.u32 %v2972, 7
        %v2974 = vsub.s32 %v2637, %v2973
        %v2975 = vrot.slane %v2090, %v2974
        %v2976 = vsel %vm2642, %v2975, %v2971
        %v2977 = vlaneseq
        %v2978 = vshrl.u32 %v2977, 7
        %v2979 = vsub.s32 %v2632, %v2978
        %v2980 = vrot.slane %v2093, %v2979
        %v2981 = vlaneseq
        %v2982 = vshrl.u32 %v2981, 7
        %v2983 = vsub.s32 %v2637, %v2982
        %v2984 = vrot.slane %v2096, %v2983
        %v2985 = vsel %vm2642, %v2984, %v2980
        %v2986 = vlaneseq
        %v2987 = vshrl.u32 %v2986, 7
        %v2988 = vsub.s32 %v2632, %v2987
        %v2989 = vrot.slane %v2099, %v2988
        %v2990 = vlaneseq
        %v2991 = vshrl.u32 %v2990, 7
        %v2992 = vsub.s32 %v2637, %v2991
        %v2993 = vrot.slane %v2102, %v2992
        %v2994 = vsel %vm2642, %v2993, %v2989
        %v2995 = vlaneseq
        %v2996 = vshrl.u32 %v2995, 7
        %v2997 = vsub.s32 %v2632, %v2996
        %v2998 = vrot.slane %v2105, %v2997
        %v2999 = vlaneseq
        %v3000 = vshrl.u32 %v2999, 7
        %v3001 = vsub.s32 %v2637, %v3000
        %v3002 = vrot.slane %v2108, %v3001
        %v3003 = vsel %vm2642, %v3002, %v2998
        %v3004 = vlaneseq
        %v3005 = vshrl.u32 %v3004, 7
        %v3006 = vsub.s32 %v2632, %v3005
        %v3007 = vrot.slane %v2111, %v3006
        %v3008 = vlaneseq
        %v3009 = vshrl.u32 %v3008, 7
        %v3010 = vsub.s32 %v2637, %v3009
        %v3011 = vrot.slane %v2114, %v3010
        %v3012 = vsel %vm2642, %v3011, %v3007
        %v3013 = vlaneseq
        %v3014 = vshrl.u32 %v3013, 7
        %v3015 = vsub.s32 %v2632, %v3014
        %v3016 = vrot.slane %v2117, %v3015
        %v3017 = vlaneseq
        %v3018 = vshrl.u32 %v3017, 7
        %v3019 = vsub.s32 %v2637, %v3018
        %v3020 = vrot.slane %v2120, %v3019
        %v3021 = vsel %vm2642, %v3020, %v3016
        %v3022 = vlaneseq
        %v3023 = vshrl.u32 %v3022, 7
        %v3024 = vsub.s32 %v2632, %v3023
        %v3025 = vrot.slane %v2123, %v3024
        %v3026 = vlaneseq
        %v3027 = vshrl.u32 %v3026, 7
        %v3028 = vsub.s32 %v2637, %v3027
        %v3029 = vrot.slane %v2126, %v3028
        %v3030 = vsel %vm2642, %v3029, %v3025
        %v3031 = vlaneseq
        %v3032 = vshrl.u32 %v3031, 7
        %v3033 = vsub.s32 %v2632, %v3032
        %v3034 = vrot.slane %v2129, %v3033
        %v3035 = vlaneseq
        %v3036 = vshrl.u32 %v3035, 7
        %v3037 = vsub.s32 %v2637, %v3036
        %v3038 = vrot.slane %v2132, %v3037
        %v3039 = vsel %vm2642, %v3038, %v3034
        %v3040 = vlaneseq
        %v3041 = vshrl.u32 %v3040, 7
        %v3042 = vsub.s32 %v2632, %v3041
        %v3043 = vrot.slane %v2135, %v3042
        %v3044 = vlaneseq
        %v3045 = vshrl.u32 %v3044, 7
        %v3046 = vsub.s32 %v2637, %v3045
        %v3047 = vrot.slane %v2138, %v3046
        %v3048 = vsel %vm2642, %v3047, %v3043
        %v3049 = vlaneseq
        %v3050 = vshrl.u32 %v3049, 7
        %v3051 = vsub.s32 %v2632, %v3050
        %v3052 = vrot.slane %v2141, %v3051
        %v3053 = vlaneseq
        %v3054 = vshrl.u32 %v3053, 7
        %v3055 = vsub.s32 %v2637, %v3054
        %v3056 = vrot.slane %v2144, %v3055
        %v3057 = vsel %vm2642, %v3056, %v3052
        %v3058 = vlaneseq
        %v3059 = vshrl.u32 %v3058, 7
        %v3060 = vsub.s32 %v2632, %v3059
        %v3061 = vrot.slane %v2147, %v3060
        %v3062 = vlaneseq
        %v3063 = vshrl.u32 %v3062, 7
        %v3064 = vsub.s32 %v2637, %v3063
        %v3065 = vrot.slane %v2150, %v3064
        %v3066 = vsel %vm2642, %v3065, %v3061
        %v3067 = vlaneseq
        %v3068 = vshrl.u32 %v3067, 7
        %v3069 = vsub.s32 %v2632, %v3068
        %v3070 = vrot.slane %v2153, %v3069
        %v3071 = vlaneseq
        %v3072 = vshrl.u32 %v3071, 7
        %v3073 = vsub.s32 %v2637, %v3072
        %v3074 = vrot.slane %v2156, %v3073
        %v3075 = vsel %vm2642, %v3074, %v3070
        %v3076 = vlaneseq
        %v3077 = vshrl.u32 %v3076, 7
        %v3078 = vsub.s32 %v2632, %v3077
        %v3079 = vrot.slane %v2159, %v3078
        %v3080 = vlaneseq
        %v3081 = vshrl.u32 %v3080, 7
        %v3082 = vsub.s32 %v2637, %v3081
        %v3083 = vrot.slane %v2162, %v3082
        %v3084 = vsel %vm2642, %v3083, %v3079
        %v3085 = vlaneseq
        %v3086 = vshrl.u32 %v3085, 7
        %v3087 = vsub.s32 %v2632, %v3086
        %v3088 = vrot.slane %v2165, %v3087
        %v3089 = vlaneseq
        %v3090 = vshrl.u32 %v3089, 7
        %v3091 = vsub.s32 %v2637, %v3090
        %v3092 = vrot.slane %v2168, %v3091
        %v3093 = vsel %vm2642, %v3092, %v3088
        %v3094 = vlaneseq
        %v3095 = vshrl.u32 %v3094, 7
        %v3096 = vsub.s32 %v2632, %v3095
        %v3097 = vrot.slane %v2171, %v3096
        %v3098 = vlaneseq
        %v3099 = vshrl.u32 %v3098, 7
        %v3100 = vsub.s32 %v2637, %v3099
        %v3101 = vrot.slane %v2174, %v3100
        %v3102 = vsel %vm2642, %v3101, %v3097
        %v3103 = vlaneseq
        %v3104 = vshrl.u32 %v3103, 7
        %v3105 = vsub.s32 %v2632, %v3104
        %v3106 = vrot.slane %v2177, %v3105
        %v3107 = vlaneseq
        %v3108 = vshrl.u32 %v3107, 7
        %v3109 = vsub.s32 %v2637, %v3108
        %v3110 = vrot.slane %v2180, %v3109
        %v3111 = vsel %vm2642, %v3110, %v3106
        %v3112 = vlaneseq
        %v3113 = vshrl.u32 %v3112, 7
        %v3114 = vsub.s32 %v2632, %v3113
        %v3115 = vrot.slane %v2183, %v3114
        %v3116 = vlaneseq
        %v3117 = vshrl.u32 %v3116, 7
        %v3118 = vsub.s32 %v2637, %v3117
        %v3119 = vrot.slane %v2186, %v3118
        %v3120 = vsel %vm2642, %v3119, %v3115
        %v3121 = vlaneseq
        %v3122 = vshrl.u32 %v3121, 7
        %v3123 = vsub.s32 %v2632, %v3122
        %v3124 = vrot.slane %v2189, %v3123
        %v3125 = vlaneseq
        %v3126 = vshrl.u32 %v3125, 7
        %v3127 = vsub.s32 %v2637, %v3126
        %v3128 = vrot.slane %v2192, %v3127
        %v3129 = vsel %vm2642, %v3128, %v3124
        %v3130 = vlaneseq
        %v3131 = vshrl.u32 %v3130, 7
        %v3132 = vsub.s32 %v2632, %v3131
        %v3133 = vrot.slane %v2195, %v3132
        %v3134 = vlaneseq
        %v3135 = vshrl.u32 %v3134, 7
        %v3136 = vsub.s32 %v2637, %v3135
        %v3137 = vrot.slane %v2198, %v3136
        %v3138 = vsel %vm2642, %v3137, %v3133
        %v3139 = vlaneseq
        %v3140 = vshrl.u32 %v3139, 7
        %v3141 = vsub.s32 %v2632, %v3140
        %v3142 = vrot.slane %v2201, %v3141
        %v3143 = vlaneseq
        %v3144 = vshrl.u32 %v3143, 7
        %v3145 = vsub.s32 %v2637, %v3144
        %v3146 = vrot.slane %v2204, %v3145
        %v3147 = vsel %vm2642, %v3146, %v3142
        %v3148 = vlaneseq
        %v3149 = vshrl.u32 %v3148, 7
        %v3150 = vsub.s32 %v2632, %v3149
        %v3151 = vrot.slane %v2207, %v3150
        %v3152 = vlaneseq
        %v3153 = vshrl.u32 %v3152, 7
        %v3154 = vsub.s32 %v2637, %v3153
        %v3155 = vrot.slane %v2210, %v3154
        %v3156 = vsel %vm2642, %v3155, %v3151
        %v3157 = vlaneseq
        %v3158 = vshrl.u32 %v3157, 7
        %v3159 = vsub.s32 %v2632, %v3158
        %v3160 = vrot.slane %v2213, %v3159
        %v3161 = vlaneseq
        %v3162 = vshrl.u32 %v3161, 7
        %v3163 = vsub.s32 %v2637, %v3162
        %v3164 = vrot.slane %v2216, %v3163
        %v3165 = vsel %vm2642, %v3164, %v3160
        %v3166 = vlaneseq
        %v3167 = vshrl.u32 %v3166, 7
        %v3168 = vsub.s32 %v2632, %v3167
        %v3169 = vrot.slane %v2219, %v3168
        %v3170 = vlaneseq
        %v3171 = vshrl.u32 %v3170, 7
        %v3172 = vsub.s32 %v2637, %v3171
        %v3173 = vrot.slane %v2222, %v3172
        %v3174 = vsel %vm2642, %v3173, %v3169
        %v3175 = vlaneseq
        %v3176 = vshrl.u32 %v3175, 7
        %v3177 = vsub.s32 %v2632, %v3176
        %v3178 = vrot.slane %v2225, %v3177
        %v3179 = vlaneseq
        %v3180 = vshrl.u32 %v3179, 7
        %v3181 = vsub.s32 %v2637, %v3180
        %v3182 = vrot.slane %v2228, %v3181
        %v3183 = vsel %vm2642, %v3182, %v3178
        %v3184 = vlaneseq
        %v3185 = vshrl.u32 %v3184, 7
        %v3186 = vsub.s32 %v2632, %v3185
        %v3187 = vrot.slane %v2231, %v3186
        %v3188 = vlaneseq
        %v3189 = vshrl.u32 %v3188, 7
        %v3190 = vsub.s32 %v2637, %v3189
        %v3191 = vrot.slane %v2234, %v3190
        %v3192 = vsel %vm2642, %v3191, %v3187
        %v3193 = vlaneseq
        %v3194 = vshrl.u32 %v3193, 7
        %v3195 = vsub.s32 %v2632, %v3194
        %v3196 = vrot.slane %v2237, %v3195
        %v3197 = vlaneseq
        %v3198 = vshrl.u32 %v3197, 7
        %v3199 = vsub.s32 %v2637, %v3198
        %v3200 = vrot.slane %v2240, %v3199
        %v3201 = vsel %vm2642, %v3200, %v3196
        %v3202 = vlaneseq
        %v3203 = vshrl.u32 %v3202, 7
        %v3204 = vsub.s32 %v2632, %v3203
        %v3205 = vrot.slane %v2243, %v3204
        %v3206 = vlaneseq
        %v3207 = vshrl.u32 %v3206, 7
        %v3208 = vsub.s32 %v2637, %v3207
        %v3209 = vrot.slane %v2246, %v3208
        %v3210 = vsel %vm2642, %v3209, %v3205
        %v3211 = vlaneseq
        %v3212 = vshrl.u32 %v3211, 7
        %v3213 = vsub.s32 %v2632, %v3212
        %v3214 = vrot.slane %v2249, %v3213
        %v3215 = vlaneseq
        %v3216 = vshrl.u32 %v3215, 7
        %v3217 = vsub.s32 %v2637, %v3216
        %v3218 = vrot.slane %v2252, %v3217
        %v3219 = vsel %vm2642, %v3218, %v3214
        %v3220 = vlaneseq
        %v3221 = vshrl.u32 %v3220, 7
        %v3222 = vsub.s32 %v2632, %v3221
        %v3223 = vrot.slane %v2255, %v3222
        %v3224 = vlaneseq
        %v3225 = vshrl.u32 %v3224, 7
        %v3226 = vsub.s32 %v2637, %v3225
        %v3227 = vrot.slane %v2258, %v3226
        %v3228 = vsel %vm2642, %v3227, %v3223
        %v3229 = vlaneseq
        %v3230 = vshrl.u32 %v3229, 7
        %v3231 = vsub.s32 %v2632, %v3230
        %v3232 = vrot.slane %v2261, %v3231
        %v3233 = vlaneseq
        %v3234 = vshrl.u32 %v3233, 7
        %v3235 = vsub.s32 %v2637, %v3234
        %v3236 = vrot.slane %v2264, %v3235
        %v3237 = vsel %vm2642, %v3236, %v3232
        %v3238 = vlaneseq
        %v3239 = vshrl.u32 %v3238, 7
        %v3240 = vsub.s32 %v2632, %v3239
        %v3241 = vrot.slane %v2267, %v3240
        %v3242 = vlaneseq
        %v3243 = vshrl.u32 %v3242, 7
        %v3244 = vsub.s32 %v2637, %v3243
        %v3245 = vrot.slane %v2270, %v3244
        %v3246 = vsel %vm2642, %v3245, %v3241
        %v3247 = vlaneseq
        %v3248 = vshrl.u32 %v3247, 7
        %v3249 = vsub.s32 %v2632, %v3248
        %v3250 = vrot.slane %v2273, %v3249
        %v3251 = vlaneseq
        %v3252 = vshrl.u32 %v3251, 7
        %v3253 = vsub.s32 %v2637, %v3252
        %v3254 = vrot.slane %v2276, %v3253
        %v3255 = vsel %vm2642, %v3254, %v3250
        %v3256 = vlaneseq
        %v3257 = vshrl.u32 %v3256, 7
        %v3258 = vsub.s32 %v2632, %v3257
        %v3259 = vrot.slane %v2279, %v3258
        %v3260 = vlaneseq
        %v3261 = vshrl.u32 %v3260, 7
        %v3262 = vsub.s32 %v2637, %v3261
        %v3263 = vrot.slane %v2282, %v3262
        %v3264 = vsel %vm2642, %v3263, %v3259
        %v3265 = vlaneseq
        %v3266 = vshrl.u32 %v3265, 7
        %v3267 = vsub.s32 %v2632, %v3266
        %v3268 = vrot.slane %v2285, %v3267
        %v3269 = vlaneseq
        %v3270 = vshrl.u32 %v3269, 7
        %v3271 = vsub.s32 %v2637, %v3270
        %v3272 = vrot.slane %v2288, %v3271
        %v3273 = vsel %vm2642, %v3272, %v3268
        %v3274 = vlaneseq
        %v3275 = vshrl.u32 %v3274, 7
        %v3276 = vsub.s32 %v2632, %v3275
        %v3277 = vrot.slane %v2291, %v3276
        %v3278 = vlaneseq
        %v3279 = vshrl.u32 %v3278, 7
        %v3280 = vsub.s32 %v2637, %v3279
        %v3281 = vrot.slane %v2294, %v3280
        %v3282 = vsel %vm2642, %v3281, %v3277
        %v3283 = vlaneseq
        %v3284 = vshrl.u32 %v3283, 7
        %v3285 = vsub.s32 %v2632, %v3284
        %v3286 = vrot.slane %v2297, %v3285
        %v3287 = vlaneseq
        %v3288 = vshrl.u32 %v3287, 7
        %v3289 = vsub.s32 %v2637, %v3288
        %v3290 = vrot.slane %v2300, %v3289
        %v3291 = vsel %vm2642, %v3290, %v3286
        %v3292 = vlaneseq
        %v3293 = vshrl.u32 %v3292, 7
        %v3294 = vsub.s32 %v2632, %v3293
        %v3295 = vrot.slane %v2303, %v3294
        %v3296 = vlaneseq
        %v3297 = vshrl.u32 %v3296, 7
        %v3298 = vsub.s32 %v2637, %v3297
        %v3299 = vrot.slane %v2306, %v3298
        %v3300 = vsel %vm2642, %v3299, %v3295
        %v3301 = vlaneseq
        %v3302 = vshrl.u32 %v3301, 7
        %v3303 = vsub.s32 %v2632, %v3302
        %v3304 = vrot.slane %v2309, %v3303
        %v3305 = vlaneseq
        %v3306 = vshrl.u32 %v3305, 7
        %v3307 = vsub.s32 %v2637, %v3306
        %v3308 = vrot.slane %v2312, %v3307
        %v3309 = vsel %vm2642, %v3308, %v3304
        %v3310 = vlaneseq
        %v3311 = vshrl.u32 %v3310, 7
        %v3312 = vsub.s32 %v2632, %v3311
        %v3313 = vrot.slane %v2315, %v3312
        %v3314 = vlaneseq
        %v3315 = vshrl.u32 %v3314, 7
        %v3316 = vsub.s32 %v2637, %v3315
        %v3317 = vrot.slane %v2318, %v3316
        %v3318 = vsel %vm2642, %v3317, %v3313
        %v3319 = vlaneseq
        %v3320 = vshrl.u32 %v3319, 7
        %v3321 = vsub.s32 %v2632, %v3320
        %v3322 = vrot.slane %v2321, %v3321
        %v3323 = vlaneseq
        %v3324 = vshrl.u32 %v3323, 7
        %v3325 = vsub.s32 %v2637, %v3324
        %v3326 = vrot.slane %v2324, %v3325
        %v3327 = vsel %vm2642, %v3326, %v3322
        %v3328 = vlaneseq
        %v3329 = vshrl.u32 %v3328, 7
        %v3330 = vsub.s32 %v2632, %v3329
        %v3331 = vrot.slane %v2327, %v3330
        %v3332 = vlaneseq
        %v3333 = vshrl.u32 %v3332, 7
        %v3334 = vsub.s32 %v2637, %v3333
        %v3335 = vrot.slane %v2330, %v3334
        %v3336 = vsel %vm2642, %v3335, %v3331
        %v3337 = vlaneseq
        %v3338 = vshrl.u32 %v3337, 7
        %v3339 = vsub.s32 %v2632, %v3338
        %v3340 = vrot.slane %v2333, %v3339
        %v3341 = vlaneseq
        %v3342 = vshrl.u32 %v3341, 7
        %v3343 = vsub.s32 %v2637, %v3342
        %v3344 = vrot.slane %v2336, %v3343
        %v3345 = vsel %vm2642, %v3344, %v3340
        %v3346 = vlaneseq
        %v3347 = vshrl.u32 %v3346, 7
        %v3348 = vsub.s32 %v2632, %v3347
        %v3349 = vrot.slane %v2339, %v3348
        %v3350 = vlaneseq
        %v3351 = vshrl.u32 %v3350, 7
        %v3352 = vsub.s32 %v2637, %v3351
        %v3353 = vrot.slane %v2342, %v3352
        %v3354 = vsel %vm2642, %v3353, %v3349
        %v3355 = vlaneseq
        %v3356 = vshrl.u32 %v3355, 7
        %v3357 = vsub.s32 %v2632, %v3356
        %v3358 = vrot.slane %v2345, %v3357
        %v3359 = vlaneseq
        %v3360 = vshrl.u32 %v3359, 7
        %v3361 = vsub.s32 %v2637, %v3360
        %v3362 = vrot.slane %v2348, %v3361
        %v3363 = vsel %vm2642, %v3362, %v3358
        %v3364 = vlaneseq
        %v3365 = vshrl.u32 %v3364, 7
        %v3366 = vsub.s32 %v2632, %v3365
        %v3367 = vrot.slane %v2351, %v3366
        %v3368 = vlaneseq
        %v3369 = vshrl.u32 %v3368, 7
        %v3370 = vsub.s32 %v2637, %v3369
        %v3371 = vrot.slane %v2354, %v3370
        %v3372 = vsel %vm2642, %v3371, %v3367
        %v3373 = vlaneseq
        %v3374 = vshrl.u32 %v3373, 7
        %v3375 = vsub.s32 %v2632, %v3374
        %v3376 = vrot.slane %v2357, %v3375
        %v3377 = vlaneseq
        %v3378 = vshrl.u32 %v3377, 7
        %v3379 = vsub.s32 %v2637, %v3378
        %v3380 = vrot.slane %v2360, %v3379
        %v3381 = vsel %vm2642, %v3380, %v3376
        %v3382 = vlaneseq
        %v3383 = vshrl.u32 %v3382, 7
        %v3384 = vsub.s32 %v2632, %v3383
        %v3385 = vrot.slane %v2363, %v3384
        %v3386 = vlaneseq
        %v3387 = vshrl.u32 %v3386, 7
        %v3388 = vsub.s32 %v2637, %v3387
        %v3389 = vrot.slane %v2366, %v3388
        %v3390 = vsel %vm2642, %v3389, %v3385
        %v3391 = vlaneseq
        %v3392 = vshrl.u32 %v3391, 7
        %v3393 = vsub.s32 %v2632, %v3392
        %v3394 = vrot.slane %v2369, %v3393
        %v3395 = vlaneseq
        %v3396 = vshrl.u32 %v3395, 7
        %v3397 = vsub.s32 %v2637, %v3396
        %v3398 = vrot.slane %v2372, %v3397
        %v3399 = vsel %vm2642, %v3398, %v3394
        %v3400 = vlaneseq
        %v3401 = vshrl.u32 %v3400, 7
        %v3402 = vsub.s32 %v2632, %v3401
        %v3403 = vrot.slane %v2375, %v3402
        %v3404 = vlaneseq
        %v3405 = vshrl.u32 %v3404, 7
        %v3406 = vsub.s32 %v2637, %v3405
        %v3407 = vrot.slane %v2378, %v3406
        %v3408 = vsel %vm2642, %v3407, %v3403
        %v3409 = vlaneseq
        %v3410 = vshrl.u32 %v3409, 7
        %v3411 = vsub.s32 %v2632, %v3410
        %v3412 = vrot.slane %v2381, %v3411
        %v3413 = vlaneseq
        %v3414 = vshrl.u32 %v3413, 7
        %v3415 = vsub.s32 %v2637, %v3414
        %v3416 = vrot.slane %v2384, %v3415
        %v3417 = vsel %vm2642, %v3416, %v3412
        %v3418 = vlaneseq
        %v3419 = vshrl.u32 %v3418, 7
        %v3420 = vsub.s32 %v2632, %v3419
        %v3421 = vrot.slane %v2387, %v3420
        %v3422 = vlaneseq
        %v3423 = vshrl.u32 %v3422, 7
        %v3424 = vsub.s32 %v2637, %v3423
        %v3425 = vrot.slane %v2390, %v3424
        %v3426 = vsel %vm2642, %v3425, %v3421
        %v3427 = vlaneseq
        %v3428 = vshrl.u32 %v3427, 7
        %v3429 = vsub.s32 %v2632, %v3428
        %v3430 = vrot.slane %v2393, %v3429
        %v3431 = vlaneseq
        %v3432 = vshrl.u32 %v3431, 7
        %v3433 = vsub.s32 %v2637, %v3432
        %v3434 = vrot.slane %v2396, %v3433
        %v3435 = vsel %vm2642, %v3434, %v3430
        %v3436 = vlaneseq
        %v3437 = vshrl.u32 %v3436, 7
        %v3438 = vsub.s32 %v2632, %v3437
        %v3439 = vrot.slane %v2399, %v3438
        %v3440 = vlaneseq
        %v3441 = vshrl.u32 %v3440, 7
        %v3442 = vsub.s32 %v2637, %v3441
        %v3443 = vrot.slane %v2402, %v3442
        %v3444 = vsel %vm2642, %v3443, %v3439
        %v3445 = vlaneseq
        %v3446 = vshrl.u32 %v3445, 7
        %v3447 = vsub.s32 %v2632, %v3446
        %v3448 = vrot.slane %v2405, %v3447
        %v3449 = vlaneseq
        %v3450 = vshrl.u32 %v3449, 7
        %v3451 = vsub.s32 %v2637, %v3450
        %v3452 = vrot.slane %v2408, %v3451
        %v3453 = vsel %vm2642, %v3452, %v3448
        %v3454 = vlaneseq
        %v3455 = vshrl.u32 %v3454, 7
        %v3456 = vsub.s32 %v2632, %v3455
        %v3457 = vrot.slane %v2411, %v3456
        %v3458 = vlaneseq
        %v3459 = vshrl.u32 %v3458, 7
        %v3460 = vsub.s32 %v2637, %v3459
        %v3461 = vrot.slane %v2414, %v3460
        %v3462 = vsel %vm2642, %v3461, %v3457
        %v3463 = vlaneseq
        %v3464 = vshrl.u32 %v3463, 7
        %v3465 = vsub.s32 %v2632, %v3464
        %v3466 = vrot.slane %v2417, %v3465
        %v3467 = vlaneseq
        %v3468 = vshrl.u32 %v3467, 7
        %v3469 = vsub.s32 %v2637, %v3468
        %v3470 = vrot.slane %v2420, %v3469
        %v3471 = vsel %vm2642, %v3470, %v3466
        %v3472 = vlaneseq
        %v3473 = vshrl.u32 %v3472, 7
        %v3474 = vsub.s32 %v2632, %v3473
        %v3475 = vrot.slane %v2423, %v3474
        %v3476 = vlaneseq
        %v3477 = vshrl.u32 %v3476, 7
        %v3478 = vsub.s32 %v2637, %v3477
        %v3479 = vrot.slane %v2426, %v3478
        %v3480 = vsel %vm2642, %v3479, %v3475
        %v3481 = vlaneseq
        %v3482 = vshrl.u32 %v3481, 7
        %v3483 = vsub.s32 %v2632, %v3482
        %v3484 = vrot.slane %v2429, %v3483
        %v3485 = vlaneseq
        %v3486 = vshrl.u32 %v3485, 7
        %v3487 = vsub.s32 %v2637, %v3486
        %v3488 = vrot.slane %v2432, %v3487
        %v3489 = vsel %vm2642, %v3488, %v3484
        %v3490 = vlaneseq
        %v3491 = vshrl.u32 %v3490, 7
        %v3492 = vsub.s32 %v2632, %v3491
        %v3493 = vrot.slane %v2435, %v3492
        %v3494 = vlaneseq
        %v3495 = vshrl.u32 %v3494, 7
        %v3496 = vsub.s32 %v2637, %v3495
        %v3497 = vrot.slane %v2438, %v3496
        %v3498 = vsel %vm2642, %v3497, %v3493
        %v3499 = vlaneseq
        %v3500 = vshrl.u32 %v3499, 7
        %v3501 = vsub.s32 %v2632, %v3500
        %v3502 = vrot.slane %v2441, %v3501
        %v3503 = vlaneseq
        %v3504 = vshrl.u32 %v3503, 7
        %v3505 = vsub.s32 %v2637, %v3504
        %v3506 = vrot.slane %v2444, %v3505
        %v3507 = vsel %vm2642, %v3506, %v3502
        %v3508 = vlaneseq
        %v3509 = vshrl.u32 %v3508, 7
        %v3510 = vsub.s32 %v2632, %v3509
        %v3511 = vrot.slane %v2447, %v3510
        %v3512 = vlaneseq
        %v3513 = vshrl.u32 %v3512, 7
        %v3514 = vsub.s32 %v2637, %v3513
        %v3515 = vrot.slane %v2450, %v3514
        %v3516 = vsel %vm2642, %v3515, %v3511
        %v3517 = vlaneseq
        %v3518 = vshrl.u32 %v3517, 7
        %v3519 = vsub.s32 %v2632, %v3518
        %v3520 = vrot.slane %v2453, %v3519
        %v3521 = vlaneseq
        %v3522 = vshrl.u32 %v3521, 7
        %v3523 = vsub.s32 %v2637, %v3522
        %v3524 = vrot.slane %v2456, %v3523
        %v3525 = vsel %vm2642, %v3524, %v3520
        %v3526 = vlaneseq
        %v3527 = vshrl.u32 %v3526, 7
        %v3528 = vsub.s32 %v2632, %v3527
        %v3529 = vrot.slane %v2459, %v3528
        %v3530 = vlaneseq
        %v3531 = vshrl.u32 %v3530, 7
        %v3532 = vsub.s32 %v2637, %v3531
        %v3533 = vrot.slane %v2462, %v3532
        %v3534 = vsel %vm2642, %v3533, %v3529
        %v3535 = vlaneseq
        %v3536 = vshrl.u32 %v3535, 7
        %v3537 = vsub.s32 %v2632, %v3536
        %v3538 = vrot.slane %v2465, %v3537
        %v3539 = vlaneseq
        %v3540 = vshrl.u32 %v3539, 7
        %v3541 = vsub.s32 %v2637, %v3540
        %v3542 = vrot.slane %v2468, %v3541
        %v3543 = vsel %vm2642, %v3542, %v3538
        %v3544 = vlaneseq
        %v3545 = vshrl.u32 %v3544, 7
        %v3546 = vsub.s32 %v2632, %v3545
        %v3547 = vrot.slane %v2471, %v3546
        %v3548 = vlaneseq
        %v3549 = vshrl.u32 %v3548, 7
        %v3550 = vsub.s32 %v2637, %v3549
        %v3551 = vrot.slane %v2474, %v3550
        %v3552 = vsel %vm2642, %v3551, %v3547
        %v3553 = vlaneseq
        %v3554 = vshrl.u32 %v3553, 7
        %v3555 = vsub.s32 %v2632, %v3554
        %v3556 = vrot.slane %v2477, %v3555
        %v3557 = vlaneseq
        %v3558 = vshrl.u32 %v3557, 7
        %v3559 = vsub.s32 %v2637, %v3558
        %v3560 = vrot.slane %v2480, %v3559
        %v3561 = vsel %vm2642, %v3560, %v3556
        %v3562 = vlaneseq
        %v3563 = vshrl.u32 %v3562, 7
        %v3564 = vsub.s32 %v2632, %v3563
        %v3565 = vrot.slane %v2483, %v3564
        %v3566 = vlaneseq
        %v3567 = vshrl.u32 %v3566, 7
        %v3568 = vsub.s32 %v2637, %v3567
        %v3569 = vrot.slane %v2486, %v3568
        %v3570 = vsel %vm2642, %v3569, %v3565
        %v3571 = vlaneseq
        %v3572 = vshrl.u32 %v3571, 7
        %v3573 = vsub.s32 %v2632, %v3572
        %v3574 = vrot.slane %v2489, %v3573
        %v3575 = vlaneseq
        %v3576 = vshrl.u32 %v3575, 7
        %v3577 = vsub.s32 %v2637, %v3576
        %v3578 = vrot.slane %v2492, %v3577
        %v3579 = vsel %vm2642, %v3578, %v3574
        %v3580 = vlaneseq
        %v3581 = vshrl.u32 %v3580, 7
        %v3582 = vsub.s32 %v2632, %v3581
        %v3583 = vrot.slane %v2495, %v3582
        %v3584 = vlaneseq
        %v3585 = vshrl.u32 %v3584, 7
        %v3586 = vsub.s32 %v2637, %v3585
        %v3587 = vrot.slane %v2498, %v3586
        %v3588 = vsel %vm2642, %v3587, %v3583
        %v3589 = vlaneseq
        %v3590 = vshrl.u32 %v3589, 7
        %v3591 = vsub.s32 %v2632, %v3590
        %v3592 = vrot.slane %v2501, %v3591
        %v3593 = vlaneseq
        %v3594 = vshrl.u32 %v3593, 7
        %v3595 = vsub.s32 %v2637, %v3594
        %v3596 = vrot.slane %v2504, %v3595
        %v3597 = vsel %vm2642, %v3596, %v3592
        %v3598 = vlaneseq
        %v3599 = vshrl.u32 %v3598, 7
        %v3600 = vsub.s32 %v2632, %v3599
        %v3601 = vrot.slane %v2507, %v3600
        %v3602 = vlaneseq
        %v3603 = vshrl.u32 %v3602, 7
        %v3604 = vsub.s32 %v2637, %v3603
        %v3605 = vrot.slane %v2510, %v3604
        %v3606 = vsel %vm2642, %v3605, %v3601
        %v3607 = vlaneseq
        %v3608 = vshrl.u32 %v3607, 7
        %v3609 = vsub.s32 %v2632, %v3608
        %v3610 = vrot.slane %v2513, %v3609
        %v3611 = vlaneseq
        %v3612 = vshrl.u32 %v3611, 7
        %v3613 = vsub.s32 %v2637, %v3612
        %v3614 = vrot.slane %v2516, %v3613
        %v3615 = vsel %vm2642, %v3614, %v3610
        %v3616 = vlaneseq
        %v3617 = vshrl.u32 %v3616, 7
        %v3618 = vsub.s32 %v2632, %v3617
        %v3619 = vrot.slane %v2519, %v3618
        %v3620 = vlaneseq
        %v3621 = vshrl.u32 %v3620, 7
        %v3622 = vsub.s32 %v2637, %v3621
        %v3623 = vrot.slane %v2522, %v3622
        %v3624 = vsel %vm2642, %v3623, %v3619
        %v3625 = vlaneseq
        %v3626 = vshrl.u32 %v3625, 7
        %v3627 = vsub.s32 %v2632, %v3626
        %v3628 = vrot.slane %v2525, %v3627
        %v3629 = vlaneseq
        %v3630 = vshrl.u32 %v3629, 7
        %v3631 = vsub.s32 %v2637, %v3630
        %v3632 = vrot.slane %v2528, %v3631
        %v3633 = vsel %vm2642, %v3632, %v3628
        %v3634 = vlaneseq
        %v3635 = vshrl.u32 %v3634, 7
        %v3636 = vsub.s32 %v2632, %v3635
        %v3637 = vrot.slane %v2531, %v3636
        %v3638 = vlaneseq
        %v3639 = vshrl.u32 %v3638, 7
        %v3640 = vsub.s32 %v2637, %v3639
        %v3641 = vrot.slane %v2534, %v3640
        %v3642 = vsel %vm2642, %v3641, %v3637
        %v3643 = vlaneseq
        %v3644 = vshrl.u32 %v3643, 7
        %v3645 = vsub.s32 %v2632, %v3644
        %v3646 = vrot.slane %v2537, %v3645
        %v3647 = vlaneseq
        %v3648 = vshrl.u32 %v3647, 7
        %v3649 = vsub.s32 %v2637, %v3648
        %v3650 = vrot.slane %v2540, %v3649
        %v3651 = vsel %vm2642, %v3650, %v3646
        %v3652 = vlaneseq
        %v3653 = vshrl.u32 %v3652, 7
        %v3654 = vsub.s32 %v2632, %v3653
        %v3655 = vrot.slane %v2543, %v3654
        %v3656 = vlaneseq
        %v3657 = vshrl.u32 %v3656, 7
        %v3658 = vsub.s32 %v2637, %v3657
        %v3659 = vrot.slane %v2546, %v3658
        %v3660 = vsel %vm2642, %v3659, %v3655
        %v3661 = vlaneseq
        %v3662 = vshrl.u32 %v3661, 7
        %v3663 = vsub.s32 %v2632, %v3662
        %v3664 = vrot.slane %v2549, %v3663
        %v3665 = vlaneseq
        %v3666 = vshrl.u32 %v3665, 7
        %v3667 = vsub.s32 %v2637, %v3666
        %v3668 = vrot.slane %v2552, %v3667
        %v3669 = vsel %vm2642, %v3668, %v3664
        %v3670 = vlaneseq
        %v3671 = vshrl.u32 %v3670, 7
        %v3672 = vsub.s32 %v2632, %v3671
        %v3673 = vrot.slane %v2555, %v3672
        %v3674 = vlaneseq
        %v3675 = vshrl.u32 %v3674, 7
        %v3676 = vsub.s32 %v2637, %v3675
        %v3677 = vrot.slane %v2558, %v3676
        %v3678 = vsel %vm2642, %v3677, %v3673
        %v3679 = vlaneseq
        %v3680 = vshrl.u32 %v3679, 7
        %v3681 = vsub.s32 %v2632, %v3680
        %v3682 = vrot.slane %v2561, %v3681
        %v3683 = vlaneseq
        %v3684 = vshrl.u32 %v3683, 7
        %v3685 = vsub.s32 %v2637, %v3684
        %v3686 = vrot.slane %v2564, %v3685
        %v3687 = vsel %vm2642, %v3686, %v3682
        %v3688 = vlaneseq
        %v3689 = vshrl.u32 %v3688, 7
        %v3690 = vsub.s32 %v2632, %v3689
        %v3691 = vrot.slane %v2567, %v3690
        %v3692 = vlaneseq
        %v3693 = vshrl.u32 %v3692, 7
        %v3694 = vsub.s32 %v2637, %v3693
        %v3695 = vrot.slane %v2570, %v3694
        %v3696 = vsel %vm2642, %v3695, %v3691
        %v3697 = vlaneseq
        %v3698 = vshrl.u32 %v3697, 7
        %v3699 = vsub.s32 %v2632, %v3698
        %v3700 = vrot.slane %v2573, %v3699
        %v3701 = vlaneseq
        %v3702 = vshrl.u32 %v3701, 7
        %v3703 = vsub.s32 %v2637, %v3702
        %v3704 = vrot.slane %v2576, %v3703
        %v3705 = vsel %vm2642, %v3704, %v3700
        %v3706 = vlaneseq
        %v3707 = vshrl.u32 %v3706, 7
        %v3708 = vsub.s32 %v2632, %v3707
        %v3709 = vrot.slane %v2579, %v3708
        %v3710 = vlaneseq
        %v3711 = vshrl.u32 %v3710, 7
        %v3712 = vsub.s32 %v2637, %v3711
        %v3713 = vrot.slane %v2582, %v3712
        %v3714 = vsel %vm2642, %v3713, %v3709
        %v3715 = vlaneseq
        %v3716 = vshrl.u32 %v3715, 7
        %v3717 = vsub.s32 %v2632, %v3716
        %v3718 = vrot.slane %v2585, %v3717
        %v3719 = vlaneseq
        %v3720 = vshrl.u32 %v3719, 7
        %v3721 = vsub.s32 %v2637, %v3720
        %v3722 = vrot.slane %v2588, %v3721
        %v3723 = vsel %vm2642, %v3722, %v3718
        %v3724 = vlaneseq
        %v3725 = vshrl.u32 %v3724, 7
        %v3726 = vsub.s32 %v2632, %v3725
        %v3727 = vrot.slane %v2591, %v3726
        %v3728 = vlaneseq
        %v3729 = vshrl.u32 %v3728, 7
        %v3730 = vsub.s32 %v2637, %v3729
        %v3731 = vrot.slane %v2594, %v3730
        %v3732 = vsel %vm2642, %v3731, %v3727
        %v3733 = vlaneseq
        %v3734 = vshrl.u32 %v3733, 7
        %v3735 = vsub.s32 %v2632, %v3734
        %v3736 = vrot.slane %v2597, %v3735
        %v3737 = vlaneseq
        %v3738 = vshrl.u32 %v3737, 7
        %v3739 = vsub.s32 %v2637, %v3738
        %v3740 = vrot.slane %v2600, %v3739
        %v3741 = vsel %vm2642, %v3740, %v3736
        %v3742 = vlaneseq
        %v3743 = vshrl.u32 %v3742, 7
        %v3744 = vsub.s32 %v2632, %v3743
        %v3745 = vrot.slane %v2603, %v3744
        %v3746 = vlaneseq
        %v3747 = vshrl.u32 %v3746, 7
        %v3748 = vsub.s32 %v2637, %v3747
        %v3749 = vrot.slane %v2606, %v3748
        %v3750 = vsel %vm2642, %v3749, %v3745
        %v3751 = vlaneseq
        %v3752 = vshrl.u32 %v3751, 7
        %v3753 = vsub.s32 %v2632, %v3752
        %v3754 = vrot.slane %v2609, %v3753
        %v3755 = vlaneseq
        %v3756 = vshrl.u32 %v3755, 7
        %v3757 = vsub.s32 %v2637, %v3756
        %v3758 = vrot.slane %v2612, %v3757
        %v3759 = vsel %vm2642, %v3758, %v3754
        %v3760 = vlaneseq
        %v3761 = vshrl.u32 %v3760, 7
        %v3762 = vsub.s32 %v2632, %v3761
        %v3763 = vrot.slane %v2615, %v3762
        %v3764 = vlaneseq
        %v3765 = vshrl.u32 %v3764, 7
        %v3766 = vsub.s32 %v2637, %v3765
        %v3767 = vrot.slane %v2618, %v3766
        %v3768 = vsel %vm2642, %v3767, %v3763
        %v3769 = vlaneseq
        %v3770 = vshrl.u32 %v3769, 7
        %v3771 = vsub.s32 %v2632, %v3770
        %v3772 = vrot.slane %v2621, %v3771
        %v3773 = vlaneseq
        %v3774 = vshrl.u32 %v3773, 7
        %v3775 = vsub.s32 %v2637, %v3774
        %v3776 = vrot.slane %v2624, %v3775
        %v3777 = vsel %vm2642, %v3776, %v3772
        %v3778 = vlaneseq
        %v3779 = vshrl.u32 %v3778, 7
        %v3780 = vsub.s32 %v2632, %v3779
        %v3781 = vrot.slane %v2627, %v3780
        %v3782 = vlaneseq
        %v3783 = vshrl.u32 %v3782, 7
        %v3784 = vsub.s32 %v2637, %v3783
        %v3785 = vrot.slane %v2630, %v3784
        %v3786 = vsel %vm2642, %v3785, %v3781
        %vm3787 = vcmask 1041409
        %v3788 = vsel %vm3787, %v2652, %v2643
        %vm3789 = vcmask 1042434
        %v3790 = vsel %vm3789, %v2661, %v3788
        %vm3791 = vcmask 1043459
        %v3792 = vsel %vm3791, %v2670, %v3790
        %vm3793 = vcmask 1044484
        %v3794 = vsel %vm3793, %v2679, %v3792
        %vm3795 = vcmask 1045509
        %v3796 = vsel %vm3795, %v2688, %v3794
        %vm3797 = vcmask 1046534
        %v3798 = vsel %vm3797, %v2697, %v3796
        %vm3799 = vcmask 1047559
        %v3800 = vsel %vm3799, %v2706, %v3798
        %v3801 = vsel %vm3787, %v2724, %v2715
        %v3802 = vsel %vm3789, %v2733, %v3801
        %v3803 = vsel %vm3791, %v2742, %v3802
        %v3804 = vsel %vm3793, %v2751, %v3803
        %v3805 = vsel %vm3795, %v2760, %v3804
        %v3806 = vsel %vm3797, %v2769, %v3805
        %v3807 = vsel %vm3799, %v2778, %v3806
        %v3808 = vsel %vm3787, %v2796, %v2787
        %v3809 = vsel %vm3789, %v2805, %v3808
        %v3810 = vsel %vm3791, %v2814, %v3809
        %v3811 = vsel %vm3793, %v2823, %v3810
        %v3812 = vsel %vm3795, %v2832, %v3811
        %v3813 = vsel %vm3797, %v2841, %v3812
        %v3814 = vsel %vm3799, %v2850, %v3813
        %v3815 = vsel %vm3787, %v2868, %v2859
        %v3816 = vsel %vm3789, %v2877, %v3815
        %v3817 = vsel %vm3791, %v2886, %v3816
        %v3818 = vsel %vm3793, %v2895, %v3817
        %v3819 = vsel %vm3795, %v2904, %v3818
        %v3820 = vsel %vm3797, %v2913, %v3819
        %v3821 = vsel %vm3799, %v2922, %v3820
        %v3822 = vsel %vm3787, %v2940, %v2931
        %v3823 = vsel %vm3789, %v2949, %v3822
        %v3824 = vsel %vm3791, %v2958, %v3823
        %v3825 = vsel %vm3793, %v2967, %v3824
        %v3826 = vsel %vm3795, %v2976, %v3825
        %v3827 = vsel %vm3797, %v2985, %v3826
        %v3828 = vsel %vm3799, %v2994, %v3827
        %v3829 = vsel %vm3787, %v3012, %v3003
        %v3830 = vsel %vm3789, %v3021, %v3829
        %v3831 = vsel %vm3791, %v3030, %v3830
        %v3832 = vsel %vm3793, %v3039, %v3831
        %v3833 = vsel %vm3795, %v3048, %v3832
        %v3834 = vsel %vm3797, %v3057, %v3833
        %v3835 = vsel %vm3799, %v3066, %v3834
        %v3836 = vsel %vm3787, %v3084, %v3075
        %v3837 = vsel %vm3789, %v3093, %v3836
        %v3838 = vsel %vm3791, %v3102, %v3837
        %v3839 = vsel %vm3793, %v3111, %v3838
        %v3840 = vsel %vm3795, %v3120, %v3839
        %v3841 = vsel %vm3797, %v3129, %v3840
        %v3842 = vsel %vm3799, %v3138, %v3841
        %v3843 = vsel %vm3787, %v3156, %v3147
        %v3844 = vsel %vm3789, %v3165, %v3843
        %v3845 = vsel %vm3791, %v3174, %v3844
        %v3846 = vsel %vm3793, %v3183, %v3845
        %v3847 = vsel %vm3795, %v3192, %v3846
        %v3848 = vsel %vm3797, %v3201, %v3847
        %v3849 = vsel %vm3799, %v3210, %v3848
        %v3850 = vsel %vm3787, %v3228, %v3219
        %v3851 = vsel %vm3789, %v3237, %v3850
        %v3852 = vsel %vm3791, %v3246, %v3851
        %v3853 = vsel %vm3793, %v3255, %v3852
        %v3854 = vsel %vm3795, %v3264, %v3853
        %v3855 = vsel %vm3797, %v3273, %v3854
        %v3856 = vsel %vm3799, %v3282, %v3855
        %v3857 = vsel %vm3787, %v3300, %v3291
        %v3858 = vsel %vm3789, %v3309, %v3857
        %v3859 = vsel %vm3791, %v3318, %v3858
        %v3860 = vsel %vm3793, %v3327, %v3859
        %v3861 = vsel %vm3795, %v3336, %v3860
        %v3862 = vsel %vm3797, %v3345, %v3861
        %v3863 = vsel %vm3799, %v3354, %v3862
        %v3864 = vsel %vm3787, %v3372, %v3363
        %v3865 = vsel %vm3789, %v3381, %v3864
        %v3866 = vsel %vm3791, %v3390, %v3865
        %v3867 = vsel %vm3793, %v3399, %v3866
        %v3868 = vsel %vm3795, %v3408, %v3867
        %v3869 = vsel %vm3797, %v3417, %v3868
        %v3870 = vsel %vm3799, %v3426, %v3869
        %v3871 = vsel %vm3787, %v3444, %v3435
        %v3872 = vsel %vm3789, %v3453, %v3871
        %v3873 = vsel %vm3791, %v3462, %v3872
        %v3874 = vsel %vm3793, %v3471, %v3873
        %v3875 = vsel %vm3795, %v3480, %v3874
        %v3876 = vsel %vm3797, %v3489, %v3875
        %v3877 = vsel %vm3799, %v3498, %v3876
        %v3878 = vsel %vm3787, %v3516, %v3507
        %v3879 = vsel %vm3789, %v3525, %v3878
        %v3880 = vsel %vm3791, %v3534, %v3879
        %v3881 = vsel %vm3793, %v3543, %v3880
        %v3882 = vsel %vm3795, %v3552, %v3881
        %v3883 = vsel %vm3797, %v3561, %v3882
        %v3884 = vsel %vm3799, %v3570, %v3883
        %v3885 = vsel %vm3787, %v3588, %v3579
        %v3886 = vsel %vm3789, %v3597, %v3885
        %v3887 = vsel %vm3791, %v3606, %v3886
        %v3888 = vsel %vm3793, %v3615, %v3887
        %v3889 = vsel %vm3795, %v3624, %v3888
        %v3890 = vsel %vm3797, %v3633, %v3889
        %v3891 = vsel %vm3799, %v3642, %v3890
        %v3892 = vsel %vm3787, %v3660, %v3651
        %v3893 = vsel %vm3789, %v3669, %v3892
        %v3894 = vsel %vm3791, %v3678, %v3893
        %v3895 = vsel %vm3793, %v3687, %v3894
        %v3896 = vsel %vm3795, %v3696, %v3895
        %v3897 = vsel %vm3797, %v3705, %v3896
        %v3898 = vsel %vm3799, %v3714, %v3897
        %v3899 = vsel %vm3787, %v3732, %v3723
        %v3900 = vsel %vm3789, %v3741, %v3899
        %v3901 = vsel %vm3791, %v3750, %v3900
        %v3902 = vsel %vm3793, %v3759, %v3901
        %v3903 = vsel %vm3795, %v3768, %v3902
        %v3904 = vsel %vm3797, %v3777, %v3903
        %v3905 = vsel %vm3799, %v3786, %v3904
        %vm3922 = vcmask 130048
        %v3923 = vsel %vm3922, %v3800, 0.0
        %3924 = vadd.xlane.f32.xlu0 %v3923
        %v3925 = vpop.xlane.xlu0 %3924
        %v3926 = vsel %vm3922, %v3807, 0.0
        %3927 = vadd.xlane.f32.xlu0 %v3926
        %v3928 = vpop.xlane.xlu0 %3927
        %v3929 = vsel %vm3922, %v3814, 0.0
        %3930 = vadd.xlane.f32.xlu0 %v3929
        %v3931 = vpop.xlane.xlu0 %3930
        %v3932 = vsel %vm3922, %v3821, 0.0
        %3933 = vadd.xlane.f32.xlu0 %v3932
        %v3934 = vpop.xlane.xlu0 %3933
        %v3935 = vsel %vm3922, %v3828, 0.0
        %3936 = vadd.xlane.f32.xlu0 %v3935
        %v3937 = vpop.xlane.xlu0 %3936
        %v3938 = vsel %vm3922, %v3835, 0.0
        %3939 = vadd.xlane.f32.xlu0 %v3938
        %v3940 = vpop.xlane.xlu0 %3939
        %v3941 = vsel %vm3922, %v3842, 0.0
        %3942 = vadd.xlane.f32.xlu0 %v3941
        %v3943 = vpop.xlane.xlu0 %3942
        %v3944 = vsel %vm3922, %v3849, 0.0
        %3945 = vadd.xlane.f32.xlu0 %v3944
        %v3946 = vpop.xlane.xlu0 %3945
        %v3947 = vsel %vm3922, %v3856, 0.0
        %3948 = vadd.xlane.f32.xlu0 %v3947
        %v3949 = vpop.xlane.xlu0 %3948
        %v3950 = vsel %vm3922, %v3863, 0.0
        %3951 = vadd.xlane.f32.xlu0 %v3950
        %v3952 = vpop.xlane.xlu0 %3951
        %v3953 = vsel %vm3922, %v3870, 0.0
        %3954 = vadd.xlane.f32.xlu0 %v3953
        %v3955 = vpop.xlane.xlu0 %3954
        %v3956 = vsel %vm3922, %v3877, 0.0
        %3957 = vadd.xlane.f32.xlu0 %v3956
        %v3958 = vpop.xlane.xlu0 %3957
        %v3959 = vsel %vm3922, %v3884, 0.0
        %3960 = vadd.xlane.f32.xlu0 %v3959
        %v3961 = vpop.xlane.xlu0 %3960
        %v3962 = vsel %vm3922, %v3891, 0.0
        %3963 = vadd.xlane.f32.xlu0 %v3962
        %v3964 = vpop.xlane.xlu0 %3963
        %v3965 = vsel %vm3922, %v3898, 0.0
        %3966 = vadd.xlane.f32.xlu0 %v3965
        %v3967 = vpop.xlane.xlu0 %3966
        %v3968 = vsel %vm3922, %v3905, 0.0
        %3969 = vadd.xlane.f32.xlu0 %v3968
        %v3970 = vpop.xlane.xlu0 %3969
        %v3971 = vmul.f32 %v702, %v702
        %v3972 = vmul.f32 %v703, %v703
        %v3973 = vmul.f32 %v704, %v704
        %v3974 = vmul.f32 %v705, %v705
        %v3975 = vmul.f32 %v706, %v706
        %v3976 = vmul.f32 %v707, %v707
        %v3977 = vmul.f32 %v708, %v708
        %v3978 = vmul.f32 %v709, %v709
        %v3979 = vmul.f32 %v710, %v710
        %v3980 = vmul.f32 %v711, %v711
        %v3981 = vmul.f32 %v712, %v712
        %v3982 = vmul.f32 %v713, %v713
        %v3983 = vmul.f32 %v714, %v714
        %v3984 = vmul.f32 %v715, %v715
        %v3985 = vmul.f32 %v716, %v716
        %v3986 = vmul.f32 %v717, %v717
        %v3987 = vsub.f32 %v1118, %v3971
        %v3988 = vsub.f32 %v1119, %v3972
        %v3989 = vsub.f32 %v1120, %v3973
        %v3990 = vsub.f32 %v1121, %v3974
        %v3991 = vsub.f32 %v1122, %v3975
        %v3992 = vsub.f32 %v1123, %v3976
        %v3993 = vsub.f32 %v1124, %v3977
        %v3994 = vsub.f32 %v1125, %v3978
        %v3995 = vsub.f32 %v1126, %v3979
        %v3996 = vsub.f32 %v1127, %v3980
        %v3997 = vsub.f32 %v1128, %v3981
        %v3998 = vsub.f32 %v1129, %v3982
        %v3999 = vsub.f32 %v1130, %v3983
        %v4000 = vsub.f32 %v1131, %v3984
        %v4001 = vsub.f32 %v1132, %v3985
        %v4002 = vsub.f32 %v1133, %v3986
        %v4003 = vmax.f32 %v3987, 0.0
        %v4004 = vmax.f32 %v3988, 0.0
        %v4005 = vmax.f32 %v3989, 0.0
        %v4006 = vmax.f32 %v3990, 0.0
        %v4007 = vmax.f32 %v3991, 0.0
        %v4008 = vmax.f32 %v3992, 0.0
        %v4009 = vmax.f32 %v3993, 0.0
        %v4010 = vmax.f32 %v3994, 0.0
        %v4011 = vmax.f32 %v3995, 0.0
        %v4012 = vmax.f32 %v3996, 0.0
        %v4013 = vmax.f32 %v3997, 0.0
        %v4014 = vmax.f32 %v3998, 0.0
        %v4015 = vmax.f32 %v3999, 0.0
        %v4016 = vmax.f32 %v4000, 0.0
        %v4017 = vmax.f32 %v4001, 0.0
        %v4018 = vmax.f32 %v4002, 0.0
        %v4019 = vsub.f32 %v702, %v3925
        %v4020 = vsub.f32 %v703, %v3928
        %v4021 = vsub.f32 %v704, %v3931
        %v4022 = vsub.f32 %v705, %v3934
        %v4023 = vsub.f32 %v706, %v3937
        %v4024 = vsub.f32 %v707, %v3940
        %v4025 = vsub.f32 %v708, %v3943
        %v4026 = vsub.f32 %v709, %v3946
        %v4027 = vsub.f32 %v710, %v3949
        %v4028 = vsub.f32 %v711, %v3952
        %v4029 = vsub.f32 %v712, %v3955
        %v4030 = vsub.f32 %v713, %v3958
        %v4031 = vsub.f32 %v714, %v3961
        %v4032 = vsub.f32 %v715, %v3964
        %v4033 = vsub.f32 %v716, %v3967
        %v4034 = vsub.f32 %v717, %v3970
        %v4035 = vmul.f32 %v4019, %v4019
        %v4036 = vmul.f32 %v4020, %v4020
        %v4037 = vmul.f32 %v4021, %v4021
        %v4038 = vmul.f32 %v4022, %v4022
        %v4039 = vmul.f32 %v4023, %v4023
        %v4040 = vmul.f32 %v4024, %v4024
        %v4041 = vmul.f32 %v4025, %v4025
        %v4042 = vmul.f32 %v4026, %v4026
        %v4043 = vmul.f32 %v4027, %v4027
        %v4044 = vmul.f32 %v4028, %v4028
        %v4045 = vmul.f32 %v4029, %v4029
        %v4046 = vmul.f32 %v4030, %v4030
        %v4047 = vmul.f32 %v4031, %v4031
        %v4048 = vmul.f32 %v4032, %v4032
        %v4049 = vmul.f32 %v4033, %v4033
        %v4050 = vmul.f32 %v4034, %v4034
        %v4051 = vadd.f32 %v4003, %v4035
        %v4052 = vadd.f32 %v4004, %v4036
        %v4053 = vadd.f32 %v4005, %v4037
        %v4054 = vadd.f32 %v4006, %v4038
        %v4055 = vadd.f32 %v4007, %v4039
        %v4056 = vadd.f32 %v4008, %v4040
        %v4057 = vadd.f32 %v4009, %v4041
        %v4058 = vadd.f32 %v4010, %v4042
        %v4059 = vadd.f32 %v4011, %v4043
        %v4060 = vadd.f32 %v4012, %v4044
        %v4061 = vadd.f32 %v4013, %v4045
        %v4062 = vadd.f32 %v4014, %v4046
        %v4063 = vadd.f32 %v4015, %v4047
        %v4064 = vadd.f32 %v4016, %v4048
        %v4065 = vadd.f32 %v4017, %v4049
        %v4066 = vadd.f32 %v4018, %v4050
        %v4067 = vadd.f32 %v4051, 1e-08
        %v4068 = vadd.f32 %v4052, 1e-08
        %v4069 = vadd.f32 %v4053, 1e-08
        %v4070 = vadd.f32 %v4054, 1e-08
        %v4071 = vadd.f32 %v4055, 1e-08
        %v4072 = vadd.f32 %v4056, 1e-08
        %v4073 = vadd.f32 %v4057, 1e-08
        %v4074 = vadd.f32 %v4058, 1e-08
        %v4075 = vadd.f32 %v4059, 1e-08
        %v4076 = vadd.f32 %v4060, 1e-08
        %v4077 = vadd.f32 %v4061, 1e-08
        %v4078 = vadd.f32 %v4062, 1e-08
        %v4079 = vadd.f32 %v4063, 1e-08
        %v4080 = vadd.f32 %v4064, 1e-08
        %v4081 = vadd.f32 %v4065, 1e-08
        %v4082 = vadd.f32 %v4066, 1e-08
        %v4083 = vrsqrt.pop %v4067
        %v4084 = vmul.f32 %v4067, %v4083
        %vm4085 = vcmp.eq.f32.partialorder %v4067, inf
        %v4086 = vsel %vm4085, %v4067, %v4084
        %vm4087 = vcmp.eq.f32.partialorder %v4067, 0.0
        %v4088 = vand.u32 %v4067, 2147483648
        %v4089 = vsel %vm4087, %v4088, %v4086
        %v4090 = vrsqrt.pop %v4068
        %v4091 = vmul.f32 %v4068, %v4090
        %vm4092 = vcmp.eq.f32.partialorder %v4068, inf
        %v4093 = vsel %vm4092, %v4068, %v4091
        %vm4094 = vcmp.eq.f32.partialorder %v4068, 0.0
        %v4095 = vand.u32 %v4068, 2147483648
        %v4096 = vsel %vm4094, %v4095, %v4093
        %v4097 = vrsqrt.pop %v4069
        %v4098 = vmul.f32 %v4069, %v4097
        %vm4099 = vcmp.eq.f32.partialorder %v4069, inf
        %v4100 = vsel %vm4099, %v4069, %v4098
        %vm4101 = vcmp.eq.f32.partialorder %v4069, 0.0
        %v4102 = vand.u32 %v4069, 2147483648
        %v4103 = vsel %vm4101, %v4102, %v4100
        %v4104 = vrsqrt.pop %v4070
        %v4105 = vmul.f32 %v4070, %v4104
        %vm4106 = vcmp.eq.f32.partialorder %v4070, inf
        %v4107 = vsel %vm4106, %v4070, %v4105
        %vm4108 = vcmp.eq.f32.partialorder %v4070, 0.0
        %v4109 = vand.u32 %v4070, 2147483648
        %v4110 = vsel %vm4108, %v4109, %v4107
        %v4111 = vrsqrt.pop %v4071
        %v4112 = vmul.f32 %v4071, %v4111
        %vm4113 = vcmp.eq.f32.partialorder %v4071, inf
        %v4114 = vsel %vm4113, %v4071, %v4112
        %vm4115 = vcmp.eq.f32.partialorder %v4071, 0.0
        %v4116 = vand.u32 %v4071, 2147483648
        %v4117 = vsel %vm4115, %v4116, %v4114
        %v4118 = vrsqrt.pop %v4072
        %v4119 = vmul.f32 %v4072, %v4118
        %vm4120 = vcmp.eq.f32.partialorder %v4072, inf
        %v4121 = vsel %vm4120, %v4072, %v4119
        %vm4122 = vcmp.eq.f32.partialorder %v4072, 0.0
        %v4123 = vand.u32 %v4072, 2147483648
        %v4124 = vsel %vm4122, %v4123, %v4121
        %v4125 = vrsqrt.pop %v4073
        %v4126 = vmul.f32 %v4073, %v4125
        %vm4127 = vcmp.eq.f32.partialorder %v4073, inf
        %v4128 = vsel %vm4127, %v4073, %v4126
        %vm4129 = vcmp.eq.f32.partialorder %v4073, 0.0
        %v4130 = vand.u32 %v4073, 2147483648
        %v4131 = vsel %vm4129, %v4130, %v4128
        %v4132 = vrsqrt.pop %v4074
        %v4133 = vmul.f32 %v4074, %v4132
        %vm4134 = vcmp.eq.f32.partialorder %v4074, inf
        %v4135 = vsel %vm4134, %v4074, %v4133
        %vm4136 = vcmp.eq.f32.partialorder %v4074, 0.0
        %v4137 = vand.u32 %v4074, 2147483648
        %v4138 = vsel %vm4136, %v4137, %v4135
        %v4139 = vrsqrt.pop %v4075
        %v4140 = vmul.f32 %v4075, %v4139
        %vm4141 = vcmp.eq.f32.partialorder %v4075, inf
        %v4142 = vsel %vm4141, %v4075, %v4140
        %vm4143 = vcmp.eq.f32.partialorder %v4075, 0.0
        %v4144 = vand.u32 %v4075, 2147483648
        %v4145 = vsel %vm4143, %v4144, %v4142
        %v4146 = vrsqrt.pop %v4076
        %v4147 = vmul.f32 %v4076, %v4146
        %vm4148 = vcmp.eq.f32.partialorder %v4076, inf
        %v4149 = vsel %vm4148, %v4076, %v4147
        %vm4150 = vcmp.eq.f32.partialorder %v4076, 0.0
        %v4151 = vand.u32 %v4076, 2147483648
        %v4152 = vsel %vm4150, %v4151, %v4149
        %v4153 = vrsqrt.pop %v4077
        %v4154 = vmul.f32 %v4077, %v4153
        %vm4155 = vcmp.eq.f32.partialorder %v4077, inf
        %v4156 = vsel %vm4155, %v4077, %v4154
        %vm4157 = vcmp.eq.f32.partialorder %v4077, 0.0
        %v4158 = vand.u32 %v4077, 2147483648
        %v4159 = vsel %vm4157, %v4158, %v4156
        %v4160 = vrsqrt.pop %v4078
        %v4161 = vmul.f32 %v4078, %v4160
        %vm4162 = vcmp.eq.f32.partialorder %v4078, inf
        %v4163 = vsel %vm4162, %v4078, %v4161
        %vm4164 = vcmp.eq.f32.partialorder %v4078, 0.0
        %v4165 = vand.u32 %v4078, 2147483648
        %v4166 = vsel %vm4164, %v4165, %v4163
        %v4167 = vrsqrt.pop %v4079
        %v4168 = vmul.f32 %v4079, %v4167
        %vm4169 = vcmp.eq.f32.partialorder %v4079, inf
        %v4170 = vsel %vm4169, %v4079, %v4168
        %vm4171 = vcmp.eq.f32.partialorder %v4079, 0.0
        %v4172 = vand.u32 %v4079, 2147483648
        %v4173 = vsel %vm4171, %v4172, %v4170
        %v4174 = vrsqrt.pop %v4080
        %v4175 = vmul.f32 %v4080, %v4174
        %vm4176 = vcmp.eq.f32.partialorder %v4080, inf
        %v4177 = vsel %vm4176, %v4080, %v4175
        %vm4178 = vcmp.eq.f32.partialorder %v4080, 0.0
        %v4179 = vand.u32 %v4080, 2147483648
        %v4180 = vsel %vm4178, %v4179, %v4177
        %v4181 = vrsqrt.pop %v4081
        %v4182 = vmul.f32 %v4081, %v4181
        %vm4183 = vcmp.eq.f32.partialorder %v4081, inf
        %v4184 = vsel %vm4183, %v4081, %v4182
        %vm4185 = vcmp.eq.f32.partialorder %v4081, 0.0
        %v4186 = vand.u32 %v4081, 2147483648
        %v4187 = vsel %vm4185, %v4186, %v4184
        %v4188 = vrsqrt.pop %v4082
        %v4189 = vmul.f32 %v4082, %v4188
        %vm4190 = vcmp.eq.f32.partialorder %v4082, inf
        %v4191 = vsel %vm4190, %v4082, %v4189
        %vm4192 = vcmp.eq.f32.partialorder %v4082, 0.0
        %v4193 = vand.u32 %v4082, 2147483648
        %v4194 = vsel %vm4192, %v4193, %v4191
        %v4197 = vlaneseq
        %v4198 = vshrl.u32 %v4197, 7
        %v4199 = vsub.s32 0, %v4198
        %v4200 = vrot.slane %v1136, %v4199
        %4202 = vbcast.lane.b32.xlu0 %v4200, 256
        %v4203 = vpop.permute.xlu0 %4202
        %s4205 = sor.u32 256, 8
        %4206 = vbcast.lane.b32.xlu0 %v4200, %s4205
        %v4207 = vpop.permute.xlu0 %4206
        %v4208 = vlaneseq
        %v4209 = vshrl.u32 %v4208, 7
        %v4210 = vsub.s32 1, %v4209
        %v4211 = vrot.slane %v1136, %v4210
        %4213 = vbcast.lane.b32.xlu0 %v4211, 256
        %v4214 = vpop.permute.xlu0 %4213
        %s4216 = sor.u32 256, 8
        %4217 = vbcast.lane.b32.xlu0 %v4211, %s4216
        %v4218 = vpop.permute.xlu0 %4217
        %v4219 = vlaneseq
        %v4220 = vshrl.u32 %v4219, 7
        %v4221 = vsub.s32 2, %v4220
        %v4222 = vrot.slane %v1136, %v4221
        %4224 = vbcast.lane.b32.xlu0 %v4222, 256
        %v4225 = vpop.permute.xlu0 %4224
        %s4227 = sor.u32 256, 8
        %4228 = vbcast.lane.b32.xlu0 %v4222, %s4227
        %v4229 = vpop.permute.xlu0 %4228
        %v4230 = vlaneseq
        %v4231 = vshrl.u32 %v4230, 7
        %v4232 = vsub.s32 3, %v4231
        %v4233 = vrot.slane %v1136, %v4232
        %4235 = vbcast.lane.b32.xlu0 %v4233, 256
        %v4236 = vpop.permute.xlu0 %4235
        %s4238 = sor.u32 256, 8
        %4239 = vbcast.lane.b32.xlu0 %v4233, %s4238
        %v4240 = vpop.permute.xlu0 %4239
        %v4241 = vlaneseq
        %v4242 = vshrl.u32 %v4241, 7
        %v4243 = vsub.s32 4, %v4242
        %v4244 = vrot.slane %v1136, %v4243
        %4246 = vbcast.lane.b32.xlu0 %v4244, 256
        %v4247 = vpop.permute.xlu0 %4246
        %s4249 = sor.u32 256, 8
        %4250 = vbcast.lane.b32.xlu0 %v4244, %s4249
        %v4251 = vpop.permute.xlu0 %4250
        %v4252 = vlaneseq
        %v4253 = vshrl.u32 %v4252, 7
        %v4254 = vsub.s32 5, %v4253
        %v4255 = vrot.slane %v1136, %v4254
        %4257 = vbcast.lane.b32.xlu0 %v4255, 256
        %v4258 = vpop.permute.xlu0 %4257
        %s4260 = sor.u32 256, 8
        %4261 = vbcast.lane.b32.xlu0 %v4255, %s4260
        %v4262 = vpop.permute.xlu0 %4261
        %v4263 = vlaneseq
        %v4264 = vshrl.u32 %v4263, 7
        %v4265 = vsub.s32 6, %v4264
        %v4266 = vrot.slane %v1136, %v4265
        %4268 = vbcast.lane.b32.xlu0 %v4266, 256
        %v4269 = vpop.permute.xlu0 %4268
        %s4271 = sor.u32 256, 8
        %4272 = vbcast.lane.b32.xlu0 %v4266, %s4271
        %v4273 = vpop.permute.xlu0 %4272
        %v4274 = vlaneseq
        %v4275 = vshrl.u32 %v4274, 7
        %v4276 = vsub.s32 7, %v4275
        %v4277 = vrot.slane %v1136, %v4276
        %4279 = vbcast.lane.b32.xlu0 %v4277, 256
        %v4280 = vpop.permute.xlu0 %4279
        %s4282 = sor.u32 256, 8
        %4283 = vbcast.lane.b32.xlu0 %v4277, %s4282
        %v4284 = vpop.permute.xlu0 %4283
        %v4285 = vlaneseq
        %v4286 = vshrl.u32 %v4285, 7
        %v4287 = vsub.s32 0, %v4286
        %v4288 = vrot.slane %v1137, %v4287
        %4290 = vbcast.lane.b32.xlu0 %v4288, 256
        %v4291 = vpop.permute.xlu0 %4290
        %s4293 = sor.u32 256, 8
        %4294 = vbcast.lane.b32.xlu0 %v4288, %s4293
        %v4295 = vpop.permute.xlu0 %4294
        %v4296 = vlaneseq
        %v4297 = vshrl.u32 %v4296, 7
        %v4298 = vsub.s32 1, %v4297
        %v4299 = vrot.slane %v1137, %v4298
        %4301 = vbcast.lane.b32.xlu0 %v4299, 256
        %v4302 = vpop.permute.xlu0 %4301
        %s4304 = sor.u32 256, 8
        %4305 = vbcast.lane.b32.xlu0 %v4299, %s4304
        %v4306 = vpop.permute.xlu0 %4305
        %v4307 = vlaneseq
        %v4308 = vshrl.u32 %v4307, 7
        %v4309 = vsub.s32 2, %v4308
        %v4310 = vrot.slane %v1137, %v4309
        %4312 = vbcast.lane.b32.xlu0 %v4310, 256
        %v4313 = vpop.permute.xlu0 %4312
        %s4315 = sor.u32 256, 8
        %4316 = vbcast.lane.b32.xlu0 %v4310, %s4315
        %v4317 = vpop.permute.xlu0 %4316
        %v4318 = vlaneseq
        %v4319 = vshrl.u32 %v4318, 7
        %v4320 = vsub.s32 3, %v4319
        %v4321 = vrot.slane %v1137, %v4320
        %4323 = vbcast.lane.b32.xlu0 %v4321, 256
        %v4324 = vpop.permute.xlu0 %4323
        %s4326 = sor.u32 256, 8
        %4327 = vbcast.lane.b32.xlu0 %v4321, %s4326
        %v4328 = vpop.permute.xlu0 %4327
        %v4329 = vlaneseq
        %v4330 = vshrl.u32 %v4329, 7
        %v4331 = vsub.s32 4, %v4330
        %v4332 = vrot.slane %v1137, %v4331
        %4334 = vbcast.lane.b32.xlu0 %v4332, 256
        %v4335 = vpop.permute.xlu0 %4334
        %s4337 = sor.u32 256, 8
        %4338 = vbcast.lane.b32.xlu0 %v4332, %s4337
        %v4339 = vpop.permute.xlu0 %4338
        %v4340 = vlaneseq
        %v4341 = vshrl.u32 %v4340, 7
        %v4342 = vsub.s32 5, %v4341
        %v4343 = vrot.slane %v1137, %v4342
        %4345 = vbcast.lane.b32.xlu0 %v4343, 256
        %v4346 = vpop.permute.xlu0 %4345
        %s4348 = sor.u32 256, 8
        %4349 = vbcast.lane.b32.xlu0 %v4343, %s4348
        %v4350 = vpop.permute.xlu0 %4349
        %v4351 = vlaneseq
        %v4352 = vshrl.u32 %v4351, 7
        %v4353 = vsub.s32 6, %v4352
        %v4354 = vrot.slane %v1137, %v4353
        %4356 = vbcast.lane.b32.xlu0 %v4354, 256
        %v4357 = vpop.permute.xlu0 %4356
        %s4359 = sor.u32 256, 8
        %4360 = vbcast.lane.b32.xlu0 %v4354, %s4359
        %v4361 = vpop.permute.xlu0 %4360
        %v4362 = vlaneseq
        %v4363 = vshrl.u32 %v4362, 7
        %v4364 = vsub.s32 7, %v4363
        %v4365 = vrot.slane %v1137, %v4364
        %4367 = vbcast.lane.b32.xlu0 %v4365, 256
        %v4368 = vpop.permute.xlu0 %4367
        %s4370 = sor.u32 256, 8
        %4371 = vbcast.lane.b32.xlu0 %v4365, %s4370
        %v4372 = vpop.permute.xlu0 %4371
        %v4405 = vmul.f32 %v4089, %v4203
        %v4406 = vmul.f32 %v4096, %v4207
        %v4407 = vmul.f32 %v4089, %v4214
        %v4408 = vmul.f32 %v4096, %v4218
        %v4409 = vmul.f32 %v4089, %v4225
        %v4410 = vmul.f32 %v4096, %v4229
        %v4411 = vmul.f32 %v4089, %v4236
        %v4412 = vmul.f32 %v4096, %v4240
        %v4413 = vmul.f32 %v4089, %v4247
        %v4414 = vmul.f32 %v4096, %v4251
        %v4415 = vmul.f32 %v4089, %v4258
        %v4416 = vmul.f32 %v4096, %v4262
        %v4417 = vmul.f32 %v4089, %v4269
        %v4418 = vmul.f32 %v4096, %v4273
        %v4419 = vmul.f32 %v4089, %v4280
        %v4420 = vmul.f32 %v4096, %v4284
        %v4421 = vmul.f32 %v4089, %v4291
        %v4422 = vmul.f32 %v4096, %v4295
        %v4423 = vmul.f32 %v4089, %v4302
        %v4424 = vmul.f32 %v4096, %v4306
        %v4425 = vmul.f32 %v4089, %v4313
        %v4426 = vmul.f32 %v4096, %v4317
        %v4427 = vmul.f32 %v4089, %v4324
        %v4428 = vmul.f32 %v4096, %v4328
        %v4429 = vmul.f32 %v4089, %v4335
        %v4430 = vmul.f32 %v4096, %v4339
        %v4431 = vmul.f32 %v4089, %v4346
        %v4432 = vmul.f32 %v4096, %v4350
        %v4433 = vmul.f32 %v4089, %v4357
        %v4434 = vmul.f32 %v4096, %v4361
        %v4435 = vmul.f32 %v4089, %v4368
        %v4436 = vmul.f32 %v4096, %v4372
        %v4437 = vmul.f32 %v4103, %v4203
        %v4438 = vmul.f32 %v4110, %v4207
        %v4439 = vmul.f32 %v4103, %v4214
        %v4440 = vmul.f32 %v4110, %v4218
        %v4441 = vmul.f32 %v4103, %v4225
        %v4442 = vmul.f32 %v4110, %v4229
        %v4443 = vmul.f32 %v4103, %v4236
        %v4444 = vmul.f32 %v4110, %v4240
        %v4445 = vmul.f32 %v4103, %v4247
        %v4446 = vmul.f32 %v4110, %v4251
        %v4447 = vmul.f32 %v4103, %v4258
        %v4448 = vmul.f32 %v4110, %v4262
        %v4449 = vmul.f32 %v4103, %v4269
        %v4450 = vmul.f32 %v4110, %v4273
        %v4451 = vmul.f32 %v4103, %v4280
        %v4452 = vmul.f32 %v4110, %v4284
        %v4453 = vmul.f32 %v4103, %v4291
        %v4454 = vmul.f32 %v4110, %v4295
        %v4455 = vmul.f32 %v4103, %v4302
        %v4456 = vmul.f32 %v4110, %v4306
        %v4457 = vmul.f32 %v4103, %v4313
        %v4458 = vmul.f32 %v4110, %v4317
        %v4459 = vmul.f32 %v4103, %v4324
        %v4460 = vmul.f32 %v4110, %v4328
        %v4461 = vmul.f32 %v4103, %v4335
        %v4462 = vmul.f32 %v4110, %v4339
        %v4463 = vmul.f32 %v4103, %v4346
        %v4464 = vmul.f32 %v4110, %v4350
        %v4465 = vmul.f32 %v4103, %v4357
        %v4466 = vmul.f32 %v4110, %v4361
        %v4467 = vmul.f32 %v4103, %v4368
        %v4468 = vmul.f32 %v4110, %v4372
        %v4469 = vmul.f32 %v4117, %v4203
        %v4470 = vmul.f32 %v4124, %v4207
        %v4471 = vmul.f32 %v4117, %v4214
        %v4472 = vmul.f32 %v4124, %v4218
        %v4473 = vmul.f32 %v4117, %v4225
        %v4474 = vmul.f32 %v4124, %v4229
        %v4475 = vmul.f32 %v4117, %v4236
        %v4476 = vmul.f32 %v4124, %v4240
        %v4477 = vmul.f32 %v4117, %v4247
        %v4478 = vmul.f32 %v4124, %v4251
        %v4479 = vmul.f32 %v4117, %v4258
        %v4480 = vmul.f32 %v4124, %v4262
        %v4481 = vmul.f32 %v4117, %v4269
        %v4482 = vmul.f32 %v4124, %v4273
        %v4483 = vmul.f32 %v4117, %v4280
        %v4484 = vmul.f32 %v4124, %v4284
        %v4485 = vmul.f32 %v4117, %v4291
        %v4486 = vmul.f32 %v4124, %v4295
        %v4487 = vmul.f32 %v4117, %v4302
        %v4488 = vmul.f32 %v4124, %v4306
        %v4489 = vmul.f32 %v4117, %v4313
        %v4490 = vmul.f32 %v4124, %v4317
        %v4491 = vmul.f32 %v4117, %v4324
        %v4492 = vmul.f32 %v4124, %v4328
        %v4493 = vmul.f32 %v4117, %v4335
        %v4494 = vmul.f32 %v4124, %v4339
        %v4495 = vmul.f32 %v4117, %v4346
        %v4496 = vmul.f32 %v4124, %v4350
        %v4497 = vmul.f32 %v4117, %v4357
        %v4498 = vmul.f32 %v4124, %v4361
        %v4499 = vmul.f32 %v4117, %v4368
        %v4500 = vmul.f32 %v4124, %v4372
        %v4501 = vmul.f32 %v4131, %v4203
        %v4502 = vmul.f32 %v4138, %v4207
        %v4503 = vmul.f32 %v4131, %v4214
        %v4504 = vmul.f32 %v4138, %v4218
        %v4505 = vmul.f32 %v4131, %v4225
        %v4506 = vmul.f32 %v4138, %v4229
        %v4507 = vmul.f32 %v4131, %v4236
        %v4508 = vmul.f32 %v4138, %v4240
        %v4509 = vmul.f32 %v4131, %v4247
        %v4510 = vmul.f32 %v4138, %v4251
        %v4511 = vmul.f32 %v4131, %v4258
        %v4512 = vmul.f32 %v4138, %v4262
        %v4513 = vmul.f32 %v4131, %v4269
        %v4514 = vmul.f32 %v4138, %v4273
        %v4515 = vmul.f32 %v4131, %v4280
        %v4516 = vmul.f32 %v4138, %v4284
        %v4517 = vmul.f32 %v4131, %v4291
        %v4518 = vmul.f32 %v4138, %v4295
        %v4519 = vmul.f32 %v4131, %v4302
        %v4520 = vmul.f32 %v4138, %v4306
        %v4521 = vmul.f32 %v4131, %v4313
        %v4522 = vmul.f32 %v4138, %v4317
        %v4523 = vmul.f32 %v4131, %v4324
        %v4524 = vmul.f32 %v4138, %v4328
        %v4525 = vmul.f32 %v4131, %v4335
        %v4526 = vmul.f32 %v4138, %v4339
        %v4527 = vmul.f32 %v4131, %v4346
        %v4528 = vmul.f32 %v4138, %v4350
        %v4529 = vmul.f32 %v4131, %v4357
        %v4530 = vmul.f32 %v4138, %v4361
        %v4531 = vmul.f32 %v4131, %v4368
        %v4532 = vmul.f32 %v4138, %v4372
        %v4533 = vmul.f32 %v4145, %v4203
        %v4534 = vmul.f32 %v4152, %v4207
        %v4535 = vmul.f32 %v4145, %v4214
        %v4536 = vmul.f32 %v4152, %v4218
        %v4537 = vmul.f32 %v4145, %v4225
        %v4538 = vmul.f32 %v4152, %v4229
        %v4539 = vmul.f32 %v4145, %v4236
        %v4540 = vmul.f32 %v4152, %v4240
        %v4541 = vmul.f32 %v4145, %v4247
        %v4542 = vmul.f32 %v4152, %v4251
        %v4543 = vmul.f32 %v4145, %v4258
        %v4544 = vmul.f32 %v4152, %v4262
        %v4545 = vmul.f32 %v4145, %v4269
        %v4546 = vmul.f32 %v4152, %v4273
        %v4547 = vmul.f32 %v4145, %v4280
        %v4548 = vmul.f32 %v4152, %v4284
        %v4549 = vmul.f32 %v4145, %v4291
        %v4550 = vmul.f32 %v4152, %v4295
        %v4551 = vmul.f32 %v4145, %v4302
        %v4552 = vmul.f32 %v4152, %v4306
        %v4553 = vmul.f32 %v4145, %v4313
        %v4554 = vmul.f32 %v4152, %v4317
        %v4555 = vmul.f32 %v4145, %v4324
        %v4556 = vmul.f32 %v4152, %v4328
        %v4557 = vmul.f32 %v4145, %v4335
        %v4558 = vmul.f32 %v4152, %v4339
        %v4559 = vmul.f32 %v4145, %v4346
        %v4560 = vmul.f32 %v4152, %v4350
        %v4561 = vmul.f32 %v4145, %v4357
        %v4562 = vmul.f32 %v4152, %v4361
        %v4563 = vmul.f32 %v4145, %v4368
        %v4564 = vmul.f32 %v4152, %v4372
        %v4565 = vmul.f32 %v4159, %v4203
        %v4566 = vmul.f32 %v4166, %v4207
        %v4567 = vmul.f32 %v4159, %v4214
        %v4568 = vmul.f32 %v4166, %v4218
        %v4569 = vmul.f32 %v4159, %v4225
        %v4570 = vmul.f32 %v4166, %v4229
        %v4571 = vmul.f32 %v4159, %v4236
        %v4572 = vmul.f32 %v4166, %v4240
        %v4573 = vmul.f32 %v4159, %v4247
        %v4574 = vmul.f32 %v4166, %v4251
        %v4575 = vmul.f32 %v4159, %v4258
        %v4576 = vmul.f32 %v4166, %v4262
        %v4577 = vmul.f32 %v4159, %v4269
        %v4578 = vmul.f32 %v4166, %v4273
        %v4579 = vmul.f32 %v4159, %v4280
        %v4580 = vmul.f32 %v4166, %v4284
        %v4581 = vmul.f32 %v4159, %v4291
        %v4582 = vmul.f32 %v4166, %v4295
        %v4583 = vmul.f32 %v4159, %v4302
        %v4584 = vmul.f32 %v4166, %v4306
        %v4585 = vmul.f32 %v4159, %v4313
        %v4586 = vmul.f32 %v4166, %v4317
        %v4587 = vmul.f32 %v4159, %v4324
        %v4588 = vmul.f32 %v4166, %v4328
        %v4589 = vmul.f32 %v4159, %v4335
        %v4590 = vmul.f32 %v4166, %v4339
        %v4591 = vmul.f32 %v4159, %v4346
        %v4592 = vmul.f32 %v4166, %v4350
        %v4593 = vmul.f32 %v4159, %v4357
        %v4594 = vmul.f32 %v4166, %v4361
        %v4595 = vmul.f32 %v4159, %v4368
        %v4596 = vmul.f32 %v4166, %v4372
        %v4597 = vmul.f32 %v4173, %v4203
        %v4598 = vmul.f32 %v4180, %v4207
        %v4599 = vmul.f32 %v4173, %v4214
        %v4600 = vmul.f32 %v4180, %v4218
        %v4601 = vmul.f32 %v4173, %v4225
        %v4602 = vmul.f32 %v4180, %v4229
        %v4603 = vmul.f32 %v4173, %v4236
        %v4604 = vmul.f32 %v4180, %v4240
        %v4605 = vmul.f32 %v4173, %v4247
        %v4606 = vmul.f32 %v4180, %v4251
        %v4607 = vmul.f32 %v4173, %v4258
        %v4608 = vmul.f32 %v4180, %v4262
        %v4609 = vmul.f32 %v4173, %v4269
        %v4610 = vmul.f32 %v4180, %v4273
        %v4611 = vmul.f32 %v4173, %v4280
        %v4612 = vmul.f32 %v4180, %v4284
        %v4613 = vmul.f32 %v4173, %v4291
        %v4614 = vmul.f32 %v4180, %v4295
        %v4615 = vmul.f32 %v4173, %v4302
        %v4616 = vmul.f32 %v4180, %v4306
        %v4617 = vmul.f32 %v4173, %v4313
        %v4618 = vmul.f32 %v4180, %v4317
        %v4619 = vmul.f32 %v4173, %v4324
        %v4620 = vmul.f32 %v4180, %v4328
        %v4621 = vmul.f32 %v4173, %v4335
        %v4622 = vmul.f32 %v4180, %v4339
        %v4623 = vmul.f32 %v4173, %v4346
        %v4624 = vmul.f32 %v4180, %v4350
        %v4625 = vmul.f32 %v4173, %v4357
        %v4626 = vmul.f32 %v4180, %v4361
        %v4627 = vmul.f32 %v4173, %v4368
        %v4628 = vmul.f32 %v4180, %v4372
        %v4629 = vmul.f32 %v4187, %v4203
        %v4630 = vmul.f32 %v4194, %v4207
        %v4631 = vmul.f32 %v4187, %v4214
        %v4632 = vmul.f32 %v4194, %v4218
        %v4633 = vmul.f32 %v4187, %v4225
        %v4634 = vmul.f32 %v4194, %v4229
        %v4635 = vmul.f32 %v4187, %v4236
        %v4636 = vmul.f32 %v4194, %v4240
        %v4637 = vmul.f32 %v4187, %v4247
        %v4638 = vmul.f32 %v4194, %v4251
        %v4639 = vmul.f32 %v4187, %v4258
        %v4640 = vmul.f32 %v4194, %v4262
        %v4641 = vmul.f32 %v4187, %v4269
        %v4642 = vmul.f32 %v4194, %v4273
        %v4643 = vmul.f32 %v4187, %v4280
        %v4644 = vmul.f32 %v4194, %v4284
        %v4645 = vmul.f32 %v4187, %v4291
        %v4646 = vmul.f32 %v4194, %v4295
        %v4647 = vmul.f32 %v4187, %v4302
        %v4648 = vmul.f32 %v4194, %v4306
        %v4649 = vmul.f32 %v4187, %v4313
        %v4650 = vmul.f32 %v4194, %v4317
        %v4651 = vmul.f32 %v4187, %v4324
        %v4652 = vmul.f32 %v4194, %v4328
        %v4653 = vmul.f32 %v4187, %v4335
        %v4654 = vmul.f32 %v4194, %v4339
        %v4655 = vmul.f32 %v4187, %v4346
        %v4656 = vmul.f32 %v4194, %v4350
        %v4657 = vmul.f32 %v4187, %v4357
        %v4658 = vmul.f32 %v4194, %v4361
        %v4659 = vmul.f32 %v4187, %v4368
        %v4660 = vmul.f32 %v4194, %v4372
        %4917 = vset.pattern.permute.xlu0 0
        %4918 = vperm.xlu0 %4917, %v4405
        %v4919 = vpop.permute.xlu0 %4918
        %4920 = vset.pattern.permute.xlu0 0
        %4921 = vperm.xlu0 %4920, %v4406
        %v4922 = vpop.permute.xlu0 %4921
        %4923 = vset.pattern.permute.xlu0 0
        %4924 = vperm.xlu0 %4923, %v4407
        %v4925 = vpop.permute.xlu0 %4924
        %4926 = vset.pattern.permute.xlu0 0
        %4927 = vperm.xlu0 %4926, %v4408
        %v4928 = vpop.permute.xlu0 %4927
        %4929 = vset.pattern.permute.xlu0 0
        %4930 = vperm.xlu0 %4929, %v4409
        %v4931 = vpop.permute.xlu0 %4930
        %4932 = vset.pattern.permute.xlu0 0
        %4933 = vperm.xlu0 %4932, %v4410
        %v4934 = vpop.permute.xlu0 %4933
        %4935 = vset.pattern.permute.xlu0 0
        %4936 = vperm.xlu0 %4935, %v4411
        %v4937 = vpop.permute.xlu0 %4936
        %4938 = vset.pattern.permute.xlu0 0
        %4939 = vperm.xlu0 %4938, %v4412
        %v4940 = vpop.permute.xlu0 %4939
        %4941 = vset.pattern.permute.xlu0 0
        %4942 = vperm.xlu0 %4941, %v4413
        %v4943 = vpop.permute.xlu0 %4942
        %4944 = vset.pattern.permute.xlu0 0
        %4945 = vperm.xlu0 %4944, %v4414
        %v4946 = vpop.permute.xlu0 %4945
        %4947 = vset.pattern.permute.xlu0 0
        %4948 = vperm.xlu0 %4947, %v4415
        %v4949 = vpop.permute.xlu0 %4948
        %4950 = vset.pattern.permute.xlu0 0
        %4951 = vperm.xlu0 %4950, %v4416
        %v4952 = vpop.permute.xlu0 %4951
        %4953 = vset.pattern.permute.xlu0 0
        %4954 = vperm.xlu0 %4953, %v4417
        %v4955 = vpop.permute.xlu0 %4954
        %4956 = vset.pattern.permute.xlu0 0
        %4957 = vperm.xlu0 %4956, %v4418
        %v4958 = vpop.permute.xlu0 %4957
        %4959 = vset.pattern.permute.xlu0 0
        %4960 = vperm.xlu0 %4959, %v4419
        %v4961 = vpop.permute.xlu0 %4960
        %4962 = vset.pattern.permute.xlu0 0
        %4963 = vperm.xlu0 %4962, %v4420
        %v4964 = vpop.permute.xlu0 %4963
        %4965 = vset.pattern.permute.xlu0 0
        %4966 = vperm.xlu0 %4965, %v4421
        %v4967 = vpop.permute.xlu0 %4966
        %4968 = vset.pattern.permute.xlu0 0
        %4969 = vperm.xlu0 %4968, %v4422
        %v4970 = vpop.permute.xlu0 %4969
        %4971 = vset.pattern.permute.xlu0 0
        %4972 = vperm.xlu0 %4971, %v4423
        %v4973 = vpop.permute.xlu0 %4972
        %4974 = vset.pattern.permute.xlu0 0
        %4975 = vperm.xlu0 %4974, %v4424
        %v4976 = vpop.permute.xlu0 %4975
        %4977 = vset.pattern.permute.xlu0 0
        %4978 = vperm.xlu0 %4977, %v4425
        %v4979 = vpop.permute.xlu0 %4978
        %4980 = vset.pattern.permute.xlu0 0
        %4981 = vperm.xlu0 %4980, %v4426
        %v4982 = vpop.permute.xlu0 %4981
        %4983 = vset.pattern.permute.xlu0 0
        %4984 = vperm.xlu0 %4983, %v4427
        %v4985 = vpop.permute.xlu0 %4984
        %4986 = vset.pattern.permute.xlu0 0
        %4987 = vperm.xlu0 %4986, %v4428
        %v4988 = vpop.permute.xlu0 %4987
        %4989 = vset.pattern.permute.xlu0 0
        %4990 = vperm.xlu0 %4989, %v4429
        %v4991 = vpop.permute.xlu0 %4990
        %4992 = vset.pattern.permute.xlu0 0
        %4993 = vperm.xlu0 %4992, %v4430
        %v4994 = vpop.permute.xlu0 %4993
        %4995 = vset.pattern.permute.xlu0 0
        %4996 = vperm.xlu0 %4995, %v4431
        %v4997 = vpop.permute.xlu0 %4996
        %4998 = vset.pattern.permute.xlu0 0
        %4999 = vperm.xlu0 %4998, %v4432
        %v5000 = vpop.permute.xlu0 %4999
        %5001 = vset.pattern.permute.xlu0 0
        %5002 = vperm.xlu0 %5001, %v4433
        %v5003 = vpop.permute.xlu0 %5002
        %5004 = vset.pattern.permute.xlu0 0
        %5005 = vperm.xlu0 %5004, %v4434
        %v5006 = vpop.permute.xlu0 %5005
        %5007 = vset.pattern.permute.xlu0 0
        %5008 = vperm.xlu0 %5007, %v4435
        %v5009 = vpop.permute.xlu0 %5008
        %5010 = vset.pattern.permute.xlu0 0
        %5011 = vperm.xlu0 %5010, %v4436
        %v5012 = vpop.permute.xlu0 %5011
        %5013 = vset.pattern.permute.xlu0 0
        %5014 = vperm.xlu0 %5013, %v4437
        %v5015 = vpop.permute.xlu0 %5014
        %5016 = vset.pattern.permute.xlu0 0
        %5017 = vperm.xlu0 %5016, %v4438
        %v5018 = vpop.permute.xlu0 %5017
        %5019 = vset.pattern.permute.xlu0 0
        %5020 = vperm.xlu0 %5019, %v4439
        %v5021 = vpop.permute.xlu0 %5020
        %5022 = vset.pattern.permute.xlu0 0
        %5023 = vperm.xlu0 %5022, %v4440
        %v5024 = vpop.permute.xlu0 %5023
        %5025 = vset.pattern.permute.xlu0 0
        %5026 = vperm.xlu0 %5025, %v4441
        %v5027 = vpop.permute.xlu0 %5026
        %5028 = vset.pattern.permute.xlu0 0
        %5029 = vperm.xlu0 %5028, %v4442
        %v5030 = vpop.permute.xlu0 %5029
        %5031 = vset.pattern.permute.xlu0 0
        %5032 = vperm.xlu0 %5031, %v4443
        %v5033 = vpop.permute.xlu0 %5032
        %5034 = vset.pattern.permute.xlu0 0
        %5035 = vperm.xlu0 %5034, %v4444
        %v5036 = vpop.permute.xlu0 %5035
        %5037 = vset.pattern.permute.xlu0 0
        %5038 = vperm.xlu0 %5037, %v4445
        %v5039 = vpop.permute.xlu0 %5038
        %5040 = vset.pattern.permute.xlu0 0
        %5041 = vperm.xlu0 %5040, %v4446
        %v5042 = vpop.permute.xlu0 %5041
        %5043 = vset.pattern.permute.xlu0 0
        %5044 = vperm.xlu0 %5043, %v4447
        %v5045 = vpop.permute.xlu0 %5044
        %5046 = vset.pattern.permute.xlu0 0
        %5047 = vperm.xlu0 %5046, %v4448
        %v5048 = vpop.permute.xlu0 %5047
        %5049 = vset.pattern.permute.xlu0 0
        %5050 = vperm.xlu0 %5049, %v4449
        %v5051 = vpop.permute.xlu0 %5050
        %5052 = vset.pattern.permute.xlu0 0
        %5053 = vperm.xlu0 %5052, %v4450
        %v5054 = vpop.permute.xlu0 %5053
        %5055 = vset.pattern.permute.xlu0 0
        %5056 = vperm.xlu0 %5055, %v4451
        %v5057 = vpop.permute.xlu0 %5056
        %5058 = vset.pattern.permute.xlu0 0
        %5059 = vperm.xlu0 %5058, %v4452
        %v5060 = vpop.permute.xlu0 %5059
        %5061 = vset.pattern.permute.xlu0 0
        %5062 = vperm.xlu0 %5061, %v4453
        %v5063 = vpop.permute.xlu0 %5062
        %5064 = vset.pattern.permute.xlu0 0
        %5065 = vperm.xlu0 %5064, %v4454
        %v5066 = vpop.permute.xlu0 %5065
        %5067 = vset.pattern.permute.xlu0 0
        %5068 = vperm.xlu0 %5067, %v4455
        %v5069 = vpop.permute.xlu0 %5068
        %5070 = vset.pattern.permute.xlu0 0
        %5071 = vperm.xlu0 %5070, %v4456
        %v5072 = vpop.permute.xlu0 %5071
        %5073 = vset.pattern.permute.xlu0 0
        %5074 = vperm.xlu0 %5073, %v4457
        %v5075 = vpop.permute.xlu0 %5074
        %5076 = vset.pattern.permute.xlu0 0
        %5077 = vperm.xlu0 %5076, %v4458
        %v5078 = vpop.permute.xlu0 %5077
        %5079 = vset.pattern.permute.xlu0 0
        %5080 = vperm.xlu0 %5079, %v4459
        %v5081 = vpop.permute.xlu0 %5080
        %5082 = vset.pattern.permute.xlu0 0
        %5083 = vperm.xlu0 %5082, %v4460
        %v5084 = vpop.permute.xlu0 %5083
        %5085 = vset.pattern.permute.xlu0 0
        %5086 = vperm.xlu0 %5085, %v4461
        %v5087 = vpop.permute.xlu0 %5086
        %5088 = vset.pattern.permute.xlu0 0
        %5089 = vperm.xlu0 %5088, %v4462
        %v5090 = vpop.permute.xlu0 %5089
        %5091 = vset.pattern.permute.xlu0 0
        %5092 = vperm.xlu0 %5091, %v4463
        %v5093 = vpop.permute.xlu0 %5092
        %5094 = vset.pattern.permute.xlu0 0
        %5095 = vperm.xlu0 %5094, %v4464
        %v5096 = vpop.permute.xlu0 %5095
        %5097 = vset.pattern.permute.xlu0 0
        %5098 = vperm.xlu0 %5097, %v4465
        %v5099 = vpop.permute.xlu0 %5098
        %5100 = vset.pattern.permute.xlu0 0
        %5101 = vperm.xlu0 %5100, %v4466
        %v5102 = vpop.permute.xlu0 %5101
        %5103 = vset.pattern.permute.xlu0 0
        %5104 = vperm.xlu0 %5103, %v4467
        %v5105 = vpop.permute.xlu0 %5104
        %5106 = vset.pattern.permute.xlu0 0
        %5107 = vperm.xlu0 %5106, %v4468
        %v5108 = vpop.permute.xlu0 %5107
        %5109 = vset.pattern.permute.xlu0 0
        %5110 = vperm.xlu0 %5109, %v4469
        %v5111 = vpop.permute.xlu0 %5110
        %5112 = vset.pattern.permute.xlu0 0
        %5113 = vperm.xlu0 %5112, %v4470
        %v5114 = vpop.permute.xlu0 %5113
        %5115 = vset.pattern.permute.xlu0 0
        %5116 = vperm.xlu0 %5115, %v4471
        %v5117 = vpop.permute.xlu0 %5116
        %5118 = vset.pattern.permute.xlu0 0
        %5119 = vperm.xlu0 %5118, %v4472
        %v5120 = vpop.permute.xlu0 %5119
        %5121 = vset.pattern.permute.xlu0 0
        %5122 = vperm.xlu0 %5121, %v4473
        %v5123 = vpop.permute.xlu0 %5122
        %5124 = vset.pattern.permute.xlu0 0
        %5125 = vperm.xlu0 %5124, %v4474
        %v5126 = vpop.permute.xlu0 %5125
        %5127 = vset.pattern.permute.xlu0 0
        %5128 = vperm.xlu0 %5127, %v4475
        %v5129 = vpop.permute.xlu0 %5128
        %5130 = vset.pattern.permute.xlu0 0
        %5131 = vperm.xlu0 %5130, %v4476
        %v5132 = vpop.permute.xlu0 %5131
        %5133 = vset.pattern.permute.xlu0 0
        %5134 = vperm.xlu0 %5133, %v4477
        %v5135 = vpop.permute.xlu0 %5134
        %5136 = vset.pattern.permute.xlu0 0
        %5137 = vperm.xlu0 %5136, %v4478
        %v5138 = vpop.permute.xlu0 %5137
        %5139 = vset.pattern.permute.xlu0 0
        %5140 = vperm.xlu0 %5139, %v4479
        %v5141 = vpop.permute.xlu0 %5140
        %5142 = vset.pattern.permute.xlu0 0
        %5143 = vperm.xlu0 %5142, %v4480
        %v5144 = vpop.permute.xlu0 %5143
        %5145 = vset.pattern.permute.xlu0 0
        %5146 = vperm.xlu0 %5145, %v4481
        %v5147 = vpop.permute.xlu0 %5146
        %5148 = vset.pattern.permute.xlu0 0
        %5149 = vperm.xlu0 %5148, %v4482
        %v5150 = vpop.permute.xlu0 %5149
        %5151 = vset.pattern.permute.xlu0 0
        %5152 = vperm.xlu0 %5151, %v4483
        %v5153 = vpop.permute.xlu0 %5152
        %5154 = vset.pattern.permute.xlu0 0
        %5155 = vperm.xlu0 %5154, %v4484
        %v5156 = vpop.permute.xlu0 %5155
        %5157 = vset.pattern.permute.xlu0 0
        %5158 = vperm.xlu0 %5157, %v4485
        %v5159 = vpop.permute.xlu0 %5158
        %5160 = vset.pattern.permute.xlu0 0
        %5161 = vperm.xlu0 %5160, %v4486
        %v5162 = vpop.permute.xlu0 %5161
        %5163 = vset.pattern.permute.xlu0 0
        %5164 = vperm.xlu0 %5163, %v4487
        %v5165 = vpop.permute.xlu0 %5164
        %5166 = vset.pattern.permute.xlu0 0
        %5167 = vperm.xlu0 %5166, %v4488
        %v5168 = vpop.permute.xlu0 %5167
        %5169 = vset.pattern.permute.xlu0 0
        %5170 = vperm.xlu0 %5169, %v4489
        %v5171 = vpop.permute.xlu0 %5170
        %5172 = vset.pattern.permute.xlu0 0
        %5173 = vperm.xlu0 %5172, %v4490
        %v5174 = vpop.permute.xlu0 %5173
        %5175 = vset.pattern.permute.xlu0 0
        %5176 = vperm.xlu0 %5175, %v4491
        %v5177 = vpop.permute.xlu0 %5176
        %5178 = vset.pattern.permute.xlu0 0
        %5179 = vperm.xlu0 %5178, %v4492
        %v5180 = vpop.permute.xlu0 %5179
        %5181 = vset.pattern.permute.xlu0 0
        %5182 = vperm.xlu0 %5181, %v4493
        %v5183 = vpop.permute.xlu0 %5182
        %5184 = vset.pattern.permute.xlu0 0
        %5185 = vperm.xlu0 %5184, %v4494
        %v5186 = vpop.permute.xlu0 %5185
        %5187 = vset.pattern.permute.xlu0 0
        %5188 = vperm.xlu0 %5187, %v4495
        %v5189 = vpop.permute.xlu0 %5188
        %5190 = vset.pattern.permute.xlu0 0
        %5191 = vperm.xlu0 %5190, %v4496
        %v5192 = vpop.permute.xlu0 %5191
        %5193 = vset.pattern.permute.xlu0 0
        %5194 = vperm.xlu0 %5193, %v4497
        %v5195 = vpop.permute.xlu0 %5194
        %5196 = vset.pattern.permute.xlu0 0
        %5197 = vperm.xlu0 %5196, %v4498
        %v5198 = vpop.permute.xlu0 %5197
        %5199 = vset.pattern.permute.xlu0 0
        %5200 = vperm.xlu0 %5199, %v4499
        %v5201 = vpop.permute.xlu0 %5200
        %5202 = vset.pattern.permute.xlu0 0
        %5203 = vperm.xlu0 %5202, %v4500
        %v5204 = vpop.permute.xlu0 %5203
        %5205 = vset.pattern.permute.xlu0 0
        %5206 = vperm.xlu0 %5205, %v4501
        %v5207 = vpop.permute.xlu0 %5206
        %5208 = vset.pattern.permute.xlu0 0
        %5209 = vperm.xlu0 %5208, %v4502
        %v5210 = vpop.permute.xlu0 %5209
        %5211 = vset.pattern.permute.xlu0 0
        %5212 = vperm.xlu0 %5211, %v4503
        %v5213 = vpop.permute.xlu0 %5212
        %5214 = vset.pattern.permute.xlu0 0
        %5215 = vperm.xlu0 %5214, %v4504
        %v5216 = vpop.permute.xlu0 %5215
        %5217 = vset.pattern.permute.xlu0 0
        %5218 = vperm.xlu0 %5217, %v4505
        %v5219 = vpop.permute.xlu0 %5218
        %5220 = vset.pattern.permute.xlu0 0
        %5221 = vperm.xlu0 %5220, %v4506
        %v5222 = vpop.permute.xlu0 %5221
        %5223 = vset.pattern.permute.xlu0 0
        %5224 = vperm.xlu0 %5223, %v4507
        %v5225 = vpop.permute.xlu0 %5224
        %5226 = vset.pattern.permute.xlu0 0
        %5227 = vperm.xlu0 %5226, %v4508
        %v5228 = vpop.permute.xlu0 %5227
        %5229 = vset.pattern.permute.xlu0 0
        %5230 = vperm.xlu0 %5229, %v4509
        %v5231 = vpop.permute.xlu0 %5230
        %5232 = vset.pattern.permute.xlu0 0
        %5233 = vperm.xlu0 %5232, %v4510
        %v5234 = vpop.permute.xlu0 %5233
        %5235 = vset.pattern.permute.xlu0 0
        %5236 = vperm.xlu0 %5235, %v4511
        %v5237 = vpop.permute.xlu0 %5236
        %5238 = vset.pattern.permute.xlu0 0
        %5239 = vperm.xlu0 %5238, %v4512
        %v5240 = vpop.permute.xlu0 %5239
        %5241 = vset.pattern.permute.xlu0 0
        %5242 = vperm.xlu0 %5241, %v4513
        %v5243 = vpop.permute.xlu0 %5242
        %5244 = vset.pattern.permute.xlu0 0
        %5245 = vperm.xlu0 %5244, %v4514
        %v5246 = vpop.permute.xlu0 %5245
        %5247 = vset.pattern.permute.xlu0 0
        %5248 = vperm.xlu0 %5247, %v4515
        %v5249 = vpop.permute.xlu0 %5248
        %5250 = vset.pattern.permute.xlu0 0
        %5251 = vperm.xlu0 %5250, %v4516
        %v5252 = vpop.permute.xlu0 %5251
        %5253 = vset.pattern.permute.xlu0 0
        %5254 = vperm.xlu0 %5253, %v4517
        %v5255 = vpop.permute.xlu0 %5254
        %5256 = vset.pattern.permute.xlu0 0
        %5257 = vperm.xlu0 %5256, %v4518
        %v5258 = vpop.permute.xlu0 %5257
        %5259 = vset.pattern.permute.xlu0 0
        %5260 = vperm.xlu0 %5259, %v4519
        %v5261 = vpop.permute.xlu0 %5260
        %5262 = vset.pattern.permute.xlu0 0
        %5263 = vperm.xlu0 %5262, %v4520
        %v5264 = vpop.permute.xlu0 %5263
        %5265 = vset.pattern.permute.xlu0 0
        %5266 = vperm.xlu0 %5265, %v4521
        %v5267 = vpop.permute.xlu0 %5266
        %5268 = vset.pattern.permute.xlu0 0
        %5269 = vperm.xlu0 %5268, %v4522
        %v5270 = vpop.permute.xlu0 %5269
        %5271 = vset.pattern.permute.xlu0 0
        %5272 = vperm.xlu0 %5271, %v4523
        %v5273 = vpop.permute.xlu0 %5272
        %5274 = vset.pattern.permute.xlu0 0
        %5275 = vperm.xlu0 %5274, %v4524
        %v5276 = vpop.permute.xlu0 %5275
        %5277 = vset.pattern.permute.xlu0 0
        %5278 = vperm.xlu0 %5277, %v4525
        %v5279 = vpop.permute.xlu0 %5278
        %5280 = vset.pattern.permute.xlu0 0
        %5281 = vperm.xlu0 %5280, %v4526
        %v5282 = vpop.permute.xlu0 %5281
        %5283 = vset.pattern.permute.xlu0 0
        %5284 = vperm.xlu0 %5283, %v4527
        %v5285 = vpop.permute.xlu0 %5284
        %5286 = vset.pattern.permute.xlu0 0
        %5287 = vperm.xlu0 %5286, %v4528
        %v5288 = vpop.permute.xlu0 %5287
        %5289 = vset.pattern.permute.xlu0 0
        %5290 = vperm.xlu0 %5289, %v4529
        %v5291 = vpop.permute.xlu0 %5290
        %5292 = vset.pattern.permute.xlu0 0
        %5293 = vperm.xlu0 %5292, %v4530
        %v5294 = vpop.permute.xlu0 %5293
        %5295 = vset.pattern.permute.xlu0 0
        %5296 = vperm.xlu0 %5295, %v4531
        %v5297 = vpop.permute.xlu0 %5296
        %5298 = vset.pattern.permute.xlu0 0
        %5299 = vperm.xlu0 %5298, %v4532
        %v5300 = vpop.permute.xlu0 %5299
        %5301 = vset.pattern.permute.xlu0 0
        %5302 = vperm.xlu0 %5301, %v4533
        %v5303 = vpop.permute.xlu0 %5302
        %5304 = vset.pattern.permute.xlu0 0
        %5305 = vperm.xlu0 %5304, %v4534
        %v5306 = vpop.permute.xlu0 %5305
        %5307 = vset.pattern.permute.xlu0 0
        %5308 = vperm.xlu0 %5307, %v4535
        %v5309 = vpop.permute.xlu0 %5308
        %5310 = vset.pattern.permute.xlu0 0
        %5311 = vperm.xlu0 %5310, %v4536
        %v5312 = vpop.permute.xlu0 %5311
        %5313 = vset.pattern.permute.xlu0 0
        %5314 = vperm.xlu0 %5313, %v4537
        %v5315 = vpop.permute.xlu0 %5314
        %5316 = vset.pattern.permute.xlu0 0
        %5317 = vperm.xlu0 %5316, %v4538
        %v5318 = vpop.permute.xlu0 %5317
        %5319 = vset.pattern.permute.xlu0 0
        %5320 = vperm.xlu0 %5319, %v4539
        %v5321 = vpop.permute.xlu0 %5320
        %5322 = vset.pattern.permute.xlu0 0
        %5323 = vperm.xlu0 %5322, %v4540
        %v5324 = vpop.permute.xlu0 %5323
        %5325 = vset.pattern.permute.xlu0 0
        %5326 = vperm.xlu0 %5325, %v4541
        %v5327 = vpop.permute.xlu0 %5326
        %5328 = vset.pattern.permute.xlu0 0
        %5329 = vperm.xlu0 %5328, %v4542
        %v5330 = vpop.permute.xlu0 %5329
        %5331 = vset.pattern.permute.xlu0 0
        %5332 = vperm.xlu0 %5331, %v4543
        %v5333 = vpop.permute.xlu0 %5332
        %5334 = vset.pattern.permute.xlu0 0
        %5335 = vperm.xlu0 %5334, %v4544
        %v5336 = vpop.permute.xlu0 %5335
        %5337 = vset.pattern.permute.xlu0 0
        %5338 = vperm.xlu0 %5337, %v4545
        %v5339 = vpop.permute.xlu0 %5338
        %5340 = vset.pattern.permute.xlu0 0
        %5341 = vperm.xlu0 %5340, %v4546
        %v5342 = vpop.permute.xlu0 %5341
        %5343 = vset.pattern.permute.xlu0 0
        %5344 = vperm.xlu0 %5343, %v4547
        %v5345 = vpop.permute.xlu0 %5344
        %5346 = vset.pattern.permute.xlu0 0
        %5347 = vperm.xlu0 %5346, %v4548
        %v5348 = vpop.permute.xlu0 %5347
        %5349 = vset.pattern.permute.xlu0 0
        %5350 = vperm.xlu0 %5349, %v4549
        %v5351 = vpop.permute.xlu0 %5350
        %5352 = vset.pattern.permute.xlu0 0
        %5353 = vperm.xlu0 %5352, %v4550
        %v5354 = vpop.permute.xlu0 %5353
        %5355 = vset.pattern.permute.xlu0 0
        %5356 = vperm.xlu0 %5355, %v4551
        %v5357 = vpop.permute.xlu0 %5356
        %5358 = vset.pattern.permute.xlu0 0
        %5359 = vperm.xlu0 %5358, %v4552
        %v5360 = vpop.permute.xlu0 %5359
        %5361 = vset.pattern.permute.xlu0 0
        %5362 = vperm.xlu0 %5361, %v4553
        %v5363 = vpop.permute.xlu0 %5362
        %5364 = vset.pattern.permute.xlu0 0
        %5365 = vperm.xlu0 %5364, %v4554
        %v5366 = vpop.permute.xlu0 %5365
        %5367 = vset.pattern.permute.xlu0 0
        %5368 = vperm.xlu0 %5367, %v4555
        %v5369 = vpop.permute.xlu0 %5368
        %5370 = vset.pattern.permute.xlu0 0
        %5371 = vperm.xlu0 %5370, %v4556
        %v5372 = vpop.permute.xlu0 %5371
        %5373 = vset.pattern.permute.xlu0 0
        %5374 = vperm.xlu0 %5373, %v4557
        %v5375 = vpop.permute.xlu0 %5374
        %5376 = vset.pattern.permute.xlu0 0
        %5377 = vperm.xlu0 %5376, %v4558
        %v5378 = vpop.permute.xlu0 %5377
        %5379 = vset.pattern.permute.xlu0 0
        %5380 = vperm.xlu0 %5379, %v4559
        %v5381 = vpop.permute.xlu0 %5380
        %5382 = vset.pattern.permute.xlu0 0
        %5383 = vperm.xlu0 %5382, %v4560
        %v5384 = vpop.permute.xlu0 %5383
        %5385 = vset.pattern.permute.xlu0 0
        %5386 = vperm.xlu0 %5385, %v4561
        %v5387 = vpop.permute.xlu0 %5386
        %5388 = vset.pattern.permute.xlu0 0
        %5389 = vperm.xlu0 %5388, %v4562
        %v5390 = vpop.permute.xlu0 %5389
        %5391 = vset.pattern.permute.xlu0 0
        %5392 = vperm.xlu0 %5391, %v4563
        %v5393 = vpop.permute.xlu0 %5392
        %5394 = vset.pattern.permute.xlu0 0
        %5395 = vperm.xlu0 %5394, %v4564
        %v5396 = vpop.permute.xlu0 %5395
        %5397 = vset.pattern.permute.xlu0 0
        %5398 = vperm.xlu0 %5397, %v4565
        %v5399 = vpop.permute.xlu0 %5398
        %5400 = vset.pattern.permute.xlu0 0
        %5401 = vperm.xlu0 %5400, %v4566
        %v5402 = vpop.permute.xlu0 %5401
        %5403 = vset.pattern.permute.xlu0 0
        %5404 = vperm.xlu0 %5403, %v4567
        %v5405 = vpop.permute.xlu0 %5404
        %5406 = vset.pattern.permute.xlu0 0
        %5407 = vperm.xlu0 %5406, %v4568
        %v5408 = vpop.permute.xlu0 %5407
        %5409 = vset.pattern.permute.xlu0 0
        %5410 = vperm.xlu0 %5409, %v4569
        %v5411 = vpop.permute.xlu0 %5410
        %5412 = vset.pattern.permute.xlu0 0
        %5413 = vperm.xlu0 %5412, %v4570
        %v5414 = vpop.permute.xlu0 %5413
        %5415 = vset.pattern.permute.xlu0 0
        %5416 = vperm.xlu0 %5415, %v4571
        %v5417 = vpop.permute.xlu0 %5416
        %5418 = vset.pattern.permute.xlu0 0
        %5419 = vperm.xlu0 %5418, %v4572
        %v5420 = vpop.permute.xlu0 %5419
        %5421 = vset.pattern.permute.xlu0 0
        %5422 = vperm.xlu0 %5421, %v4573
        %v5423 = vpop.permute.xlu0 %5422
        %5424 = vset.pattern.permute.xlu0 0
        %5425 = vperm.xlu0 %5424, %v4574
        %v5426 = vpop.permute.xlu0 %5425
        %5427 = vset.pattern.permute.xlu0 0
        %5428 = vperm.xlu0 %5427, %v4575
        %v5429 = vpop.permute.xlu0 %5428
        %5430 = vset.pattern.permute.xlu0 0
        %5431 = vperm.xlu0 %5430, %v4576
        %v5432 = vpop.permute.xlu0 %5431
        %5433 = vset.pattern.permute.xlu0 0
        %5434 = vperm.xlu0 %5433, %v4577
        %v5435 = vpop.permute.xlu0 %5434
        %5436 = vset.pattern.permute.xlu0 0
        %5437 = vperm.xlu0 %5436, %v4578
        %v5438 = vpop.permute.xlu0 %5437
        %5439 = vset.pattern.permute.xlu0 0
        %5440 = vperm.xlu0 %5439, %v4579
        %v5441 = vpop.permute.xlu0 %5440
        %5442 = vset.pattern.permute.xlu0 0
        %5443 = vperm.xlu0 %5442, %v4580
        %v5444 = vpop.permute.xlu0 %5443
        %5445 = vset.pattern.permute.xlu0 0
        %5446 = vperm.xlu0 %5445, %v4581
        %v5447 = vpop.permute.xlu0 %5446
        %5448 = vset.pattern.permute.xlu0 0
        %5449 = vperm.xlu0 %5448, %v4582
        %v5450 = vpop.permute.xlu0 %5449
        %5451 = vset.pattern.permute.xlu0 0
        %5452 = vperm.xlu0 %5451, %v4583
        %v5453 = vpop.permute.xlu0 %5452
        %5454 = vset.pattern.permute.xlu0 0
        %5455 = vperm.xlu0 %5454, %v4584
        %v5456 = vpop.permute.xlu0 %5455
        %5457 = vset.pattern.permute.xlu0 0
        %5458 = vperm.xlu0 %5457, %v4585
        %v5459 = vpop.permute.xlu0 %5458
        %5460 = vset.pattern.permute.xlu0 0
        %5461 = vperm.xlu0 %5460, %v4586
        %v5462 = vpop.permute.xlu0 %5461
        %5463 = vset.pattern.permute.xlu0 0
        %5464 = vperm.xlu0 %5463, %v4587
        %v5465 = vpop.permute.xlu0 %5464
        %5466 = vset.pattern.permute.xlu0 0
        %5467 = vperm.xlu0 %5466, %v4588
        %v5468 = vpop.permute.xlu0 %5467
        %5469 = vset.pattern.permute.xlu0 0
        %5470 = vperm.xlu0 %5469, %v4589
        %v5471 = vpop.permute.xlu0 %5470
        %5472 = vset.pattern.permute.xlu0 0
        %5473 = vperm.xlu0 %5472, %v4590
        %v5474 = vpop.permute.xlu0 %5473
        %5475 = vset.pattern.permute.xlu0 0
        %5476 = vperm.xlu0 %5475, %v4591
        %v5477 = vpop.permute.xlu0 %5476
        %5478 = vset.pattern.permute.xlu0 0
        %5479 = vperm.xlu0 %5478, %v4592
        %v5480 = vpop.permute.xlu0 %5479
        %5481 = vset.pattern.permute.xlu0 0
        %5482 = vperm.xlu0 %5481, %v4593
        %v5483 = vpop.permute.xlu0 %5482
        %5484 = vset.pattern.permute.xlu0 0
        %5485 = vperm.xlu0 %5484, %v4594
        %v5486 = vpop.permute.xlu0 %5485
        %5487 = vset.pattern.permute.xlu0 0
        %5488 = vperm.xlu0 %5487, %v4595
        %v5489 = vpop.permute.xlu0 %5488
        %5490 = vset.pattern.permute.xlu0 0
        %5491 = vperm.xlu0 %5490, %v4596
        %v5492 = vpop.permute.xlu0 %5491
        %5493 = vset.pattern.permute.xlu0 0
        %5494 = vperm.xlu0 %5493, %v4597
        %v5495 = vpop.permute.xlu0 %5494
        %5496 = vset.pattern.permute.xlu0 0
        %5497 = vperm.xlu0 %5496, %v4598
        %v5498 = vpop.permute.xlu0 %5497
        %5499 = vset.pattern.permute.xlu0 0
        %5500 = vperm.xlu0 %5499, %v4599
        %v5501 = vpop.permute.xlu0 %5500
        %5502 = vset.pattern.permute.xlu0 0
        %5503 = vperm.xlu0 %5502, %v4600
        %v5504 = vpop.permute.xlu0 %5503
        %5505 = vset.pattern.permute.xlu0 0
        %5506 = vperm.xlu0 %5505, %v4601
        %v5507 = vpop.permute.xlu0 %5506
        %5508 = vset.pattern.permute.xlu0 0
        %5509 = vperm.xlu0 %5508, %v4602
        %v5510 = vpop.permute.xlu0 %5509
        %5511 = vset.pattern.permute.xlu0 0
        %5512 = vperm.xlu0 %5511, %v4603
        %v5513 = vpop.permute.xlu0 %5512
        %5514 = vset.pattern.permute.xlu0 0
        %5515 = vperm.xlu0 %5514, %v4604
        %v5516 = vpop.permute.xlu0 %5515
        %5517 = vset.pattern.permute.xlu0 0
        %5518 = vperm.xlu0 %5517, %v4605
        %v5519 = vpop.permute.xlu0 %5518
        %5520 = vset.pattern.permute.xlu0 0
        %5521 = vperm.xlu0 %5520, %v4606
        %v5522 = vpop.permute.xlu0 %5521
        %5523 = vset.pattern.permute.xlu0 0
        %5524 = vperm.xlu0 %5523, %v4607
        %v5525 = vpop.permute.xlu0 %5524
        %5526 = vset.pattern.permute.xlu0 0
        %5527 = vperm.xlu0 %5526, %v4608
        %v5528 = vpop.permute.xlu0 %5527
        %5529 = vset.pattern.permute.xlu0 0
        %5530 = vperm.xlu0 %5529, %v4609
        %v5531 = vpop.permute.xlu0 %5530
        %5532 = vset.pattern.permute.xlu0 0
        %5533 = vperm.xlu0 %5532, %v4610
        %v5534 = vpop.permute.xlu0 %5533
        %5535 = vset.pattern.permute.xlu0 0
        %5536 = vperm.xlu0 %5535, %v4611
        %v5537 = vpop.permute.xlu0 %5536
        %5538 = vset.pattern.permute.xlu0 0
        %5539 = vperm.xlu0 %5538, %v4612
        %v5540 = vpop.permute.xlu0 %5539
        %5541 = vset.pattern.permute.xlu0 0
        %5542 = vperm.xlu0 %5541, %v4613
        %v5543 = vpop.permute.xlu0 %5542
        %5544 = vset.pattern.permute.xlu0 0
        %5545 = vperm.xlu0 %5544, %v4614
        %v5546 = vpop.permute.xlu0 %5545
        %5547 = vset.pattern.permute.xlu0 0
        %5548 = vperm.xlu0 %5547, %v4615
        %v5549 = vpop.permute.xlu0 %5548
        %5550 = vset.pattern.permute.xlu0 0
        %5551 = vperm.xlu0 %5550, %v4616
        %v5552 = vpop.permute.xlu0 %5551
        %5553 = vset.pattern.permute.xlu0 0
        %5554 = vperm.xlu0 %5553, %v4617
        %v5555 = vpop.permute.xlu0 %5554
        %5556 = vset.pattern.permute.xlu0 0
        %5557 = vperm.xlu0 %5556, %v4618
        %v5558 = vpop.permute.xlu0 %5557
        %5559 = vset.pattern.permute.xlu0 0
        %5560 = vperm.xlu0 %5559, %v4619
        %v5561 = vpop.permute.xlu0 %5560
        %5562 = vset.pattern.permute.xlu0 0
        %5563 = vperm.xlu0 %5562, %v4620
        %v5564 = vpop.permute.xlu0 %5563
        %5565 = vset.pattern.permute.xlu0 0
        %5566 = vperm.xlu0 %5565, %v4621
        %v5567 = vpop.permute.xlu0 %5566
        %5568 = vset.pattern.permute.xlu0 0
        %5569 = vperm.xlu0 %5568, %v4622
        %v5570 = vpop.permute.xlu0 %5569
        %5571 = vset.pattern.permute.xlu0 0
        %5572 = vperm.xlu0 %5571, %v4623
        %v5573 = vpop.permute.xlu0 %5572
        %5574 = vset.pattern.permute.xlu0 0
        %5575 = vperm.xlu0 %5574, %v4624
        %v5576 = vpop.permute.xlu0 %5575
        %5577 = vset.pattern.permute.xlu0 0
        %5578 = vperm.xlu0 %5577, %v4625
        %v5579 = vpop.permute.xlu0 %5578
        %5580 = vset.pattern.permute.xlu0 0
        %5581 = vperm.xlu0 %5580, %v4626
        %v5582 = vpop.permute.xlu0 %5581
        %5583 = vset.pattern.permute.xlu0 0
        %5584 = vperm.xlu0 %5583, %v4627
        %v5585 = vpop.permute.xlu0 %5584
        %5586 = vset.pattern.permute.xlu0 0
        %5587 = vperm.xlu0 %5586, %v4628
        %v5588 = vpop.permute.xlu0 %5587
        %5589 = vset.pattern.permute.xlu0 0
        %5590 = vperm.xlu0 %5589, %v4629
        %v5591 = vpop.permute.xlu0 %5590
        %5592 = vset.pattern.permute.xlu0 0
        %5593 = vperm.xlu0 %5592, %v4630
        %v5594 = vpop.permute.xlu0 %5593
        %5595 = vset.pattern.permute.xlu0 0
        %5596 = vperm.xlu0 %5595, %v4631
        %v5597 = vpop.permute.xlu0 %5596
        %5598 = vset.pattern.permute.xlu0 0
        %5599 = vperm.xlu0 %5598, %v4632
        %v5600 = vpop.permute.xlu0 %5599
        %5601 = vset.pattern.permute.xlu0 0
        %5602 = vperm.xlu0 %5601, %v4633
        %v5603 = vpop.permute.xlu0 %5602
        %5604 = vset.pattern.permute.xlu0 0
        %5605 = vperm.xlu0 %5604, %v4634
        %v5606 = vpop.permute.xlu0 %5605
        %5607 = vset.pattern.permute.xlu0 0
        %5608 = vperm.xlu0 %5607, %v4635
        %v5609 = vpop.permute.xlu0 %5608
        %5610 = vset.pattern.permute.xlu0 0
        %5611 = vperm.xlu0 %5610, %v4636
        %v5612 = vpop.permute.xlu0 %5611
        %5613 = vset.pattern.permute.xlu0 0
        %5614 = vperm.xlu0 %5613, %v4637
        %v5615 = vpop.permute.xlu0 %5614
        %5616 = vset.pattern.permute.xlu0 0
        %5617 = vperm.xlu0 %5616, %v4638
        %v5618 = vpop.permute.xlu0 %5617
        %5619 = vset.pattern.permute.xlu0 0
        %5620 = vperm.xlu0 %5619, %v4639
        %v5621 = vpop.permute.xlu0 %5620
        %5622 = vset.pattern.permute.xlu0 0
        %5623 = vperm.xlu0 %5622, %v4640
        %v5624 = vpop.permute.xlu0 %5623
        %5625 = vset.pattern.permute.xlu0 0
        %5626 = vperm.xlu0 %5625, %v4641
        %v5627 = vpop.permute.xlu0 %5626
        %5628 = vset.pattern.permute.xlu0 0
        %5629 = vperm.xlu0 %5628, %v4642
        %v5630 = vpop.permute.xlu0 %5629
        %5631 = vset.pattern.permute.xlu0 0
        %5632 = vperm.xlu0 %5631, %v4643
        %v5633 = vpop.permute.xlu0 %5632
        %5634 = vset.pattern.permute.xlu0 0
        %5635 = vperm.xlu0 %5634, %v4644
        %v5636 = vpop.permute.xlu0 %5635
        %5637 = vset.pattern.permute.xlu0 0
        %5638 = vperm.xlu0 %5637, %v4645
        %v5639 = vpop.permute.xlu0 %5638
        %5640 = vset.pattern.permute.xlu0 0
        %5641 = vperm.xlu0 %5640, %v4646
        %v5642 = vpop.permute.xlu0 %5641
        %5643 = vset.pattern.permute.xlu0 0
        %5644 = vperm.xlu0 %5643, %v4647
        %v5645 = vpop.permute.xlu0 %5644
        %5646 = vset.pattern.permute.xlu0 0
        %5647 = vperm.xlu0 %5646, %v4648
        %v5648 = vpop.permute.xlu0 %5647
        %5649 = vset.pattern.permute.xlu0 0
        %5650 = vperm.xlu0 %5649, %v4649
        %v5651 = vpop.permute.xlu0 %5650
        %5652 = vset.pattern.permute.xlu0 0
        %5653 = vperm.xlu0 %5652, %v4650
        %v5654 = vpop.permute.xlu0 %5653
        %5655 = vset.pattern.permute.xlu0 0
        %5656 = vperm.xlu0 %5655, %v4651
        %v5657 = vpop.permute.xlu0 %5656
        %5658 = vset.pattern.permute.xlu0 0
        %5659 = vperm.xlu0 %5658, %v4652
        %v5660 = vpop.permute.xlu0 %5659
        %5661 = vset.pattern.permute.xlu0 0
        %5662 = vperm.xlu0 %5661, %v4653
        %v5663 = vpop.permute.xlu0 %5662
        %5664 = vset.pattern.permute.xlu0 0
        %5665 = vperm.xlu0 %5664, %v4654
        %v5666 = vpop.permute.xlu0 %5665
        %5667 = vset.pattern.permute.xlu0 0
        %5668 = vperm.xlu0 %5667, %v4655
        %v5669 = vpop.permute.xlu0 %5668
        %5670 = vset.pattern.permute.xlu0 0
        %5671 = vperm.xlu0 %5670, %v4656
        %v5672 = vpop.permute.xlu0 %5671
        %5673 = vset.pattern.permute.xlu0 0
        %5674 = vperm.xlu0 %5673, %v4657
        %v5675 = vpop.permute.xlu0 %5674
        %5676 = vset.pattern.permute.xlu0 0
        %5677 = vperm.xlu0 %5676, %v4658
        %v5678 = vpop.permute.xlu0 %5677
        %5679 = vset.pattern.permute.xlu0 0
        %5680 = vperm.xlu0 %5679, %v4659
        %v5681 = vpop.permute.xlu0 %5680
        %5682 = vset.pattern.permute.xlu0 0
        %5683 = vperm.xlu0 %5682, %v4660
        %v5684 = vpop.permute.xlu0 %5683
        %v5685 = vlaneseq
        %v5686 = vshrl.u32 %v5685, 7
        %v5687 = vsub.s32 %v2632, %v5686
        %v5688 = vrot.slane %v4919, %v5687
        %v5689 = vlaneseq
        %v5690 = vshrl.u32 %v5689, 7
        %v5691 = vsub.s32 %v2637, %v5690
        %v5692 = vrot.slane %v4922, %v5691
        %v5693 = vsel %vm2642, %v5692, %v5688
        %v5694 = vlaneseq
        %v5695 = vshrl.u32 %v5694, 7
        %v5696 = vsub.s32 %v2632, %v5695
        %v5697 = vrot.slane %v4925, %v5696
        %v5698 = vlaneseq
        %v5699 = vshrl.u32 %v5698, 7
        %v5700 = vsub.s32 %v2637, %v5699
        %v5701 = vrot.slane %v4928, %v5700
        %v5702 = vsel %vm2642, %v5701, %v5697
        %v5703 = vlaneseq
        %v5704 = vshrl.u32 %v5703, 7
        %v5705 = vsub.s32 %v2632, %v5704
        %v5706 = vrot.slane %v4931, %v5705
        %v5707 = vlaneseq
        %v5708 = vshrl.u32 %v5707, 7
        %v5709 = vsub.s32 %v2637, %v5708
        %v5710 = vrot.slane %v4934, %v5709
        %v5711 = vsel %vm2642, %v5710, %v5706
        %v5712 = vlaneseq
        %v5713 = vshrl.u32 %v5712, 7
        %v5714 = vsub.s32 %v2632, %v5713
        %v5715 = vrot.slane %v4937, %v5714
        %v5716 = vlaneseq
        %v5717 = vshrl.u32 %v5716, 7
        %v5718 = vsub.s32 %v2637, %v5717
        %v5719 = vrot.slane %v4940, %v5718
        %v5720 = vsel %vm2642, %v5719, %v5715
        %v5721 = vlaneseq
        %v5722 = vshrl.u32 %v5721, 7
        %v5723 = vsub.s32 %v2632, %v5722
        %v5724 = vrot.slane %v4943, %v5723
        %v5725 = vlaneseq
        %v5726 = vshrl.u32 %v5725, 7
        %v5727 = vsub.s32 %v2637, %v5726
        %v5728 = vrot.slane %v4946, %v5727
        %v5729 = vsel %vm2642, %v5728, %v5724
        %v5730 = vlaneseq
        %v5731 = vshrl.u32 %v5730, 7
        %v5732 = vsub.s32 %v2632, %v5731
        %v5733 = vrot.slane %v4949, %v5732
        %v5734 = vlaneseq
        %v5735 = vshrl.u32 %v5734, 7
        %v5736 = vsub.s32 %v2637, %v5735
        %v5737 = vrot.slane %v4952, %v5736
        %v5738 = vsel %vm2642, %v5737, %v5733
        %v5739 = vlaneseq
        %v5740 = vshrl.u32 %v5739, 7
        %v5741 = vsub.s32 %v2632, %v5740
        %v5742 = vrot.slane %v4955, %v5741
        %v5743 = vlaneseq
        %v5744 = vshrl.u32 %v5743, 7
        %v5745 = vsub.s32 %v2637, %v5744
        %v5746 = vrot.slane %v4958, %v5745
        %v5747 = vsel %vm2642, %v5746, %v5742
        %v5748 = vlaneseq
        %v5749 = vshrl.u32 %v5748, 7
        %v5750 = vsub.s32 %v2632, %v5749
        %v5751 = vrot.slane %v4961, %v5750
        %v5752 = vlaneseq
        %v5753 = vshrl.u32 %v5752, 7
        %v5754 = vsub.s32 %v2637, %v5753
        %v5755 = vrot.slane %v4964, %v5754
        %v5756 = vsel %vm2642, %v5755, %v5751
        %v5757 = vlaneseq
        %v5758 = vshrl.u32 %v5757, 7
        %v5759 = vsub.s32 %v2632, %v5758
        %v5760 = vrot.slane %v4967, %v5759
        %v5761 = vlaneseq
        %v5762 = vshrl.u32 %v5761, 7
        %v5763 = vsub.s32 %v2637, %v5762
        %v5764 = vrot.slane %v4970, %v5763
        %v5765 = vsel %vm2642, %v5764, %v5760
        %v5766 = vlaneseq
        %v5767 = vshrl.u32 %v5766, 7
        %v5768 = vsub.s32 %v2632, %v5767
        %v5769 = vrot.slane %v4973, %v5768
        %v5770 = vlaneseq
        %v5771 = vshrl.u32 %v5770, 7
        %v5772 = vsub.s32 %v2637, %v5771
        %v5773 = vrot.slane %v4976, %v5772
        %v5774 = vsel %vm2642, %v5773, %v5769
        %v5775 = vlaneseq
        %v5776 = vshrl.u32 %v5775, 7
        %v5777 = vsub.s32 %v2632, %v5776
        %v5778 = vrot.slane %v4979, %v5777
        %v5779 = vlaneseq
        %v5780 = vshrl.u32 %v5779, 7
        %v5781 = vsub.s32 %v2637, %v5780
        %v5782 = vrot.slane %v4982, %v5781
        %v5783 = vsel %vm2642, %v5782, %v5778
        %v5784 = vlaneseq
        %v5785 = vshrl.u32 %v5784, 7
        %v5786 = vsub.s32 %v2632, %v5785
        %v5787 = vrot.slane %v4985, %v5786
        %v5788 = vlaneseq
        %v5789 = vshrl.u32 %v5788, 7
        %v5790 = vsub.s32 %v2637, %v5789
        %v5791 = vrot.slane %v4988, %v5790
        %v5792 = vsel %vm2642, %v5791, %v5787
        %v5793 = vlaneseq
        %v5794 = vshrl.u32 %v5793, 7
        %v5795 = vsub.s32 %v2632, %v5794
        %v5796 = vrot.slane %v4991, %v5795
        %v5797 = vlaneseq
        %v5798 = vshrl.u32 %v5797, 7
        %v5799 = vsub.s32 %v2637, %v5798
        %v5800 = vrot.slane %v4994, %v5799
        %v5801 = vsel %vm2642, %v5800, %v5796
        %v5802 = vlaneseq
        %v5803 = vshrl.u32 %v5802, 7
        %v5804 = vsub.s32 %v2632, %v5803
        %v5805 = vrot.slane %v4997, %v5804
        %v5806 = vlaneseq
        %v5807 = vshrl.u32 %v5806, 7
        %v5808 = vsub.s32 %v2637, %v5807
        %v5809 = vrot.slane %v5000, %v5808
        %v5810 = vsel %vm2642, %v5809, %v5805
        %v5811 = vlaneseq
        %v5812 = vshrl.u32 %v5811, 7
        %v5813 = vsub.s32 %v2632, %v5812
        %v5814 = vrot.slane %v5003, %v5813
        %v5815 = vlaneseq
        %v5816 = vshrl.u32 %v5815, 7
        %v5817 = vsub.s32 %v2637, %v5816
        %v5818 = vrot.slane %v5006, %v5817
        %v5819 = vsel %vm2642, %v5818, %v5814
        %v5820 = vlaneseq
        %v5821 = vshrl.u32 %v5820, 7
        %v5822 = vsub.s32 %v2632, %v5821
        %v5823 = vrot.slane %v5009, %v5822
        %v5824 = vlaneseq
        %v5825 = vshrl.u32 %v5824, 7
        %v5826 = vsub.s32 %v2637, %v5825
        %v5827 = vrot.slane %v5012, %v5826
        %v5828 = vsel %vm2642, %v5827, %v5823
        %v5829 = vlaneseq
        %v5830 = vshrl.u32 %v5829, 7
        %v5831 = vsub.s32 %v2632, %v5830
        %v5832 = vrot.slane %v5015, %v5831
        %v5833 = vlaneseq
        %v5834 = vshrl.u32 %v5833, 7
        %v5835 = vsub.s32 %v2637, %v5834
        %v5836 = vrot.slane %v5018, %v5835
        %v5837 = vsel %vm2642, %v5836, %v5832
        %v5838 = vlaneseq
        %v5839 = vshrl.u32 %v5838, 7
        %v5840 = vsub.s32 %v2632, %v5839
        %v5841 = vrot.slane %v5021, %v5840
        %v5842 = vlaneseq
        %v5843 = vshrl.u32 %v5842, 7
        %v5844 = vsub.s32 %v2637, %v5843
        %v5845 = vrot.slane %v5024, %v5844
        %v5846 = vsel %vm2642, %v5845, %v5841
        %v5847 = vlaneseq
        %v5848 = vshrl.u32 %v5847, 7
        %v5849 = vsub.s32 %v2632, %v5848
        %v5850 = vrot.slane %v5027, %v5849
        %v5851 = vlaneseq
        %v5852 = vshrl.u32 %v5851, 7
        %v5853 = vsub.s32 %v2637, %v5852
        %v5854 = vrot.slane %v5030, %v5853
        %v5855 = vsel %vm2642, %v5854, %v5850
        %v5856 = vlaneseq
        %v5857 = vshrl.u32 %v5856, 7
        %v5858 = vsub.s32 %v2632, %v5857
        %v5859 = vrot.slane %v5033, %v5858
        %v5860 = vlaneseq
        %v5861 = vshrl.u32 %v5860, 7
        %v5862 = vsub.s32 %v2637, %v5861
        %v5863 = vrot.slane %v5036, %v5862
        %v5864 = vsel %vm2642, %v5863, %v5859
        %v5865 = vlaneseq
        %v5866 = vshrl.u32 %v5865, 7
        %v5867 = vsub.s32 %v2632, %v5866
        %v5868 = vrot.slane %v5039, %v5867
        %v5869 = vlaneseq
        %v5870 = vshrl.u32 %v5869, 7
        %v5871 = vsub.s32 %v2637, %v5870
        %v5872 = vrot.slane %v5042, %v5871
        %v5873 = vsel %vm2642, %v5872, %v5868
        %v5874 = vlaneseq
        %v5875 = vshrl.u32 %v5874, 7
        %v5876 = vsub.s32 %v2632, %v5875
        %v5877 = vrot.slane %v5045, %v5876
        %v5878 = vlaneseq
        %v5879 = vshrl.u32 %v5878, 7
        %v5880 = vsub.s32 %v2637, %v5879
        %v5881 = vrot.slane %v5048, %v5880
        %v5882 = vsel %vm2642, %v5881, %v5877
        %v5883 = vlaneseq
        %v5884 = vshrl.u32 %v5883, 7
        %v5885 = vsub.s32 %v2632, %v5884
        %v5886 = vrot.slane %v5051, %v5885
        %v5887 = vlaneseq
        %v5888 = vshrl.u32 %v5887, 7
        %v5889 = vsub.s32 %v2637, %v5888
        %v5890 = vrot.slane %v5054, %v5889
        %v5891 = vsel %vm2642, %v5890, %v5886
        %v5892 = vlaneseq
        %v5893 = vshrl.u32 %v5892, 7
        %v5894 = vsub.s32 %v2632, %v5893
        %v5895 = vrot.slane %v5057, %v5894
        %v5896 = vlaneseq
        %v5897 = vshrl.u32 %v5896, 7
        %v5898 = vsub.s32 %v2637, %v5897
        %v5899 = vrot.slane %v5060, %v5898
        %v5900 = vsel %vm2642, %v5899, %v5895
        %v5901 = vlaneseq
        %v5902 = vshrl.u32 %v5901, 7
        %v5903 = vsub.s32 %v2632, %v5902
        %v5904 = vrot.slane %v5063, %v5903
        %v5905 = vlaneseq
        %v5906 = vshrl.u32 %v5905, 7
        %v5907 = vsub.s32 %v2637, %v5906
        %v5908 = vrot.slane %v5066, %v5907
        %v5909 = vsel %vm2642, %v5908, %v5904
        %v5910 = vlaneseq
        %v5911 = vshrl.u32 %v5910, 7
        %v5912 = vsub.s32 %v2632, %v5911
        %v5913 = vrot.slane %v5069, %v5912
        %v5914 = vlaneseq
        %v5915 = vshrl.u32 %v5914, 7
        %v5916 = vsub.s32 %v2637, %v5915
        %v5917 = vrot.slane %v5072, %v5916
        %v5918 = vsel %vm2642, %v5917, %v5913
        %v5919 = vlaneseq
        %v5920 = vshrl.u32 %v5919, 7
        %v5921 = vsub.s32 %v2632, %v5920
        %v5922 = vrot.slane %v5075, %v5921
        %v5923 = vlaneseq
        %v5924 = vshrl.u32 %v5923, 7
        %v5925 = vsub.s32 %v2637, %v5924
        %v5926 = vrot.slane %v5078, %v5925
        %v5927 = vsel %vm2642, %v5926, %v5922
        %v5928 = vlaneseq
        %v5929 = vshrl.u32 %v5928, 7
        %v5930 = vsub.s32 %v2632, %v5929
        %v5931 = vrot.slane %v5081, %v5930
        %v5932 = vlaneseq
        %v5933 = vshrl.u32 %v5932, 7
        %v5934 = vsub.s32 %v2637, %v5933
        %v5935 = vrot.slane %v5084, %v5934
        %v5936 = vsel %vm2642, %v5935, %v5931
        %v5937 = vlaneseq
        %v5938 = vshrl.u32 %v5937, 7
        %v5939 = vsub.s32 %v2632, %v5938
        %v5940 = vrot.slane %v5087, %v5939
        %v5941 = vlaneseq
        %v5942 = vshrl.u32 %v5941, 7
        %v5943 = vsub.s32 %v2637, %v5942
        %v5944 = vrot.slane %v5090, %v5943
        %v5945 = vsel %vm2642, %v5944, %v5940
        %v5946 = vlaneseq
        %v5947 = vshrl.u32 %v5946, 7
        %v5948 = vsub.s32 %v2632, %v5947
        %v5949 = vrot.slane %v5093, %v5948
        %v5950 = vlaneseq
        %v5951 = vshrl.u32 %v5950, 7
        %v5952 = vsub.s32 %v2637, %v5951
        %v5953 = vrot.slane %v5096, %v5952
        %v5954 = vsel %vm2642, %v5953, %v5949
        %v5955 = vlaneseq
        %v5956 = vshrl.u32 %v5955, 7
        %v5957 = vsub.s32 %v2632, %v5956
        %v5958 = vrot.slane %v5099, %v5957
        %v5959 = vlaneseq
        %v5960 = vshrl.u32 %v5959, 7
        %v5961 = vsub.s32 %v2637, %v5960
        %v5962 = vrot.slane %v5102, %v5961
        %v5963 = vsel %vm2642, %v5962, %v5958
        %v5964 = vlaneseq
        %v5965 = vshrl.u32 %v5964, 7
        %v5966 = vsub.s32 %v2632, %v5965
        %v5967 = vrot.slane %v5105, %v5966
        %v5968 = vlaneseq
        %v5969 = vshrl.u32 %v5968, 7
        %v5970 = vsub.s32 %v2637, %v5969
        %v5971 = vrot.slane %v5108, %v5970
        %v5972 = vsel %vm2642, %v5971, %v5967
        %v5973 = vlaneseq
        %v5974 = vshrl.u32 %v5973, 7
        %v5975 = vsub.s32 %v2632, %v5974
        %v5976 = vrot.slane %v5111, %v5975
        %v5977 = vlaneseq
        %v5978 = vshrl.u32 %v5977, 7
        %v5979 = vsub.s32 %v2637, %v5978
        %v5980 = vrot.slane %v5114, %v5979
        %v5981 = vsel %vm2642, %v5980, %v5976
        %v5982 = vlaneseq
        %v5983 = vshrl.u32 %v5982, 7
        %v5984 = vsub.s32 %v2632, %v5983
        %v5985 = vrot.slane %v5117, %v5984
        %v5986 = vlaneseq
        %v5987 = vshrl.u32 %v5986, 7
        %v5988 = vsub.s32 %v2637, %v5987
        %v5989 = vrot.slane %v5120, %v5988
        %v5990 = vsel %vm2642, %v5989, %v5985
        %v5991 = vlaneseq
        %v5992 = vshrl.u32 %v5991, 7
        %v5993 = vsub.s32 %v2632, %v5992
        %v5994 = vrot.slane %v5123, %v5993
        %v5995 = vlaneseq
        %v5996 = vshrl.u32 %v5995, 7
        %v5997 = vsub.s32 %v2637, %v5996
        %v5998 = vrot.slane %v5126, %v5997
        %v5999 = vsel %vm2642, %v5998, %v5994
        %v6000 = vlaneseq
        %v6001 = vshrl.u32 %v6000, 7
        %v6002 = vsub.s32 %v2632, %v6001
        %v6003 = vrot.slane %v5129, %v6002
        %v6004 = vlaneseq
        %v6005 = vshrl.u32 %v6004, 7
        %v6006 = vsub.s32 %v2637, %v6005
        %v6007 = vrot.slane %v5132, %v6006
        %v6008 = vsel %vm2642, %v6007, %v6003
        %v6009 = vlaneseq
        %v6010 = vshrl.u32 %v6009, 7
        %v6011 = vsub.s32 %v2632, %v6010
        %v6012 = vrot.slane %v5135, %v6011
        %v6013 = vlaneseq
        %v6014 = vshrl.u32 %v6013, 7
        %v6015 = vsub.s32 %v2637, %v6014
        %v6016 = vrot.slane %v5138, %v6015
        %v6017 = vsel %vm2642, %v6016, %v6012
        %v6018 = vlaneseq
        %v6019 = vshrl.u32 %v6018, 7
        %v6020 = vsub.s32 %v2632, %v6019
        %v6021 = vrot.slane %v5141, %v6020
        %v6022 = vlaneseq
        %v6023 = vshrl.u32 %v6022, 7
        %v6024 = vsub.s32 %v2637, %v6023
        %v6025 = vrot.slane %v5144, %v6024
        %v6026 = vsel %vm2642, %v6025, %v6021
        %v6027 = vlaneseq
        %v6028 = vshrl.u32 %v6027, 7
        %v6029 = vsub.s32 %v2632, %v6028
        %v6030 = vrot.slane %v5147, %v6029
        %v6031 = vlaneseq
        %v6032 = vshrl.u32 %v6031, 7
        %v6033 = vsub.s32 %v2637, %v6032
        %v6034 = vrot.slane %v5150, %v6033
        %v6035 = vsel %vm2642, %v6034, %v6030
        %v6036 = vlaneseq
        %v6037 = vshrl.u32 %v6036, 7
        %v6038 = vsub.s32 %v2632, %v6037
        %v6039 = vrot.slane %v5153, %v6038
        %v6040 = vlaneseq
        %v6041 = vshrl.u32 %v6040, 7
        %v6042 = vsub.s32 %v2637, %v6041
        %v6043 = vrot.slane %v5156, %v6042
        %v6044 = vsel %vm2642, %v6043, %v6039
        %v6045 = vlaneseq
        %v6046 = vshrl.u32 %v6045, 7
        %v6047 = vsub.s32 %v2632, %v6046
        %v6048 = vrot.slane %v5159, %v6047
        %v6049 = vlaneseq
        %v6050 = vshrl.u32 %v6049, 7
        %v6051 = vsub.s32 %v2637, %v6050
        %v6052 = vrot.slane %v5162, %v6051
        %v6053 = vsel %vm2642, %v6052, %v6048
        %v6054 = vlaneseq
        %v6055 = vshrl.u32 %v6054, 7
        %v6056 = vsub.s32 %v2632, %v6055
        %v6057 = vrot.slane %v5165, %v6056
        %v6058 = vlaneseq
        %v6059 = vshrl.u32 %v6058, 7
        %v6060 = vsub.s32 %v2637, %v6059
        %v6061 = vrot.slane %v5168, %v6060
        %v6062 = vsel %vm2642, %v6061, %v6057
        %v6063 = vlaneseq
        %v6064 = vshrl.u32 %v6063, 7
        %v6065 = vsub.s32 %v2632, %v6064
        %v6066 = vrot.slane %v5171, %v6065
        %v6067 = vlaneseq
        %v6068 = vshrl.u32 %v6067, 7
        %v6069 = vsub.s32 %v2637, %v6068
        %v6070 = vrot.slane %v5174, %v6069
        %v6071 = vsel %vm2642, %v6070, %v6066
        %v6072 = vlaneseq
        %v6073 = vshrl.u32 %v6072, 7
        %v6074 = vsub.s32 %v2632, %v6073
        %v6075 = vrot.slane %v5177, %v6074
        %v6076 = vlaneseq
        %v6077 = vshrl.u32 %v6076, 7
        %v6078 = vsub.s32 %v2637, %v6077
        %v6079 = vrot.slane %v5180, %v6078
        %v6080 = vsel %vm2642, %v6079, %v6075
        %v6081 = vlaneseq
        %v6082 = vshrl.u32 %v6081, 7
        %v6083 = vsub.s32 %v2632, %v6082
        %v6084 = vrot.slane %v5183, %v6083
        %v6085 = vlaneseq
        %v6086 = vshrl.u32 %v6085, 7
        %v6087 = vsub.s32 %v2637, %v6086
        %v6088 = vrot.slane %v5186, %v6087
        %v6089 = vsel %vm2642, %v6088, %v6084
        %v6090 = vlaneseq
        %v6091 = vshrl.u32 %v6090, 7
        %v6092 = vsub.s32 %v2632, %v6091
        %v6093 = vrot.slane %v5189, %v6092
        %v6094 = vlaneseq
        %v6095 = vshrl.u32 %v6094, 7
        %v6096 = vsub.s32 %v2637, %v6095
        %v6097 = vrot.slane %v5192, %v6096
        %v6098 = vsel %vm2642, %v6097, %v6093
        %v6099 = vlaneseq
        %v6100 = vshrl.u32 %v6099, 7
        %v6101 = vsub.s32 %v2632, %v6100
        %v6102 = vrot.slane %v5195, %v6101
        %v6103 = vlaneseq
        %v6104 = vshrl.u32 %v6103, 7
        %v6105 = vsub.s32 %v2637, %v6104
        %v6106 = vrot.slane %v5198, %v6105
        %v6107 = vsel %vm2642, %v6106, %v6102
        %v6108 = vlaneseq
        %v6109 = vshrl.u32 %v6108, 7
        %v6110 = vsub.s32 %v2632, %v6109
        %v6111 = vrot.slane %v5201, %v6110
        %v6112 = vlaneseq
        %v6113 = vshrl.u32 %v6112, 7
        %v6114 = vsub.s32 %v2637, %v6113
        %v6115 = vrot.slane %v5204, %v6114
        %v6116 = vsel %vm2642, %v6115, %v6111
        %v6117 = vlaneseq
        %v6118 = vshrl.u32 %v6117, 7
        %v6119 = vsub.s32 %v2632, %v6118
        %v6120 = vrot.slane %v5207, %v6119
        %v6121 = vlaneseq
        %v6122 = vshrl.u32 %v6121, 7
        %v6123 = vsub.s32 %v2637, %v6122
        %v6124 = vrot.slane %v5210, %v6123
        %v6125 = vsel %vm2642, %v6124, %v6120
        %v6126 = vlaneseq
        %v6127 = vshrl.u32 %v6126, 7
        %v6128 = vsub.s32 %v2632, %v6127
        %v6129 = vrot.slane %v5213, %v6128
        %v6130 = vlaneseq
        %v6131 = vshrl.u32 %v6130, 7
        %v6132 = vsub.s32 %v2637, %v6131
        %v6133 = vrot.slane %v5216, %v6132
        %v6134 = vsel %vm2642, %v6133, %v6129
        %v6135 = vlaneseq
        %v6136 = vshrl.u32 %v6135, 7
        %v6137 = vsub.s32 %v2632, %v6136
        %v6138 = vrot.slane %v5219, %v6137
        %v6139 = vlaneseq
        %v6140 = vshrl.u32 %v6139, 7
        %v6141 = vsub.s32 %v2637, %v6140
        %v6142 = vrot.slane %v5222, %v6141
        %v6143 = vsel %vm2642, %v6142, %v6138
        %v6144 = vlaneseq
        %v6145 = vshrl.u32 %v6144, 7
        %v6146 = vsub.s32 %v2632, %v6145
        %v6147 = vrot.slane %v5225, %v6146
        %v6148 = vlaneseq
        %v6149 = vshrl.u32 %v6148, 7
        %v6150 = vsub.s32 %v2637, %v6149
        %v6151 = vrot.slane %v5228, %v6150
        %v6152 = vsel %vm2642, %v6151, %v6147
        %v6153 = vlaneseq
        %v6154 = vshrl.u32 %v6153, 7
        %v6155 = vsub.s32 %v2632, %v6154
        %v6156 = vrot.slane %v5231, %v6155
        %v6157 = vlaneseq
        %v6158 = vshrl.u32 %v6157, 7
        %v6159 = vsub.s32 %v2637, %v6158
        %v6160 = vrot.slane %v5234, %v6159
        %v6161 = vsel %vm2642, %v6160, %v6156
        %v6162 = vlaneseq
        %v6163 = vshrl.u32 %v6162, 7
        %v6164 = vsub.s32 %v2632, %v6163
        %v6165 = vrot.slane %v5237, %v6164
        %v6166 = vlaneseq
        %v6167 = vshrl.u32 %v6166, 7
        %v6168 = vsub.s32 %v2637, %v6167
        %v6169 = vrot.slane %v5240, %v6168
        %v6170 = vsel %vm2642, %v6169, %v6165
        %v6171 = vlaneseq
        %v6172 = vshrl.u32 %v6171, 7
        %v6173 = vsub.s32 %v2632, %v6172
        %v6174 = vrot.slane %v5243, %v6173
        %v6175 = vlaneseq
        %v6176 = vshrl.u32 %v6175, 7
        %v6177 = vsub.s32 %v2637, %v6176
        %v6178 = vrot.slane %v5246, %v6177
        %v6179 = vsel %vm2642, %v6178, %v6174
        %v6180 = vlaneseq
        %v6181 = vshrl.u32 %v6180, 7
        %v6182 = vsub.s32 %v2632, %v6181
        %v6183 = vrot.slane %v5249, %v6182
        %v6184 = vlaneseq
        %v6185 = vshrl.u32 %v6184, 7
        %v6186 = vsub.s32 %v2637, %v6185
        %v6187 = vrot.slane %v5252, %v6186
        %v6188 = vsel %vm2642, %v6187, %v6183
        %v6189 = vlaneseq
        %v6190 = vshrl.u32 %v6189, 7
        %v6191 = vsub.s32 %v2632, %v6190
        %v6192 = vrot.slane %v5255, %v6191
        %v6193 = vlaneseq
        %v6194 = vshrl.u32 %v6193, 7
        %v6195 = vsub.s32 %v2637, %v6194
        %v6196 = vrot.slane %v5258, %v6195
        %v6197 = vsel %vm2642, %v6196, %v6192
        %v6198 = vlaneseq
        %v6199 = vshrl.u32 %v6198, 7
        %v6200 = vsub.s32 %v2632, %v6199
        %v6201 = vrot.slane %v5261, %v6200
        %v6202 = vlaneseq
        %v6203 = vshrl.u32 %v6202, 7
        %v6204 = vsub.s32 %v2637, %v6203
        %v6205 = vrot.slane %v5264, %v6204
        %v6206 = vsel %vm2642, %v6205, %v6201
        %v6207 = vlaneseq
        %v6208 = vshrl.u32 %v6207, 7
        %v6209 = vsub.s32 %v2632, %v6208
        %v6210 = vrot.slane %v5267, %v6209
        %v6211 = vlaneseq
        %v6212 = vshrl.u32 %v6211, 7
        %v6213 = vsub.s32 %v2637, %v6212
        %v6214 = vrot.slane %v5270, %v6213
        %v6215 = vsel %vm2642, %v6214, %v6210
        %v6216 = vlaneseq
        %v6217 = vshrl.u32 %v6216, 7
        %v6218 = vsub.s32 %v2632, %v6217
        %v6219 = vrot.slane %v5273, %v6218
        %v6220 = vlaneseq
        %v6221 = vshrl.u32 %v6220, 7
        %v6222 = vsub.s32 %v2637, %v6221
        %v6223 = vrot.slane %v5276, %v6222
        %v6224 = vsel %vm2642, %v6223, %v6219
        %v6225 = vlaneseq
        %v6226 = vshrl.u32 %v6225, 7
        %v6227 = vsub.s32 %v2632, %v6226
        %v6228 = vrot.slane %v5279, %v6227
        %v6229 = vlaneseq
        %v6230 = vshrl.u32 %v6229, 7
        %v6231 = vsub.s32 %v2637, %v6230
        %v6232 = vrot.slane %v5282, %v6231
        %v6233 = vsel %vm2642, %v6232, %v6228
        %v6234 = vlaneseq
        %v6235 = vshrl.u32 %v6234, 7
        %v6236 = vsub.s32 %v2632, %v6235
        %v6237 = vrot.slane %v5285, %v6236
        %v6238 = vlaneseq
        %v6239 = vshrl.u32 %v6238, 7
        %v6240 = vsub.s32 %v2637, %v6239
        %v6241 = vrot.slane %v5288, %v6240
        %v6242 = vsel %vm2642, %v6241, %v6237
        %v6243 = vlaneseq
        %v6244 = vshrl.u32 %v6243, 7
        %v6245 = vsub.s32 %v2632, %v6244
        %v6246 = vrot.slane %v5291, %v6245
        %v6247 = vlaneseq
        %v6248 = vshrl.u32 %v6247, 7
        %v6249 = vsub.s32 %v2637, %v6248
        %v6250 = vrot.slane %v5294, %v6249
        %v6251 = vsel %vm2642, %v6250, %v6246
        %v6252 = vlaneseq
        %v6253 = vshrl.u32 %v6252, 7
        %v6254 = vsub.s32 %v2632, %v6253
        %v6255 = vrot.slane %v5297, %v6254
        %v6256 = vlaneseq
        %v6257 = vshrl.u32 %v6256, 7
        %v6258 = vsub.s32 %v2637, %v6257
        %v6259 = vrot.slane %v5300, %v6258
        %v6260 = vsel %vm2642, %v6259, %v6255
        %v6261 = vlaneseq
        %v6262 = vshrl.u32 %v6261, 7
        %v6263 = vsub.s32 %v2632, %v6262
        %v6264 = vrot.slane %v5303, %v6263
        %v6265 = vlaneseq
        %v6266 = vshrl.u32 %v6265, 7
        %v6267 = vsub.s32 %v2637, %v6266
        %v6268 = vrot.slane %v5306, %v6267
        %v6269 = vsel %vm2642, %v6268, %v6264
        %v6270 = vlaneseq
        %v6271 = vshrl.u32 %v6270, 7
        %v6272 = vsub.s32 %v2632, %v6271
        %v6273 = vrot.slane %v5309, %v6272
        %v6274 = vlaneseq
        %v6275 = vshrl.u32 %v6274, 7
        %v6276 = vsub.s32 %v2637, %v6275
        %v6277 = vrot.slane %v5312, %v6276
        %v6278 = vsel %vm2642, %v6277, %v6273
        %v6279 = vlaneseq
        %v6280 = vshrl.u32 %v6279, 7
        %v6281 = vsub.s32 %v2632, %v6280
        %v6282 = vrot.slane %v5315, %v6281
        %v6283 = vlaneseq
        %v6284 = vshrl.u32 %v6283, 7
        %v6285 = vsub.s32 %v2637, %v6284
        %v6286 = vrot.slane %v5318, %v6285
        %v6287 = vsel %vm2642, %v6286, %v6282
        %v6288 = vlaneseq
        %v6289 = vshrl.u32 %v6288, 7
        %v6290 = vsub.s32 %v2632, %v6289
        %v6291 = vrot.slane %v5321, %v6290
        %v6292 = vlaneseq
        %v6293 = vshrl.u32 %v6292, 7
        %v6294 = vsub.s32 %v2637, %v6293
        %v6295 = vrot.slane %v5324, %v6294
        %v6296 = vsel %vm2642, %v6295, %v6291
        %v6297 = vlaneseq
        %v6298 = vshrl.u32 %v6297, 7
        %v6299 = vsub.s32 %v2632, %v6298
        %v6300 = vrot.slane %v5327, %v6299
        %v6301 = vlaneseq
        %v6302 = vshrl.u32 %v6301, 7
        %v6303 = vsub.s32 %v2637, %v6302
        %v6304 = vrot.slane %v5330, %v6303
        %v6305 = vsel %vm2642, %v6304, %v6300
        %v6306 = vlaneseq
        %v6307 = vshrl.u32 %v6306, 7
        %v6308 = vsub.s32 %v2632, %v6307
        %v6309 = vrot.slane %v5333, %v6308
        %v6310 = vlaneseq
        %v6311 = vshrl.u32 %v6310, 7
        %v6312 = vsub.s32 %v2637, %v6311
        %v6313 = vrot.slane %v5336, %v6312
        %v6314 = vsel %vm2642, %v6313, %v6309
        %v6315 = vlaneseq
        %v6316 = vshrl.u32 %v6315, 7
        %v6317 = vsub.s32 %v2632, %v6316
        %v6318 = vrot.slane %v5339, %v6317
        %v6319 = vlaneseq
        %v6320 = vshrl.u32 %v6319, 7
        %v6321 = vsub.s32 %v2637, %v6320
        %v6322 = vrot.slane %v5342, %v6321
        %v6323 = vsel %vm2642, %v6322, %v6318
        %v6324 = vlaneseq
        %v6325 = vshrl.u32 %v6324, 7
        %v6326 = vsub.s32 %v2632, %v6325
        %v6327 = vrot.slane %v5345, %v6326
        %v6328 = vlaneseq
        %v6329 = vshrl.u32 %v6328, 7
        %v6330 = vsub.s32 %v2637, %v6329
        %v6331 = vrot.slane %v5348, %v6330
        %v6332 = vsel %vm2642, %v6331, %v6327
        %v6333 = vlaneseq
        %v6334 = vshrl.u32 %v6333, 7
        %v6335 = vsub.s32 %v2632, %v6334
        %v6336 = vrot.slane %v5351, %v6335
        %v6337 = vlaneseq
        %v6338 = vshrl.u32 %v6337, 7
        %v6339 = vsub.s32 %v2637, %v6338
        %v6340 = vrot.slane %v5354, %v6339
        %v6341 = vsel %vm2642, %v6340, %v6336
        %v6342 = vlaneseq
        %v6343 = vshrl.u32 %v6342, 7
        %v6344 = vsub.s32 %v2632, %v6343
        %v6345 = vrot.slane %v5357, %v6344
        %v6346 = vlaneseq
        %v6347 = vshrl.u32 %v6346, 7
        %v6348 = vsub.s32 %v2637, %v6347
        %v6349 = vrot.slane %v5360, %v6348
        %v6350 = vsel %vm2642, %v6349, %v6345
        %v6351 = vlaneseq
        %v6352 = vshrl.u32 %v6351, 7
        %v6353 = vsub.s32 %v2632, %v6352
        %v6354 = vrot.slane %v5363, %v6353
        %v6355 = vlaneseq
        %v6356 = vshrl.u32 %v6355, 7
        %v6357 = vsub.s32 %v2637, %v6356
        %v6358 = vrot.slane %v5366, %v6357
        %v6359 = vsel %vm2642, %v6358, %v6354
        %v6360 = vlaneseq
        %v6361 = vshrl.u32 %v6360, 7
        %v6362 = vsub.s32 %v2632, %v6361
        %v6363 = vrot.slane %v5369, %v6362
        %v6364 = vlaneseq
        %v6365 = vshrl.u32 %v6364, 7
        %v6366 = vsub.s32 %v2637, %v6365
        %v6367 = vrot.slane %v5372, %v6366
        %v6368 = vsel %vm2642, %v6367, %v6363
        %v6369 = vlaneseq
        %v6370 = vshrl.u32 %v6369, 7
        %v6371 = vsub.s32 %v2632, %v6370
        %v6372 = vrot.slane %v5375, %v6371
        %v6373 = vlaneseq
        %v6374 = vshrl.u32 %v6373, 7
        %v6375 = vsub.s32 %v2637, %v6374
        %v6376 = vrot.slane %v5378, %v6375
        %v6377 = vsel %vm2642, %v6376, %v6372
        %v6378 = vlaneseq
        %v6379 = vshrl.u32 %v6378, 7
        %v6380 = vsub.s32 %v2632, %v6379
        %v6381 = vrot.slane %v5381, %v6380
        %v6382 = vlaneseq
        %v6383 = vshrl.u32 %v6382, 7
        %v6384 = vsub.s32 %v2637, %v6383
        %v6385 = vrot.slane %v5384, %v6384
        %v6386 = vsel %vm2642, %v6385, %v6381
        %v6387 = vlaneseq
        %v6388 = vshrl.u32 %v6387, 7
        %v6389 = vsub.s32 %v2632, %v6388
        %v6390 = vrot.slane %v5387, %v6389
        %v6391 = vlaneseq
        %v6392 = vshrl.u32 %v6391, 7
        %v6393 = vsub.s32 %v2637, %v6392
        %v6394 = vrot.slane %v5390, %v6393
        %v6395 = vsel %vm2642, %v6394, %v6390
        %v6396 = vlaneseq
        %v6397 = vshrl.u32 %v6396, 7
        %v6398 = vsub.s32 %v2632, %v6397
        %v6399 = vrot.slane %v5393, %v6398
        %v6400 = vlaneseq
        %v6401 = vshrl.u32 %v6400, 7
        %v6402 = vsub.s32 %v2637, %v6401
        %v6403 = vrot.slane %v5396, %v6402
        %v6404 = vsel %vm2642, %v6403, %v6399
        %v6405 = vlaneseq
        %v6406 = vshrl.u32 %v6405, 7
        %v6407 = vsub.s32 %v2632, %v6406
        %v6408 = vrot.slane %v5399, %v6407
        %v6409 = vlaneseq
        %v6410 = vshrl.u32 %v6409, 7
        %v6411 = vsub.s32 %v2637, %v6410
        %v6412 = vrot.slane %v5402, %v6411
        %v6413 = vsel %vm2642, %v6412, %v6408
        %v6414 = vlaneseq
        %v6415 = vshrl.u32 %v6414, 7
        %v6416 = vsub.s32 %v2632, %v6415
        %v6417 = vrot.slane %v5405, %v6416
        %v6418 = vlaneseq
        %v6419 = vshrl.u32 %v6418, 7
        %v6420 = vsub.s32 %v2637, %v6419
        %v6421 = vrot.slane %v5408, %v6420
        %v6422 = vsel %vm2642, %v6421, %v6417
        %v6423 = vlaneseq
        %v6424 = vshrl.u32 %v6423, 7
        %v6425 = vsub.s32 %v2632, %v6424
        %v6426 = vrot.slane %v5411, %v6425
        %v6427 = vlaneseq
        %v6428 = vshrl.u32 %v6427, 7
        %v6429 = vsub.s32 %v2637, %v6428
        %v6430 = vrot.slane %v5414, %v6429
        %v6431 = vsel %vm2642, %v6430, %v6426
        %v6432 = vlaneseq
        %v6433 = vshrl.u32 %v6432, 7
        %v6434 = vsub.s32 %v2632, %v6433
        %v6435 = vrot.slane %v5417, %v6434
        %v6436 = vlaneseq
        %v6437 = vshrl.u32 %v6436, 7
        %v6438 = vsub.s32 %v2637, %v6437
        %v6439 = vrot.slane %v5420, %v6438
        %v6440 = vsel %vm2642, %v6439, %v6435
        %v6441 = vlaneseq
        %v6442 = vshrl.u32 %v6441, 7
        %v6443 = vsub.s32 %v2632, %v6442
        %v6444 = vrot.slane %v5423, %v6443
        %v6445 = vlaneseq
        %v6446 = vshrl.u32 %v6445, 7
        %v6447 = vsub.s32 %v2637, %v6446
        %v6448 = vrot.slane %v5426, %v6447
        %v6449 = vsel %vm2642, %v6448, %v6444
        %v6450 = vlaneseq
        %v6451 = vshrl.u32 %v6450, 7
        %v6452 = vsub.s32 %v2632, %v6451
        %v6453 = vrot.slane %v5429, %v6452
        %v6454 = vlaneseq
        %v6455 = vshrl.u32 %v6454, 7
        %v6456 = vsub.s32 %v2637, %v6455
        %v6457 = vrot.slane %v5432, %v6456
        %v6458 = vsel %vm2642, %v6457, %v6453
        %v6459 = vlaneseq
        %v6460 = vshrl.u32 %v6459, 7
        %v6461 = vsub.s32 %v2632, %v6460
        %v6462 = vrot.slane %v5435, %v6461
        %v6463 = vlaneseq
        %v6464 = vshrl.u32 %v6463, 7
        %v6465 = vsub.s32 %v2637, %v6464
        %v6466 = vrot.slane %v5438, %v6465
        %v6467 = vsel %vm2642, %v6466, %v6462
        %v6468 = vlaneseq
        %v6469 = vshrl.u32 %v6468, 7
        %v6470 = vsub.s32 %v2632, %v6469
        %v6471 = vrot.slane %v5441, %v6470
        %v6472 = vlaneseq
        %v6473 = vshrl.u32 %v6472, 7
        %v6474 = vsub.s32 %v2637, %v6473
        %v6475 = vrot.slane %v5444, %v6474
        %v6476 = vsel %vm2642, %v6475, %v6471
        %v6477 = vlaneseq
        %v6478 = vshrl.u32 %v6477, 7
        %v6479 = vsub.s32 %v2632, %v6478
        %v6480 = vrot.slane %v5447, %v6479
        %v6481 = vlaneseq
        %v6482 = vshrl.u32 %v6481, 7
        %v6483 = vsub.s32 %v2637, %v6482
        %v6484 = vrot.slane %v5450, %v6483
        %v6485 = vsel %vm2642, %v6484, %v6480
        %v6486 = vlaneseq
        %v6487 = vshrl.u32 %v6486, 7
        %v6488 = vsub.s32 %v2632, %v6487
        %v6489 = vrot.slane %v5453, %v6488
        %v6490 = vlaneseq
        %v6491 = vshrl.u32 %v6490, 7
        %v6492 = vsub.s32 %v2637, %v6491
        %v6493 = vrot.slane %v5456, %v6492
        %v6494 = vsel %vm2642, %v6493, %v6489
        %v6495 = vlaneseq
        %v6496 = vshrl.u32 %v6495, 7
        %v6497 = vsub.s32 %v2632, %v6496
        %v6498 = vrot.slane %v5459, %v6497
        %v6499 = vlaneseq
        %v6500 = vshrl.u32 %v6499, 7
        %v6501 = vsub.s32 %v2637, %v6500
        %v6502 = vrot.slane %v5462, %v6501
        %v6503 = vsel %vm2642, %v6502, %v6498
        %v6504 = vlaneseq
        %v6505 = vshrl.u32 %v6504, 7
        %v6506 = vsub.s32 %v2632, %v6505
        %v6507 = vrot.slane %v5465, %v6506
        %v6508 = vlaneseq
        %v6509 = vshrl.u32 %v6508, 7
        %v6510 = vsub.s32 %v2637, %v6509
        %v6511 = vrot.slane %v5468, %v6510
        %v6512 = vsel %vm2642, %v6511, %v6507
        %v6513 = vlaneseq
        %v6514 = vshrl.u32 %v6513, 7
        %v6515 = vsub.s32 %v2632, %v6514
        %v6516 = vrot.slane %v5471, %v6515
        %v6517 = vlaneseq
        %v6518 = vshrl.u32 %v6517, 7
        %v6519 = vsub.s32 %v2637, %v6518
        %v6520 = vrot.slane %v5474, %v6519
        %v6521 = vsel %vm2642, %v6520, %v6516
        %v6522 = vlaneseq
        %v6523 = vshrl.u32 %v6522, 7
        %v6524 = vsub.s32 %v2632, %v6523
        %v6525 = vrot.slane %v5477, %v6524
        %v6526 = vlaneseq
        %v6527 = vshrl.u32 %v6526, 7
        %v6528 = vsub.s32 %v2637, %v6527
        %v6529 = vrot.slane %v5480, %v6528
        %v6530 = vsel %vm2642, %v6529, %v6525
        %v6531 = vlaneseq
        %v6532 = vshrl.u32 %v6531, 7
        %v6533 = vsub.s32 %v2632, %v6532
        %v6534 = vrot.slane %v5483, %v6533
        %v6535 = vlaneseq
        %v6536 = vshrl.u32 %v6535, 7
        %v6537 = vsub.s32 %v2637, %v6536
        %v6538 = vrot.slane %v5486, %v6537
        %v6539 = vsel %vm2642, %v6538, %v6534
        %v6540 = vlaneseq
        %v6541 = vshrl.u32 %v6540, 7
        %v6542 = vsub.s32 %v2632, %v6541
        %v6543 = vrot.slane %v5489, %v6542
        %v6544 = vlaneseq
        %v6545 = vshrl.u32 %v6544, 7
        %v6546 = vsub.s32 %v2637, %v6545
        %v6547 = vrot.slane %v5492, %v6546
        %v6548 = vsel %vm2642, %v6547, %v6543
        %v6549 = vlaneseq
        %v6550 = vshrl.u32 %v6549, 7
        %v6551 = vsub.s32 %v2632, %v6550
        %v6552 = vrot.slane %v5495, %v6551
        %v6553 = vlaneseq
        %v6554 = vshrl.u32 %v6553, 7
        %v6555 = vsub.s32 %v2637, %v6554
        %v6556 = vrot.slane %v5498, %v6555
        %v6557 = vsel %vm2642, %v6556, %v6552
        %v6558 = vlaneseq
        %v6559 = vshrl.u32 %v6558, 7
        %v6560 = vsub.s32 %v2632, %v6559
        %v6561 = vrot.slane %v5501, %v6560
        %v6562 = vlaneseq
        %v6563 = vshrl.u32 %v6562, 7
        %v6564 = vsub.s32 %v2637, %v6563
        %v6565 = vrot.slane %v5504, %v6564
        %v6566 = vsel %vm2642, %v6565, %v6561
        %v6567 = vlaneseq
        %v6568 = vshrl.u32 %v6567, 7
        %v6569 = vsub.s32 %v2632, %v6568
        %v6570 = vrot.slane %v5507, %v6569
        %v6571 = vlaneseq
        %v6572 = vshrl.u32 %v6571, 7
        %v6573 = vsub.s32 %v2637, %v6572
        %v6574 = vrot.slane %v5510, %v6573
        %v6575 = vsel %vm2642, %v6574, %v6570
        %v6576 = vlaneseq
        %v6577 = vshrl.u32 %v6576, 7
        %v6578 = vsub.s32 %v2632, %v6577
        %v6579 = vrot.slane %v5513, %v6578
        %v6580 = vlaneseq
        %v6581 = vshrl.u32 %v6580, 7
        %v6582 = vsub.s32 %v2637, %v6581
        %v6583 = vrot.slane %v5516, %v6582
        %v6584 = vsel %vm2642, %v6583, %v6579
        %v6585 = vlaneseq
        %v6586 = vshrl.u32 %v6585, 7
        %v6587 = vsub.s32 %v2632, %v6586
        %v6588 = vrot.slane %v5519, %v6587
        %v6589 = vlaneseq
        %v6590 = vshrl.u32 %v6589, 7
        %v6591 = vsub.s32 %v2637, %v6590
        %v6592 = vrot.slane %v5522, %v6591
        %v6593 = vsel %vm2642, %v6592, %v6588
        %v6594 = vlaneseq
        %v6595 = vshrl.u32 %v6594, 7
        %v6596 = vsub.s32 %v2632, %v6595
        %v6597 = vrot.slane %v5525, %v6596
        %v6598 = vlaneseq
        %v6599 = vshrl.u32 %v6598, 7
        %v6600 = vsub.s32 %v2637, %v6599
        %v6601 = vrot.slane %v5528, %v6600
        %v6602 = vsel %vm2642, %v6601, %v6597
        %v6603 = vlaneseq
        %v6604 = vshrl.u32 %v6603, 7
        %v6605 = vsub.s32 %v2632, %v6604
        %v6606 = vrot.slane %v5531, %v6605
        %v6607 = vlaneseq
        %v6608 = vshrl.u32 %v6607, 7
        %v6609 = vsub.s32 %v2637, %v6608
        %v6610 = vrot.slane %v5534, %v6609
        %v6611 = vsel %vm2642, %v6610, %v6606
        %v6612 = vlaneseq
        %v6613 = vshrl.u32 %v6612, 7
        %v6614 = vsub.s32 %v2632, %v6613
        %v6615 = vrot.slane %v5537, %v6614
        %v6616 = vlaneseq
        %v6617 = vshrl.u32 %v6616, 7
        %v6618 = vsub.s32 %v2637, %v6617
        %v6619 = vrot.slane %v5540, %v6618
        %v6620 = vsel %vm2642, %v6619, %v6615
        %v6621 = vlaneseq
        %v6622 = vshrl.u32 %v6621, 7
        %v6623 = vsub.s32 %v2632, %v6622
        %v6624 = vrot.slane %v5543, %v6623
        %v6625 = vlaneseq
        %v6626 = vshrl.u32 %v6625, 7
        %v6627 = vsub.s32 %v2637, %v6626
        %v6628 = vrot.slane %v5546, %v6627
        %v6629 = vsel %vm2642, %v6628, %v6624
        %v6630 = vlaneseq
        %v6631 = vshrl.u32 %v6630, 7
        %v6632 = vsub.s32 %v2632, %v6631
        %v6633 = vrot.slane %v5549, %v6632
        %v6634 = vlaneseq
        %v6635 = vshrl.u32 %v6634, 7
        %v6636 = vsub.s32 %v2637, %v6635
        %v6637 = vrot.slane %v5552, %v6636
        %v6638 = vsel %vm2642, %v6637, %v6633
        %v6639 = vlaneseq
        %v6640 = vshrl.u32 %v6639, 7
        %v6641 = vsub.s32 %v2632, %v6640
        %v6642 = vrot.slane %v5555, %v6641
        %v6643 = vlaneseq
        %v6644 = vshrl.u32 %v6643, 7
        %v6645 = vsub.s32 %v2637, %v6644
        %v6646 = vrot.slane %v5558, %v6645
        %v6647 = vsel %vm2642, %v6646, %v6642
        %v6648 = vlaneseq
        %v6649 = vshrl.u32 %v6648, 7
        %v6650 = vsub.s32 %v2632, %v6649
        %v6651 = vrot.slane %v5561, %v6650
        %v6652 = vlaneseq
        %v6653 = vshrl.u32 %v6652, 7
        %v6654 = vsub.s32 %v2637, %v6653
        %v6655 = vrot.slane %v5564, %v6654
        %v6656 = vsel %vm2642, %v6655, %v6651
        %v6657 = vlaneseq
        %v6658 = vshrl.u32 %v6657, 7
        %v6659 = vsub.s32 %v2632, %v6658
        %v6660 = vrot.slane %v5567, %v6659
        %v6661 = vlaneseq
        %v6662 = vshrl.u32 %v6661, 7
        %v6663 = vsub.s32 %v2637, %v6662
        %v6664 = vrot.slane %v5570, %v6663
        %v6665 = vsel %vm2642, %v6664, %v6660
        %v6666 = vlaneseq
        %v6667 = vshrl.u32 %v6666, 7
        %v6668 = vsub.s32 %v2632, %v6667
        %v6669 = vrot.slane %v5573, %v6668
        %v6670 = vlaneseq
        %v6671 = vshrl.u32 %v6670, 7
        %v6672 = vsub.s32 %v2637, %v6671
        %v6673 = vrot.slane %v5576, %v6672
        %v6674 = vsel %vm2642, %v6673, %v6669
        %v6675 = vlaneseq
        %v6676 = vshrl.u32 %v6675, 7
        %v6677 = vsub.s32 %v2632, %v6676
        %v6678 = vrot.slane %v5579, %v6677
        %v6679 = vlaneseq
        %v6680 = vshrl.u32 %v6679, 7
        %v6681 = vsub.s32 %v2637, %v6680
        %v6682 = vrot.slane %v5582, %v6681
        %v6683 = vsel %vm2642, %v6682, %v6678
        %v6684 = vlaneseq
        %v6685 = vshrl.u32 %v6684, 7
        %v6686 = vsub.s32 %v2632, %v6685
        %v6687 = vrot.slane %v5585, %v6686
        %v6688 = vlaneseq
        %v6689 = vshrl.u32 %v6688, 7
        %v6690 = vsub.s32 %v2637, %v6689
        %v6691 = vrot.slane %v5588, %v6690
        %v6692 = vsel %vm2642, %v6691, %v6687
        %v6693 = vlaneseq
        %v6694 = vshrl.u32 %v6693, 7
        %v6695 = vsub.s32 %v2632, %v6694
        %v6696 = vrot.slane %v5591, %v6695
        %v6697 = vlaneseq
        %v6698 = vshrl.u32 %v6697, 7
        %v6699 = vsub.s32 %v2637, %v6698
        %v6700 = vrot.slane %v5594, %v6699
        %v6701 = vsel %vm2642, %v6700, %v6696
        %v6702 = vlaneseq
        %v6703 = vshrl.u32 %v6702, 7
        %v6704 = vsub.s32 %v2632, %v6703
        %v6705 = vrot.slane %v5597, %v6704
        %v6706 = vlaneseq
        %v6707 = vshrl.u32 %v6706, 7
        %v6708 = vsub.s32 %v2637, %v6707
        %v6709 = vrot.slane %v5600, %v6708
        %v6710 = vsel %vm2642, %v6709, %v6705
        %v6711 = vlaneseq
        %v6712 = vshrl.u32 %v6711, 7
        %v6713 = vsub.s32 %v2632, %v6712
        %v6714 = vrot.slane %v5603, %v6713
        %v6715 = vlaneseq
        %v6716 = vshrl.u32 %v6715, 7
        %v6717 = vsub.s32 %v2637, %v6716
        %v6718 = vrot.slane %v5606, %v6717
        %v6719 = vsel %vm2642, %v6718, %v6714
        %v6720 = vlaneseq
        %v6721 = vshrl.u32 %v6720, 7
        %v6722 = vsub.s32 %v2632, %v6721
        %v6723 = vrot.slane %v5609, %v6722
        %v6724 = vlaneseq
        %v6725 = vshrl.u32 %v6724, 7
        %v6726 = vsub.s32 %v2637, %v6725
        %v6727 = vrot.slane %v5612, %v6726
        %v6728 = vsel %vm2642, %v6727, %v6723
        %v6729 = vlaneseq
        %v6730 = vshrl.u32 %v6729, 7
        %v6731 = vsub.s32 %v2632, %v6730
        %v6732 = vrot.slane %v5615, %v6731
        %v6733 = vlaneseq
        %v6734 = vshrl.u32 %v6733, 7
        %v6735 = vsub.s32 %v2637, %v6734
        %v6736 = vrot.slane %v5618, %v6735
        %v6737 = vsel %vm2642, %v6736, %v6732
        %v6738 = vlaneseq
        %v6739 = vshrl.u32 %v6738, 7
        %v6740 = vsub.s32 %v2632, %v6739
        %v6741 = vrot.slane %v5621, %v6740
        %v6742 = vlaneseq
        %v6743 = vshrl.u32 %v6742, 7
        %v6744 = vsub.s32 %v2637, %v6743
        %v6745 = vrot.slane %v5624, %v6744
        %v6746 = vsel %vm2642, %v6745, %v6741
        %v6747 = vlaneseq
        %v6748 = vshrl.u32 %v6747, 7
        %v6749 = vsub.s32 %v2632, %v6748
        %v6750 = vrot.slane %v5627, %v6749
        %v6751 = vlaneseq
        %v6752 = vshrl.u32 %v6751, 7
        %v6753 = vsub.s32 %v2637, %v6752
        %v6754 = vrot.slane %v5630, %v6753
        %v6755 = vsel %vm2642, %v6754, %v6750
        %v6756 = vlaneseq
        %v6757 = vshrl.u32 %v6756, 7
        %v6758 = vsub.s32 %v2632, %v6757
        %v6759 = vrot.slane %v5633, %v6758
        %v6760 = vlaneseq
        %v6761 = vshrl.u32 %v6760, 7
        %v6762 = vsub.s32 %v2637, %v6761
        %v6763 = vrot.slane %v5636, %v6762
        %v6764 = vsel %vm2642, %v6763, %v6759
        %v6765 = vlaneseq
        %v6766 = vshrl.u32 %v6765, 7
        %v6767 = vsub.s32 %v2632, %v6766
        %v6768 = vrot.slane %v5639, %v6767
        %v6769 = vlaneseq
        %v6770 = vshrl.u32 %v6769, 7
        %v6771 = vsub.s32 %v2637, %v6770
        %v6772 = vrot.slane %v5642, %v6771
        %v6773 = vsel %vm2642, %v6772, %v6768
        %v6774 = vlaneseq
        %v6775 = vshrl.u32 %v6774, 7
        %v6776 = vsub.s32 %v2632, %v6775
        %v6777 = vrot.slane %v5645, %v6776
        %v6778 = vlaneseq
        %v6779 = vshrl.u32 %v6778, 7
        %v6780 = vsub.s32 %v2637, %v6779
        %v6781 = vrot.slane %v5648, %v6780
        %v6782 = vsel %vm2642, %v6781, %v6777
        %v6783 = vlaneseq
        %v6784 = vshrl.u32 %v6783, 7
        %v6785 = vsub.s32 %v2632, %v6784
        %v6786 = vrot.slane %v5651, %v6785
        %v6787 = vlaneseq
        %v6788 = vshrl.u32 %v6787, 7
        %v6789 = vsub.s32 %v2637, %v6788
        %v6790 = vrot.slane %v5654, %v6789
        %v6791 = vsel %vm2642, %v6790, %v6786
        %v6792 = vlaneseq
        %v6793 = vshrl.u32 %v6792, 7
        %v6794 = vsub.s32 %v2632, %v6793
        %v6795 = vrot.slane %v5657, %v6794
        %v6796 = vlaneseq
        %v6797 = vshrl.u32 %v6796, 7
        %v6798 = vsub.s32 %v2637, %v6797
        %v6799 = vrot.slane %v5660, %v6798
        %v6800 = vsel %vm2642, %v6799, %v6795
        %v6801 = vlaneseq
        %v6802 = vshrl.u32 %v6801, 7
        %v6803 = vsub.s32 %v2632, %v6802
        %v6804 = vrot.slane %v5663, %v6803
        %v6805 = vlaneseq
        %v6806 = vshrl.u32 %v6805, 7
        %v6807 = vsub.s32 %v2637, %v6806
        %v6808 = vrot.slane %v5666, %v6807
        %v6809 = vsel %vm2642, %v6808, %v6804
        %v6810 = vlaneseq
        %v6811 = vshrl.u32 %v6810, 7
        %v6812 = vsub.s32 %v2632, %v6811
        %v6813 = vrot.slane %v5669, %v6812
        %v6814 = vlaneseq
        %v6815 = vshrl.u32 %v6814, 7
        %v6816 = vsub.s32 %v2637, %v6815
        %v6817 = vrot.slane %v5672, %v6816
        %v6818 = vsel %vm2642, %v6817, %v6813
        %v6819 = vlaneseq
        %v6820 = vshrl.u32 %v6819, 7
        %v6821 = vsub.s32 %v2632, %v6820
        %v6822 = vrot.slane %v5675, %v6821
        %v6823 = vlaneseq
        %v6824 = vshrl.u32 %v6823, 7
        %v6825 = vsub.s32 %v2637, %v6824
        %v6826 = vrot.slane %v5678, %v6825
        %v6827 = vsel %vm2642, %v6826, %v6822
        %v6828 = vlaneseq
        %v6829 = vshrl.u32 %v6828, 7
        %v6830 = vsub.s32 %v2632, %v6829
        %v6831 = vrot.slane %v5681, %v6830
        %v6832 = vlaneseq
        %v6833 = vshrl.u32 %v6832, 7
        %v6834 = vsub.s32 %v2637, %v6833
        %v6835 = vrot.slane %v5684, %v6834
        %v6836 = vsel %vm2642, %v6835, %v6831
        %v6837 = vsel %vm3787, %v5702, %v5693
        %v6838 = vsel %vm3789, %v5711, %v6837
        %v6839 = vsel %vm3791, %v5720, %v6838
        %v6840 = vsel %vm3793, %v5729, %v6839
        %v6841 = vsel %vm3795, %v5738, %v6840
        %v6842 = vsel %vm3797, %v5747, %v6841
        %v6843 = vsel %vm3799, %v5756, %v6842
        %v6844 = vsel %vm3787, %v5774, %v5765
        %v6845 = vsel %vm3789, %v5783, %v6844
        %v6846 = vsel %vm3791, %v5792, %v6845
        %v6847 = vsel %vm3793, %v5801, %v6846
        %v6848 = vsel %vm3795, %v5810, %v6847
        %v6849 = vsel %vm3797, %v5819, %v6848
        %v6850 = vsel %vm3799, %v5828, %v6849
        %v6851 = vsel %vm3787, %v5846, %v5837
        %v6852 = vsel %vm3789, %v5855, %v6851
        %v6853 = vsel %vm3791, %v5864, %v6852
        %v6854 = vsel %vm3793, %v5873, %v6853
        %v6855 = vsel %vm3795, %v5882, %v6854
        %v6856 = vsel %vm3797, %v5891, %v6855
        %v6857 = vsel %vm3799, %v5900, %v6856
        %v6858 = vsel %vm3787, %v5918, %v5909
        %v6859 = vsel %vm3789, %v5927, %v6858
        %v6860 = vsel %vm3791, %v5936, %v6859
        %v6861 = vsel %vm3793, %v5945, %v6860
        %v6862 = vsel %vm3795, %v5954, %v6861
        %v6863 = vsel %vm3797, %v5963, %v6862
        %v6864 = vsel %vm3799, %v5972, %v6863
        %v6865 = vsel %vm3787, %v5990, %v5981
        %v6866 = vsel %vm3789, %v5999, %v6865
        %v6867 = vsel %vm3791, %v6008, %v6866
        %v6868 = vsel %vm3793, %v6017, %v6867
        %v6869 = vsel %vm3795, %v6026, %v6868
        %v6870 = vsel %vm3797, %v6035, %v6869
        %v6871 = vsel %vm3799, %v6044, %v6870
        %v6872 = vsel %vm3787, %v6062, %v6053
        %v6873 = vsel %vm3789, %v6071, %v6872
        %v6874 = vsel %vm3791, %v6080, %v6873
        %v6875 = vsel %vm3793, %v6089, %v6874
        %v6876 = vsel %vm3795, %v6098, %v6875
        %v6877 = vsel %vm3797, %v6107, %v6876
        %v6878 = vsel %vm3799, %v6116, %v6877
        %v6879 = vsel %vm3787, %v6134, %v6125
        %v6880 = vsel %vm3789, %v6143, %v6879
        %v6881 = vsel %vm3791, %v6152, %v6880
        %v6882 = vsel %vm3793, %v6161, %v6881
        %v6883 = vsel %vm3795, %v6170, %v6882
        %v6884 = vsel %vm3797, %v6179, %v6883
        %v6885 = vsel %vm3799, %v6188, %v6884
        %v6886 = vsel %vm3787, %v6206, %v6197
        %v6887 = vsel %vm3789, %v6215, %v6886
        %v6888 = vsel %vm3791, %v6224, %v6887
        %v6889 = vsel %vm3793, %v6233, %v6888
        %v6890 = vsel %vm3795, %v6242, %v6889
        %v6891 = vsel %vm3797, %v6251, %v6890
        %v6892 = vsel %vm3799, %v6260, %v6891
        %v6893 = vsel %vm3787, %v6278, %v6269
        %v6894 = vsel %vm3789, %v6287, %v6893
        %v6895 = vsel %vm3791, %v6296, %v6894
        %v6896 = vsel %vm3793, %v6305, %v6895
        %v6897 = vsel %vm3795, %v6314, %v6896
        %v6898 = vsel %vm3797, %v6323, %v6897
        %v6899 = vsel %vm3799, %v6332, %v6898
        %v6900 = vsel %vm3787, %v6350, %v6341
        %v6901 = vsel %vm3789, %v6359, %v6900
        %v6902 = vsel %vm3791, %v6368, %v6901
        %v6903 = vsel %vm3793, %v6377, %v6902
        %v6904 = vsel %vm3795, %v6386, %v6903
        %v6905 = vsel %vm3797, %v6395, %v6904
        %v6906 = vsel %vm3799, %v6404, %v6905
        %v6907 = vsel %vm3787, %v6422, %v6413
        %v6908 = vsel %vm3789, %v6431, %v6907
        %v6909 = vsel %vm3791, %v6440, %v6908
        %v6910 = vsel %vm3793, %v6449, %v6909
        %v6911 = vsel %vm3795, %v6458, %v6910
        %v6912 = vsel %vm3797, %v6467, %v6911
        %v6913 = vsel %vm3799, %v6476, %v6912
        %v6914 = vsel %vm3787, %v6494, %v6485
        %v6915 = vsel %vm3789, %v6503, %v6914
        %v6916 = vsel %vm3791, %v6512, %v6915
        %v6917 = vsel %vm3793, %v6521, %v6916
        %v6918 = vsel %vm3795, %v6530, %v6917
        %v6919 = vsel %vm3797, %v6539, %v6918
        %v6920 = vsel %vm3799, %v6548, %v6919
        %v6921 = vsel %vm3787, %v6566, %v6557
        %v6922 = vsel %vm3789, %v6575, %v6921
        %v6923 = vsel %vm3791, %v6584, %v6922
        %v6924 = vsel %vm3793, %v6593, %v6923
        %v6925 = vsel %vm3795, %v6602, %v6924
        %v6926 = vsel %vm3797, %v6611, %v6925
        %v6927 = vsel %vm3799, %v6620, %v6926
        %v6928 = vsel %vm3787, %v6638, %v6629
        %v6929 = vsel %vm3789, %v6647, %v6928
        %v6930 = vsel %vm3791, %v6656, %v6929
        %v6931 = vsel %vm3793, %v6665, %v6930
        %v6932 = vsel %vm3795, %v6674, %v6931
        %v6933 = vsel %vm3797, %v6683, %v6932
        %v6934 = vsel %vm3799, %v6692, %v6933
        %v6935 = vsel %vm3787, %v6710, %v6701
        %v6936 = vsel %vm3789, %v6719, %v6935
        %v6937 = vsel %vm3791, %v6728, %v6936
        %v6938 = vsel %vm3793, %v6737, %v6937
        %v6939 = vsel %vm3795, %v6746, %v6938
        %v6940 = vsel %vm3797, %v6755, %v6939
        %v6941 = vsel %vm3799, %v6764, %v6940
        %v6942 = vsel %vm3787, %v6782, %v6773
        %v6943 = vsel %vm3789, %v6791, %v6942
        %v6944 = vsel %vm3791, %v6800, %v6943
        %v6945 = vsel %vm3793, %v6809, %v6944
        %v6946 = vsel %vm3795, %v6818, %v6945
        %v6947 = vsel %vm3797, %v6827, %v6946
        %v6948 = vsel %vm3799, %v6836, %v6947
        %v6965 = vsel %vm3922, %v6843, 0.0
        %6966 = vadd.xlane.f32.xlu0 %v6965
        %v6967 = vpop.xlane.xlu0 %6966
        %v6968 = vsel %vm3922, %v6850, 0.0
        %6969 = vadd.xlane.f32.xlu0 %v6968
        %v6970 = vpop.xlane.xlu0 %6969
        %v6971 = vsel %vm3922, %v6857, 0.0
        %6972 = vadd.xlane.f32.xlu0 %v6971
        %v6973 = vpop.xlane.xlu0 %6972
        %v6974 = vsel %vm3922, %v6864, 0.0
        %6975 = vadd.xlane.f32.xlu0 %v6974
        %v6976 = vpop.xlane.xlu0 %6975
        %v6977 = vsel %vm3922, %v6871, 0.0
        %6978 = vadd.xlane.f32.xlu0 %v6977
        %v6979 = vpop.xlane.xlu0 %6978
        %v6980 = vsel %vm3922, %v6878, 0.0
        %6981 = vadd.xlane.f32.xlu0 %v6980
        %v6982 = vpop.xlane.xlu0 %6981
        %v6983 = vsel %vm3922, %v6885, 0.0
        %6984 = vadd.xlane.f32.xlu0 %v6983
        %v6985 = vpop.xlane.xlu0 %6984
        %v6986 = vsel %vm3922, %v6892, 0.0
        %6987 = vadd.xlane.f32.xlu0 %v6986
        %v6988 = vpop.xlane.xlu0 %6987
        %v6989 = vsel %vm3922, %v6899, 0.0
        %6990 = vadd.xlane.f32.xlu0 %v6989
        %v6991 = vpop.xlane.xlu0 %6990
        %v6992 = vsel %vm3922, %v6906, 0.0
        %6993 = vadd.xlane.f32.xlu0 %v6992
        %v6994 = vpop.xlane.xlu0 %6993
        %v6995 = vsel %vm3922, %v6913, 0.0
        %6996 = vadd.xlane.f32.xlu0 %v6995
        %v6997 = vpop.xlane.xlu0 %6996
        %v6998 = vsel %vm3922, %v6920, 0.0
        %6999 = vadd.xlane.f32.xlu0 %v6998
        %v7000 = vpop.xlane.xlu0 %6999
        %v7001 = vsel %vm3922, %v6927, 0.0
        %7002 = vadd.xlane.f32.xlu0 %v7001
        %v7003 = vpop.xlane.xlu0 %7002
        %v7004 = vsel %vm3922, %v6934, 0.0
        %7005 = vadd.xlane.f32.xlu0 %v7004
        %v7006 = vpop.xlane.xlu0 %7005
        %v7007 = vsel %vm3922, %v6941, 0.0
        %7008 = vadd.xlane.f32.xlu0 %v7007
        %v7009 = vpop.xlane.xlu0 %7008
        %v7010 = vsel %vm3922, %v6948, 0.0
        %7011 = vadd.xlane.f32.xlu0 %v7010
        %v7012 = vpop.xlane.xlu0 %7011
        %vm7013 = vcmp.le.f32.partialorder %v6967, 1e-08
        %vm7014 = vcmp.le.f32.partialorder %v6970, 1e-08
        %vm7015 = vcmp.le.f32.partialorder %v6973, 1e-08
        %vm7016 = vcmp.le.f32.partialorder %v6976, 1e-08
        %vm7017 = vcmp.le.f32.partialorder %v6979, 1e-08
        %vm7018 = vcmp.le.f32.partialorder %v6982, 1e-08
        %vm7019 = vcmp.le.f32.partialorder %v6985, 1e-08
        %vm7020 = vcmp.le.f32.partialorder %v6988, 1e-08
        %vm7021 = vcmp.le.f32.partialorder %v6991, 1e-08
        %vm7022 = vcmp.le.f32.partialorder %v6994, 1e-08
        %vm7023 = vcmp.le.f32.partialorder %v6997, 1e-08
        %vm7024 = vcmp.le.f32.partialorder %v7000, 1e-08
        %vm7025 = vcmp.le.f32.partialorder %v7003, 1e-08
        %vm7026 = vcmp.le.f32.partialorder %v7006, 1e-08
        %vm7027 = vcmp.le.f32.partialorder %v7009, 1e-08
        %vm7028 = vcmp.le.f32.partialorder %v7012, 1e-08
        %v7029 = vsel %vm7013, 1.0, %v6967
        %v7030 = vsel %vm7014, 1.0, %v6970
        %v7031 = vsel %vm7015, 1.0, %v6973
        %v7032 = vsel %vm7016, 1.0, %v6976
        %v7033 = vsel %vm7017, 1.0, %v6979
        %v7034 = vsel %vm7018, 1.0, %v6982
        %v7035 = vsel %vm7019, 1.0, %v6985
        %v7036 = vsel %vm7020, 1.0, %v6988
        %v7037 = vsel %vm7021, 1.0, %v6991
        %v7038 = vsel %vm7022, 1.0, %v6994
        %v7039 = vsel %vm7023, 1.0, %v6997
        %v7040 = vsel %vm7024, 1.0, %v7000
        %v7041 = vsel %vm7025, 1.0, %v7003
        %v7042 = vsel %vm7026, 1.0, %v7006
        %v7043 = vsel %vm7027, 1.0, %v7009
        %v7044 = vsel %vm7028, 1.0, %v7012
        %v7045 = vrcp.pop %v7029
        %v7046 = vmul.f32 1.0, %v7045
        %v7047 = vrcp.pop %v7030
        %v7048 = vmul.f32 1.0, %v7047
        %v7049 = vrcp.pop %v7031
        %v7050 = vmul.f32 1.0, %v7049
        %v7051 = vrcp.pop %v7032
        %v7052 = vmul.f32 1.0, %v7051
        %v7053 = vrcp.pop %v7033
        %v7054 = vmul.f32 1.0, %v7053
        %v7055 = vrcp.pop %v7034
        %v7056 = vmul.f32 1.0, %v7055
        %v7057 = vrcp.pop %v7035
        %v7058 = vmul.f32 1.0, %v7057
        %v7059 = vrcp.pop %v7036
        %v7060 = vmul.f32 1.0, %v7059
        %v7061 = vrcp.pop %v7037
        %v7062 = vmul.f32 1.0, %v7061
        %v7063 = vrcp.pop %v7038
        %v7064 = vmul.f32 1.0, %v7063
        %v7065 = vrcp.pop %v7039
        %v7066 = vmul.f32 1.0, %v7065
        %v7067 = vrcp.pop %v7040
        %v7068 = vmul.f32 1.0, %v7067
        %v7069 = vrcp.pop %v7041
        %v7070 = vmul.f32 1.0, %v7069
        %v7071 = vrcp.pop %v7042
        %v7072 = vmul.f32 1.0, %v7071
        %v7073 = vrcp.pop %v7043
        %v7074 = vmul.f32 1.0, %v7073
        %v7075 = vrcp.pop %v7044
        %v7076 = vmul.f32 1.0, %v7075
        %v7077 = vmul.f32 %v4019, %v7046
        %v7078 = vmul.f32 %v4020, %v7048
        %v7079 = vmul.f32 %v4021, %v7050
        %v7080 = vmul.f32 %v4022, %v7052
        %v7081 = vmul.f32 %v4023, %v7054
        %v7082 = vmul.f32 %v4024, %v7056
        %v7083 = vmul.f32 %v4025, %v7058
        %v7084 = vmul.f32 %v4026, %v7060
        %v7085 = vmul.f32 %v4027, %v7062
        %v7086 = vmul.f32 %v4028, %v7064
        %v7087 = vmul.f32 %v4029, %v7066
        %v7088 = vmul.f32 %v4030, %v7068
        %v7089 = vmul.f32 %v4031, %v7070
        %v7090 = vmul.f32 %v4032, %v7072
        %v7091 = vmul.f32 %v4033, %v7074
        %v7092 = vmul.f32 %v4034, %v7076
        %v7095 = vlaneseq
        %v7096 = vshrl.u32 %v7095, 7
        %v7097 = vsub.s32 0, %v7096
        %v7098 = vrot.slane %v1138, %v7097
        %7100 = vbcast.lane.b32.xlu0 %v7098, 256
        %v7101 = vpop.permute.xlu0 %7100
        %s7103 = sor.u32 256, 8
        %7104 = vbcast.lane.b32.xlu0 %v7098, %s7103
        %v7105 = vpop.permute.xlu0 %7104
        %v7106 = vlaneseq
        %v7107 = vshrl.u32 %v7106, 7
        %v7108 = vsub.s32 1, %v7107
        %v7109 = vrot.slane %v1138, %v7108
        %7111 = vbcast.lane.b32.xlu0 %v7109, 256
        %v7112 = vpop.permute.xlu0 %7111
        %s7114 = sor.u32 256, 8
        %7115 = vbcast.lane.b32.xlu0 %v7109, %s7114
        %v7116 = vpop.permute.xlu0 %7115
        %v7117 = vlaneseq
        %v7118 = vshrl.u32 %v7117, 7
        %v7119 = vsub.s32 2, %v7118
        %v7120 = vrot.slane %v1138, %v7119
        %7122 = vbcast.lane.b32.xlu0 %v7120, 256
        %v7123 = vpop.permute.xlu0 %7122
        %s7125 = sor.u32 256, 8
        %7126 = vbcast.lane.b32.xlu0 %v7120, %s7125
        %v7127 = vpop.permute.xlu0 %7126
        %v7128 = vlaneseq
        %v7129 = vshrl.u32 %v7128, 7
        %v7130 = vsub.s32 3, %v7129
        %v7131 = vrot.slane %v1138, %v7130
        %7133 = vbcast.lane.b32.xlu0 %v7131, 256
        %v7134 = vpop.permute.xlu0 %7133
        %s7136 = sor.u32 256, 8
        %7137 = vbcast.lane.b32.xlu0 %v7131, %s7136
        %v7138 = vpop.permute.xlu0 %7137
        %v7139 = vlaneseq
        %v7140 = vshrl.u32 %v7139, 7
        %v7141 = vsub.s32 4, %v7140
        %v7142 = vrot.slane %v1138, %v7141
        %7144 = vbcast.lane.b32.xlu0 %v7142, 256
        %v7145 = vpop.permute.xlu0 %7144
        %s7147 = sor.u32 256, 8
        %7148 = vbcast.lane.b32.xlu0 %v7142, %s7147
        %v7149 = vpop.permute.xlu0 %7148
        %v7150 = vlaneseq
        %v7151 = vshrl.u32 %v7150, 7
        %v7152 = vsub.s32 5, %v7151
        %v7153 = vrot.slane %v1138, %v7152
        %7155 = vbcast.lane.b32.xlu0 %v7153, 256
        %v7156 = vpop.permute.xlu0 %7155
        %s7158 = sor.u32 256, 8
        %7159 = vbcast.lane.b32.xlu0 %v7153, %s7158
        %v7160 = vpop.permute.xlu0 %7159
        %v7161 = vlaneseq
        %v7162 = vshrl.u32 %v7161, 7
        %v7163 = vsub.s32 6, %v7162
        %v7164 = vrot.slane %v1138, %v7163
        %7166 = vbcast.lane.b32.xlu0 %v7164, 256
        %v7167 = vpop.permute.xlu0 %7166
        %s7169 = sor.u32 256, 8
        %7170 = vbcast.lane.b32.xlu0 %v7164, %s7169
        %v7171 = vpop.permute.xlu0 %7170
        %v7172 = vlaneseq
        %v7173 = vshrl.u32 %v7172, 7
        %v7174 = vsub.s32 7, %v7173
        %v7175 = vrot.slane %v1138, %v7174
        %7177 = vbcast.lane.b32.xlu0 %v7175, 256
        %v7178 = vpop.permute.xlu0 %7177
        %s7180 = sor.u32 256, 8
        %7181 = vbcast.lane.b32.xlu0 %v7175, %s7180
        %v7182 = vpop.permute.xlu0 %7181
        %v7183 = vlaneseq
        %v7184 = vshrl.u32 %v7183, 7
        %v7185 = vsub.s32 0, %v7184
        %v7186 = vrot.slane %v1139, %v7185
        %7188 = vbcast.lane.b32.xlu0 %v7186, 256
        %v7189 = vpop.permute.xlu0 %7188
        %s7191 = sor.u32 256, 8
        %7192 = vbcast.lane.b32.xlu0 %v7186, %s7191
        %v7193 = vpop.permute.xlu0 %7192
        %v7194 = vlaneseq
        %v7195 = vshrl.u32 %v7194, 7
        %v7196 = vsub.s32 1, %v7195
        %v7197 = vrot.slane %v1139, %v7196
        %7199 = vbcast.lane.b32.xlu0 %v7197, 256
        %v7200 = vpop.permute.xlu0 %7199
        %s7202 = sor.u32 256, 8
        %7203 = vbcast.lane.b32.xlu0 %v7197, %s7202
        %v7204 = vpop.permute.xlu0 %7203
        %v7205 = vlaneseq
        %v7206 = vshrl.u32 %v7205, 7
        %v7207 = vsub.s32 2, %v7206
        %v7208 = vrot.slane %v1139, %v7207
        %7210 = vbcast.lane.b32.xlu0 %v7208, 256
        %v7211 = vpop.permute.xlu0 %7210
        %s7213 = sor.u32 256, 8
        %7214 = vbcast.lane.b32.xlu0 %v7208, %s7213
        %v7215 = vpop.permute.xlu0 %7214
        %v7216 = vlaneseq
        %v7217 = vshrl.u32 %v7216, 7
        %v7218 = vsub.s32 3, %v7217
        %v7219 = vrot.slane %v1139, %v7218
        %7221 = vbcast.lane.b32.xlu0 %v7219, 256
        %v7222 = vpop.permute.xlu0 %7221
        %s7224 = sor.u32 256, 8
        %7225 = vbcast.lane.b32.xlu0 %v7219, %s7224
        %v7226 = vpop.permute.xlu0 %7225
        %v7227 = vlaneseq
        %v7228 = vshrl.u32 %v7227, 7
        %v7229 = vsub.s32 4, %v7228
        %v7230 = vrot.slane %v1139, %v7229
        %7232 = vbcast.lane.b32.xlu0 %v7230, 256
        %v7233 = vpop.permute.xlu0 %7232
        %s7235 = sor.u32 256, 8
        %7236 = vbcast.lane.b32.xlu0 %v7230, %s7235
        %v7237 = vpop.permute.xlu0 %7236
        %v7238 = vlaneseq
        %v7239 = vshrl.u32 %v7238, 7
        %v7240 = vsub.s32 5, %v7239
        %v7241 = vrot.slane %v1139, %v7240
        %7243 = vbcast.lane.b32.xlu0 %v7241, 256
        %v7244 = vpop.permute.xlu0 %7243
        %s7246 = sor.u32 256, 8
        %7247 = vbcast.lane.b32.xlu0 %v7241, %s7246
        %v7248 = vpop.permute.xlu0 %7247
        %v7249 = vlaneseq
        %v7250 = vshrl.u32 %v7249, 7
        %v7251 = vsub.s32 6, %v7250
        %v7252 = vrot.slane %v1139, %v7251
        %7254 = vbcast.lane.b32.xlu0 %v7252, 256
        %v7255 = vpop.permute.xlu0 %7254
        %s7257 = sor.u32 256, 8
        %7258 = vbcast.lane.b32.xlu0 %v7252, %s7257
        %v7259 = vpop.permute.xlu0 %7258
        %v7260 = vlaneseq
        %v7261 = vshrl.u32 %v7260, 7
        %v7262 = vsub.s32 7, %v7261
        %v7263 = vrot.slane %v1139, %v7262
        %7265 = vbcast.lane.b32.xlu0 %v7263, 256
        %v7266 = vpop.permute.xlu0 %7265
        %s7268 = sor.u32 256, 8
        %7269 = vbcast.lane.b32.xlu0 %v7263, %s7268
        %v7270 = vpop.permute.xlu0 %7269
        %v7303 = vmul.f32 %v7077, %v7101
        %v7304 = vmul.f32 %v7078, %v7105
        %v7305 = vmul.f32 %v7077, %v7112
        %v7306 = vmul.f32 %v7078, %v7116
        %v7307 = vmul.f32 %v7077, %v7123
        %v7308 = vmul.f32 %v7078, %v7127
        %v7309 = vmul.f32 %v7077, %v7134
        %v7310 = vmul.f32 %v7078, %v7138
        %v7311 = vmul.f32 %v7077, %v7145
        %v7312 = vmul.f32 %v7078, %v7149
        %v7313 = vmul.f32 %v7077, %v7156
        %v7314 = vmul.f32 %v7078, %v7160
        %v7315 = vmul.f32 %v7077, %v7167
        %v7316 = vmul.f32 %v7078, %v7171
        %v7317 = vmul.f32 %v7077, %v7178
        %v7318 = vmul.f32 %v7078, %v7182
        %v7319 = vmul.f32 %v7077, %v7189
        %v7320 = vmul.f32 %v7078, %v7193
        %v7321 = vmul.f32 %v7077, %v7200
        %v7322 = vmul.f32 %v7078, %v7204
        %v7323 = vmul.f32 %v7077, %v7211
        %v7324 = vmul.f32 %v7078, %v7215
        %v7325 = vmul.f32 %v7077, %v7222
        %v7326 = vmul.f32 %v7078, %v7226
        %v7327 = vmul.f32 %v7077, %v7233
        %v7328 = vmul.f32 %v7078, %v7237
        %v7329 = vmul.f32 %v7077, %v7244
        %v7330 = vmul.f32 %v7078, %v7248
        %v7331 = vmul.f32 %v7077, %v7255
        %v7332 = vmul.f32 %v7078, %v7259
        %v7333 = vmul.f32 %v7077, %v7266
        %v7334 = vmul.f32 %v7078, %v7270
        %v7335 = vmul.f32 %v7079, %v7101
        %v7336 = vmul.f32 %v7080, %v7105
        %v7337 = vmul.f32 %v7079, %v7112
        %v7338 = vmul.f32 %v7080, %v7116
        %v7339 = vmul.f32 %v7079, %v7123
        %v7340 = vmul.f32 %v7080, %v7127
        %v7341 = vmul.f32 %v7079, %v7134
        %v7342 = vmul.f32 %v7080, %v7138
        %v7343 = vmul.f32 %v7079, %v7145
        %v7344 = vmul.f32 %v7080, %v7149
        %v7345 = vmul.f32 %v7079, %v7156
        %v7346 = vmul.f32 %v7080, %v7160
        %v7347 = vmul.f32 %v7079, %v7167
        %v7348 = vmul.f32 %v7080, %v7171
        %v7349 = vmul.f32 %v7079, %v7178
        %v7350 = vmul.f32 %v7080, %v7182
        %v7351 = vmul.f32 %v7079, %v7189
        %v7352 = vmul.f32 %v7080, %v7193
        %v7353 = vmul.f32 %v7079, %v7200
        %v7354 = vmul.f32 %v7080, %v7204
        %v7355 = vmul.f32 %v7079, %v7211
        %v7356 = vmul.f32 %v7080, %v7215
        %v7357 = vmul.f32 %v7079, %v7222
        %v7358 = vmul.f32 %v7080, %v7226
        %v7359 = vmul.f32 %v7079, %v7233
        %v7360 = vmul.f32 %v7080, %v7237
        %v7361 = vmul.f32 %v7079, %v7244
        %v7362 = vmul.f32 %v7080, %v7248
        %v7363 = vmul.f32 %v7079, %v7255
        %v7364 = vmul.f32 %v7080, %v7259
        %v7365 = vmul.f32 %v7079, %v7266
        %v7366 = vmul.f32 %v7080, %v7270
        %v7367 = vmul.f32 %v7081, %v7101
        %v7368 = vmul.f32 %v7082, %v7105
        %v7369 = vmul.f32 %v7081, %v7112
        %v7370 = vmul.f32 %v7082, %v7116
        %v7371 = vmul.f32 %v7081, %v7123
        %v7372 = vmul.f32 %v7082, %v7127
        %v7373 = vmul.f32 %v7081, %v7134
        %v7374 = vmul.f32 %v7082, %v7138
        %v7375 = vmul.f32 %v7081, %v7145
        %v7376 = vmul.f32 %v7082, %v7149
        %v7377 = vmul.f32 %v7081, %v7156
        %v7378 = vmul.f32 %v7082, %v7160
        %v7379 = vmul.f32 %v7081, %v7167
        %v7380 = vmul.f32 %v7082, %v7171
        %v7381 = vmul.f32 %v7081, %v7178
        %v7382 = vmul.f32 %v7082, %v7182
        %v7383 = vmul.f32 %v7081, %v7189
        %v7384 = vmul.f32 %v7082, %v7193
        %v7385 = vmul.f32 %v7081, %v7200
        %v7386 = vmul.f32 %v7082, %v7204
        %v7387 = vmul.f32 %v7081, %v7211
        %v7388 = vmul.f32 %v7082, %v7215
        %v7389 = vmul.f32 %v7081, %v7222
        %v7390 = vmul.f32 %v7082, %v7226
        %v7391 = vmul.f32 %v7081, %v7233
        %v7392 = vmul.f32 %v7082, %v7237
        %v7393 = vmul.f32 %v7081, %v7244
        %v7394 = vmul.f32 %v7082, %v7248
        %v7395 = vmul.f32 %v7081, %v7255
        %v7396 = vmul.f32 %v7082, %v7259
        %v7397 = vmul.f32 %v7081, %v7266
        %v7398 = vmul.f32 %v7082, %v7270
        %v7399 = vmul.f32 %v7083, %v7101
        %v7400 = vmul.f32 %v7084, %v7105
        %v7401 = vmul.f32 %v7083, %v7112
        %v7402 = vmul.f32 %v7084, %v7116
        %v7403 = vmul.f32 %v7083, %v7123
        %v7404 = vmul.f32 %v7084, %v7127
        %v7405 = vmul.f32 %v7083, %v7134
        %v7406 = vmul.f32 %v7084, %v7138
        %v7407 = vmul.f32 %v7083, %v7145
        %v7408 = vmul.f32 %v7084, %v7149
        %v7409 = vmul.f32 %v7083, %v7156
        %v7410 = vmul.f32 %v7084, %v7160
        %v7411 = vmul.f32 %v7083, %v7167
        %v7412 = vmul.f32 %v7084, %v7171
        %v7413 = vmul.f32 %v7083, %v7178
        %v7414 = vmul.f32 %v7084, %v7182
        %v7415 = vmul.f32 %v7083, %v7189
        %v7416 = vmul.f32 %v7084, %v7193
        %v7417 = vmul.f32 %v7083, %v7200
        %v7418 = vmul.f32 %v7084, %v7204
        %v7419 = vmul.f32 %v7083, %v7211
        %v7420 = vmul.f32 %v7084, %v7215
        %v7421 = vmul.f32 %v7083, %v7222
        %v7422 = vmul.f32 %v7084, %v7226
        %v7423 = vmul.f32 %v7083, %v7233
        %v7424 = vmul.f32 %v7084, %v7237
        %v7425 = vmul.f32 %v7083, %v7244
        %v7426 = vmul.f32 %v7084, %v7248
        %v7427 = vmul.f32 %v7083, %v7255
        %v7428 = vmul.f32 %v7084, %v7259
        %v7429 = vmul.f32 %v7083, %v7266
        %v7430 = vmul.f32 %v7084, %v7270
        %v7431 = vmul.f32 %v7085, %v7101
        %v7432 = vmul.f32 %v7086, %v7105
        %v7433 = vmul.f32 %v7085, %v7112
        %v7434 = vmul.f32 %v7086, %v7116
        %v7435 = vmul.f32 %v7085, %v7123
        %v7436 = vmul.f32 %v7086, %v7127
        %v7437 = vmul.f32 %v7085, %v7134
        %v7438 = vmul.f32 %v7086, %v7138
        %v7439 = vmul.f32 %v7085, %v7145
        %v7440 = vmul.f32 %v7086, %v7149
        %v7441 = vmul.f32 %v7085, %v7156
        %v7442 = vmul.f32 %v7086, %v7160
        %v7443 = vmul.f32 %v7085, %v7167
        %v7444 = vmul.f32 %v7086, %v7171
        %v7445 = vmul.f32 %v7085, %v7178
        %v7446 = vmul.f32 %v7086, %v7182
        %v7447 = vmul.f32 %v7085, %v7189
        %v7448 = vmul.f32 %v7086, %v7193
        %v7449 = vmul.f32 %v7085, %v7200
        %v7450 = vmul.f32 %v7086, %v7204
        %v7451 = vmul.f32 %v7085, %v7211
        %v7452 = vmul.f32 %v7086, %v7215
        %v7453 = vmul.f32 %v7085, %v7222
        %v7454 = vmul.f32 %v7086, %v7226
        %v7455 = vmul.f32 %v7085, %v7233
        %v7456 = vmul.f32 %v7086, %v7237
        %v7457 = vmul.f32 %v7085, %v7244
        %v7458 = vmul.f32 %v7086, %v7248
        %v7459 = vmul.f32 %v7085, %v7255
        %v7460 = vmul.f32 %v7086, %v7259
        %v7461 = vmul.f32 %v7085, %v7266
        %v7462 = vmul.f32 %v7086, %v7270
        %v7463 = vmul.f32 %v7087, %v7101
        %v7464 = vmul.f32 %v7088, %v7105
        %v7465 = vmul.f32 %v7087, %v7112
        %v7466 = vmul.f32 %v7088, %v7116
        %v7467 = vmul.f32 %v7087, %v7123
        %v7468 = vmul.f32 %v7088, %v7127
        %v7469 = vmul.f32 %v7087, %v7134
        %v7470 = vmul.f32 %v7088, %v7138
        %v7471 = vmul.f32 %v7087, %v7145
        %v7472 = vmul.f32 %v7088, %v7149
        %v7473 = vmul.f32 %v7087, %v7156
        %v7474 = vmul.f32 %v7088, %v7160
        %v7475 = vmul.f32 %v7087, %v7167
        %v7476 = vmul.f32 %v7088, %v7171
        %v7477 = vmul.f32 %v7087, %v7178
        %v7478 = vmul.f32 %v7088, %v7182
        %v7479 = vmul.f32 %v7087, %v7189
        %v7480 = vmul.f32 %v7088, %v7193
        %v7481 = vmul.f32 %v7087, %v7200
        %v7482 = vmul.f32 %v7088, %v7204
        %v7483 = vmul.f32 %v7087, %v7211
        %v7484 = vmul.f32 %v7088, %v7215
        %v7485 = vmul.f32 %v7087, %v7222
        %v7486 = vmul.f32 %v7088, %v7226
        %v7487 = vmul.f32 %v7087, %v7233
        %v7488 = vmul.f32 %v7088, %v7237
        %v7489 = vmul.f32 %v7087, %v7244
        %v7490 = vmul.f32 %v7088, %v7248
        %v7491 = vmul.f32 %v7087, %v7255
        %v7492 = vmul.f32 %v7088, %v7259
        %v7493 = vmul.f32 %v7087, %v7266
        %v7494 = vmul.f32 %v7088, %v7270
        %v7495 = vmul.f32 %v7089, %v7101
        %v7496 = vmul.f32 %v7090, %v7105
        %v7497 = vmul.f32 %v7089, %v7112
        %v7498 = vmul.f32 %v7090, %v7116
        %v7499 = vmul.f32 %v7089, %v7123
        %v7500 = vmul.f32 %v7090, %v7127
        %v7501 = vmul.f32 %v7089, %v7134
        %v7502 = vmul.f32 %v7090, %v7138
        %v7503 = vmul.f32 %v7089, %v7145
        %v7504 = vmul.f32 %v7090, %v7149
        %v7505 = vmul.f32 %v7089, %v7156
        %v7506 = vmul.f32 %v7090, %v7160
        %v7507 = vmul.f32 %v7089, %v7167
        %v7508 = vmul.f32 %v7090, %v7171
        %v7509 = vmul.f32 %v7089, %v7178
        %v7510 = vmul.f32 %v7090, %v7182
        %v7511 = vmul.f32 %v7089, %v7189
        %v7512 = vmul.f32 %v7090, %v7193
        %v7513 = vmul.f32 %v7089, %v7200
        %v7514 = vmul.f32 %v7090, %v7204
        %v7515 = vmul.f32 %v7089, %v7211
        %v7516 = vmul.f32 %v7090, %v7215
        %v7517 = vmul.f32 %v7089, %v7222
        %v7518 = vmul.f32 %v7090, %v7226
        %v7519 = vmul.f32 %v7089, %v7233
        %v7520 = vmul.f32 %v7090, %v7237
        %v7521 = vmul.f32 %v7089, %v7244
        %v7522 = vmul.f32 %v7090, %v7248
        %v7523 = vmul.f32 %v7089, %v7255
        %v7524 = vmul.f32 %v7090, %v7259
        %v7525 = vmul.f32 %v7089, %v7266
        %v7526 = vmul.f32 %v7090, %v7270
        %v7527 = vmul.f32 %v7091, %v7101
        %v7528 = vmul.f32 %v7092, %v7105
        %v7529 = vmul.f32 %v7091, %v7112
        %v7530 = vmul.f32 %v7092, %v7116
        %v7531 = vmul.f32 %v7091, %v7123
        %v7532 = vmul.f32 %v7092, %v7127
        %v7533 = vmul.f32 %v7091, %v7134
        %v7534 = vmul.f32 %v7092, %v7138
        %v7535 = vmul.f32 %v7091, %v7145
        %v7536 = vmul.f32 %v7092, %v7149
        %v7537 = vmul.f32 %v7091, %v7156
        %v7538 = vmul.f32 %v7092, %v7160
        %v7539 = vmul.f32 %v7091, %v7167
        %v7540 = vmul.f32 %v7092, %v7171
        %v7541 = vmul.f32 %v7091, %v7178
        %v7542 = vmul.f32 %v7092, %v7182
        %v7543 = vmul.f32 %v7091, %v7189
        %v7544 = vmul.f32 %v7092, %v7193
        %v7545 = vmul.f32 %v7091, %v7200
        %v7546 = vmul.f32 %v7092, %v7204
        %v7547 = vmul.f32 %v7091, %v7211
        %v7548 = vmul.f32 %v7092, %v7215
        %v7549 = vmul.f32 %v7091, %v7222
        %v7550 = vmul.f32 %v7092, %v7226
        %v7551 = vmul.f32 %v7091, %v7233
        %v7552 = vmul.f32 %v7092, %v7237
        %v7553 = vmul.f32 %v7091, %v7244
        %v7554 = vmul.f32 %v7092, %v7248
        %v7555 = vmul.f32 %v7091, %v7255
        %v7556 = vmul.f32 %v7092, %v7259
        %v7557 = vmul.f32 %v7091, %v7266
        %v7558 = vmul.f32 %v7092, %v7270
        %7815 = vset.pattern.permute.xlu0 0
        %7816 = vperm.xlu0 %7815, %v7303
        %v7817 = vpop.permute.xlu0 %7816
        %7818 = vset.pattern.permute.xlu0 0
        %7819 = vperm.xlu0 %7818, %v7304
        %v7820 = vpop.permute.xlu0 %7819
        %7821 = vset.pattern.permute.xlu0 0
        %7822 = vperm.xlu0 %7821, %v7305
        %v7823 = vpop.permute.xlu0 %7822
        %7824 = vset.pattern.permute.xlu0 0
        %7825 = vperm.xlu0 %7824, %v7306
        %v7826 = vpop.permute.xlu0 %7825
        %7827 = vset.pattern.permute.xlu0 0
        %7828 = vperm.xlu0 %7827, %v7307
        %v7829 = vpop.permute.xlu0 %7828
        %7830 = vset.pattern.permute.xlu0 0
        %7831 = vperm.xlu0 %7830, %v7308
        %v7832 = vpop.permute.xlu0 %7831
        %7833 = vset.pattern.permute.xlu0 0
        %7834 = vperm.xlu0 %7833, %v7309
        %v7835 = vpop.permute.xlu0 %7834
        %7836 = vset.pattern.permute.xlu0 0
        %7837 = vperm.xlu0 %7836, %v7310
        %v7838 = vpop.permute.xlu0 %7837
        %7839 = vset.pattern.permute.xlu0 0
        %7840 = vperm.xlu0 %7839, %v7311
        %v7841 = vpop.permute.xlu0 %7840
        %7842 = vset.pattern.permute.xlu0 0
        %7843 = vperm.xlu0 %7842, %v7312
        %v7844 = vpop.permute.xlu0 %7843
        %7845 = vset.pattern.permute.xlu0 0
        %7846 = vperm.xlu0 %7845, %v7313
        %v7847 = vpop.permute.xlu0 %7846
        %7848 = vset.pattern.permute.xlu0 0
        %7849 = vperm.xlu0 %7848, %v7314
        %v7850 = vpop.permute.xlu0 %7849
        %7851 = vset.pattern.permute.xlu0 0
        %7852 = vperm.xlu0 %7851, %v7315
        %v7853 = vpop.permute.xlu0 %7852
        %7854 = vset.pattern.permute.xlu0 0
        %7855 = vperm.xlu0 %7854, %v7316
        %v7856 = vpop.permute.xlu0 %7855
        %7857 = vset.pattern.permute.xlu0 0
        %7858 = vperm.xlu0 %7857, %v7317
        %v7859 = vpop.permute.xlu0 %7858
        %7860 = vset.pattern.permute.xlu0 0
        %7861 = vperm.xlu0 %7860, %v7318
        %v7862 = vpop.permute.xlu0 %7861
        %7863 = vset.pattern.permute.xlu0 0
        %7864 = vperm.xlu0 %7863, %v7319
        %v7865 = vpop.permute.xlu0 %7864
        %7866 = vset.pattern.permute.xlu0 0
        %7867 = vperm.xlu0 %7866, %v7320
        %v7868 = vpop.permute.xlu0 %7867
        %7869 = vset.pattern.permute.xlu0 0
        %7870 = vperm.xlu0 %7869, %v7321
        %v7871 = vpop.permute.xlu0 %7870
        %7872 = vset.pattern.permute.xlu0 0
        %7873 = vperm.xlu0 %7872, %v7322
        %v7874 = vpop.permute.xlu0 %7873
        %7875 = vset.pattern.permute.xlu0 0
        %7876 = vperm.xlu0 %7875, %v7323
        %v7877 = vpop.permute.xlu0 %7876
        %7878 = vset.pattern.permute.xlu0 0
        %7879 = vperm.xlu0 %7878, %v7324
        %v7880 = vpop.permute.xlu0 %7879
        %7881 = vset.pattern.permute.xlu0 0
        %7882 = vperm.xlu0 %7881, %v7325
        %v7883 = vpop.permute.xlu0 %7882
        %7884 = vset.pattern.permute.xlu0 0
        %7885 = vperm.xlu0 %7884, %v7326
        %v7886 = vpop.permute.xlu0 %7885
        %7887 = vset.pattern.permute.xlu0 0
        %7888 = vperm.xlu0 %7887, %v7327
        %v7889 = vpop.permute.xlu0 %7888
        %7890 = vset.pattern.permute.xlu0 0
        %7891 = vperm.xlu0 %7890, %v7328
        %v7892 = vpop.permute.xlu0 %7891
        %7893 = vset.pattern.permute.xlu0 0
        %7894 = vperm.xlu0 %7893, %v7329
        %v7895 = vpop.permute.xlu0 %7894
        %7896 = vset.pattern.permute.xlu0 0
        %7897 = vperm.xlu0 %7896, %v7330
        %v7898 = vpop.permute.xlu0 %7897
        %7899 = vset.pattern.permute.xlu0 0
        %7900 = vperm.xlu0 %7899, %v7331
        %v7901 = vpop.permute.xlu0 %7900
        %7902 = vset.pattern.permute.xlu0 0
        %7903 = vperm.xlu0 %7902, %v7332
        %v7904 = vpop.permute.xlu0 %7903
        %7905 = vset.pattern.permute.xlu0 0
        %7906 = vperm.xlu0 %7905, %v7333
        %v7907 = vpop.permute.xlu0 %7906
        %7908 = vset.pattern.permute.xlu0 0
        %7909 = vperm.xlu0 %7908, %v7334
        %v7910 = vpop.permute.xlu0 %7909
        %7911 = vset.pattern.permute.xlu0 0
        %7912 = vperm.xlu0 %7911, %v7335
        %v7913 = vpop.permute.xlu0 %7912
        %7914 = vset.pattern.permute.xlu0 0
        %7915 = vperm.xlu0 %7914, %v7336
        %v7916 = vpop.permute.xlu0 %7915
        %7917 = vset.pattern.permute.xlu0 0
        %7918 = vperm.xlu0 %7917, %v7337
        %v7919 = vpop.permute.xlu0 %7918
        %7920 = vset.pattern.permute.xlu0 0
        %7921 = vperm.xlu0 %7920, %v7338
        %v7922 = vpop.permute.xlu0 %7921
        %7923 = vset.pattern.permute.xlu0 0
        %7924 = vperm.xlu0 %7923, %v7339
        %v7925 = vpop.permute.xlu0 %7924
        %7926 = vset.pattern.permute.xlu0 0
        %7927 = vperm.xlu0 %7926, %v7340
        %v7928 = vpop.permute.xlu0 %7927
        %7929 = vset.pattern.permute.xlu0 0
        %7930 = vperm.xlu0 %7929, %v7341
        %v7931 = vpop.permute.xlu0 %7930
        %7932 = vset.pattern.permute.xlu0 0
        %7933 = vperm.xlu0 %7932, %v7342
        %v7934 = vpop.permute.xlu0 %7933
        %7935 = vset.pattern.permute.xlu0 0
        %7936 = vperm.xlu0 %7935, %v7343
        %v7937 = vpop.permute.xlu0 %7936
        %7938 = vset.pattern.permute.xlu0 0
        %7939 = vperm.xlu0 %7938, %v7344
        %v7940 = vpop.permute.xlu0 %7939
        %7941 = vset.pattern.permute.xlu0 0
        %7942 = vperm.xlu0 %7941, %v7345
        %v7943 = vpop.permute.xlu0 %7942
        %7944 = vset.pattern.permute.xlu0 0
        %7945 = vperm.xlu0 %7944, %v7346
        %v7946 = vpop.permute.xlu0 %7945
        %7947 = vset.pattern.permute.xlu0 0
        %7948 = vperm.xlu0 %7947, %v7347
        %v7949 = vpop.permute.xlu0 %7948
        %7950 = vset.pattern.permute.xlu0 0
        %7951 = vperm.xlu0 %7950, %v7348
        %v7952 = vpop.permute.xlu0 %7951
        %7953 = vset.pattern.permute.xlu0 0
        %7954 = vperm.xlu0 %7953, %v7349
        %v7955 = vpop.permute.xlu0 %7954
        %7956 = vset.pattern.permute.xlu0 0
        %7957 = vperm.xlu0 %7956, %v7350
        %v7958 = vpop.permute.xlu0 %7957
        %7959 = vset.pattern.permute.xlu0 0
        %7960 = vperm.xlu0 %7959, %v7351
        %v7961 = vpop.permute.xlu0 %7960
        %7962 = vset.pattern.permute.xlu0 0
        %7963 = vperm.xlu0 %7962, %v7352
        %v7964 = vpop.permute.xlu0 %7963
        %7965 = vset.pattern.permute.xlu0 0
        %7966 = vperm.xlu0 %7965, %v7353
        %v7967 = vpop.permute.xlu0 %7966
        %7968 = vset.pattern.permute.xlu0 0
        %7969 = vperm.xlu0 %7968, %v7354
        %v7970 = vpop.permute.xlu0 %7969
        %7971 = vset.pattern.permute.xlu0 0
        %7972 = vperm.xlu0 %7971, %v7355
        %v7973 = vpop.permute.xlu0 %7972
        %7974 = vset.pattern.permute.xlu0 0
        %7975 = vperm.xlu0 %7974, %v7356
        %v7976 = vpop.permute.xlu0 %7975
        %7977 = vset.pattern.permute.xlu0 0
        %7978 = vperm.xlu0 %7977, %v7357
        %v7979 = vpop.permute.xlu0 %7978
        %7980 = vset.pattern.permute.xlu0 0
        %7981 = vperm.xlu0 %7980, %v7358
        %v7982 = vpop.permute.xlu0 %7981
        %7983 = vset.pattern.permute.xlu0 0
        %7984 = vperm.xlu0 %7983, %v7359
        %v7985 = vpop.permute.xlu0 %7984
        %7986 = vset.pattern.permute.xlu0 0
        %7987 = vperm.xlu0 %7986, %v7360
        %v7988 = vpop.permute.xlu0 %7987
        %7989 = vset.pattern.permute.xlu0 0
        %7990 = vperm.xlu0 %7989, %v7361
        %v7991 = vpop.permute.xlu0 %7990
        %7992 = vset.pattern.permute.xlu0 0
        %7993 = vperm.xlu0 %7992, %v7362
        %v7994 = vpop.permute.xlu0 %7993
        %7995 = vset.pattern.permute.xlu0 0
        %7996 = vperm.xlu0 %7995, %v7363
        %v7997 = vpop.permute.xlu0 %7996
        %7998 = vset.pattern.permute.xlu0 0
        %7999 = vperm.xlu0 %7998, %v7364
        %v8000 = vpop.permute.xlu0 %7999
        %8001 = vset.pattern.permute.xlu0 0
        %8002 = vperm.xlu0 %8001, %v7365
        %v8003 = vpop.permute.xlu0 %8002
        %8004 = vset.pattern.permute.xlu0 0
        %8005 = vperm.xlu0 %8004, %v7366
        %v8006 = vpop.permute.xlu0 %8005
        %8007 = vset.pattern.permute.xlu0 0
        %8008 = vperm.xlu0 %8007, %v7367
        %v8009 = vpop.permute.xlu0 %8008
        %8010 = vset.pattern.permute.xlu0 0
        %8011 = vperm.xlu0 %8010, %v7368
        %v8012 = vpop.permute.xlu0 %8011
        %8013 = vset.pattern.permute.xlu0 0
        %8014 = vperm.xlu0 %8013, %v7369
        %v8015 = vpop.permute.xlu0 %8014
        %8016 = vset.pattern.permute.xlu0 0
        %8017 = vperm.xlu0 %8016, %v7370
        %v8018 = vpop.permute.xlu0 %8017
        %8019 = vset.pattern.permute.xlu0 0
        %8020 = vperm.xlu0 %8019, %v7371
        %v8021 = vpop.permute.xlu0 %8020
        %8022 = vset.pattern.permute.xlu0 0
        %8023 = vperm.xlu0 %8022, %v7372
        %v8024 = vpop.permute.xlu0 %8023
        %8025 = vset.pattern.permute.xlu0 0
        %8026 = vperm.xlu0 %8025, %v7373
        %v8027 = vpop.permute.xlu0 %8026
        %8028 = vset.pattern.permute.xlu0 0
        %8029 = vperm.xlu0 %8028, %v7374
        %v8030 = vpop.permute.xlu0 %8029
        %8031 = vset.pattern.permute.xlu0 0
        %8032 = vperm.xlu0 %8031, %v7375
        %v8033 = vpop.permute.xlu0 %8032
        %8034 = vset.pattern.permute.xlu0 0
        %8035 = vperm.xlu0 %8034, %v7376
        %v8036 = vpop.permute.xlu0 %8035
        %8037 = vset.pattern.permute.xlu0 0
        %8038 = vperm.xlu0 %8037, %v7377
        %v8039 = vpop.permute.xlu0 %8038
        %8040 = vset.pattern.permute.xlu0 0
        %8041 = vperm.xlu0 %8040, %v7378
        %v8042 = vpop.permute.xlu0 %8041
        %8043 = vset.pattern.permute.xlu0 0
        %8044 = vperm.xlu0 %8043, %v7379
        %v8045 = vpop.permute.xlu0 %8044
        %8046 = vset.pattern.permute.xlu0 0
        %8047 = vperm.xlu0 %8046, %v7380
        %v8048 = vpop.permute.xlu0 %8047
        %8049 = vset.pattern.permute.xlu0 0
        %8050 = vperm.xlu0 %8049, %v7381
        %v8051 = vpop.permute.xlu0 %8050
        %8052 = vset.pattern.permute.xlu0 0
        %8053 = vperm.xlu0 %8052, %v7382
        %v8054 = vpop.permute.xlu0 %8053
        %8055 = vset.pattern.permute.xlu0 0
        %8056 = vperm.xlu0 %8055, %v7383
        %v8057 = vpop.permute.xlu0 %8056
        %8058 = vset.pattern.permute.xlu0 0
        %8059 = vperm.xlu0 %8058, %v7384
        %v8060 = vpop.permute.xlu0 %8059
        %8061 = vset.pattern.permute.xlu0 0
        %8062 = vperm.xlu0 %8061, %v7385
        %v8063 = vpop.permute.xlu0 %8062
        %8064 = vset.pattern.permute.xlu0 0
        %8065 = vperm.xlu0 %8064, %v7386
        %v8066 = vpop.permute.xlu0 %8065
        %8067 = vset.pattern.permute.xlu0 0
        %8068 = vperm.xlu0 %8067, %v7387
        %v8069 = vpop.permute.xlu0 %8068
        %8070 = vset.pattern.permute.xlu0 0
        %8071 = vperm.xlu0 %8070, %v7388
        %v8072 = vpop.permute.xlu0 %8071
        %8073 = vset.pattern.permute.xlu0 0
        %8074 = vperm.xlu0 %8073, %v7389
        %v8075 = vpop.permute.xlu0 %8074
        %8076 = vset.pattern.permute.xlu0 0
        %8077 = vperm.xlu0 %8076, %v7390
        %v8078 = vpop.permute.xlu0 %8077
        %8079 = vset.pattern.permute.xlu0 0
        %8080 = vperm.xlu0 %8079, %v7391
        %v8081 = vpop.permute.xlu0 %8080
        %8082 = vset.pattern.permute.xlu0 0
        %8083 = vperm.xlu0 %8082, %v7392
        %v8084 = vpop.permute.xlu0 %8083
        %8085 = vset.pattern.permute.xlu0 0
        %8086 = vperm.xlu0 %8085, %v7393
        %v8087 = vpop.permute.xlu0 %8086
        %8088 = vset.pattern.permute.xlu0 0
        %8089 = vperm.xlu0 %8088, %v7394
        %v8090 = vpop.permute.xlu0 %8089
        %8091 = vset.pattern.permute.xlu0 0
        %8092 = vperm.xlu0 %8091, %v7395
        %v8093 = vpop.permute.xlu0 %8092
        %8094 = vset.pattern.permute.xlu0 0
        %8095 = vperm.xlu0 %8094, %v7396
        %v8096 = vpop.permute.xlu0 %8095
        %8097 = vset.pattern.permute.xlu0 0
        %8098 = vperm.xlu0 %8097, %v7397
        %v8099 = vpop.permute.xlu0 %8098
        %8100 = vset.pattern.permute.xlu0 0
        %8101 = vperm.xlu0 %8100, %v7398
        %v8102 = vpop.permute.xlu0 %8101
        %8103 = vset.pattern.permute.xlu0 0
        %8104 = vperm.xlu0 %8103, %v7399
        %v8105 = vpop.permute.xlu0 %8104
        %8106 = vset.pattern.permute.xlu0 0
        %8107 = vperm.xlu0 %8106, %v7400
        %v8108 = vpop.permute.xlu0 %8107
        %8109 = vset.pattern.permute.xlu0 0
        %8110 = vperm.xlu0 %8109, %v7401
        %v8111 = vpop.permute.xlu0 %8110
        %8112 = vset.pattern.permute.xlu0 0
        %8113 = vperm.xlu0 %8112, %v7402
        %v8114 = vpop.permute.xlu0 %8113
        %8115 = vset.pattern.permute.xlu0 0
        %8116 = vperm.xlu0 %8115, %v7403
        %v8117 = vpop.permute.xlu0 %8116
        %8118 = vset.pattern.permute.xlu0 0
        %8119 = vperm.xlu0 %8118, %v7404
        %v8120 = vpop.permute.xlu0 %8119
        %8121 = vset.pattern.permute.xlu0 0
        %8122 = vperm.xlu0 %8121, %v7405
        %v8123 = vpop.permute.xlu0 %8122
        %8124 = vset.pattern.permute.xlu0 0
        %8125 = vperm.xlu0 %8124, %v7406
        %v8126 = vpop.permute.xlu0 %8125
        %8127 = vset.pattern.permute.xlu0 0
        %8128 = vperm.xlu0 %8127, %v7407
        %v8129 = vpop.permute.xlu0 %8128
        %8130 = vset.pattern.permute.xlu0 0
        %8131 = vperm.xlu0 %8130, %v7408
        %v8132 = vpop.permute.xlu0 %8131
        %8133 = vset.pattern.permute.xlu0 0
        %8134 = vperm.xlu0 %8133, %v7409
        %v8135 = vpop.permute.xlu0 %8134
        %8136 = vset.pattern.permute.xlu0 0
        %8137 = vperm.xlu0 %8136, %v7410
        %v8138 = vpop.permute.xlu0 %8137
        %8139 = vset.pattern.permute.xlu0 0
        %8140 = vperm.xlu0 %8139, %v7411
        %v8141 = vpop.permute.xlu0 %8140
        %8142 = vset.pattern.permute.xlu0 0
        %8143 = vperm.xlu0 %8142, %v7412
        %v8144 = vpop.permute.xlu0 %8143
        %8145 = vset.pattern.permute.xlu0 0
        %8146 = vperm.xlu0 %8145, %v7413
        %v8147 = vpop.permute.xlu0 %8146
        %8148 = vset.pattern.permute.xlu0 0
        %8149 = vperm.xlu0 %8148, %v7414
        %v8150 = vpop.permute.xlu0 %8149
        %8151 = vset.pattern.permute.xlu0 0
        %8152 = vperm.xlu0 %8151, %v7415
        %v8153 = vpop.permute.xlu0 %8152
        %8154 = vset.pattern.permute.xlu0 0
        %8155 = vperm.xlu0 %8154, %v7416
        %v8156 = vpop.permute.xlu0 %8155
        %8157 = vset.pattern.permute.xlu0 0
        %8158 = vperm.xlu0 %8157, %v7417
        %v8159 = vpop.permute.xlu0 %8158
        %8160 = vset.pattern.permute.xlu0 0
        %8161 = vperm.xlu0 %8160, %v7418
        %v8162 = vpop.permute.xlu0 %8161
        %8163 = vset.pattern.permute.xlu0 0
        %8164 = vperm.xlu0 %8163, %v7419
        %v8165 = vpop.permute.xlu0 %8164
        %8166 = vset.pattern.permute.xlu0 0
        %8167 = vperm.xlu0 %8166, %v7420
        %v8168 = vpop.permute.xlu0 %8167
        %8169 = vset.pattern.permute.xlu0 0
        %8170 = vperm.xlu0 %8169, %v7421
        %v8171 = vpop.permute.xlu0 %8170
        %8172 = vset.pattern.permute.xlu0 0
        %8173 = vperm.xlu0 %8172, %v7422
        %v8174 = vpop.permute.xlu0 %8173
        %8175 = vset.pattern.permute.xlu0 0
        %8176 = vperm.xlu0 %8175, %v7423
        %v8177 = vpop.permute.xlu0 %8176
        %8178 = vset.pattern.permute.xlu0 0
        %8179 = vperm.xlu0 %8178, %v7424
        %v8180 = vpop.permute.xlu0 %8179
        %8181 = vset.pattern.permute.xlu0 0
        %8182 = vperm.xlu0 %8181, %v7425
        %v8183 = vpop.permute.xlu0 %8182
        %8184 = vset.pattern.permute.xlu0 0
        %8185 = vperm.xlu0 %8184, %v7426
        %v8186 = vpop.permute.xlu0 %8185
        %8187 = vset.pattern.permute.xlu0 0
        %8188 = vperm.xlu0 %8187, %v7427
        %v8189 = vpop.permute.xlu0 %8188
        %8190 = vset.pattern.permute.xlu0 0
        %8191 = vperm.xlu0 %8190, %v7428
        %v8192 = vpop.permute.xlu0 %8191
        %8193 = vset.pattern.permute.xlu0 0
        %8194 = vperm.xlu0 %8193, %v7429
        %v8195 = vpop.permute.xlu0 %8194
        %8196 = vset.pattern.permute.xlu0 0
        %8197 = vperm.xlu0 %8196, %v7430
        %v8198 = vpop.permute.xlu0 %8197
        %8199 = vset.pattern.permute.xlu0 0
        %8200 = vperm.xlu0 %8199, %v7431
        %v8201 = vpop.permute.xlu0 %8200
        %8202 = vset.pattern.permute.xlu0 0
        %8203 = vperm.xlu0 %8202, %v7432
        %v8204 = vpop.permute.xlu0 %8203
        %8205 = vset.pattern.permute.xlu0 0
        %8206 = vperm.xlu0 %8205, %v7433
        %v8207 = vpop.permute.xlu0 %8206
        %8208 = vset.pattern.permute.xlu0 0
        %8209 = vperm.xlu0 %8208, %v7434
        %v8210 = vpop.permute.xlu0 %8209
        %8211 = vset.pattern.permute.xlu0 0
        %8212 = vperm.xlu0 %8211, %v7435
        %v8213 = vpop.permute.xlu0 %8212
        %8214 = vset.pattern.permute.xlu0 0
        %8215 = vperm.xlu0 %8214, %v7436
        %v8216 = vpop.permute.xlu0 %8215
        %8217 = vset.pattern.permute.xlu0 0
        %8218 = vperm.xlu0 %8217, %v7437
        %v8219 = vpop.permute.xlu0 %8218
        %8220 = vset.pattern.permute.xlu0 0
        %8221 = vperm.xlu0 %8220, %v7438
        %v8222 = vpop.permute.xlu0 %8221
        %8223 = vset.pattern.permute.xlu0 0
        %8224 = vperm.xlu0 %8223, %v7439
        %v8225 = vpop.permute.xlu0 %8224
        %8226 = vset.pattern.permute.xlu0 0
        %8227 = vperm.xlu0 %8226, %v7440
        %v8228 = vpop.permute.xlu0 %8227
        %8229 = vset.pattern.permute.xlu0 0
        %8230 = vperm.xlu0 %8229, %v7441
        %v8231 = vpop.permute.xlu0 %8230
        %8232 = vset.pattern.permute.xlu0 0
        %8233 = vperm.xlu0 %8232, %v7442
        %v8234 = vpop.permute.xlu0 %8233
        %8235 = vset.pattern.permute.xlu0 0
        %8236 = vperm.xlu0 %8235, %v7443
        %v8237 = vpop.permute.xlu0 %8236
        %8238 = vset.pattern.permute.xlu0 0
        %8239 = vperm.xlu0 %8238, %v7444
        %v8240 = vpop.permute.xlu0 %8239
        %8241 = vset.pattern.permute.xlu0 0
        %8242 = vperm.xlu0 %8241, %v7445
        %v8243 = vpop.permute.xlu0 %8242
        %8244 = vset.pattern.permute.xlu0 0
        %8245 = vperm.xlu0 %8244, %v7446
        %v8246 = vpop.permute.xlu0 %8245
        %8247 = vset.pattern.permute.xlu0 0
        %8248 = vperm.xlu0 %8247, %v7447
        %v8249 = vpop.permute.xlu0 %8248
        %8250 = vset.pattern.permute.xlu0 0
        %8251 = vperm.xlu0 %8250, %v7448
        %v8252 = vpop.permute.xlu0 %8251
        %8253 = vset.pattern.permute.xlu0 0
        %8254 = vperm.xlu0 %8253, %v7449
        %v8255 = vpop.permute.xlu0 %8254
        %8256 = vset.pattern.permute.xlu0 0
        %8257 = vperm.xlu0 %8256, %v7450
        %v8258 = vpop.permute.xlu0 %8257
        %8259 = vset.pattern.permute.xlu0 0
        %8260 = vperm.xlu0 %8259, %v7451
        %v8261 = vpop.permute.xlu0 %8260
        %8262 = vset.pattern.permute.xlu0 0
        %8263 = vperm.xlu0 %8262, %v7452
        %v8264 = vpop.permute.xlu0 %8263
        %8265 = vset.pattern.permute.xlu0 0
        %8266 = vperm.xlu0 %8265, %v7453
        %v8267 = vpop.permute.xlu0 %8266
        %8268 = vset.pattern.permute.xlu0 0
        %8269 = vperm.xlu0 %8268, %v7454
        %v8270 = vpop.permute.xlu0 %8269
        %8271 = vset.pattern.permute.xlu0 0
        %8272 = vperm.xlu0 %8271, %v7455
        %v8273 = vpop.permute.xlu0 %8272
        %8274 = vset.pattern.permute.xlu0 0
        %8275 = vperm.xlu0 %8274, %v7456
        %v8276 = vpop.permute.xlu0 %8275
        %8277 = vset.pattern.permute.xlu0 0
        %8278 = vperm.xlu0 %8277, %v7457
        %v8279 = vpop.permute.xlu0 %8278
        %8280 = vset.pattern.permute.xlu0 0
        %8281 = vperm.xlu0 %8280, %v7458
        %v8282 = vpop.permute.xlu0 %8281
        %8283 = vset.pattern.permute.xlu0 0
        %8284 = vperm.xlu0 %8283, %v7459
        %v8285 = vpop.permute.xlu0 %8284
        %8286 = vset.pattern.permute.xlu0 0
        %8287 = vperm.xlu0 %8286, %v7460
        %v8288 = vpop.permute.xlu0 %8287
        %8289 = vset.pattern.permute.xlu0 0
        %8290 = vperm.xlu0 %8289, %v7461
        %v8291 = vpop.permute.xlu0 %8290
        %8292 = vset.pattern.permute.xlu0 0
        %8293 = vperm.xlu0 %8292, %v7462
        %v8294 = vpop.permute.xlu0 %8293
        %8295 = vset.pattern.permute.xlu0 0
        %8296 = vperm.xlu0 %8295, %v7463
        %v8297 = vpop.permute.xlu0 %8296
        %8298 = vset.pattern.permute.xlu0 0
        %8299 = vperm.xlu0 %8298, %v7464
        %v8300 = vpop.permute.xlu0 %8299
        %8301 = vset.pattern.permute.xlu0 0
        %8302 = vperm.xlu0 %8301, %v7465
        %v8303 = vpop.permute.xlu0 %8302
        %8304 = vset.pattern.permute.xlu0 0
        %8305 = vperm.xlu0 %8304, %v7466
        %v8306 = vpop.permute.xlu0 %8305
        %8307 = vset.pattern.permute.xlu0 0
        %8308 = vperm.xlu0 %8307, %v7467
        %v8309 = vpop.permute.xlu0 %8308
        %8310 = vset.pattern.permute.xlu0 0
        %8311 = vperm.xlu0 %8310, %v7468
        %v8312 = vpop.permute.xlu0 %8311
        %8313 = vset.pattern.permute.xlu0 0
        %8314 = vperm.xlu0 %8313, %v7469
        %v8315 = vpop.permute.xlu0 %8314
        %8316 = vset.pattern.permute.xlu0 0
        %8317 = vperm.xlu0 %8316, %v7470
        %v8318 = vpop.permute.xlu0 %8317
        %8319 = vset.pattern.permute.xlu0 0
        %8320 = vperm.xlu0 %8319, %v7471
        %v8321 = vpop.permute.xlu0 %8320
        %8322 = vset.pattern.permute.xlu0 0
        %8323 = vperm.xlu0 %8322, %v7472
        %v8324 = vpop.permute.xlu0 %8323
        %8325 = vset.pattern.permute.xlu0 0
        %8326 = vperm.xlu0 %8325, %v7473
        %v8327 = vpop.permute.xlu0 %8326
        %8328 = vset.pattern.permute.xlu0 0
        %8329 = vperm.xlu0 %8328, %v7474
        %v8330 = vpop.permute.xlu0 %8329
        %8331 = vset.pattern.permute.xlu0 0
        %8332 = vperm.xlu0 %8331, %v7475
        %v8333 = vpop.permute.xlu0 %8332
        %8334 = vset.pattern.permute.xlu0 0
        %8335 = vperm.xlu0 %8334, %v7476
        %v8336 = vpop.permute.xlu0 %8335
        %8337 = vset.pattern.permute.xlu0 0
        %8338 = vperm.xlu0 %8337, %v7477
        %v8339 = vpop.permute.xlu0 %8338
        %8340 = vset.pattern.permute.xlu0 0
        %8341 = vperm.xlu0 %8340, %v7478
        %v8342 = vpop.permute.xlu0 %8341
        %8343 = vset.pattern.permute.xlu0 0
        %8344 = vperm.xlu0 %8343, %v7479
        %v8345 = vpop.permute.xlu0 %8344
        %8346 = vset.pattern.permute.xlu0 0
        %8347 = vperm.xlu0 %8346, %v7480
        %v8348 = vpop.permute.xlu0 %8347
        %8349 = vset.pattern.permute.xlu0 0
        %8350 = vperm.xlu0 %8349, %v7481
        %v8351 = vpop.permute.xlu0 %8350
        %8352 = vset.pattern.permute.xlu0 0
        %8353 = vperm.xlu0 %8352, %v7482
        %v8354 = vpop.permute.xlu0 %8353
        %8355 = vset.pattern.permute.xlu0 0
        %8356 = vperm.xlu0 %8355, %v7483
        %v8357 = vpop.permute.xlu0 %8356
        %8358 = vset.pattern.permute.xlu0 0
        %8359 = vperm.xlu0 %8358, %v7484
        %v8360 = vpop.permute.xlu0 %8359
        %8361 = vset.pattern.permute.xlu0 0
        %8362 = vperm.xlu0 %8361, %v7485
        %v8363 = vpop.permute.xlu0 %8362
        %8364 = vset.pattern.permute.xlu0 0
        %8365 = vperm.xlu0 %8364, %v7486
        %v8366 = vpop.permute.xlu0 %8365
        %8367 = vset.pattern.permute.xlu0 0
        %8368 = vperm.xlu0 %8367, %v7487
        %v8369 = vpop.permute.xlu0 %8368
        %8370 = vset.pattern.permute.xlu0 0
        %8371 = vperm.xlu0 %8370, %v7488
        %v8372 = vpop.permute.xlu0 %8371
        %8373 = vset.pattern.permute.xlu0 0
        %8374 = vperm.xlu0 %8373, %v7489
        %v8375 = vpop.permute.xlu0 %8374
        %8376 = vset.pattern.permute.xlu0 0
        %8377 = vperm.xlu0 %8376, %v7490
        %v8378 = vpop.permute.xlu0 %8377
        %8379 = vset.pattern.permute.xlu0 0
        %8380 = vperm.xlu0 %8379, %v7491
        %v8381 = vpop.permute.xlu0 %8380
        %8382 = vset.pattern.permute.xlu0 0
        %8383 = vperm.xlu0 %8382, %v7492
        %v8384 = vpop.permute.xlu0 %8383
        %8385 = vset.pattern.permute.xlu0 0
        %8386 = vperm.xlu0 %8385, %v7493
        %v8387 = vpop.permute.xlu0 %8386
        %8388 = vset.pattern.permute.xlu0 0
        %8389 = vperm.xlu0 %8388, %v7494
        %v8390 = vpop.permute.xlu0 %8389
        %8391 = vset.pattern.permute.xlu0 0
        %8392 = vperm.xlu0 %8391, %v7495
        %v8393 = vpop.permute.xlu0 %8392
        %8394 = vset.pattern.permute.xlu0 0
        %8395 = vperm.xlu0 %8394, %v7496
        %v8396 = vpop.permute.xlu0 %8395
        %8397 = vset.pattern.permute.xlu0 0
        %8398 = vperm.xlu0 %8397, %v7497
        %v8399 = vpop.permute.xlu0 %8398
        %8400 = vset.pattern.permute.xlu0 0
        %8401 = vperm.xlu0 %8400, %v7498
        %v8402 = vpop.permute.xlu0 %8401
        %8403 = vset.pattern.permute.xlu0 0
        %8404 = vperm.xlu0 %8403, %v7499
        %v8405 = vpop.permute.xlu0 %8404
        %8406 = vset.pattern.permute.xlu0 0
        %8407 = vperm.xlu0 %8406, %v7500
        %v8408 = vpop.permute.xlu0 %8407
        %8409 = vset.pattern.permute.xlu0 0
        %8410 = vperm.xlu0 %8409, %v7501
        %v8411 = vpop.permute.xlu0 %8410
        %8412 = vset.pattern.permute.xlu0 0
        %8413 = vperm.xlu0 %8412, %v7502
        %v8414 = vpop.permute.xlu0 %8413
        %8415 = vset.pattern.permute.xlu0 0
        %8416 = vperm.xlu0 %8415, %v7503
        %v8417 = vpop.permute.xlu0 %8416
        %8418 = vset.pattern.permute.xlu0 0
        %8419 = vperm.xlu0 %8418, %v7504
        %v8420 = vpop.permute.xlu0 %8419
        %8421 = vset.pattern.permute.xlu0 0
        %8422 = vperm.xlu0 %8421, %v7505
        %v8423 = vpop.permute.xlu0 %8422
        %8424 = vset.pattern.permute.xlu0 0
        %8425 = vperm.xlu0 %8424, %v7506
        %v8426 = vpop.permute.xlu0 %8425
        %8427 = vset.pattern.permute.xlu0 0
        %8428 = vperm.xlu0 %8427, %v7507
        %v8429 = vpop.permute.xlu0 %8428
        %8430 = vset.pattern.permute.xlu0 0
        %8431 = vperm.xlu0 %8430, %v7508
        %v8432 = vpop.permute.xlu0 %8431
        %8433 = vset.pattern.permute.xlu0 0
        %8434 = vperm.xlu0 %8433, %v7509
        %v8435 = vpop.permute.xlu0 %8434
        %8436 = vset.pattern.permute.xlu0 0
        %8437 = vperm.xlu0 %8436, %v7510
        %v8438 = vpop.permute.xlu0 %8437
        %8439 = vset.pattern.permute.xlu0 0
        %8440 = vperm.xlu0 %8439, %v7511
        %v8441 = vpop.permute.xlu0 %8440
        %8442 = vset.pattern.permute.xlu0 0
        %8443 = vperm.xlu0 %8442, %v7512
        %v8444 = vpop.permute.xlu0 %8443
        %8445 = vset.pattern.permute.xlu0 0
        %8446 = vperm.xlu0 %8445, %v7513
        %v8447 = vpop.permute.xlu0 %8446
        %8448 = vset.pattern.permute.xlu0 0
        %8449 = vperm.xlu0 %8448, %v7514
        %v8450 = vpop.permute.xlu0 %8449
        %8451 = vset.pattern.permute.xlu0 0
        %8452 = vperm.xlu0 %8451, %v7515
        %v8453 = vpop.permute.xlu0 %8452
        %8454 = vset.pattern.permute.xlu0 0
        %8455 = vperm.xlu0 %8454, %v7516
        %v8456 = vpop.permute.xlu0 %8455
        %8457 = vset.pattern.permute.xlu0 0
        %8458 = vperm.xlu0 %8457, %v7517
        %v8459 = vpop.permute.xlu0 %8458
        %8460 = vset.pattern.permute.xlu0 0
        %8461 = vperm.xlu0 %8460, %v7518
        %v8462 = vpop.permute.xlu0 %8461
        %8463 = vset.pattern.permute.xlu0 0
        %8464 = vperm.xlu0 %8463, %v7519
        %v8465 = vpop.permute.xlu0 %8464
        %8466 = vset.pattern.permute.xlu0 0
        %8467 = vperm.xlu0 %8466, %v7520
        %v8468 = vpop.permute.xlu0 %8467
        %8469 = vset.pattern.permute.xlu0 0
        %8470 = vperm.xlu0 %8469, %v7521
        %v8471 = vpop.permute.xlu0 %8470
        %8472 = vset.pattern.permute.xlu0 0
        %8473 = vperm.xlu0 %8472, %v7522
        %v8474 = vpop.permute.xlu0 %8473
        %8475 = vset.pattern.permute.xlu0 0
        %8476 = vperm.xlu0 %8475, %v7523
        %v8477 = vpop.permute.xlu0 %8476
        %8478 = vset.pattern.permute.xlu0 0
        %8479 = vperm.xlu0 %8478, %v7524
        %v8480 = vpop.permute.xlu0 %8479
        %8481 = vset.pattern.permute.xlu0 0
        %8482 = vperm.xlu0 %8481, %v7525
        %v8483 = vpop.permute.xlu0 %8482
        %8484 = vset.pattern.permute.xlu0 0
        %8485 = vperm.xlu0 %8484, %v7526
        %v8486 = vpop.permute.xlu0 %8485
        %8487 = vset.pattern.permute.xlu0 0
        %8488 = vperm.xlu0 %8487, %v7527
        %v8489 = vpop.permute.xlu0 %8488
        %8490 = vset.pattern.permute.xlu0 0
        %8491 = vperm.xlu0 %8490, %v7528
        %v8492 = vpop.permute.xlu0 %8491
        %8493 = vset.pattern.permute.xlu0 0
        %8494 = vperm.xlu0 %8493, %v7529
        %v8495 = vpop.permute.xlu0 %8494
        %8496 = vset.pattern.permute.xlu0 0
        %8497 = vperm.xlu0 %8496, %v7530
        %v8498 = vpop.permute.xlu0 %8497
        %8499 = vset.pattern.permute.xlu0 0
        %8500 = vperm.xlu0 %8499, %v7531
        %v8501 = vpop.permute.xlu0 %8500
        %8502 = vset.pattern.permute.xlu0 0
        %8503 = vperm.xlu0 %8502, %v7532
        %v8504 = vpop.permute.xlu0 %8503
        %8505 = vset.pattern.permute.xlu0 0
        %8506 = vperm.xlu0 %8505, %v7533
        %v8507 = vpop.permute.xlu0 %8506
        %8508 = vset.pattern.permute.xlu0 0
        %8509 = vperm.xlu0 %8508, %v7534
        %v8510 = vpop.permute.xlu0 %8509
        %8511 = vset.pattern.permute.xlu0 0
        %8512 = vperm.xlu0 %8511, %v7535
        %v8513 = vpop.permute.xlu0 %8512
        %8514 = vset.pattern.permute.xlu0 0
        %8515 = vperm.xlu0 %8514, %v7536
        %v8516 = vpop.permute.xlu0 %8515
        %8517 = vset.pattern.permute.xlu0 0
        %8518 = vperm.xlu0 %8517, %v7537
        %v8519 = vpop.permute.xlu0 %8518
        %8520 = vset.pattern.permute.xlu0 0
        %8521 = vperm.xlu0 %8520, %v7538
        %v8522 = vpop.permute.xlu0 %8521
        %8523 = vset.pattern.permute.xlu0 0
        %8524 = vperm.xlu0 %8523, %v7539
        %v8525 = vpop.permute.xlu0 %8524
        %8526 = vset.pattern.permute.xlu0 0
        %8527 = vperm.xlu0 %8526, %v7540
        %v8528 = vpop.permute.xlu0 %8527
        %8529 = vset.pattern.permute.xlu0 0
        %8530 = vperm.xlu0 %8529, %v7541
        %v8531 = vpop.permute.xlu0 %8530
        %8532 = vset.pattern.permute.xlu0 0
        %8533 = vperm.xlu0 %8532, %v7542
        %v8534 = vpop.permute.xlu0 %8533
        %8535 = vset.pattern.permute.xlu0 0
        %8536 = vperm.xlu0 %8535, %v7543
        %v8537 = vpop.permute.xlu0 %8536
        %8538 = vset.pattern.permute.xlu0 0
        %8539 = vperm.xlu0 %8538, %v7544
        %v8540 = vpop.permute.xlu0 %8539
        %8541 = vset.pattern.permute.xlu0 0
        %8542 = vperm.xlu0 %8541, %v7545
        %v8543 = vpop.permute.xlu0 %8542
        %8544 = vset.pattern.permute.xlu0 0
        %8545 = vperm.xlu0 %8544, %v7546
        %v8546 = vpop.permute.xlu0 %8545
        %8547 = vset.pattern.permute.xlu0 0
        %8548 = vperm.xlu0 %8547, %v7547
        %v8549 = vpop.permute.xlu0 %8548
        %8550 = vset.pattern.permute.xlu0 0
        %8551 = vperm.xlu0 %8550, %v7548
        %v8552 = vpop.permute.xlu0 %8551
        %8553 = vset.pattern.permute.xlu0 0
        %8554 = vperm.xlu0 %8553, %v7549
        %v8555 = vpop.permute.xlu0 %8554
        %8556 = vset.pattern.permute.xlu0 0
        %8557 = vperm.xlu0 %8556, %v7550
        %v8558 = vpop.permute.xlu0 %8557
        %8559 = vset.pattern.permute.xlu0 0
        %8560 = vperm.xlu0 %8559, %v7551
        %v8561 = vpop.permute.xlu0 %8560
        %8562 = vset.pattern.permute.xlu0 0
        %8563 = vperm.xlu0 %8562, %v7552
        %v8564 = vpop.permute.xlu0 %8563
        %8565 = vset.pattern.permute.xlu0 0
        %8566 = vperm.xlu0 %8565, %v7553
        %v8567 = vpop.permute.xlu0 %8566
        %8568 = vset.pattern.permute.xlu0 0
        %8569 = vperm.xlu0 %8568, %v7554
        %v8570 = vpop.permute.xlu0 %8569
        %8571 = vset.pattern.permute.xlu0 0
        %8572 = vperm.xlu0 %8571, %v7555
        %v8573 = vpop.permute.xlu0 %8572
        %8574 = vset.pattern.permute.xlu0 0
        %8575 = vperm.xlu0 %8574, %v7556
        %v8576 = vpop.permute.xlu0 %8575
        %8577 = vset.pattern.permute.xlu0 0
        %8578 = vperm.xlu0 %8577, %v7557
        %v8579 = vpop.permute.xlu0 %8578
        %8580 = vset.pattern.permute.xlu0 0
        %8581 = vperm.xlu0 %8580, %v7558
        %v8582 = vpop.permute.xlu0 %8581
        %v8583 = vlaneseq
        %v8584 = vshrl.u32 %v8583, 7
        %v8585 = vsub.s32 %v2632, %v8584
        %v8586 = vrot.slane %v7817, %v8585
        %v8587 = vlaneseq
        %v8588 = vshrl.u32 %v8587, 7
        %v8589 = vsub.s32 %v2637, %v8588
        %v8590 = vrot.slane %v7820, %v8589
        %v8591 = vsel %vm2642, %v8590, %v8586
        %v8592 = vlaneseq
        %v8593 = vshrl.u32 %v8592, 7
        %v8594 = vsub.s32 %v2632, %v8593
        %v8595 = vrot.slane %v7823, %v8594
        %v8596 = vlaneseq
        %v8597 = vshrl.u32 %v8596, 7
        %v8598 = vsub.s32 %v2637, %v8597
        %v8599 = vrot.slane %v7826, %v8598
        %v8600 = vsel %vm2642, %v8599, %v8595
        %v8601 = vlaneseq
        %v8602 = vshrl.u32 %v8601, 7
        %v8603 = vsub.s32 %v2632, %v8602
        %v8604 = vrot.slane %v7829, %v8603
        %v8605 = vlaneseq
        %v8606 = vshrl.u32 %v8605, 7
        %v8607 = vsub.s32 %v2637, %v8606
        %v8608 = vrot.slane %v7832, %v8607
        %v8609 = vsel %vm2642, %v8608, %v8604
        %v8610 = vlaneseq
        %v8611 = vshrl.u32 %v8610, 7
        %v8612 = vsub.s32 %v2632, %v8611
        %v8613 = vrot.slane %v7835, %v8612
        %v8614 = vlaneseq
        %v8615 = vshrl.u32 %v8614, 7
        %v8616 = vsub.s32 %v2637, %v8615
        %v8617 = vrot.slane %v7838, %v8616
        %v8618 = vsel %vm2642, %v8617, %v8613
        %v8619 = vlaneseq
        %v8620 = vshrl.u32 %v8619, 7
        %v8621 = vsub.s32 %v2632, %v8620
        %v8622 = vrot.slane %v7841, %v8621
        %v8623 = vlaneseq
        %v8624 = vshrl.u32 %v8623, 7
        %v8625 = vsub.s32 %v2637, %v8624
        %v8626 = vrot.slane %v7844, %v8625
        %v8627 = vsel %vm2642, %v8626, %v8622
        %v8628 = vlaneseq
        %v8629 = vshrl.u32 %v8628, 7
        %v8630 = vsub.s32 %v2632, %v8629
        %v8631 = vrot.slane %v7847, %v8630
        %v8632 = vlaneseq
        %v8633 = vshrl.u32 %v8632, 7
        %v8634 = vsub.s32 %v2637, %v8633
        %v8635 = vrot.slane %v7850, %v8634
        %v8636 = vsel %vm2642, %v8635, %v8631
        %v8637 = vlaneseq
        %v8638 = vshrl.u32 %v8637, 7
        %v8639 = vsub.s32 %v2632, %v8638
        %v8640 = vrot.slane %v7853, %v8639
        %v8641 = vlaneseq
        %v8642 = vshrl.u32 %v8641, 7
        %v8643 = vsub.s32 %v2637, %v8642
        %v8644 = vrot.slane %v7856, %v8643
        %v8645 = vsel %vm2642, %v8644, %v8640
        %v8646 = vlaneseq
        %v8647 = vshrl.u32 %v8646, 7
        %v8648 = vsub.s32 %v2632, %v8647
        %v8649 = vrot.slane %v7859, %v8648
        %v8650 = vlaneseq
        %v8651 = vshrl.u32 %v8650, 7
        %v8652 = vsub.s32 %v2637, %v8651
        %v8653 = vrot.slane %v7862, %v8652
        %v8654 = vsel %vm2642, %v8653, %v8649
        %v8655 = vlaneseq
        %v8656 = vshrl.u32 %v8655, 7
        %v8657 = vsub.s32 %v2632, %v8656
        %v8658 = vrot.slane %v7865, %v8657
        %v8659 = vlaneseq
        %v8660 = vshrl.u32 %v8659, 7
        %v8661 = vsub.s32 %v2637, %v8660
        %v8662 = vrot.slane %v7868, %v8661
        %v8663 = vsel %vm2642, %v8662, %v8658
        %v8664 = vlaneseq
        %v8665 = vshrl.u32 %v8664, 7
        %v8666 = vsub.s32 %v2632, %v8665
        %v8667 = vrot.slane %v7871, %v8666
        %v8668 = vlaneseq
        %v8669 = vshrl.u32 %v8668, 7
        %v8670 = vsub.s32 %v2637, %v8669
        %v8671 = vrot.slane %v7874, %v8670
        %v8672 = vsel %vm2642, %v8671, %v8667
        %v8673 = vlaneseq
        %v8674 = vshrl.u32 %v8673, 7
        %v8675 = vsub.s32 %v2632, %v8674
        %v8676 = vrot.slane %v7877, %v8675
        %v8677 = vlaneseq
        %v8678 = vshrl.u32 %v8677, 7
        %v8679 = vsub.s32 %v2637, %v8678
        %v8680 = vrot.slane %v7880, %v8679
        %v8681 = vsel %vm2642, %v8680, %v8676
        %v8682 = vlaneseq
        %v8683 = vshrl.u32 %v8682, 7
        %v8684 = vsub.s32 %v2632, %v8683
        %v8685 = vrot.slane %v7883, %v8684
        %v8686 = vlaneseq
        %v8687 = vshrl.u32 %v8686, 7
        %v8688 = vsub.s32 %v2637, %v8687
        %v8689 = vrot.slane %v7886, %v8688
        %v8690 = vsel %vm2642, %v8689, %v8685
        %v8691 = vlaneseq
        %v8692 = vshrl.u32 %v8691, 7
        %v8693 = vsub.s32 %v2632, %v8692
        %v8694 = vrot.slane %v7889, %v8693
        %v8695 = vlaneseq
        %v8696 = vshrl.u32 %v8695, 7
        %v8697 = vsub.s32 %v2637, %v8696
        %v8698 = vrot.slane %v7892, %v8697
        %v8699 = vsel %vm2642, %v8698, %v8694
        %v8700 = vlaneseq
        %v8701 = vshrl.u32 %v8700, 7
        %v8702 = vsub.s32 %v2632, %v8701
        %v8703 = vrot.slane %v7895, %v8702
        %v8704 = vlaneseq
        %v8705 = vshrl.u32 %v8704, 7
        %v8706 = vsub.s32 %v2637, %v8705
        %v8707 = vrot.slane %v7898, %v8706
        %v8708 = vsel %vm2642, %v8707, %v8703
        %v8709 = vlaneseq
        %v8710 = vshrl.u32 %v8709, 7
        %v8711 = vsub.s32 %v2632, %v8710
        %v8712 = vrot.slane %v7901, %v8711
        %v8713 = vlaneseq
        %v8714 = vshrl.u32 %v8713, 7
        %v8715 = vsub.s32 %v2637, %v8714
        %v8716 = vrot.slane %v7904, %v8715
        %v8717 = vsel %vm2642, %v8716, %v8712
        %v8718 = vlaneseq
        %v8719 = vshrl.u32 %v8718, 7
        %v8720 = vsub.s32 %v2632, %v8719
        %v8721 = vrot.slane %v7907, %v8720
        %v8722 = vlaneseq
        %v8723 = vshrl.u32 %v8722, 7
        %v8724 = vsub.s32 %v2637, %v8723
        %v8725 = vrot.slane %v7910, %v8724
        %v8726 = vsel %vm2642, %v8725, %v8721
        %v8727 = vlaneseq
        %v8728 = vshrl.u32 %v8727, 7
        %v8729 = vsub.s32 %v2632, %v8728
        %v8730 = vrot.slane %v7913, %v8729
        %v8731 = vlaneseq
        %v8732 = vshrl.u32 %v8731, 7
        %v8733 = vsub.s32 %v2637, %v8732
        %v8734 = vrot.slane %v7916, %v8733
        %v8735 = vsel %vm2642, %v8734, %v8730
        %v8736 = vlaneseq
        %v8737 = vshrl.u32 %v8736, 7
        %v8738 = vsub.s32 %v2632, %v8737
        %v8739 = vrot.slane %v7919, %v8738
        %v8740 = vlaneseq
        %v8741 = vshrl.u32 %v8740, 7
        %v8742 = vsub.s32 %v2637, %v8741
        %v8743 = vrot.slane %v7922, %v8742
        %v8744 = vsel %vm2642, %v8743, %v8739
        %v8745 = vlaneseq
        %v8746 = vshrl.u32 %v8745, 7
        %v8747 = vsub.s32 %v2632, %v8746
        %v8748 = vrot.slane %v7925, %v8747
        %v8749 = vlaneseq
        %v8750 = vshrl.u32 %v8749, 7
        %v8751 = vsub.s32 %v2637, %v8750
        %v8752 = vrot.slane %v7928, %v8751
        %v8753 = vsel %vm2642, %v8752, %v8748
        %v8754 = vlaneseq
        %v8755 = vshrl.u32 %v8754, 7
        %v8756 = vsub.s32 %v2632, %v8755
        %v8757 = vrot.slane %v7931, %v8756
        %v8758 = vlaneseq
        %v8759 = vshrl.u32 %v8758, 7
        %v8760 = vsub.s32 %v2637, %v8759
        %v8761 = vrot.slane %v7934, %v8760
        %v8762 = vsel %vm2642, %v8761, %v8757
        %v8763 = vlaneseq
        %v8764 = vshrl.u32 %v8763, 7
        %v8765 = vsub.s32 %v2632, %v8764
        %v8766 = vrot.slane %v7937, %v8765
        %v8767 = vlaneseq
        %v8768 = vshrl.u32 %v8767, 7
        %v8769 = vsub.s32 %v2637, %v8768
        %v8770 = vrot.slane %v7940, %v8769
        %v8771 = vsel %vm2642, %v8770, %v8766
        %v8772 = vlaneseq
        %v8773 = vshrl.u32 %v8772, 7
        %v8774 = vsub.s32 %v2632, %v8773
        %v8775 = vrot.slane %v7943, %v8774
        %v8776 = vlaneseq
        %v8777 = vshrl.u32 %v8776, 7
        %v8778 = vsub.s32 %v2637, %v8777
        %v8779 = vrot.slane %v7946, %v8778
        %v8780 = vsel %vm2642, %v8779, %v8775
        %v8781 = vlaneseq
        %v8782 = vshrl.u32 %v8781, 7
        %v8783 = vsub.s32 %v2632, %v8782
        %v8784 = vrot.slane %v7949, %v8783
        %v8785 = vlaneseq
        %v8786 = vshrl.u32 %v8785, 7
        %v8787 = vsub.s32 %v2637, %v8786
        %v8788 = vrot.slane %v7952, %v8787
        %v8789 = vsel %vm2642, %v8788, %v8784
        %v8790 = vlaneseq
        %v8791 = vshrl.u32 %v8790, 7
        %v8792 = vsub.s32 %v2632, %v8791
        %v8793 = vrot.slane %v7955, %v8792
        %v8794 = vlaneseq
        %v8795 = vshrl.u32 %v8794, 7
        %v8796 = vsub.s32 %v2637, %v8795
        %v8797 = vrot.slane %v7958, %v8796
        %v8798 = vsel %vm2642, %v8797, %v8793
        %v8799 = vlaneseq
        %v8800 = vshrl.u32 %v8799, 7
        %v8801 = vsub.s32 %v2632, %v8800
        %v8802 = vrot.slane %v7961, %v8801
        %v8803 = vlaneseq
        %v8804 = vshrl.u32 %v8803, 7
        %v8805 = vsub.s32 %v2637, %v8804
        %v8806 = vrot.slane %v7964, %v8805
        %v8807 = vsel %vm2642, %v8806, %v8802
        %v8808 = vlaneseq
        %v8809 = vshrl.u32 %v8808, 7
        %v8810 = vsub.s32 %v2632, %v8809
        %v8811 = vrot.slane %v7967, %v8810
        %v8812 = vlaneseq
        %v8813 = vshrl.u32 %v8812, 7
        %v8814 = vsub.s32 %v2637, %v8813
        %v8815 = vrot.slane %v7970, %v8814
        %v8816 = vsel %vm2642, %v8815, %v8811
        %v8817 = vlaneseq
        %v8818 = vshrl.u32 %v8817, 7
        %v8819 = vsub.s32 %v2632, %v8818
        %v8820 = vrot.slane %v7973, %v8819
        %v8821 = vlaneseq
        %v8822 = vshrl.u32 %v8821, 7
        %v8823 = vsub.s32 %v2637, %v8822
        %v8824 = vrot.slane %v7976, %v8823
        %v8825 = vsel %vm2642, %v8824, %v8820
        %v8826 = vlaneseq
        %v8827 = vshrl.u32 %v8826, 7
        %v8828 = vsub.s32 %v2632, %v8827
        %v8829 = vrot.slane %v7979, %v8828
        %v8830 = vlaneseq
        %v8831 = vshrl.u32 %v8830, 7
        %v8832 = vsub.s32 %v2637, %v8831
        %v8833 = vrot.slane %v7982, %v8832
        %v8834 = vsel %vm2642, %v8833, %v8829
        %v8835 = vlaneseq
        %v8836 = vshrl.u32 %v8835, 7
        %v8837 = vsub.s32 %v2632, %v8836
        %v8838 = vrot.slane %v7985, %v8837
        %v8839 = vlaneseq
        %v8840 = vshrl.u32 %v8839, 7
        %v8841 = vsub.s32 %v2637, %v8840
        %v8842 = vrot.slane %v7988, %v8841
        %v8843 = vsel %vm2642, %v8842, %v8838
        %v8844 = vlaneseq
        %v8845 = vshrl.u32 %v8844, 7
        %v8846 = vsub.s32 %v2632, %v8845
        %v8847 = vrot.slane %v7991, %v8846
        %v8848 = vlaneseq
        %v8849 = vshrl.u32 %v8848, 7
        %v8850 = vsub.s32 %v2637, %v8849
        %v8851 = vrot.slane %v7994, %v8850
        %v8852 = vsel %vm2642, %v8851, %v8847
        %v8853 = vlaneseq
        %v8854 = vshrl.u32 %v8853, 7
        %v8855 = vsub.s32 %v2632, %v8854
        %v8856 = vrot.slane %v7997, %v8855
        %v8857 = vlaneseq
        %v8858 = vshrl.u32 %v8857, 7
        %v8859 = vsub.s32 %v2637, %v8858
        %v8860 = vrot.slane %v8000, %v8859
        %v8861 = vsel %vm2642, %v8860, %v8856
        %v8862 = vlaneseq
        %v8863 = vshrl.u32 %v8862, 7
        %v8864 = vsub.s32 %v2632, %v8863
        %v8865 = vrot.slane %v8003, %v8864
        %v8866 = vlaneseq
        %v8867 = vshrl.u32 %v8866, 7
        %v8868 = vsub.s32 %v2637, %v8867
        %v8869 = vrot.slane %v8006, %v8868
        %v8870 = vsel %vm2642, %v8869, %v8865
        %v8871 = vlaneseq
        %v8872 = vshrl.u32 %v8871, 7
        %v8873 = vsub.s32 %v2632, %v8872
        %v8874 = vrot.slane %v8009, %v8873
        %v8875 = vlaneseq
        %v8876 = vshrl.u32 %v8875, 7
        %v8877 = vsub.s32 %v2637, %v8876
        %v8878 = vrot.slane %v8012, %v8877
        %v8879 = vsel %vm2642, %v8878, %v8874
        %v8880 = vlaneseq
        %v8881 = vshrl.u32 %v8880, 7
        %v8882 = vsub.s32 %v2632, %v8881
        %v8883 = vrot.slane %v8015, %v8882
        %v8884 = vlaneseq
        %v8885 = vshrl.u32 %v8884, 7
        %v8886 = vsub.s32 %v2637, %v8885
        %v8887 = vrot.slane %v8018, %v8886
        %v8888 = vsel %vm2642, %v8887, %v8883
        %v8889 = vlaneseq
        %v8890 = vshrl.u32 %v8889, 7
        %v8891 = vsub.s32 %v2632, %v8890
        %v8892 = vrot.slane %v8021, %v8891
        %v8893 = vlaneseq
        %v8894 = vshrl.u32 %v8893, 7
        %v8895 = vsub.s32 %v2637, %v8894
        %v8896 = vrot.slane %v8024, %v8895
        %v8897 = vsel %vm2642, %v8896, %v8892
        %v8898 = vlaneseq
        %v8899 = vshrl.u32 %v8898, 7
        %v8900 = vsub.s32 %v2632, %v8899
        %v8901 = vrot.slane %v8027, %v8900
        %v8902 = vlaneseq
        %v8903 = vshrl.u32 %v8902, 7
        %v8904 = vsub.s32 %v2637, %v8903
        %v8905 = vrot.slane %v8030, %v8904
        %v8906 = vsel %vm2642, %v8905, %v8901
        %v8907 = vlaneseq
        %v8908 = vshrl.u32 %v8907, 7
        %v8909 = vsub.s32 %v2632, %v8908
        %v8910 = vrot.slane %v8033, %v8909
        %v8911 = vlaneseq
        %v8912 = vshrl.u32 %v8911, 7
        %v8913 = vsub.s32 %v2637, %v8912
        %v8914 = vrot.slane %v8036, %v8913
        %v8915 = vsel %vm2642, %v8914, %v8910
        %v8916 = vlaneseq
        %v8917 = vshrl.u32 %v8916, 7
        %v8918 = vsub.s32 %v2632, %v8917
        %v8919 = vrot.slane %v8039, %v8918
        %v8920 = vlaneseq
        %v8921 = vshrl.u32 %v8920, 7
        %v8922 = vsub.s32 %v2637, %v8921
        %v8923 = vrot.slane %v8042, %v8922
        %v8924 = vsel %vm2642, %v8923, %v8919
        %v8925 = vlaneseq
        %v8926 = vshrl.u32 %v8925, 7
        %v8927 = vsub.s32 %v2632, %v8926
        %v8928 = vrot.slane %v8045, %v8927
        %v8929 = vlaneseq
        %v8930 = vshrl.u32 %v8929, 7
        %v8931 = vsub.s32 %v2637, %v8930
        %v8932 = vrot.slane %v8048, %v8931
        %v8933 = vsel %vm2642, %v8932, %v8928
        %v8934 = vlaneseq
        %v8935 = vshrl.u32 %v8934, 7
        %v8936 = vsub.s32 %v2632, %v8935
        %v8937 = vrot.slane %v8051, %v8936
        %v8938 = vlaneseq
        %v8939 = vshrl.u32 %v8938, 7
        %v8940 = vsub.s32 %v2637, %v8939
        %v8941 = vrot.slane %v8054, %v8940
        %v8942 = vsel %vm2642, %v8941, %v8937
        %v8943 = vlaneseq
        %v8944 = vshrl.u32 %v8943, 7
        %v8945 = vsub.s32 %v2632, %v8944
        %v8946 = vrot.slane %v8057, %v8945
        %v8947 = vlaneseq
        %v8948 = vshrl.u32 %v8947, 7
        %v8949 = vsub.s32 %v2637, %v8948
        %v8950 = vrot.slane %v8060, %v8949
        %v8951 = vsel %vm2642, %v8950, %v8946
        %v8952 = vlaneseq
        %v8953 = vshrl.u32 %v8952, 7
        %v8954 = vsub.s32 %v2632, %v8953
        %v8955 = vrot.slane %v8063, %v8954
        %v8956 = vlaneseq
        %v8957 = vshrl.u32 %v8956, 7
        %v8958 = vsub.s32 %v2637, %v8957
        %v8959 = vrot.slane %v8066, %v8958
        %v8960 = vsel %vm2642, %v8959, %v8955
        %v8961 = vlaneseq
        %v8962 = vshrl.u32 %v8961, 7
        %v8963 = vsub.s32 %v2632, %v8962
        %v8964 = vrot.slane %v8069, %v8963
        %v8965 = vlaneseq
        %v8966 = vshrl.u32 %v8965, 7
        %v8967 = vsub.s32 %v2637, %v8966
        %v8968 = vrot.slane %v8072, %v8967
        %v8969 = vsel %vm2642, %v8968, %v8964
        %v8970 = vlaneseq
        %v8971 = vshrl.u32 %v8970, 7
        %v8972 = vsub.s32 %v2632, %v8971
        %v8973 = vrot.slane %v8075, %v8972
        %v8974 = vlaneseq
        %v8975 = vshrl.u32 %v8974, 7
        %v8976 = vsub.s32 %v2637, %v8975
        %v8977 = vrot.slane %v8078, %v8976
        %v8978 = vsel %vm2642, %v8977, %v8973
        %v8979 = vlaneseq
        %v8980 = vshrl.u32 %v8979, 7
        %v8981 = vsub.s32 %v2632, %v8980
        %v8982 = vrot.slane %v8081, %v8981
        %v8983 = vlaneseq
        %v8984 = vshrl.u32 %v8983, 7
        %v8985 = vsub.s32 %v2637, %v8984
        %v8986 = vrot.slane %v8084, %v8985
        %v8987 = vsel %vm2642, %v8986, %v8982
        %v8988 = vlaneseq
        %v8989 = vshrl.u32 %v8988, 7
        %v8990 = vsub.s32 %v2632, %v8989
        %v8991 = vrot.slane %v8087, %v8990
        %v8992 = vlaneseq
        %v8993 = vshrl.u32 %v8992, 7
        %v8994 = vsub.s32 %v2637, %v8993
        %v8995 = vrot.slane %v8090, %v8994
        %v8996 = vsel %vm2642, %v8995, %v8991
        %v8997 = vlaneseq
        %v8998 = vshrl.u32 %v8997, 7
        %v8999 = vsub.s32 %v2632, %v8998
        %v9000 = vrot.slane %v8093, %v8999
        %v9001 = vlaneseq
        %v9002 = vshrl.u32 %v9001, 7
        %v9003 = vsub.s32 %v2637, %v9002
        %v9004 = vrot.slane %v8096, %v9003
        %v9005 = vsel %vm2642, %v9004, %v9000
        %v9006 = vlaneseq
        %v9007 = vshrl.u32 %v9006, 7
        %v9008 = vsub.s32 %v2632, %v9007
        %v9009 = vrot.slane %v8099, %v9008
        %v9010 = vlaneseq
        %v9011 = vshrl.u32 %v9010, 7
        %v9012 = vsub.s32 %v2637, %v9011
        %v9013 = vrot.slane %v8102, %v9012
        %v9014 = vsel %vm2642, %v9013, %v9009
        %v9015 = vlaneseq
        %v9016 = vshrl.u32 %v9015, 7
        %v9017 = vsub.s32 %v2632, %v9016
        %v9018 = vrot.slane %v8105, %v9017
        %v9019 = vlaneseq
        %v9020 = vshrl.u32 %v9019, 7
        %v9021 = vsub.s32 %v2637, %v9020
        %v9022 = vrot.slane %v8108, %v9021
        %v9023 = vsel %vm2642, %v9022, %v9018
        %v9024 = vlaneseq
        %v9025 = vshrl.u32 %v9024, 7
        %v9026 = vsub.s32 %v2632, %v9025
        %v9027 = vrot.slane %v8111, %v9026
        %v9028 = vlaneseq
        %v9029 = vshrl.u32 %v9028, 7
        %v9030 = vsub.s32 %v2637, %v9029
        %v9031 = vrot.slane %v8114, %v9030
        %v9032 = vsel %vm2642, %v9031, %v9027
        %v9033 = vlaneseq
        %v9034 = vshrl.u32 %v9033, 7
        %v9035 = vsub.s32 %v2632, %v9034
        %v9036 = vrot.slane %v8117, %v9035
        %v9037 = vlaneseq
        %v9038 = vshrl.u32 %v9037, 7
        %v9039 = vsub.s32 %v2637, %v9038
        %v9040 = vrot.slane %v8120, %v9039
        %v9041 = vsel %vm2642, %v9040, %v9036
        %v9042 = vlaneseq
        %v9043 = vshrl.u32 %v9042, 7
        %v9044 = vsub.s32 %v2632, %v9043
        %v9045 = vrot.slane %v8123, %v9044
        %v9046 = vlaneseq
        %v9047 = vshrl.u32 %v9046, 7
        %v9048 = vsub.s32 %v2637, %v9047
        %v9049 = vrot.slane %v8126, %v9048
        %v9050 = vsel %vm2642, %v9049, %v9045
        %v9051 = vlaneseq
        %v9052 = vshrl.u32 %v9051, 7
        %v9053 = vsub.s32 %v2632, %v9052
        %v9054 = vrot.slane %v8129, %v9053
        %v9055 = vlaneseq
        %v9056 = vshrl.u32 %v9055, 7
        %v9057 = vsub.s32 %v2637, %v9056
        %v9058 = vrot.slane %v8132, %v9057
        %v9059 = vsel %vm2642, %v9058, %v9054
        %v9060 = vlaneseq
        %v9061 = vshrl.u32 %v9060, 7
        %v9062 = vsub.s32 %v2632, %v9061
        %v9063 = vrot.slane %v8135, %v9062
        %v9064 = vlaneseq
        %v9065 = vshrl.u32 %v9064, 7
        %v9066 = vsub.s32 %v2637, %v9065
        %v9067 = vrot.slane %v8138, %v9066
        %v9068 = vsel %vm2642, %v9067, %v9063
        %v9069 = vlaneseq
        %v9070 = vshrl.u32 %v9069, 7
        %v9071 = vsub.s32 %v2632, %v9070
        %v9072 = vrot.slane %v8141, %v9071
        %v9073 = vlaneseq
        %v9074 = vshrl.u32 %v9073, 7
        %v9075 = vsub.s32 %v2637, %v9074
        %v9076 = vrot.slane %v8144, %v9075
        %v9077 = vsel %vm2642, %v9076, %v9072
        %v9078 = vlaneseq
        %v9079 = vshrl.u32 %v9078, 7
        %v9080 = vsub.s32 %v2632, %v9079
        %v9081 = vrot.slane %v8147, %v9080
        %v9082 = vlaneseq
        %v9083 = vshrl.u32 %v9082, 7
        %v9084 = vsub.s32 %v2637, %v9083
        %v9085 = vrot.slane %v8150, %v9084
        %v9086 = vsel %vm2642, %v9085, %v9081
        %v9087 = vlaneseq
        %v9088 = vshrl.u32 %v9087, 7
        %v9089 = vsub.s32 %v2632, %v9088
        %v9090 = vrot.slane %v8153, %v9089
        %v9091 = vlaneseq
        %v9092 = vshrl.u32 %v9091, 7
        %v9093 = vsub.s32 %v2637, %v9092
        %v9094 = vrot.slane %v8156, %v9093
        %v9095 = vsel %vm2642, %v9094, %v9090
        %v9096 = vlaneseq
        %v9097 = vshrl.u32 %v9096, 7
        %v9098 = vsub.s32 %v2632, %v9097
        %v9099 = vrot.slane %v8159, %v9098
        %v9100 = vlaneseq
        %v9101 = vshrl.u32 %v9100, 7
        %v9102 = vsub.s32 %v2637, %v9101
        %v9103 = vrot.slane %v8162, %v9102
        %v9104 = vsel %vm2642, %v9103, %v9099
        %v9105 = vlaneseq
        %v9106 = vshrl.u32 %v9105, 7
        %v9107 = vsub.s32 %v2632, %v9106
        %v9108 = vrot.slane %v8165, %v9107
        %v9109 = vlaneseq
        %v9110 = vshrl.u32 %v9109, 7
        %v9111 = vsub.s32 %v2637, %v9110
        %v9112 = vrot.slane %v8168, %v9111
        %v9113 = vsel %vm2642, %v9112, %v9108
        %v9114 = vlaneseq
        %v9115 = vshrl.u32 %v9114, 7
        %v9116 = vsub.s32 %v2632, %v9115
        %v9117 = vrot.slane %v8171, %v9116
        %v9118 = vlaneseq
        %v9119 = vshrl.u32 %v9118, 7
        %v9120 = vsub.s32 %v2637, %v9119
        %v9121 = vrot.slane %v8174, %v9120
        %v9122 = vsel %vm2642, %v9121, %v9117
        %v9123 = vlaneseq
        %v9124 = vshrl.u32 %v9123, 7
        %v9125 = vsub.s32 %v2632, %v9124
        %v9126 = vrot.slane %v8177, %v9125
        %v9127 = vlaneseq
        %v9128 = vshrl.u32 %v9127, 7
        %v9129 = vsub.s32 %v2637, %v9128
        %v9130 = vrot.slane %v8180, %v9129
        %v9131 = vsel %vm2642, %v9130, %v9126
        %v9132 = vlaneseq
        %v9133 = vshrl.u32 %v9132, 7
        %v9134 = vsub.s32 %v2632, %v9133
        %v9135 = vrot.slane %v8183, %v9134
        %v9136 = vlaneseq
        %v9137 = vshrl.u32 %v9136, 7
        %v9138 = vsub.s32 %v2637, %v9137
        %v9139 = vrot.slane %v8186, %v9138
        %v9140 = vsel %vm2642, %v9139, %v9135
        %v9141 = vlaneseq
        %v9142 = vshrl.u32 %v9141, 7
        %v9143 = vsub.s32 %v2632, %v9142
        %v9144 = vrot.slane %v8189, %v9143
        %v9145 = vlaneseq
        %v9146 = vshrl.u32 %v9145, 7
        %v9147 = vsub.s32 %v2637, %v9146
        %v9148 = vrot.slane %v8192, %v9147
        %v9149 = vsel %vm2642, %v9148, %v9144
        %v9150 = vlaneseq
        %v9151 = vshrl.u32 %v9150, 7
        %v9152 = vsub.s32 %v2632, %v9151
        %v9153 = vrot.slane %v8195, %v9152
        %v9154 = vlaneseq
        %v9155 = vshrl.u32 %v9154, 7
        %v9156 = vsub.s32 %v2637, %v9155
        %v9157 = vrot.slane %v8198, %v9156
        %v9158 = vsel %vm2642, %v9157, %v9153
        %v9159 = vlaneseq
        %v9160 = vshrl.u32 %v9159, 7
        %v9161 = vsub.s32 %v2632, %v9160
        %v9162 = vrot.slane %v8201, %v9161
        %v9163 = vlaneseq
        %v9164 = vshrl.u32 %v9163, 7
        %v9165 = vsub.s32 %v2637, %v9164
        %v9166 = vrot.slane %v8204, %v9165
        %v9167 = vsel %vm2642, %v9166, %v9162
        %v9168 = vlaneseq
        %v9169 = vshrl.u32 %v9168, 7
        %v9170 = vsub.s32 %v2632, %v9169
        %v9171 = vrot.slane %v8207, %v9170
        %v9172 = vlaneseq
        %v9173 = vshrl.u32 %v9172, 7
        %v9174 = vsub.s32 %v2637, %v9173
        %v9175 = vrot.slane %v8210, %v9174
        %v9176 = vsel %vm2642, %v9175, %v9171
        %v9177 = vlaneseq
        %v9178 = vshrl.u32 %v9177, 7
        %v9179 = vsub.s32 %v2632, %v9178
        %v9180 = vrot.slane %v8213, %v9179
        %v9181 = vlaneseq
        %v9182 = vshrl.u32 %v9181, 7
        %v9183 = vsub.s32 %v2637, %v9182
        %v9184 = vrot.slane %v8216, %v9183
        %v9185 = vsel %vm2642, %v9184, %v9180
        %v9186 = vlaneseq
        %v9187 = vshrl.u32 %v9186, 7
        %v9188 = vsub.s32 %v2632, %v9187
        %v9189 = vrot.slane %v8219, %v9188
        %v9190 = vlaneseq
        %v9191 = vshrl.u32 %v9190, 7
        %v9192 = vsub.s32 %v2637, %v9191
        %v9193 = vrot.slane %v8222, %v9192
        %v9194 = vsel %vm2642, %v9193, %v9189
        %v9195 = vlaneseq
        %v9196 = vshrl.u32 %v9195, 7
        %v9197 = vsub.s32 %v2632, %v9196
        %v9198 = vrot.slane %v8225, %v9197
        %v9199 = vlaneseq
        %v9200 = vshrl.u32 %v9199, 7
        %v9201 = vsub.s32 %v2637, %v9200
        %v9202 = vrot.slane %v8228, %v9201
        %v9203 = vsel %vm2642, %v9202, %v9198
        %v9204 = vlaneseq
        %v9205 = vshrl.u32 %v9204, 7
        %v9206 = vsub.s32 %v2632, %v9205
        %v9207 = vrot.slane %v8231, %v9206
        %v9208 = vlaneseq
        %v9209 = vshrl.u32 %v9208, 7
        %v9210 = vsub.s32 %v2637, %v9209
        %v9211 = vrot.slane %v8234, %v9210
        %v9212 = vsel %vm2642, %v9211, %v9207
        %v9213 = vlaneseq
        %v9214 = vshrl.u32 %v9213, 7
        %v9215 = vsub.s32 %v2632, %v9214
        %v9216 = vrot.slane %v8237, %v9215
        %v9217 = vlaneseq
        %v9218 = vshrl.u32 %v9217, 7
        %v9219 = vsub.s32 %v2637, %v9218
        %v9220 = vrot.slane %v8240, %v9219
        %v9221 = vsel %vm2642, %v9220, %v9216
        %v9222 = vlaneseq
        %v9223 = vshrl.u32 %v9222, 7
        %v9224 = vsub.s32 %v2632, %v9223
        %v9225 = vrot.slane %v8243, %v9224
        %v9226 = vlaneseq
        %v9227 = vshrl.u32 %v9226, 7
        %v9228 = vsub.s32 %v2637, %v9227
        %v9229 = vrot.slane %v8246, %v9228
        %v9230 = vsel %vm2642, %v9229, %v9225
        %v9231 = vlaneseq
        %v9232 = vshrl.u32 %v9231, 7
        %v9233 = vsub.s32 %v2632, %v9232
        %v9234 = vrot.slane %v8249, %v9233
        %v9235 = vlaneseq
        %v9236 = vshrl.u32 %v9235, 7
        %v9237 = vsub.s32 %v2637, %v9236
        %v9238 = vrot.slane %v8252, %v9237
        %v9239 = vsel %vm2642, %v9238, %v9234
        %v9240 = vlaneseq
        %v9241 = vshrl.u32 %v9240, 7
        %v9242 = vsub.s32 %v2632, %v9241
        %v9243 = vrot.slane %v8255, %v9242
        %v9244 = vlaneseq
        %v9245 = vshrl.u32 %v9244, 7
        %v9246 = vsub.s32 %v2637, %v9245
        %v9247 = vrot.slane %v8258, %v9246
        %v9248 = vsel %vm2642, %v9247, %v9243
        %v9249 = vlaneseq
        %v9250 = vshrl.u32 %v9249, 7
        %v9251 = vsub.s32 %v2632, %v9250
        %v9252 = vrot.slane %v8261, %v9251
        %v9253 = vlaneseq
        %v9254 = vshrl.u32 %v9253, 7
        %v9255 = vsub.s32 %v2637, %v9254
        %v9256 = vrot.slane %v8264, %v9255
        %v9257 = vsel %vm2642, %v9256, %v9252
        %v9258 = vlaneseq
        %v9259 = vshrl.u32 %v9258, 7
        %v9260 = vsub.s32 %v2632, %v9259
        %v9261 = vrot.slane %v8267, %v9260
        %v9262 = vlaneseq
        %v9263 = vshrl.u32 %v9262, 7
        %v9264 = vsub.s32 %v2637, %v9263
        %v9265 = vrot.slane %v8270, %v9264
        %v9266 = vsel %vm2642, %v9265, %v9261
        %v9267 = vlaneseq
        %v9268 = vshrl.u32 %v9267, 7
        %v9269 = vsub.s32 %v2632, %v9268
        %v9270 = vrot.slane %v8273, %v9269
        %v9271 = vlaneseq
        %v9272 = vshrl.u32 %v9271, 7
        %v9273 = vsub.s32 %v2637, %v9272
        %v9274 = vrot.slane %v8276, %v9273
        %v9275 = vsel %vm2642, %v9274, %v9270
        %v9276 = vlaneseq
        %v9277 = vshrl.u32 %v9276, 7
        %v9278 = vsub.s32 %v2632, %v9277
        %v9279 = vrot.slane %v8279, %v9278
        %v9280 = vlaneseq
        %v9281 = vshrl.u32 %v9280, 7
        %v9282 = vsub.s32 %v2637, %v9281
        %v9283 = vrot.slane %v8282, %v9282
        %v9284 = vsel %vm2642, %v9283, %v9279
        %v9285 = vlaneseq
        %v9286 = vshrl.u32 %v9285, 7
        %v9287 = vsub.s32 %v2632, %v9286
        %v9288 = vrot.slane %v8285, %v9287
        %v9289 = vlaneseq
        %v9290 = vshrl.u32 %v9289, 7
        %v9291 = vsub.s32 %v2637, %v9290
        %v9292 = vrot.slane %v8288, %v9291
        %v9293 = vsel %vm2642, %v9292, %v9288
        %v9294 = vlaneseq
        %v9295 = vshrl.u32 %v9294, 7
        %v9296 = vsub.s32 %v2632, %v9295
        %v9297 = vrot.slane %v8291, %v9296
        %v9298 = vlaneseq
        %v9299 = vshrl.u32 %v9298, 7
        %v9300 = vsub.s32 %v2637, %v9299
        %v9301 = vrot.slane %v8294, %v9300
        %v9302 = vsel %vm2642, %v9301, %v9297
        %v9303 = vlaneseq
        %v9304 = vshrl.u32 %v9303, 7
        %v9305 = vsub.s32 %v2632, %v9304
        %v9306 = vrot.slane %v8297, %v9305
        %v9307 = vlaneseq
        %v9308 = vshrl.u32 %v9307, 7
        %v9309 = vsub.s32 %v2637, %v9308
        %v9310 = vrot.slane %v8300, %v9309
        %v9311 = vsel %vm2642, %v9310, %v9306
        %v9312 = vlaneseq
        %v9313 = vshrl.u32 %v9312, 7
        %v9314 = vsub.s32 %v2632, %v9313
        %v9315 = vrot.slane %v8303, %v9314
        %v9316 = vlaneseq
        %v9317 = vshrl.u32 %v9316, 7
        %v9318 = vsub.s32 %v2637, %v9317
        %v9319 = vrot.slane %v8306, %v9318
        %v9320 = vsel %vm2642, %v9319, %v9315
        %v9321 = vlaneseq
        %v9322 = vshrl.u32 %v9321, 7
        %v9323 = vsub.s32 %v2632, %v9322
        %v9324 = vrot.slane %v8309, %v9323
        %v9325 = vlaneseq
        %v9326 = vshrl.u32 %v9325, 7
        %v9327 = vsub.s32 %v2637, %v9326
        %v9328 = vrot.slane %v8312, %v9327
        %v9329 = vsel %vm2642, %v9328, %v9324
        %v9330 = vlaneseq
        %v9331 = vshrl.u32 %v9330, 7
        %v9332 = vsub.s32 %v2632, %v9331
        %v9333 = vrot.slane %v8315, %v9332
        %v9334 = vlaneseq
        %v9335 = vshrl.u32 %v9334, 7
        %v9336 = vsub.s32 %v2637, %v9335
        %v9337 = vrot.slane %v8318, %v9336
        %v9338 = vsel %vm2642, %v9337, %v9333
        %v9339 = vlaneseq
        %v9340 = vshrl.u32 %v9339, 7
        %v9341 = vsub.s32 %v2632, %v9340
        %v9342 = vrot.slane %v8321, %v9341
        %v9343 = vlaneseq
        %v9344 = vshrl.u32 %v9343, 7
        %v9345 = vsub.s32 %v2637, %v9344
        %v9346 = vrot.slane %v8324, %v9345
        %v9347 = vsel %vm2642, %v9346, %v9342
        %v9348 = vlaneseq
        %v9349 = vshrl.u32 %v9348, 7
        %v9350 = vsub.s32 %v2632, %v9349
        %v9351 = vrot.slane %v8327, %v9350
        %v9352 = vlaneseq
        %v9353 = vshrl.u32 %v9352, 7
        %v9354 = vsub.s32 %v2637, %v9353
        %v9355 = vrot.slane %v8330, %v9354
        %v9356 = vsel %vm2642, %v9355, %v9351
        %v9357 = vlaneseq
        %v9358 = vshrl.u32 %v9357, 7
        %v9359 = vsub.s32 %v2632, %v9358
        %v9360 = vrot.slane %v8333, %v9359
        %v9361 = vlaneseq
        %v9362 = vshrl.u32 %v9361, 7
        %v9363 = vsub.s32 %v2637, %v9362
        %v9364 = vrot.slane %v8336, %v9363
        %v9365 = vsel %vm2642, %v9364, %v9360
        %v9366 = vlaneseq
        %v9367 = vshrl.u32 %v9366, 7
        %v9368 = vsub.s32 %v2632, %v9367
        %v9369 = vrot.slane %v8339, %v9368
        %v9370 = vlaneseq
        %v9371 = vshrl.u32 %v9370, 7
        %v9372 = vsub.s32 %v2637, %v9371
        %v9373 = vrot.slane %v8342, %v9372
        %v9374 = vsel %vm2642, %v9373, %v9369
        %v9375 = vlaneseq
        %v9376 = vshrl.u32 %v9375, 7
        %v9377 = vsub.s32 %v2632, %v9376
        %v9378 = vrot.slane %v8345, %v9377
        %v9379 = vlaneseq
        %v9380 = vshrl.u32 %v9379, 7
        %v9381 = vsub.s32 %v2637, %v9380
        %v9382 = vrot.slane %v8348, %v9381
        %v9383 = vsel %vm2642, %v9382, %v9378
        %v9384 = vlaneseq
        %v9385 = vshrl.u32 %v9384, 7
        %v9386 = vsub.s32 %v2632, %v9385
        %v9387 = vrot.slane %v8351, %v9386
        %v9388 = vlaneseq
        %v9389 = vshrl.u32 %v9388, 7
        %v9390 = vsub.s32 %v2637, %v9389
        %v9391 = vrot.slane %v8354, %v9390
        %v9392 = vsel %vm2642, %v9391, %v9387
        %v9393 = vlaneseq
        %v9394 = vshrl.u32 %v9393, 7
        %v9395 = vsub.s32 %v2632, %v9394
        %v9396 = vrot.slane %v8357, %v9395
        %v9397 = vlaneseq
        %v9398 = vshrl.u32 %v9397, 7
        %v9399 = vsub.s32 %v2637, %v9398
        %v9400 = vrot.slane %v8360, %v9399
        %v9401 = vsel %vm2642, %v9400, %v9396
        %v9402 = vlaneseq
        %v9403 = vshrl.u32 %v9402, 7
        %v9404 = vsub.s32 %v2632, %v9403
        %v9405 = vrot.slane %v8363, %v9404
        %v9406 = vlaneseq
        %v9407 = vshrl.u32 %v9406, 7
        %v9408 = vsub.s32 %v2637, %v9407
        %v9409 = vrot.slane %v8366, %v9408
        %v9410 = vsel %vm2642, %v9409, %v9405
        %v9411 = vlaneseq
        %v9412 = vshrl.u32 %v9411, 7
        %v9413 = vsub.s32 %v2632, %v9412
        %v9414 = vrot.slane %v8369, %v9413
        %v9415 = vlaneseq
        %v9416 = vshrl.u32 %v9415, 7
        %v9417 = vsub.s32 %v2637, %v9416
        %v9418 = vrot.slane %v8372, %v9417
        %v9419 = vsel %vm2642, %v9418, %v9414
        %v9420 = vlaneseq
        %v9421 = vshrl.u32 %v9420, 7
        %v9422 = vsub.s32 %v2632, %v9421
        %v9423 = vrot.slane %v8375, %v9422
        %v9424 = vlaneseq
        %v9425 = vshrl.u32 %v9424, 7
        %v9426 = vsub.s32 %v2637, %v9425
        %v9427 = vrot.slane %v8378, %v9426
        %v9428 = vsel %vm2642, %v9427, %v9423
        %v9429 = vlaneseq
        %v9430 = vshrl.u32 %v9429, 7
        %v9431 = vsub.s32 %v2632, %v9430
        %v9432 = vrot.slane %v8381, %v9431
        %v9433 = vlaneseq
        %v9434 = vshrl.u32 %v9433, 7
        %v9435 = vsub.s32 %v2637, %v9434
        %v9436 = vrot.slane %v8384, %v9435
        %v9437 = vsel %vm2642, %v9436, %v9432
        %v9438 = vlaneseq
        %v9439 = vshrl.u32 %v9438, 7
        %v9440 = vsub.s32 %v2632, %v9439
        %v9441 = vrot.slane %v8387, %v9440
        %v9442 = vlaneseq
        %v9443 = vshrl.u32 %v9442, 7
        %v9444 = vsub.s32 %v2637, %v9443
        %v9445 = vrot.slane %v8390, %v9444
        %v9446 = vsel %vm2642, %v9445, %v9441
        %v9447 = vlaneseq
        %v9448 = vshrl.u32 %v9447, 7
        %v9449 = vsub.s32 %v2632, %v9448
        %v9450 = vrot.slane %v8393, %v9449
        %v9451 = vlaneseq
        %v9452 = vshrl.u32 %v9451, 7
        %v9453 = vsub.s32 %v2637, %v9452
        %v9454 = vrot.slane %v8396, %v9453
        %v9455 = vsel %vm2642, %v9454, %v9450
        %v9456 = vlaneseq
        %v9457 = vshrl.u32 %v9456, 7
        %v9458 = vsub.s32 %v2632, %v9457
        %v9459 = vrot.slane %v8399, %v9458
        %v9460 = vlaneseq
        %v9461 = vshrl.u32 %v9460, 7
        %v9462 = vsub.s32 %v2637, %v9461
        %v9463 = vrot.slane %v8402, %v9462
        %v9464 = vsel %vm2642, %v9463, %v9459
        %v9465 = vlaneseq
        %v9466 = vshrl.u32 %v9465, 7
        %v9467 = vsub.s32 %v2632, %v9466
        %v9468 = vrot.slane %v8405, %v9467
        %v9469 = vlaneseq
        %v9470 = vshrl.u32 %v9469, 7
        %v9471 = vsub.s32 %v2637, %v9470
        %v9472 = vrot.slane %v8408, %v9471
        %v9473 = vsel %vm2642, %v9472, %v9468
        %v9474 = vlaneseq
        %v9475 = vshrl.u32 %v9474, 7
        %v9476 = vsub.s32 %v2632, %v9475
        %v9477 = vrot.slane %v8411, %v9476
        %v9478 = vlaneseq
        %v9479 = vshrl.u32 %v9478, 7
        %v9480 = vsub.s32 %v2637, %v9479
        %v9481 = vrot.slane %v8414, %v9480
        %v9482 = vsel %vm2642, %v9481, %v9477
        %v9483 = vlaneseq
        %v9484 = vshrl.u32 %v9483, 7
        %v9485 = vsub.s32 %v2632, %v9484
        %v9486 = vrot.slane %v8417, %v9485
        %v9487 = vlaneseq
        %v9488 = vshrl.u32 %v9487, 7
        %v9489 = vsub.s32 %v2637, %v9488
        %v9490 = vrot.slane %v8420, %v9489
        %v9491 = vsel %vm2642, %v9490, %v9486
        %v9492 = vlaneseq
        %v9493 = vshrl.u32 %v9492, 7
        %v9494 = vsub.s32 %v2632, %v9493
        %v9495 = vrot.slane %v8423, %v9494
        %v9496 = vlaneseq
        %v9497 = vshrl.u32 %v9496, 7
        %v9498 = vsub.s32 %v2637, %v9497
        %v9499 = vrot.slane %v8426, %v9498
        %v9500 = vsel %vm2642, %v9499, %v9495
        %v9501 = vlaneseq
        %v9502 = vshrl.u32 %v9501, 7
        %v9503 = vsub.s32 %v2632, %v9502
        %v9504 = vrot.slane %v8429, %v9503
        %v9505 = vlaneseq
        %v9506 = vshrl.u32 %v9505, 7
        %v9507 = vsub.s32 %v2637, %v9506
        %v9508 = vrot.slane %v8432, %v9507
        %v9509 = vsel %vm2642, %v9508, %v9504
        %v9510 = vlaneseq
        %v9511 = vshrl.u32 %v9510, 7
        %v9512 = vsub.s32 %v2632, %v9511
        %v9513 = vrot.slane %v8435, %v9512
        %v9514 = vlaneseq
        %v9515 = vshrl.u32 %v9514, 7
        %v9516 = vsub.s32 %v2637, %v9515
        %v9517 = vrot.slane %v8438, %v9516
        %v9518 = vsel %vm2642, %v9517, %v9513
        %v9519 = vlaneseq
        %v9520 = vshrl.u32 %v9519, 7
        %v9521 = vsub.s32 %v2632, %v9520
        %v9522 = vrot.slane %v8441, %v9521
        %v9523 = vlaneseq
        %v9524 = vshrl.u32 %v9523, 7
        %v9525 = vsub.s32 %v2637, %v9524
        %v9526 = vrot.slane %v8444, %v9525
        %v9527 = vsel %vm2642, %v9526, %v9522
        %v9528 = vlaneseq
        %v9529 = vshrl.u32 %v9528, 7
        %v9530 = vsub.s32 %v2632, %v9529
        %v9531 = vrot.slane %v8447, %v9530
        %v9532 = vlaneseq
        %v9533 = vshrl.u32 %v9532, 7
        %v9534 = vsub.s32 %v2637, %v9533
        %v9535 = vrot.slane %v8450, %v9534
        %v9536 = vsel %vm2642, %v9535, %v9531
        %v9537 = vlaneseq
        %v9538 = vshrl.u32 %v9537, 7
        %v9539 = vsub.s32 %v2632, %v9538
        %v9540 = vrot.slane %v8453, %v9539
        %v9541 = vlaneseq
        %v9542 = vshrl.u32 %v9541, 7
        %v9543 = vsub.s32 %v2637, %v9542
        %v9544 = vrot.slane %v8456, %v9543
        %v9545 = vsel %vm2642, %v9544, %v9540
        %v9546 = vlaneseq
        %v9547 = vshrl.u32 %v9546, 7
        %v9548 = vsub.s32 %v2632, %v9547
        %v9549 = vrot.slane %v8459, %v9548
        %v9550 = vlaneseq
        %v9551 = vshrl.u32 %v9550, 7
        %v9552 = vsub.s32 %v2637, %v9551
        %v9553 = vrot.slane %v8462, %v9552
        %v9554 = vsel %vm2642, %v9553, %v9549
        %v9555 = vlaneseq
        %v9556 = vshrl.u32 %v9555, 7
        %v9557 = vsub.s32 %v2632, %v9556
        %v9558 = vrot.slane %v8465, %v9557
        %v9559 = vlaneseq
        %v9560 = vshrl.u32 %v9559, 7
        %v9561 = vsub.s32 %v2637, %v9560
        %v9562 = vrot.slane %v8468, %v9561
        %v9563 = vsel %vm2642, %v9562, %v9558
        %v9564 = vlaneseq
        %v9565 = vshrl.u32 %v9564, 7
        %v9566 = vsub.s32 %v2632, %v9565
        %v9567 = vrot.slane %v8471, %v9566
        %v9568 = vlaneseq
        %v9569 = vshrl.u32 %v9568, 7
        %v9570 = vsub.s32 %v2637, %v9569
        %v9571 = vrot.slane %v8474, %v9570
        %v9572 = vsel %vm2642, %v9571, %v9567
        %v9573 = vlaneseq
        %v9574 = vshrl.u32 %v9573, 7
        %v9575 = vsub.s32 %v2632, %v9574
        %v9576 = vrot.slane %v8477, %v9575
        %v9577 = vlaneseq
        %v9578 = vshrl.u32 %v9577, 7
        %v9579 = vsub.s32 %v2637, %v9578
        %v9580 = vrot.slane %v8480, %v9579
        %v9581 = vsel %vm2642, %v9580, %v9576
        %v9582 = vlaneseq
        %v9583 = vshrl.u32 %v9582, 7
        %v9584 = vsub.s32 %v2632, %v9583
        %v9585 = vrot.slane %v8483, %v9584
        %v9586 = vlaneseq
        %v9587 = vshrl.u32 %v9586, 7
        %v9588 = vsub.s32 %v2637, %v9587
        %v9589 = vrot.slane %v8486, %v9588
        %v9590 = vsel %vm2642, %v9589, %v9585
        %v9591 = vlaneseq
        %v9592 = vshrl.u32 %v9591, 7
        %v9593 = vsub.s32 %v2632, %v9592
        %v9594 = vrot.slane %v8489, %v9593
        %v9595 = vlaneseq
        %v9596 = vshrl.u32 %v9595, 7
        %v9597 = vsub.s32 %v2637, %v9596
        %v9598 = vrot.slane %v8492, %v9597
        %v9599 = vsel %vm2642, %v9598, %v9594
        %v9600 = vlaneseq
        %v9601 = vshrl.u32 %v9600, 7
        %v9602 = vsub.s32 %v2632, %v9601
        %v9603 = vrot.slane %v8495, %v9602
        %v9604 = vlaneseq
        %v9605 = vshrl.u32 %v9604, 7
        %v9606 = vsub.s32 %v2637, %v9605
        %v9607 = vrot.slane %v8498, %v9606
        %v9608 = vsel %vm2642, %v9607, %v9603
        %v9609 = vlaneseq
        %v9610 = vshrl.u32 %v9609, 7
        %v9611 = vsub.s32 %v2632, %v9610
        %v9612 = vrot.slane %v8501, %v9611
        %v9613 = vlaneseq
        %v9614 = vshrl.u32 %v9613, 7
        %v9615 = vsub.s32 %v2637, %v9614
        %v9616 = vrot.slane %v8504, %v9615
        %v9617 = vsel %vm2642, %v9616, %v9612
        %v9618 = vlaneseq
        %v9619 = vshrl.u32 %v9618, 7
        %v9620 = vsub.s32 %v2632, %v9619
        %v9621 = vrot.slane %v8507, %v9620
        %v9622 = vlaneseq
        %v9623 = vshrl.u32 %v9622, 7
        %v9624 = vsub.s32 %v2637, %v9623
        %v9625 = vrot.slane %v8510, %v9624
        %v9626 = vsel %vm2642, %v9625, %v9621
        %v9627 = vlaneseq
        %v9628 = vshrl.u32 %v9627, 7
        %v9629 = vsub.s32 %v2632, %v9628
        %v9630 = vrot.slane %v8513, %v9629
        %v9631 = vlaneseq
        %v9632 = vshrl.u32 %v9631, 7
        %v9633 = vsub.s32 %v2637, %v9632
        %v9634 = vrot.slane %v8516, %v9633
        %v9635 = vsel %vm2642, %v9634, %v9630
        %v9636 = vlaneseq
        %v9637 = vshrl.u32 %v9636, 7
        %v9638 = vsub.s32 %v2632, %v9637
        %v9639 = vrot.slane %v8519, %v9638
        %v9640 = vlaneseq
        %v9641 = vshrl.u32 %v9640, 7
        %v9642 = vsub.s32 %v2637, %v9641
        %v9643 = vrot.slane %v8522, %v9642
        %v9644 = vsel %vm2642, %v9643, %v9639
        %v9645 = vlaneseq
        %v9646 = vshrl.u32 %v9645, 7
        %v9647 = vsub.s32 %v2632, %v9646
        %v9648 = vrot.slane %v8525, %v9647
        %v9649 = vlaneseq
        %v9650 = vshrl.u32 %v9649, 7
        %v9651 = vsub.s32 %v2637, %v9650
        %v9652 = vrot.slane %v8528, %v9651
        %v9653 = vsel %vm2642, %v9652, %v9648
        %v9654 = vlaneseq
        %v9655 = vshrl.u32 %v9654, 7
        %v9656 = vsub.s32 %v2632, %v9655
        %v9657 = vrot.slane %v8531, %v9656
        %v9658 = vlaneseq
        %v9659 = vshrl.u32 %v9658, 7
        %v9660 = vsub.s32 %v2637, %v9659
        %v9661 = vrot.slane %v8534, %v9660
        %v9662 = vsel %vm2642, %v9661, %v9657
        %v9663 = vlaneseq
        %v9664 = vshrl.u32 %v9663, 7
        %v9665 = vsub.s32 %v2632, %v9664
        %v9666 = vrot.slane %v8537, %v9665
        %v9667 = vlaneseq
        %v9668 = vshrl.u32 %v9667, 7
        %v9669 = vsub.s32 %v2637, %v9668
        %v9670 = vrot.slane %v8540, %v9669
        %v9671 = vsel %vm2642, %v9670, %v9666
        %v9672 = vlaneseq
        %v9673 = vshrl.u32 %v9672, 7
        %v9674 = vsub.s32 %v2632, %v9673
        %v9675 = vrot.slane %v8543, %v9674
        %v9676 = vlaneseq
        %v9677 = vshrl.u32 %v9676, 7
        %v9678 = vsub.s32 %v2637, %v9677
        %v9679 = vrot.slane %v8546, %v9678
        %v9680 = vsel %vm2642, %v9679, %v9675
        %v9681 = vlaneseq
        %v9682 = vshrl.u32 %v9681, 7
        %v9683 = vsub.s32 %v2632, %v9682
        %v9684 = vrot.slane %v8549, %v9683
        %v9685 = vlaneseq
        %v9686 = vshrl.u32 %v9685, 7
        %v9687 = vsub.s32 %v2637, %v9686
        %v9688 = vrot.slane %v8552, %v9687
        %v9689 = vsel %vm2642, %v9688, %v9684
        %v9690 = vlaneseq
        %v9691 = vshrl.u32 %v9690, 7
        %v9692 = vsub.s32 %v2632, %v9691
        %v9693 = vrot.slane %v8555, %v9692
        %v9694 = vlaneseq
        %v9695 = vshrl.u32 %v9694, 7
        %v9696 = vsub.s32 %v2637, %v9695
        %v9697 = vrot.slane %v8558, %v9696
        %v9698 = vsel %vm2642, %v9697, %v9693
        %v9699 = vlaneseq
        %v9700 = vshrl.u32 %v9699, 7
        %v9701 = vsub.s32 %v2632, %v9700
        %v9702 = vrot.slane %v8561, %v9701
        %v9703 = vlaneseq
        %v9704 = vshrl.u32 %v9703, 7
        %v9705 = vsub.s32 %v2637, %v9704
        %v9706 = vrot.slane %v8564, %v9705
        %v9707 = vsel %vm2642, %v9706, %v9702
        %v9708 = vlaneseq
        %v9709 = vshrl.u32 %v9708, 7
        %v9710 = vsub.s32 %v2632, %v9709
        %v9711 = vrot.slane %v8567, %v9710
        %v9712 = vlaneseq
        %v9713 = vshrl.u32 %v9712, 7
        %v9714 = vsub.s32 %v2637, %v9713
        %v9715 = vrot.slane %v8570, %v9714
        %v9716 = vsel %vm2642, %v9715, %v9711
        %v9717 = vlaneseq
        %v9718 = vshrl.u32 %v9717, 7
        %v9719 = vsub.s32 %v2632, %v9718
        %v9720 = vrot.slane %v8573, %v9719
        %v9721 = vlaneseq
        %v9722 = vshrl.u32 %v9721, 7
        %v9723 = vsub.s32 %v2637, %v9722
        %v9724 = vrot.slane %v8576, %v9723
        %v9725 = vsel %vm2642, %v9724, %v9720
        %v9726 = vlaneseq
        %v9727 = vshrl.u32 %v9726, 7
        %v9728 = vsub.s32 %v2632, %v9727
        %v9729 = vrot.slane %v8579, %v9728
        %v9730 = vlaneseq
        %v9731 = vshrl.u32 %v9730, 7
        %v9732 = vsub.s32 %v2637, %v9731
        %v9733 = vrot.slane %v8582, %v9732
        %v9734 = vsel %vm2642, %v9733, %v9729
        %v9735 = vsel %vm3787, %v8600, %v8591
        %v9736 = vsel %vm3789, %v8609, %v9735
        %v9737 = vsel %vm3791, %v8618, %v9736
        %v9738 = vsel %vm3793, %v8627, %v9737
        %v9739 = vsel %vm3795, %v8636, %v9738
        %v9740 = vsel %vm3797, %v8645, %v9739
        %v9741 = vsel %vm3799, %v8654, %v9740
        %v9742 = vsel %vm3787, %v8672, %v8663
        %v9743 = vsel %vm3789, %v8681, %v9742
        %v9744 = vsel %vm3791, %v8690, %v9743
        %v9745 = vsel %vm3793, %v8699, %v9744
        %v9746 = vsel %vm3795, %v8708, %v9745
        %v9747 = vsel %vm3797, %v8717, %v9746
        %v9748 = vsel %vm3799, %v8726, %v9747
        %v9749 = vsel %vm3787, %v8744, %v8735
        %v9750 = vsel %vm3789, %v8753, %v9749
        %v9751 = vsel %vm3791, %v8762, %v9750
        %v9752 = vsel %vm3793, %v8771, %v9751
        %v9753 = vsel %vm3795, %v8780, %v9752
        %v9754 = vsel %vm3797, %v8789, %v9753
        %v9755 = vsel %vm3799, %v8798, %v9754
        %v9756 = vsel %vm3787, %v8816, %v8807
        %v9757 = vsel %vm3789, %v8825, %v9756
        %v9758 = vsel %vm3791, %v8834, %v9757
        %v9759 = vsel %vm3793, %v8843, %v9758
        %v9760 = vsel %vm3795, %v8852, %v9759
        %v9761 = vsel %vm3797, %v8861, %v9760
        %v9762 = vsel %vm3799, %v8870, %v9761
        %v9763 = vsel %vm3787, %v8888, %v8879
        %v9764 = vsel %vm3789, %v8897, %v9763
        %v9765 = vsel %vm3791, %v8906, %v9764
        %v9766 = vsel %vm3793, %v8915, %v9765
        %v9767 = vsel %vm3795, %v8924, %v9766
        %v9768 = vsel %vm3797, %v8933, %v9767
        %v9769 = vsel %vm3799, %v8942, %v9768
        %v9770 = vsel %vm3787, %v8960, %v8951
        %v9771 = vsel %vm3789, %v8969, %v9770
        %v9772 = vsel %vm3791, %v8978, %v9771
        %v9773 = vsel %vm3793, %v8987, %v9772
        %v9774 = vsel %vm3795, %v8996, %v9773
        %v9775 = vsel %vm3797, %v9005, %v9774
        %v9776 = vsel %vm3799, %v9014, %v9775
        %v9777 = vsel %vm3787, %v9032, %v9023
        %v9778 = vsel %vm3789, %v9041, %v9777
        %v9779 = vsel %vm3791, %v9050, %v9778
        %v9780 = vsel %vm3793, %v9059, %v9779
        %v9781 = vsel %vm3795, %v9068, %v9780
        %v9782 = vsel %vm3797, %v9077, %v9781
        %v9783 = vsel %vm3799, %v9086, %v9782
        %v9784 = vsel %vm3787, %v9104, %v9095
        %v9785 = vsel %vm3789, %v9113, %v9784
        %v9786 = vsel %vm3791, %v9122, %v9785
        %v9787 = vsel %vm3793, %v9131, %v9786
        %v9788 = vsel %vm3795, %v9140, %v9787
        %v9789 = vsel %vm3797, %v9149, %v9788
        %v9790 = vsel %vm3799, %v9158, %v9789
        %v9791 = vsel %vm3787, %v9176, %v9167
        %v9792 = vsel %vm3789, %v9185, %v9791
        %v9793 = vsel %vm3791, %v9194, %v9792
        %v9794 = vsel %vm3793, %v9203, %v9793
        %v9795 = vsel %vm3795, %v9212, %v9794
        %v9796 = vsel %vm3797, %v9221, %v9795
        %v9797 = vsel %vm3799, %v9230, %v9796
        %v9798 = vsel %vm3787, %v9248, %v9239
        %v9799 = vsel %vm3789, %v9257, %v9798
        %v9800 = vsel %vm3791, %v9266, %v9799
        %v9801 = vsel %vm3793, %v9275, %v9800
        %v9802 = vsel %vm3795, %v9284, %v9801
        %v9803 = vsel %vm3797, %v9293, %v9802
        %v9804 = vsel %vm3799, %v9302, %v9803
        %v9805 = vsel %vm3787, %v9320, %v9311
        %v9806 = vsel %vm3789, %v9329, %v9805
        %v9807 = vsel %vm3791, %v9338, %v9806
        %v9808 = vsel %vm3793, %v9347, %v9807
        %v9809 = vsel %vm3795, %v9356, %v9808
        %v9810 = vsel %vm3797, %v9365, %v9809
        %v9811 = vsel %vm3799, %v9374, %v9810
        %v9812 = vsel %vm3787, %v9392, %v9383
        %v9813 = vsel %vm3789, %v9401, %v9812
        %v9814 = vsel %vm3791, %v9410, %v9813
        %v9815 = vsel %vm3793, %v9419, %v9814
        %v9816 = vsel %vm3795, %v9428, %v9815
        %v9817 = vsel %vm3797, %v9437, %v9816
        %v9818 = vsel %vm3799, %v9446, %v9817
        %v9819 = vsel %vm3787, %v9464, %v9455
        %v9820 = vsel %vm3789, %v9473, %v9819
        %v9821 = vsel %vm3791, %v9482, %v9820
        %v9822 = vsel %vm3793, %v9491, %v9821
        %v9823 = vsel %vm3795, %v9500, %v9822
        %v9824 = vsel %vm3797, %v9509, %v9823
        %v9825 = vsel %vm3799, %v9518, %v9824
        %v9826 = vsel %vm3787, %v9536, %v9527
        %v9827 = vsel %vm3789, %v9545, %v9826
        %v9828 = vsel %vm3791, %v9554, %v9827
        %v9829 = vsel %vm3793, %v9563, %v9828
        %v9830 = vsel %vm3795, %v9572, %v9829
        %v9831 = vsel %vm3797, %v9581, %v9830
        %v9832 = vsel %vm3799, %v9590, %v9831
        %v9833 = vsel %vm3787, %v9608, %v9599
        %v9834 = vsel %vm3789, %v9617, %v9833
        %v9835 = vsel %vm3791, %v9626, %v9834
        %v9836 = vsel %vm3793, %v9635, %v9835
        %v9837 = vsel %vm3795, %v9644, %v9836
        %v9838 = vsel %vm3797, %v9653, %v9837
        %v9839 = vsel %vm3799, %v9662, %v9838
        %v9840 = vsel %vm3787, %v9680, %v9671
        %v9841 = vsel %vm3789, %v9689, %v9840
        %v9842 = vsel %vm3791, %v9698, %v9841
        %v9843 = vsel %vm3793, %v9707, %v9842
        %v9844 = vsel %vm3795, %v9716, %v9843
        %v9845 = vsel %vm3797, %v9725, %v9844
        %v9846 = vsel %vm3799, %v9734, %v9845
        %v9863 = vsel %vm3922, %v9741, 0.0
        %9864 = vadd.xlane.f32.xlu0 %v9863
        %v9865 = vpop.xlane.xlu0 %9864
        %v9866 = vsel %vm3922, %v9748, 0.0
        %9867 = vadd.xlane.f32.xlu0 %v9866
        %v9868 = vpop.xlane.xlu0 %9867
        %v9869 = vsel %vm3922, %v9755, 0.0
        %9870 = vadd.xlane.f32.xlu0 %v9869
        %v9871 = vpop.xlane.xlu0 %9870
        %v9872 = vsel %vm3922, %v9762, 0.0
        %9873 = vadd.xlane.f32.xlu0 %v9872
        %v9874 = vpop.xlane.xlu0 %9873
        %v9875 = vsel %vm3922, %v9769, 0.0
        %9876 = vadd.xlane.f32.xlu0 %v9875
        %v9877 = vpop.xlane.xlu0 %9876
        %v9878 = vsel %vm3922, %v9776, 0.0
        %9879 = vadd.xlane.f32.xlu0 %v9878
        %v9880 = vpop.xlane.xlu0 %9879
        %v9881 = vsel %vm3922, %v9783, 0.0
        %9882 = vadd.xlane.f32.xlu0 %v9881
        %v9883 = vpop.xlane.xlu0 %9882
        %v9884 = vsel %vm3922, %v9790, 0.0
        %9885 = vadd.xlane.f32.xlu0 %v9884
        %v9886 = vpop.xlane.xlu0 %9885
        %v9887 = vsel %vm3922, %v9797, 0.0
        %9888 = vadd.xlane.f32.xlu0 %v9887
        %v9889 = vpop.xlane.xlu0 %9888
        %v9890 = vsel %vm3922, %v9804, 0.0
        %9891 = vadd.xlane.f32.xlu0 %v9890
        %v9892 = vpop.xlane.xlu0 %9891
        %v9893 = vsel %vm3922, %v9811, 0.0
        %9894 = vadd.xlane.f32.xlu0 %v9893
        %v9895 = vpop.xlane.xlu0 %9894
        %v9896 = vsel %vm3922, %v9818, 0.0
        %9897 = vadd.xlane.f32.xlu0 %v9896
        %v9898 = vpop.xlane.xlu0 %9897
        %v9899 = vsel %vm3922, %v9825, 0.0
        %9900 = vadd.xlane.f32.xlu0 %v9899
        %v9901 = vpop.xlane.xlu0 %9900
        %v9902 = vsel %vm3922, %v9832, 0.0
        %9903 = vadd.xlane.f32.xlu0 %v9902
        %v9904 = vpop.xlane.xlu0 %9903
        %v9905 = vsel %vm3922, %v9839, 0.0
        %9906 = vadd.xlane.f32.xlu0 %v9905
        %v9907 = vpop.xlane.xlu0 %9906
        %v9908 = vsel %vm3922, %v9846, 0.0
        %9909 = vadd.xlane.f32.xlu0 %v9908
        %v9910 = vpop.xlane.xlu0 %9909
        %v9912 = vlaneseq
        %v9913 = vshrl.u32 %v9912, 7
        %v9914 = vsub.s32 0, %v9913
        %v9915 = vrot.slane %v1140, %v9914
        %9917 = vbcast.lane.b32.xlu0 %v9915, 256
        %v9918 = vpop.permute.xlu0 %9917
        %s9920 = sor.u32 256, 8
        %9921 = vbcast.lane.b32.xlu0 %v9915, %s9920
        %v9922 = vpop.permute.xlu0 %9921
        %v9925 = vadd.f32 %v9865, %v9918
        %v9926 = vadd.f32 %v9868, %v9922
        %v9927 = vadd.f32 %v9871, %v9918
        %v9928 = vadd.f32 %v9874, %v9922
        %v9929 = vadd.f32 %v9877, %v9918
        %v9930 = vadd.f32 %v9880, %v9922
        %v9931 = vadd.f32 %v9883, %v9918
        %v9932 = vadd.f32 %v9886, %v9922
        %v9933 = vadd.f32 %v9889, %v9918
        %v9934 = vadd.f32 %v9892, %v9922
        %v9935 = vadd.f32 %v9895, %v9918
        %v9936 = vadd.f32 %v9898, %v9922
        %v9937 = vadd.f32 %v9901, %v9918
        %v9938 = vadd.f32 %v9904, %v9922
        %v9939 = vadd.f32 %v9907, %v9918
        %v9940 = vadd.f32 %v9910, %v9922
        %v9941 = vsub.f32 0.0, %v9925
        %v9942 = vsub.f32 0.0, %v9926
        %v9943 = vsub.f32 0.0, %v9927
        %v9944 = vsub.f32 0.0, %v9928
        %v9945 = vsub.f32 0.0, %v9929
        %v9946 = vsub.f32 0.0, %v9930
        %v9947 = vsub.f32 0.0, %v9931
        %v9948 = vsub.f32 0.0, %v9932
        %v9949 = vsub.f32 0.0, %v9933
        %v9950 = vsub.f32 0.0, %v9934
        %v9951 = vsub.f32 0.0, %v9935
        %v9952 = vsub.f32 0.0, %v9936
        %v9953 = vsub.f32 0.0, %v9937
        %v9954 = vsub.f32 0.0, %v9938
        %v9955 = vsub.f32 0.0, %v9939
        %v9956 = vsub.f32 0.0, %v9940
        %v9957 = vmul.f32 %v9941, 1.442695
        %v9958 = vpow.pop %v9957
        %v9959 = vmul.f32 %v9942, 1.442695
        %v9960 = vpow.pop %v9959
        %v9961 = vmul.f32 %v9943, 1.442695
        %v9962 = vpow.pop %v9961
        %v9963 = vmul.f32 %v9944, 1.442695
        %v9964 = vpow.pop %v9963
        %v9965 = vmul.f32 %v9945, 1.442695
        %v9966 = vpow.pop %v9965
        %v9967 = vmul.f32 %v9946, 1.442695
        %v9968 = vpow.pop %v9967
        %v9969 = vmul.f32 %v9947, 1.442695
        %v9970 = vpow.pop %v9969
        %v9971 = vmul.f32 %v9948, 1.442695
        %v9972 = vpow.pop %v9971
        %v9973 = vmul.f32 %v9949, 1.442695
        %v9974 = vpow.pop %v9973
        %v9975 = vmul.f32 %v9950, 1.442695
        %v9976 = vpow.pop %v9975
        %v9977 = vmul.f32 %v9951, 1.442695
        %v9978 = vpow.pop %v9977
        %v9979 = vmul.f32 %v9952, 1.442695
        %v9980 = vpow.pop %v9979
        %v9981 = vmul.f32 %v9953, 1.442695
        %v9982 = vpow.pop %v9981
        %v9983 = vmul.f32 %v9954, 1.442695
        %v9984 = vpow.pop %v9983
        %v9985 = vmul.f32 %v9955, 1.442695
        %v9986 = vpow.pop %v9985
        %v9987 = vmul.f32 %v9956, 1.442695
        %v9988 = vpow.pop %v9987
        %v9989 = vadd.f32 %v9958, 1.0
        %v9990 = vadd.f32 %v9960, 1.0
        %v9991 = vadd.f32 %v9962, 1.0
        %v9992 = vadd.f32 %v9964, 1.0
        %v9993 = vadd.f32 %v9966, 1.0
        %v9994 = vadd.f32 %v9968, 1.0
        %v9995 = vadd.f32 %v9970, 1.0
        %v9996 = vadd.f32 %v9972, 1.0
        %v9997 = vadd.f32 %v9974, 1.0
        %v9998 = vadd.f32 %v9976, 1.0
        %v9999 = vadd.f32 %v9978, 1.0
        %v10000 = vadd.f32 %v9980, 1.0
        %v10001 = vadd.f32 %v9982, 1.0
        %v10002 = vadd.f32 %v9984, 1.0
        %v10003 = vadd.f32 %v9986, 1.0
        %v10004 = vadd.f32 %v9988, 1.0
        %v10005 = vrcp.pop %v9989
        %v10006 = vmul.f32 1.0, %v10005
        %v10007 = vrcp.pop %v9990
        %v10008 = vmul.f32 1.0, %v10007
        %v10009 = vrcp.pop %v9991
        %v10010 = vmul.f32 1.0, %v10009
        %v10011 = vrcp.pop %v9992
        %v10012 = vmul.f32 1.0, %v10011
        %v10013 = vrcp.pop %v9993
        %v10014 = vmul.f32 1.0, %v10013
        %v10015 = vrcp.pop %v9994
        %v10016 = vmul.f32 1.0, %v10015
        %v10017 = vrcp.pop %v9995
        %v10018 = vmul.f32 1.0, %v10017
        %v10019 = vrcp.pop %v9996
        %v10020 = vmul.f32 1.0, %v10019
        %v10021 = vrcp.pop %v9997
        %v10022 = vmul.f32 1.0, %v10021
        %v10023 = vrcp.pop %v9998
        %v10024 = vmul.f32 1.0, %v10023
        %v10025 = vrcp.pop %v9999
        %v10026 = vmul.f32 1.0, %v10025
        %v10027 = vrcp.pop %v10000
        %v10028 = vmul.f32 1.0, %v10027
        %v10029 = vrcp.pop %v10001
        %v10030 = vmul.f32 1.0, %v10029
        %v10031 = vrcp.pop %v10002
        %v10032 = vmul.f32 1.0, %v10031
        %v10033 = vrcp.pop %v10003
        %v10034 = vmul.f32 1.0, %v10033
        %v10035 = vrcp.pop %v10004
        %v10036 = vmul.f32 1.0, %v10035
        %v10037 = vmul.f32 %v10006, %v7046
        %v10038 = vmul.f32 %v10008, %v7048
        %v10039 = vmul.f32 %v10010, %v7050
        %v10040 = vmul.f32 %v10012, %v7052
        %v10041 = vmul.f32 %v10014, %v7054
        %v10042 = vmul.f32 %v10016, %v7056
        %v10043 = vmul.f32 %v10018, %v7058
        %v10044 = vmul.f32 %v10020, %v7060
        %v10045 = vmul.f32 %v10022, %v7062
        %v10046 = vmul.f32 %v10024, %v7064
        %v10047 = vmul.f32 %v10026, %v7066
        %v10048 = vmul.f32 %v10028, %v7068
        %v10049 = vmul.f32 %v10030, %v7070
        %v10050 = vmul.f32 %v10032, %v7072
        %v10051 = vmul.f32 %v10034, %v7074
        %v10052 = vmul.f32 %v10036, %v7076
        %v10053 = vmul.f32 %v3925, %v10037
        %v10054 = vmul.f32 %v3928, %v10038
        %v10055 = vmul.f32 %v3931, %v10039
        %v10056 = vmul.f32 %v3934, %v10040
        %v10057 = vmul.f32 %v3937, %v10041
        %v10058 = vmul.f32 %v3940, %v10042
        %v10059 = vmul.f32 %v3943, %v10043
        %v10060 = vmul.f32 %v3946, %v10044
        %v10061 = vmul.f32 %v3949, %v10045
        %v10062 = vmul.f32 %v3952, %v10046
        %v10063 = vmul.f32 %v3955, %v10047
        %v10064 = vmul.f32 %v3958, %v10048
        %v10065 = vmul.f32 %v3961, %v10049
        %v10066 = vmul.f32 %v3964, %v10050
        %v10067 = vmul.f32 %v3967, %v10051
        %v10068 = vmul.f32 %v3970, %v10052
        %10070 = vset.pattern.permute.xlu0 0
        %10071 = vperm.xlu0 %10070, %v10037
        %v10072 = vpop.permute.xlu0 %10071
        %10075 = vset.pattern.permute.xlu0 0
        %10076 = vperm.xlu0 %10075, %v10038
        %v10077 = vpop.permute.xlu0 %10076
        %10080 = vset.pattern.permute.xlu0 0
        %10081 = vperm.xlu0 %10080, %v10039
        %v10082 = vpop.permute.xlu0 %10081
        %10085 = vset.pattern.permute.xlu0 0
        %10086 = vperm.xlu0 %10085, %v10040
        %v10087 = vpop.permute.xlu0 %10086
        %10090 = vset.pattern.permute.xlu0 0
        %10091 = vperm.xlu0 %10090, %v10041
        %v10092 = vpop.permute.xlu0 %10091
        %10095 = vset.pattern.permute.xlu0 0
        %10096 = vperm.xlu0 %10095, %v10042
        %v10097 = vpop.permute.xlu0 %10096
        %10100 = vset.pattern.permute.xlu0 0
        %10101 = vperm.xlu0 %10100, %v10043
        %v10102 = vpop.permute.xlu0 %10101
        %10105 = vset.pattern.permute.xlu0 0
        %10106 = vperm.xlu0 %10105, %v10044
        %v10107 = vpop.permute.xlu0 %10106
        %10110 = vset.pattern.permute.xlu0 0
        %10111 = vperm.xlu0 %10110, %v10045
        %v10112 = vpop.permute.xlu0 %10111
        %10115 = vset.pattern.permute.xlu0 0
        %10116 = vperm.xlu0 %10115, %v10046
        %v10117 = vpop.permute.xlu0 %10116
        %10120 = vset.pattern.permute.xlu0 0
        %10121 = vperm.xlu0 %10120, %v10047
        %v10122 = vpop.permute.xlu0 %10121
        %10125 = vset.pattern.permute.xlu0 0
        %10126 = vperm.xlu0 %10125, %v10048
        %v10127 = vpop.permute.xlu0 %10126
        %10130 = vset.pattern.permute.xlu0 0
        %10131 = vperm.xlu0 %10130, %v10049
        %v10132 = vpop.permute.xlu0 %10131
        %10135 = vset.pattern.permute.xlu0 0
        %10136 = vperm.xlu0 %10135, %v10050
        %v10137 = vpop.permute.xlu0 %10136
        %10140 = vset.pattern.permute.xlu0 0
        %10141 = vperm.xlu0 %10140, %v10051
        %v10142 = vpop.permute.xlu0 %10141
        %10145 = vset.pattern.permute.xlu0 0
        %10146 = vperm.xlu0 %10145, %v10052
        %v10147 = vpop.permute.xlu0 %10146
        %v10149 = vmul.f32 %v302, %v10072
        %v10150 = vmul.f32 %v303, %v10072
        %v10151 = vmul.f32 %v304, %v10072
        %v10152 = vmul.f32 %v305, %v10072
        %v10153 = vmul.f32 %v306, %v10072
        %v10154 = vmul.f32 %v307, %v10072
        %v10155 = vmul.f32 %v308, %v10072
        %v10156 = vmul.f32 %v309, %v10072
        %v10157 = vmul.f32 %v310, %v10072
        %v10158 = vmul.f32 %v311, %v10072
        %v10159 = vmul.f32 %v312, %v10072
        %v10160 = vmul.f32 %v313, %v10072
        %v10161 = vmul.f32 %v314, %v10077
        %v10162 = vmul.f32 %v315, %v10077
        %v10163 = vmul.f32 %v316, %v10077
        %v10164 = vmul.f32 %v317, %v10077
        %v10165 = vmul.f32 %v318, %v10077
        %v10166 = vmul.f32 %v319, %v10077
        %v10167 = vmul.f32 %v320, %v10077
        %v10168 = vmul.f32 %v321, %v10077
        %v10169 = vmul.f32 %v322, %v10077
        %v10170 = vmul.f32 %v323, %v10077
        %v10171 = vmul.f32 %v324, %v10077
        %v10172 = vmul.f32 %v325, %v10077
        %v10173 = vmul.f32 %v326, %v10082
        %v10174 = vmul.f32 %v327, %v10082
        %v10175 = vmul.f32 %v328, %v10082
        %v10176 = vmul.f32 %v329, %v10082
        %v10177 = vmul.f32 %v330, %v10082
        %v10178 = vmul.f32 %v331, %v10082
        %v10179 = vmul.f32 %v332, %v10082
        %v10180 = vmul.f32 %v333, %v10082
        %v10181 = vmul.f32 %v334, %v10082
        %v10182 = vmul.f32 %v335, %v10082
        %v10183 = vmul.f32 %v336, %v10082
        %v10184 = vmul.f32 %v337, %v10082
        %v10185 = vmul.f32 %v338, %v10087
        %v10186 = vmul.f32 %v339, %v10087
        %v10187 = vmul.f32 %v340, %v10087
        %v10188 = vmul.f32 %v341, %v10087
        %v10189 = vmul.f32 %v342, %v10087
        %v10190 = vmul.f32 %v343, %v10087
        %v10191 = vmul.f32 %v344, %v10087
        %v10192 = vmul.f32 %v345, %v10087
        %v10193 = vmul.f32 %v346, %v10087
        %v10194 = vmul.f32 %v347, %v10087
        %v10195 = vmul.f32 %v348, %v10087
        %v10196 = vmul.f32 %v349, %v10087
        %v10197 = vmul.f32 %v350, %v10092
        %v10198 = vmul.f32 %v351, %v10092
        %v10199 = vmul.f32 %v352, %v10092
        %v10200 = vmul.f32 %v353, %v10092
        %v10201 = vmul.f32 %v354, %v10092
        %v10202 = vmul.f32 %v355, %v10092
        %v10203 = vmul.f32 %v356, %v10092
        %v10204 = vmul.f32 %v357, %v10092
        %v10205 = vmul.f32 %v358, %v10092
        %v10206 = vmul.f32 %v359, %v10092
        %v10207 = vmul.f32 %v360, %v10092
        %v10208 = vmul.f32 %v361, %v10092
        %v10209 = vmul.f32 %v362, %v10097
        %v10210 = vmul.f32 %v363, %v10097
        %v10211 = vmul.f32 %v364, %v10097
        %v10212 = vmul.f32 %v365, %v10097
        %v10213 = vmul.f32 %v366, %v10097
        %v10214 = vmul.f32 %v367, %v10097
        %v10215 = vmul.f32 %v368, %v10097
        %v10216 = vmul.f32 %v369, %v10097
        %v10217 = vmul.f32 %v370, %v10097
        %v10218 = vmul.f32 %v371, %v10097
        %v10219 = vmul.f32 %v372, %v10097
        %v10220 = vmul.f32 %v373, %v10097
        %v10221 = vmul.f32 %v374, %v10102
        %v10222 = vmul.f32 %v375, %v10102
        %v10223 = vmul.f32 %v376, %v10102
        %v10224 = vmul.f32 %v377, %v10102
        %v10225 = vmul.f32 %v378, %v10102
        %v10226 = vmul.f32 %v379, %v10102
        %v10227 = vmul.f32 %v380, %v10102
        %v10228 = vmul.f32 %v381, %v10102
        %v10229 = vmul.f32 %v382, %v10102
        %v10230 = vmul.f32 %v383, %v10102
        %v10231 = vmul.f32 %v384, %v10102
        %v10232 = vmul.f32 %v385, %v10102
        %v10233 = vmul.f32 %v386, %v10107
        %v10234 = vmul.f32 %v387, %v10107
        %v10235 = vmul.f32 %v388, %v10107
        %v10236 = vmul.f32 %v389, %v10107
        %v10237 = vmul.f32 %v390, %v10107
        %v10238 = vmul.f32 %v391, %v10107
        %v10239 = vmul.f32 %v392, %v10107
        %v10240 = vmul.f32 %v393, %v10107
        %v10241 = vmul.f32 %v394, %v10107
        %v10242 = vmul.f32 %v395, %v10107
        %v10243 = vmul.f32 %v396, %v10107
        %v10244 = vmul.f32 %v397, %v10107
        %v10245 = vmul.f32 %v398, %v10112
        %v10246 = vmul.f32 %v399, %v10112
        %v10247 = vmul.f32 %v400, %v10112
        %v10248 = vmul.f32 %v401, %v10112
        %v10249 = vmul.f32 %v402, %v10112
        %v10250 = vmul.f32 %v403, %v10112
        %v10251 = vmul.f32 %v404, %v10112
        %v10252 = vmul.f32 %v405, %v10112
        %v10253 = vmul.f32 %v406, %v10112
        %v10254 = vmul.f32 %v407, %v10112
        %v10255 = vmul.f32 %v408, %v10112
        %v10256 = vmul.f32 %v409, %v10112
        %v10257 = vmul.f32 %v410, %v10117
        %v10258 = vmul.f32 %v411, %v10117
        %v10259 = vmul.f32 %v412, %v10117
        %v10260 = vmul.f32 %v413, %v10117
        %v10261 = vmul.f32 %v414, %v10117
        %v10262 = vmul.f32 %v415, %v10117
        %v10263 = vmul.f32 %v416, %v10117
        %v10264 = vmul.f32 %v417, %v10117
        %v10265 = vmul.f32 %v418, %v10117
        %v10266 = vmul.f32 %v419, %v10117
        %v10267 = vmul.f32 %v420, %v10117
        %v10268 = vmul.f32 %v421, %v10117
        %v10269 = vmul.f32 %v422, %v10122
        %v10270 = vmul.f32 %v423, %v10122
        %v10271 = vmul.f32 %v424, %v10122
        %v10272 = vmul.f32 %v425, %v10122
        %v10273 = vmul.f32 %v426, %v10122
        %v10274 = vmul.f32 %v427, %v10122
        %v10275 = vmul.f32 %v428, %v10122
        %v10276 = vmul.f32 %v429, %v10122
        %v10277 = vmul.f32 %v430, %v10122
        %v10278 = vmul.f32 %v431, %v10122
        %v10279 = vmul.f32 %v432, %v10122
        %v10280 = vmul.f32 %v433, %v10122
        %v10281 = vmul.f32 %v434, %v10127
        %v10282 = vmul.f32 %v435, %v10127
        %v10283 = vmul.f32 %v436, %v10127
        %v10284 = vmul.f32 %v437, %v10127
        %v10285 = vmul.f32 %v438, %v10127
        %v10286 = vmul.f32 %v439, %v10127
        %v10287 = vmul.f32 %v440, %v10127
        %v10288 = vmul.f32 %v441, %v10127
        %v10289 = vmul.f32 %v442, %v10127
        %v10290 = vmul.f32 %v443, %v10127
        %v10291 = vmul.f32 %v444, %v10127
        %v10292 = vmul.f32 %v445, %v10127
        %v10293 = vmul.f32 %v446, %v10132
        %v10294 = vmul.f32 %v447, %v10132
        %v10295 = vmul.f32 %v448, %v10132
        %v10296 = vmul.f32 %v449, %v10132
        %v10297 = vmul.f32 %v450, %v10132
        %v10298 = vmul.f32 %v451, %v10132
        %v10299 = vmul.f32 %v452, %v10132
        %v10300 = vmul.f32 %v453, %v10132
        %v10301 = vmul.f32 %v454, %v10132
        %v10302 = vmul.f32 %v455, %v10132
        %v10303 = vmul.f32 %v456, %v10132
        %v10304 = vmul.f32 %v457, %v10132
        %v10305 = vmul.f32 %v458, %v10137
        %v10306 = vmul.f32 %v459, %v10137
        %v10307 = vmul.f32 %v460, %v10137
        %v10308 = vmul.f32 %v461, %v10137
        %v10309 = vmul.f32 %v462, %v10137
        %v10310 = vmul.f32 %v463, %v10137
        %v10311 = vmul.f32 %v464, %v10137
        %v10312 = vmul.f32 %v465, %v10137
        %v10313 = vmul.f32 %v466, %v10137
        %v10314 = vmul.f32 %v467, %v10137
        %v10315 = vmul.f32 %v468, %v10137
        %v10316 = vmul.f32 %v469, %v10137
        %v10317 = vmul.f32 %v470, %v10142
        %v10318 = vmul.f32 %v471, %v10142
        %v10319 = vmul.f32 %v472, %v10142
        %v10320 = vmul.f32 %v473, %v10142
        %v10321 = vmul.f32 %v474, %v10142
        %v10322 = vmul.f32 %v475, %v10142
        %v10323 = vmul.f32 %v476, %v10142
        %v10324 = vmul.f32 %v477, %v10142
        %v10325 = vmul.f32 %v478, %v10142
        %v10326 = vmul.f32 %v479, %v10142
        %v10327 = vmul.f32 %v480, %v10142
        %v10328 = vmul.f32 %v481, %v10142
        %v10329 = vmul.f32 %v482, %v10147
        %v10330 = vmul.f32 %v483, %v10147
        %v10331 = vmul.f32 %v484, %v10147
        %v10332 = vmul.f32 %v485, %v10147
        %v10333 = vmul.f32 %v486, %v10147
        %v10334 = vmul.f32 %v487, %v10147
        %v10335 = vmul.f32 %v488, %v10147
        %v10336 = vmul.f32 %v489, %v10147
        %v10337 = vmul.f32 %v490, %v10147
        %v10338 = vmul.f32 %v491, %v10147
        %v10339 = vmul.f32 %v492, %v10147
        %v10340 = vmul.f32 %v493, %v10147
        %10342 = vset.pattern.permute.xlu0 0
        %10343 = vperm.xlu0 %10342, %v10053
        %v10344 = vpop.permute.xlu0 %10343
        %10347 = vset.pattern.permute.xlu0 0
        %10348 = vperm.xlu0 %10347, %v10054
        %v10349 = vpop.permute.xlu0 %10348
        %10352 = vset.pattern.permute.xlu0 0
        %10353 = vperm.xlu0 %10352, %v10055
        %v10354 = vpop.permute.xlu0 %10353
        %10357 = vset.pattern.permute.xlu0 0
        %10358 = vperm.xlu0 %10357, %v10056
        %v10359 = vpop.permute.xlu0 %10358
        %10362 = vset.pattern.permute.xlu0 0
        %10363 = vperm.xlu0 %10362, %v10057
        %v10364 = vpop.permute.xlu0 %10363
        %10367 = vset.pattern.permute.xlu0 0
        %10368 = vperm.xlu0 %10367, %v10058
        %v10369 = vpop.permute.xlu0 %10368
        %10372 = vset.pattern.permute.xlu0 0
        %10373 = vperm.xlu0 %10372, %v10059
        %v10374 = vpop.permute.xlu0 %10373
        %10377 = vset.pattern.permute.xlu0 0
        %10378 = vperm.xlu0 %10377, %v10060
        %v10379 = vpop.permute.xlu0 %10378
        %10382 = vset.pattern.permute.xlu0 0
        %10383 = vperm.xlu0 %10382, %v10061
        %v10384 = vpop.permute.xlu0 %10383
        %10387 = vset.pattern.permute.xlu0 0
        %10388 = vperm.xlu0 %10387, %v10062
        %v10389 = vpop.permute.xlu0 %10388
        %10392 = vset.pattern.permute.xlu0 0
        %10393 = vperm.xlu0 %10392, %v10063
        %v10394 = vpop.permute.xlu0 %10393
        %10397 = vset.pattern.permute.xlu0 0
        %10398 = vperm.xlu0 %10397, %v10064
        %v10399 = vpop.permute.xlu0 %10398
        %10402 = vset.pattern.permute.xlu0 0
        %10403 = vperm.xlu0 %10402, %v10065
        %v10404 = vpop.permute.xlu0 %10403
        %10407 = vset.pattern.permute.xlu0 0
        %10408 = vperm.xlu0 %10407, %v10066
        %v10409 = vpop.permute.xlu0 %10408
        %10412 = vset.pattern.permute.xlu0 0
        %10413 = vperm.xlu0 %10412, %v10067
        %v10414 = vpop.permute.xlu0 %10413
        %10417 = vset.pattern.permute.xlu0 0
        %10418 = vperm.xlu0 %10417, %v10068
        %v10419 = vpop.permute.xlu0 %10418
        %v10421 = vsub.f32 %v10149, %v10344
        %v10422 = vsub.f32 %v10150, %v10344
        %v10423 = vsub.f32 %v10151, %v10344
        %v10424 = vsub.f32 %v10152, %v10344
        %v10425 = vsub.f32 %v10153, %v10344
        %v10426 = vsub.f32 %v10154, %v10344
        %v10427 = vsub.f32 %v10155, %v10344
        %v10428 = vsub.f32 %v10156, %v10344
        %v10429 = vsub.f32 %v10157, %v10344
        %v10430 = vsub.f32 %v10158, %v10344
        %v10431 = vsub.f32 %v10159, %v10344
        %v10432 = vsub.f32 %v10160, %v10344
        %v10433 = vsub.f32 %v10161, %v10349
        %v10434 = vsub.f32 %v10162, %v10349
        %v10435 = vsub.f32 %v10163, %v10349
        %v10436 = vsub.f32 %v10164, %v10349
        %v10437 = vsub.f32 %v10165, %v10349
        %v10438 = vsub.f32 %v10166, %v10349
        %v10439 = vsub.f32 %v10167, %v10349
        %v10440 = vsub.f32 %v10168, %v10349
        %v10441 = vsub.f32 %v10169, %v10349
        %v10442 = vsub.f32 %v10170, %v10349
        %v10443 = vsub.f32 %v10171, %v10349
        %v10444 = vsub.f32 %v10172, %v10349
        %v10445 = vsub.f32 %v10173, %v10354
        %v10446 = vsub.f32 %v10174, %v10354
        %v10447 = vsub.f32 %v10175, %v10354
        %v10448 = vsub.f32 %v10176, %v10354
        %v10449 = vsub.f32 %v10177, %v10354
        %v10450 = vsub.f32 %v10178, %v10354
        %v10451 = vsub.f32 %v10179, %v10354
        %v10452 = vsub.f32 %v10180, %v10354
        %v10453 = vsub.f32 %v10181, %v10354
        %v10454 = vsub.f32 %v10182, %v10354
        %v10455 = vsub.f32 %v10183, %v10354
        %v10456 = vsub.f32 %v10184, %v10354
        %v10457 = vsub.f32 %v10185, %v10359
        %v10458 = vsub.f32 %v10186, %v10359
        %v10459 = vsub.f32 %v10187, %v10359
        %v10460 = vsub.f32 %v10188, %v10359
        %v10461 = vsub.f32 %v10189, %v10359
        %v10462 = vsub.f32 %v10190, %v10359
        %v10463 = vsub.f32 %v10191, %v10359
        %v10464 = vsub.f32 %v10192, %v10359
        %v10465 = vsub.f32 %v10193, %v10359
        %v10466 = vsub.f32 %v10194, %v10359
        %v10467 = vsub.f32 %v10195, %v10359
        %v10468 = vsub.f32 %v10196, %v10359
        %v10469 = vsub.f32 %v10197, %v10364
        %v10470 = vsub.f32 %v10198, %v10364
        %v10471 = vsub.f32 %v10199, %v10364
        %v10472 = vsub.f32 %v10200, %v10364
        %v10473 = vsub.f32 %v10201, %v10364
        %v10474 = vsub.f32 %v10202, %v10364
        %v10475 = vsub.f32 %v10203, %v10364
        %v10476 = vsub.f32 %v10204, %v10364
        %v10477 = vsub.f32 %v10205, %v10364
        %v10478 = vsub.f32 %v10206, %v10364
        %v10479 = vsub.f32 %v10207, %v10364
        %v10480 = vsub.f32 %v10208, %v10364
        %v10481 = vsub.f32 %v10209, %v10369
        %v10482 = vsub.f32 %v10210, %v10369
        %v10483 = vsub.f32 %v10211, %v10369
        %v10484 = vsub.f32 %v10212, %v10369
        %v10485 = vsub.f32 %v10213, %v10369
        %v10486 = vsub.f32 %v10214, %v10369
        %v10487 = vsub.f32 %v10215, %v10369
        %v10488 = vsub.f32 %v10216, %v10369
        %v10489 = vsub.f32 %v10217, %v10369
        %v10490 = vsub.f32 %v10218, %v10369
        %v10491 = vsub.f32 %v10219, %v10369
        %v10492 = vsub.f32 %v10220, %v10369
        %v10493 = vsub.f32 %v10221, %v10374
        %v10494 = vsub.f32 %v10222, %v10374
        %v10495 = vsub.f32 %v10223, %v10374
        %v10496 = vsub.f32 %v10224, %v10374
        %v10497 = vsub.f32 %v10225, %v10374
        %v10498 = vsub.f32 %v10226, %v10374
        %v10499 = vsub.f32 %v10227, %v10374
        %v10500 = vsub.f32 %v10228, %v10374
        %v10501 = vsub.f32 %v10229, %v10374
        %v10502 = vsub.f32 %v10230, %v10374
        %v10503 = vsub.f32 %v10231, %v10374
        %v10504 = vsub.f32 %v10232, %v10374
        %v10505 = vsub.f32 %v10233, %v10379
        %v10506 = vsub.f32 %v10234, %v10379
        %v10507 = vsub.f32 %v10235, %v10379
        %v10508 = vsub.f32 %v10236, %v10379
        %v10509 = vsub.f32 %v10237, %v10379
        %v10510 = vsub.f32 %v10238, %v10379
        %v10511 = vsub.f32 %v10239, %v10379
        %v10512 = vsub.f32 %v10240, %v10379
        %v10513 = vsub.f32 %v10241, %v10379
        %v10514 = vsub.f32 %v10242, %v10379
        %v10515 = vsub.f32 %v10243, %v10379
        %v10516 = vsub.f32 %v10244, %v10379
        %v10517 = vsub.f32 %v10245, %v10384
        %v10518 = vsub.f32 %v10246, %v10384
        %v10519 = vsub.f32 %v10247, %v10384
        %v10520 = vsub.f32 %v10248, %v10384
        %v10521 = vsub.f32 %v10249, %v10384
        %v10522 = vsub.f32 %v10250, %v10384
        %v10523 = vsub.f32 %v10251, %v10384
        %v10524 = vsub.f32 %v10252, %v10384
        %v10525 = vsub.f32 %v10253, %v10384
        %v10526 = vsub.f32 %v10254, %v10384
        %v10527 = vsub.f32 %v10255, %v10384
        %v10528 = vsub.f32 %v10256, %v10384
        %v10529 = vsub.f32 %v10257, %v10389
        %v10530 = vsub.f32 %v10258, %v10389
        %v10531 = vsub.f32 %v10259, %v10389
        %v10532 = vsub.f32 %v10260, %v10389
        %v10533 = vsub.f32 %v10261, %v10389
        %v10534 = vsub.f32 %v10262, %v10389
        %v10535 = vsub.f32 %v10263, %v10389
        %v10536 = vsub.f32 %v10264, %v10389
        %v10537 = vsub.f32 %v10265, %v10389
        %v10538 = vsub.f32 %v10266, %v10389
        %v10539 = vsub.f32 %v10267, %v10389
        %v10540 = vsub.f32 %v10268, %v10389
        %v10541 = vsub.f32 %v10269, %v10394
        %v10542 = vsub.f32 %v10270, %v10394
        %v10543 = vsub.f32 %v10271, %v10394
        %v10544 = vsub.f32 %v10272, %v10394
        %v10545 = vsub.f32 %v10273, %v10394
        %v10546 = vsub.f32 %v10274, %v10394
        %v10547 = vsub.f32 %v10275, %v10394
        %v10548 = vsub.f32 %v10276, %v10394
        %v10549 = vsub.f32 %v10277, %v10394
        %v10550 = vsub.f32 %v10278, %v10394
        %v10551 = vsub.f32 %v10279, %v10394
        %v10552 = vsub.f32 %v10280, %v10394
        %v10553 = vsub.f32 %v10281, %v10399
        %v10554 = vsub.f32 %v10282, %v10399
        %v10555 = vsub.f32 %v10283, %v10399
        %v10556 = vsub.f32 %v10284, %v10399
        %v10557 = vsub.f32 %v10285, %v10399
        %v10558 = vsub.f32 %v10286, %v10399
        %v10559 = vsub.f32 %v10287, %v10399
        %v10560 = vsub.f32 %v10288, %v10399
        %v10561 = vsub.f32 %v10289, %v10399
        %v10562 = vsub.f32 %v10290, %v10399
        %v10563 = vsub.f32 %v10291, %v10399
        %v10564 = vsub.f32 %v10292, %v10399
        %v10565 = vsub.f32 %v10293, %v10404
        %v10566 = vsub.f32 %v10294, %v10404
        %v10567 = vsub.f32 %v10295, %v10404
        %v10568 = vsub.f32 %v10296, %v10404
        %v10569 = vsub.f32 %v10297, %v10404
        %v10570 = vsub.f32 %v10298, %v10404
        %v10571 = vsub.f32 %v10299, %v10404
        %v10572 = vsub.f32 %v10300, %v10404
        %v10573 = vsub.f32 %v10301, %v10404
        %v10574 = vsub.f32 %v10302, %v10404
        %v10575 = vsub.f32 %v10303, %v10404
        %v10576 = vsub.f32 %v10304, %v10404
        %v10577 = vsub.f32 %v10305, %v10409
        %v10578 = vsub.f32 %v10306, %v10409
        %v10579 = vsub.f32 %v10307, %v10409
        %v10580 = vsub.f32 %v10308, %v10409
        %v10581 = vsub.f32 %v10309, %v10409
        %v10582 = vsub.f32 %v10310, %v10409
        %v10583 = vsub.f32 %v10311, %v10409
        %v10584 = vsub.f32 %v10312, %v10409
        %v10585 = vsub.f32 %v10313, %v10409
        %v10586 = vsub.f32 %v10314, %v10409
        %v10587 = vsub.f32 %v10315, %v10409
        %v10588 = vsub.f32 %v10316, %v10409
        %v10589 = vsub.f32 %v10317, %v10414
        %v10590 = vsub.f32 %v10318, %v10414
        %v10591 = vsub.f32 %v10319, %v10414
        %v10592 = vsub.f32 %v10320, %v10414
        %v10593 = vsub.f32 %v10321, %v10414
        %v10594 = vsub.f32 %v10322, %v10414
        %v10595 = vsub.f32 %v10323, %v10414
        %v10596 = vsub.f32 %v10324, %v10414
        %v10597 = vsub.f32 %v10325, %v10414
        %v10598 = vsub.f32 %v10326, %v10414
        %v10599 = vsub.f32 %v10327, %v10414
        %v10600 = vsub.f32 %v10328, %v10414
        %v10601 = vsub.f32 %v10329, %v10419
        %v10602 = vsub.f32 %v10330, %v10419
        %v10603 = vsub.f32 %v10331, %v10419
        %v10604 = vsub.f32 %v10332, %v10419
        %v10605 = vsub.f32 %v10333, %v10419
        %v10606 = vsub.f32 %v10334, %v10419
        %v10607 = vsub.f32 %v10335, %v10419
        %v10608 = vsub.f32 %v10336, %v10419
        %v10609 = vsub.f32 %v10337, %v10419
        %v10610 = vsub.f32 %v10338, %v10419
        %v10611 = vsub.f32 %v10339, %v10419
        %v10612 = vsub.f32 %v10340, %v10419
        %10613 = vst [vmem:[%s299] sm:$0xff] %v10421
        %10614 = vst [vmem:[%s299 + $0x8] sm:$0xff] %v10422
        %10615 = vst [vmem:[%s299 + $0x10] sm:$0xff] %v10423
        %10616 = vst [vmem:[%s299 + $0x18] sm:$0xff] %v10424
        %10617 = vst [vmem:[%s299 + $0x20] sm:$0xff] %v10425
        %10618 = vst [vmem:[%s299 + $0x28] sm:$0xff] %v10426
        %10619 = vst [vmem:[%s299 + $0x30] sm:$0xff] %v10427
        %10620 = vst [vmem:[%s299 + $0x38] sm:$0xff] %v10428
        %10621 = vst [vmem:[%s299 + $0x40] sm:$0xff] %v10429
        %10622 = vst [vmem:[%s299 + $0x48] sm:$0xff] %v10430
        %10623 = vst [vmem:[%s299 + $0x50] sm:$0xff] %v10431
        %10624 = vst [vmem:[%s299 + $0x58] sm:$0xff] %v10432
        %10625 = vst [vmem:[%s299 + $0x60] sm:$0xff] %v10433
        %10626 = vst [vmem:[%s299 + $0x68] sm:$0xff] %v10434
        %10627 = vst [vmem:[%s299 + $0x70] sm:$0xff] %v10435
        %10628 = vst [vmem:[%s299 + $0x78] sm:$0xff] %v10436
        %10629 = vst [vmem:[%s299 + $0x80] sm:$0xff] %v10437
        %10630 = vst [vmem:[%s299 + $0x88] sm:$0xff] %v10438
        %10631 = vst [vmem:[%s299 + $0x90] sm:$0xff] %v10439
        %10632 = vst [vmem:[%s299 + $0x98] sm:$0xff] %v10440
        %10633 = vst [vmem:[%s299 + $0xa0] sm:$0xff] %v10441
        %10634 = vst [vmem:[%s299 + $0xa8] sm:$0xff] %v10442
        %10635 = vst [vmem:[%s299 + $0xb0] sm:$0xff] %v10443
        %10636 = vst [vmem:[%s299 + $0xb8] sm:$0xff] %v10444
        %10637 = vst [vmem:[%s299 + $0xc0] sm:$0xff] %v10445
        %10638 = vst [vmem:[%s299 + $0xc8] sm:$0xff] %v10446
        %10639 = vst [vmem:[%s299 + $0xd0] sm:$0xff] %v10447
        %10640 = vst [vmem:[%s299 + $0xd8] sm:$0xff] %v10448
        %10641 = vst [vmem:[%s299 + $0xe0] sm:$0xff] %v10449
        %10642 = vst [vmem:[%s299 + $0xe8] sm:$0xff] %v10450
        %10643 = vst [vmem:[%s299 + $0xf0] sm:$0xff] %v10451
        %10644 = vst [vmem:[%s299 + $0xf8] sm:$0xff] %v10452
        %10645 = vst [vmem:[%s299 + $0x100] sm:$0xff] %v10453
        %10646 = vst [vmem:[%s299 + $0x108] sm:$0xff] %v10454
        %10647 = vst [vmem:[%s299 + $0x110] sm:$0xff] %v10455
        %10648 = vst [vmem:[%s299 + $0x118] sm:$0xff] %v10456
        %10649 = vst [vmem:[%s299 + $0x120] sm:$0xff] %v10457
        %10650 = vst [vmem:[%s299 + $0x128] sm:$0xff] %v10458
        %10651 = vst [vmem:[%s299 + $0x130] sm:$0xff] %v10459
        %10652 = vst [vmem:[%s299 + $0x138] sm:$0xff] %v10460
        %10653 = vst [vmem:[%s299 + $0x140] sm:$0xff] %v10461
        %10654 = vst [vmem:[%s299 + $0x148] sm:$0xff] %v10462
        %10655 = vst [vmem:[%s299 + $0x150] sm:$0xff] %v10463
        %10656 = vst [vmem:[%s299 + $0x158] sm:$0xff] %v10464
        %10657 = vst [vmem:[%s299 + $0x160] sm:$0xff] %v10465
        %10658 = vst [vmem:[%s299 + $0x168] sm:$0xff] %v10466
        %10659 = vst [vmem:[%s299 + $0x170] sm:$0xff] %v10467
        %10660 = vst [vmem:[%s299 + $0x178] sm:$0xff] %v10468
        %10661 = vst [vmem:[%s299 + $0x180] sm:$0xff] %v10469
        %10662 = vst [vmem:[%s299 + $0x188] sm:$0xff] %v10470
        %10663 = vst [vmem:[%s299 + $0x190] sm:$0xff] %v10471
        %10664 = vst [vmem:[%s299 + $0x198] sm:$0xff] %v10472
        %10665 = vst [vmem:[%s299 + $0x1a0] sm:$0xff] %v10473
        %10666 = vst [vmem:[%s299 + $0x1a8] sm:$0xff] %v10474
        %10667 = vst [vmem:[%s299 + $0x1b0] sm:$0xff] %v10475
        %10668 = vst [vmem:[%s299 + $0x1b8] sm:$0xff] %v10476
        %10669 = vst [vmem:[%s299 + $0x1c0] sm:$0xff] %v10477
        %10670 = vst [vmem:[%s299 + $0x1c8] sm:$0xff] %v10478
        %10671 = vst [vmem:[%s299 + $0x1d0] sm:$0xff] %v10479
        %10672 = vst [vmem:[%s299 + $0x1d8] sm:$0xff] %v10480
        %10673 = vst [vmem:[%s299 + $0x1e0] sm:$0xff] %v10481
        %10674 = vst [vmem:[%s299 + $0x1e8] sm:$0xff] %v10482
        %10675 = vst [vmem:[%s299 + $0x1f0] sm:$0xff] %v10483
        %10676 = vst [vmem:[%s299 + $0x1f8] sm:$0xff] %v10484
        %10677 = vst [vmem:[%s299 + $0x200] sm:$0xff] %v10485
        %10678 = vst [vmem:[%s299 + $0x208] sm:$0xff] %v10486
        %10679 = vst [vmem:[%s299 + $0x210] sm:$0xff] %v10487
        %10680 = vst [vmem:[%s299 + $0x218] sm:$0xff] %v10488
        %10681 = vst [vmem:[%s299 + $0x220] sm:$0xff] %v10489
        %10682 = vst [vmem:[%s299 + $0x228] sm:$0xff] %v10490
        %10683 = vst [vmem:[%s299 + $0x230] sm:$0xff] %v10491
        %10684 = vst [vmem:[%s299 + $0x238] sm:$0xff] %v10492
        %10685 = vst [vmem:[%s299 + $0x240] sm:$0xff] %v10493
        %10686 = vst [vmem:[%s299 + $0x248] sm:$0xff] %v10494
        %10687 = vst [vmem:[%s299 + $0x250] sm:$0xff] %v10495
        %10688 = vst [vmem:[%s299 + $0x258] sm:$0xff] %v10496
        %10689 = vst [vmem:[%s299 + $0x260] sm:$0xff] %v10497
        %10690 = vst [vmem:[%s299 + $0x268] sm:$0xff] %v10498
        %10691 = vst [vmem:[%s299 + $0x270] sm:$0xff] %v10499
        %10692 = vst [vmem:[%s299 + $0x278] sm:$0xff] %v10500
        %10693 = vst [vmem:[%s299 + $0x280] sm:$0xff] %v10501
        %10694 = vst [vmem:[%s299 + $0x288] sm:$0xff] %v10502
        %10695 = vst [vmem:[%s299 + $0x290] sm:$0xff] %v10503
        %10696 = vst [vmem:[%s299 + $0x298] sm:$0xff] %v10504
        %10697 = vst [vmem:[%s299 + $0x2a0] sm:$0xff] %v10505
        %10698 = vst [vmem:[%s299 + $0x2a8] sm:$0xff] %v10506
        %10699 = vst [vmem:[%s299 + $0x2b0] sm:$0xff] %v10507
        %10700 = vst [vmem:[%s299 + $0x2b8] sm:$0xff] %v10508
        %10701 = vst [vmem:[%s299 + $0x2c0] sm:$0xff] %v10509
        %10702 = vst [vmem:[%s299 + $0x2c8] sm:$0xff] %v10510
        %10703 = vst [vmem:[%s299 + $0x2d0] sm:$0xff] %v10511
        %10704 = vst [vmem:[%s299 + $0x2d8] sm:$0xff] %v10512
        %10705 = vst [vmem:[%s299 + $0x2e0] sm:$0xff] %v10513
        %10706 = vst [vmem:[%s299 + $0x2e8] sm:$0xff] %v10514
        %10707 = vst [vmem:[%s299 + $0x2f0] sm:$0xff] %v10515
        %10708 = vst [vmem:[%s299 + $0x2f8] sm:$0xff] %v10516
        %10709 = vst [vmem:[%s299 + $0x300] sm:$0xff] %v10517
        %10710 = vst [vmem:[%s299 + $0x308] sm:$0xff] %v10518
        %10711 = vst [vmem:[%s299 + $0x310] sm:$0xff] %v10519
        %10712 = vst [vmem:[%s299 + $0x318] sm:$0xff] %v10520
        %10713 = vst [vmem:[%s299 + $0x320] sm:$0xff] %v10521
        %10714 = vst [vmem:[%s299 + $0x328] sm:$0xff] %v10522
        %10715 = vst [vmem:[%s299 + $0x330] sm:$0xff] %v10523
        %10716 = vst [vmem:[%s299 + $0x338] sm:$0xff] %v10524
        %10717 = vst [vmem:[%s299 + $0x340] sm:$0xff] %v10525
        %10718 = vst [vmem:[%s299 + $0x348] sm:$0xff] %v10526
        %10719 = vst [vmem:[%s299 + $0x350] sm:$0xff] %v10527
        %10720 = vst [vmem:[%s299 + $0x358] sm:$0xff] %v10528
        %10721 = vst [vmem:[%s299 + $0x360] sm:$0xff] %v10529
        %10722 = vst [vmem:[%s299 + $0x368] sm:$0xff] %v10530
        %10723 = vst [vmem:[%s299 + $0x370] sm:$0xff] %v10531
        %10724 = vst [vmem:[%s299 + $0x378] sm:$0xff] %v10532
        %10725 = vst [vmem:[%s299 + $0x380] sm:$0xff] %v10533
        %10726 = vst [vmem:[%s299 + $0x388] sm:$0xff] %v10534
        %10727 = vst [vmem:[%s299 + $0x390] sm:$0xff] %v10535
        %10728 = vst [vmem:[%s299 + $0x398] sm:$0xff] %v10536
        %10729 = vst [vmem:[%s299 + $0x3a0] sm:$0xff] %v10537
        %10730 = vst [vmem:[%s299 + $0x3a8] sm:$0xff] %v10538
        %10731 = vst [vmem:[%s299 + $0x3b0] sm:$0xff] %v10539
        %10732 = vst [vmem:[%s299 + $0x3b8] sm:$0xff] %v10540
        %10733 = vst [vmem:[%s299 + $0x3c0] sm:$0xff] %v10541
        %10734 = vst [vmem:[%s299 + $0x3c8] sm:$0xff] %v10542
        %10735 = vst [vmem:[%s299 + $0x3d0] sm:$0xff] %v10543
        %10736 = vst [vmem:[%s299 + $0x3d8] sm:$0xff] %v10544
        %10737 = vst [vmem:[%s299 + $0x3e0] sm:$0xff] %v10545
        %10738 = vst [vmem:[%s299 + $0x3e8] sm:$0xff] %v10546
        %10739 = vst [vmem:[%s299 + $0x3f0] sm:$0xff] %v10547
        %10740 = vst [vmem:[%s299 + $0x3f8] sm:$0xff] %v10548
        %10741 = vst [vmem:[%s299 + $0x400] sm:$0xff] %v10549
        %10742 = vst [vmem:[%s299 + $0x408] sm:$0xff] %v10550
        %10743 = vst [vmem:[%s299 + $0x410] sm:$0xff] %v10551
        %10744 = vst [vmem:[%s299 + $0x418] sm:$0xff] %v10552
        %10745 = vst [vmem:[%s299 + $0x420] sm:$0xff] %v10553
        %10746 = vst [vmem:[%s299 + $0x428] sm:$0xff] %v10554
        %10747 = vst [vmem:[%s299 + $0x430] sm:$0xff] %v10555
        %10748 = vst [vmem:[%s299 + $0x438] sm:$0xff] %v10556
        %10749 = vst [vmem:[%s299 + $0x440] sm:$0xff] %v10557
        %10750 = vst [vmem:[%s299 + $0x448] sm:$0xff] %v10558
        %10751 = vst [vmem:[%s299 + $0x450] sm:$0xff] %v10559
        %10752 = vst [vmem:[%s299 + $0x458] sm:$0xff] %v10560
        %10753 = vst [vmem:[%s299 + $0x460] sm:$0xff] %v10561
        %10754 = vst [vmem:[%s299 + $0x468] sm:$0xff] %v10562
        %10755 = vst [vmem:[%s299 + $0x470] sm:$0xff] %v10563
        %10756 = vst [vmem:[%s299 + $0x478] sm:$0xff] %v10564
        %10757 = vst [vmem:[%s299 + $0x480] sm:$0xff] %v10565
        %10758 = vst [vmem:[%s299 + $0x488] sm:$0xff] %v10566
        %10759 = vst [vmem:[%s299 + $0x490] sm:$0xff] %v10567
        %10760 = vst [vmem:[%s299 + $0x498] sm:$0xff] %v10568
        %10761 = vst [vmem:[%s299 + $0x4a0] sm:$0xff] %v10569
        %10762 = vst [vmem:[%s299 + $0x4a8] sm:$0xff] %v10570
        %10763 = vst [vmem:[%s299 + $0x4b0] sm:$0xff] %v10571
        %10764 = vst [vmem:[%s299 + $0x4b8] sm:$0xff] %v10572
        %10765 = vst [vmem:[%s299 + $0x4c0] sm:$0xff] %v10573
        %10766 = vst [vmem:[%s299 + $0x4c8] sm:$0xff] %v10574
        %10767 = vst [vmem:[%s299 + $0x4d0] sm:$0xff] %v10575
        %10768 = vst [vmem:[%s299 + $0x4d8] sm:$0xff] %v10576
        %10769 = vst [vmem:[%s299 + $0x4e0] sm:$0xff] %v10577
        %10770 = vst [vmem:[%s299 + $0x4e8] sm:$0xff] %v10578
        %10771 = vst [vmem:[%s299 + $0x4f0] sm:$0xff] %v10579
        %10772 = vst [vmem:[%s299 + $0x4f8] sm:$0xff] %v10580
        %10773 = vst [vmem:[%s299 + $0x500] sm:$0xff] %v10581
        %10774 = vst [vmem:[%s299 + $0x508] sm:$0xff] %v10582
        %10775 = vst [vmem:[%s299 + $0x510] sm:$0xff] %v10583
        %10776 = vst [vmem:[%s299 + $0x518] sm:$0xff] %v10584
        %10777 = vst [vmem:[%s299 + $0x520] sm:$0xff] %v10585
        %10778 = vst [vmem:[%s299 + $0x528] sm:$0xff] %v10586
        %10779 = vst [vmem:[%s299 + $0x530] sm:$0xff] %v10587
        %10780 = vst [vmem:[%s299 + $0x538] sm:$0xff] %v10588
        %10781 = vst [vmem:[%s299 + $0x540] sm:$0xff] %v10589
        %10782 = vst [vmem:[%s299 + $0x548] sm:$0xff] %v10590
        %10783 = vst [vmem:[%s299 + $0x550] sm:$0xff] %v10591
        %10784 = vst [vmem:[%s299 + $0x558] sm:$0xff] %v10592
        %10785 = vst [vmem:[%s299 + $0x560] sm:$0xff] %v10593
        %10786 = vst [vmem:[%s299 + $0x568] sm:$0xff] %v10594
        %10787 = vst [vmem:[%s299 + $0x570] sm:$0xff] %v10595
        %10788 = vst [vmem:[%s299 + $0x578] sm:$0xff] %v10596
        %10789 = vst [vmem:[%s299 + $0x580] sm:$0xff] %v10597
        %10790 = vst [vmem:[%s299 + $0x588] sm:$0xff] %v10598
        %10791 = vst [vmem:[%s299 + $0x590] sm:$0xff] %v10599
        %10792 = vst [vmem:[%s299 + $0x598] sm:$0xff] %v10600
        %10793 = vst [vmem:[%s299 + $0x5a0] sm:$0xff] %v10601
        %10794 = vst [vmem:[%s299 + $0x5a8] sm:$0xff] %v10602
        %10795 = vst [vmem:[%s299 + $0x5b0] sm:$0xff] %v10603
        %10796 = vst [vmem:[%s299 + $0x5b8] sm:$0xff] %v10604
        %10797 = vst [vmem:[%s299 + $0x5c0] sm:$0xff] %v10605
        %10798 = vst [vmem:[%s299 + $0x5c8] sm:$0xff] %v10606
        %10799 = vst [vmem:[%s299 + $0x5d0] sm:$0xff] %v10607
        %10800 = vst [vmem:[%s299 + $0x5d8] sm:$0xff] %v10608
        %10801 = vst [vmem:[%s299 + $0x5e0] sm:$0xff] %v10609
        %10802 = vst [vmem:[%s299 + $0x5e8] sm:$0xff] %v10610
        %10803 = vst [vmem:[%s299 + $0x5f0] sm:$0xff] %v10611
        %10804 = vst [vmem:[%s299 + $0x5f8] sm:$0xff] %v10612
        %s10805 = sand.u32 %s142, 1
        %s10806 = scalar_lea.sflag [#allocation4], %s10805
        %s10807 = sand.u32 %s142, 1
        %s10808 = smul.addr %s10807, 1536
        %s10809 = scalar_lea.vmem [#allocation11], %s10808
        // Predicated region
        $region61: #{tpu_custom_call.1} parent=39 // pred_check
          %p10810 = pneg %p152
        $region62: #{tpu_custom_call.1} parent=39 // pred_check_branch
          %10812 = sbr.rel (%p10810) target = $region64
        $region63: #{tpu_custom_call.1} parent=39 // pred_region
          %s10813 = smul.u32 8, %s24
          %s10815 = ssub.s32 24576, 24576
          %10816 = vsyncadd %s10806, %s10815
          %s10817 = smul.addr %s10813, 24
          %s10818 = smul.addr %s10817, 128
          %s10819 = scalar_lea.hbm %s5, %s10818
          %s10820 = sshll.u32 %s10809, 4
          %s10821 = int_to_ptr.vmem [resolvable:$true] %s10820
          %10826 = dma.vmem_to_hbm [thread:$0]  %s10821, 24576, %s10819, %s10806, 1536, 1536, 96
        $region64: #{tpu_custom_call.1} parent=39 // pred_fallthru
          _
      $region40: #{tpu_custom_call.1} parent=5 // pred_fallthru
        _
      %p10827 = scmp.le.s32.totalorder 2, %s19
      // Predicated region
      $region65: #{tpu_custom_call.1} parent=5 // pred_check
        %p10828 = pneg %p10827
      $region66: #{tpu_custom_call.1} parent=5 // pred_check_branch
        %10830 = sbr.rel (%p10828) target = $region68
      $region67: #{tpu_custom_call.1} parent=5 // pred_region
        %s10831 = ssub.s32 %s19, 2
        // Predicated region
        $region69: #{tpu_custom_call.1} parent=67 // pred_check
          %p10832 = pneg %p158
        $region70: #{tpu_custom_call.1} parent=67 // pred_check_branch
          %10834 = sbr.rel (%p10832) target = $region72
        $region71: #{tpu_custom_call.1} parent=67 // pred_region
          %s10835 = sand.u32 %s143, 1
          %s10836 = scalar_lea.sflag [#allocation4], %s10835
          %s10837 = sand.u32 %s143, 1
          %s10838 = smul.addr %s10837, 1536
          %s10839 = scalar_lea.vmem [#allocation11], %s10838
          %10840 = dma.done %s10836, 24576
        $region72: #{tpu_custom_call.1} parent=67 // pred_fallthru
          _
      $region68: #{tpu_custom_call.1} parent=5 // pred_fallthru
        _
    $region6: #{tpu_custom_call.1} parent=1 // loop_footer
      %s23 = sadd.s32 1, %s19
    $region7: #{tpu_custom_call.1} parent=1 // loop_footer_branch
      %18 = sbr.rel target = $region3
    $region8: #{tpu_custom_call.1} parent=1 // loop_exit
      _
    %10841 = vsyncpa [#allocation3], 1
    %s10842 = scalar_lea.sflag [#allocation3], 1
    %10843 = vsyncpa %s10842, 1
    %10844 = vsyncpa [#allocation6], 1
    %10845 = vsyncpa [#allocation9], 1
    %10846 = vsyncpa [#allocation4], 1
    %s10847 = scalar_lea.sflag [#allocation4], 1
    %10848 = vsyncpa %s10847, 1

</llo_original>
